<compile_context>
chip_gen: v5e
topology: v5e:2x2
jax: 0.10.0
libtpu: 0.0.40
codegen_flags: <defaults>
</compile_context>

<pallas_src>
import jax
import jax.numpy as jnp
from jax import lax
from jax.experimental import pallas as pl
from jax.experimental.pallas import tpu as pltpu

side = 32
N_POINTS = 1000
HW = side * side                  # 1024 spatial positions per image
CHANS = (3, 8, 16, 32)            # synthetic extractor channel progression
TN = 256                          # lane chunk for the conv matmul
TL = 256                          # lane chunk for the loss reductions


# --------------------------- fused Pallas kernel ----------------------------

def _fused_inpainting_kernel(mask_ref, tmask_ref, w1_ref, w2_ref, w3_ref,
                             out_ref, f1_ref, f2_ref, f3_ref, patch_ref):
    """Whole InpaintingLoss forward on one TensorCore.

    mask_ref : (B, HW)   f32   per-image {0,1} occupancy (the 32x32 image)
    tmask_ref: (9, HW)   f32   per-tap 'same'-padding validity masks
    w*_ref   : (Cout, 9*Cin) bf16 flattened conv weights (tap-major, Cin minor)
    out_ref  : (1, 2)    f32 SMEM  -> [prc, style]
    f*_ref   : (C, B*HW) f32 VMEM  feature scratch per stage
    patch_ref: (144, HW) f32 VMEM  im2col scratch (reused per stage / image)
    """
    batch = mask_ref.shape[0]

    def conv_stage(load_in, w_ref, out_feat_ref, cin):
        k = 9 * cin
        for b in range(batch):
            # ---- in-kernel im2col: 9 rolled + masked copies of the input ---
            for t in range(9):
                dy = t // 3 - 1
                dx = t % 3 - 1
                s = dy * side + dx                 # input offset for this tap
                xb = load_in(b)                    # (cin, HW) f32
                if s % HW != 0:
                    rolled = pltpu.roll(xb, (-s) % HW, axis=1)
                else:
                    rolled = xb
                m = tmask_ref[pl.ds(t, 1), :]      # (1, HW) validity mask
                patch_ref[pl.ds(t * cin, cin), :] = rolled * m
            # ---- weight-stationary matmul + ReLU, chunked over lanes -------
            for j in range(HW // TN):
                pv = patch_ref[pl.ds(0, k), pl.ds(j * TN, TN)]   # (k, TN) f32
                y = jnp.dot(w_ref[...], pv.astype(jnp.bfloat16),
                            preferred_element_type=jnp.float32)  # (cout, TN)
                out_feat_ref[:, pl.ds(b * HW + j * TN, TN)] = jnp.maximum(y, 0.0)

    # Stage 1: the 3 input channels are identical copies of the mask image
    # (built in-kernel, no HBM image materialization).
    conv_stage(lambda b: jnp.broadcast_to(mask_ref[pl.ds(b, 1), :],
                                          (CHANS[0], HW)),
               w1_ref, f1_ref, CHANS[0])
    conv_stage(lambda b: f1_ref[:, pl.ds(b * HW, HW)], w2_ref, f2_ref, CHANS[1])
    conv_stage(lambda b: f2_ref[:, pl.ds(b * HW, HW)], w3_ref, f3_ref, CHANS[2])

    # ---- perceptual + style losses (dedup: feat_output is feat_gt) ---------
    prc = jnp.float32(0.0)
    style = jnp.float32(0.0)
    for feat_ref in (f1_ref, f2_ref, f3_ref):
        c = feat_ref.shape[0]
        psum = jnp.float32(0.0)
        ssum = jnp.float32(0.0)
        for b in range(batch):
            gacc = jnp.zeros((c, c), jnp.float32)
            for j in range(HW // TL):
                fo = feat_ref[:, pl.ds(b * HW + j * TL, TL)]     # (c, TL) f32
                fg = fo                    # pred/gt features are identical
                psum = psum + jnp.sum(jnp.abs(fo - fg))
                fo16 = fo.astype(jnp.bfloat16)
                gacc = gacc + lax.dot_general(
                    fo16, fo16, (((1,), (1,)), ((), ())),
                    preferred_element_type=jnp.float32)
            g_out = gacc * (1.0 / (c * HW))    # torch gram_matrix divisor
            g_gt = g_out                       # gram reused for the gt branch
            ssum = ssum + jnp.sum(jnp.abs(g_out - g_gt))
        prc = prc + psum / (batch * c * HW)    # nn.L1Loss() mean over B,C,H,W
        style = style + ssum / (batch * c * c)  # mean over B,C,C
    out_ref[0, 0] = prc
    out_ref[0, 1] = style


def _run_fused(mask, tap_masks, ws):
    batch = mask.shape[0]
    out = pl.pallas_call(
        _fused_inpainting_kernel,
        out_shape=jax.ShapeDtypeStruct((1, 2), jnp.float32),
        in_specs=[pl.BlockSpec(memory_space=pltpu.MemorySpace.VMEM)] * 5,
        out_specs=pl.BlockSpec(memory_space=pltpu.MemorySpace.SMEM),
        scratch_shapes=[
            pltpu.VMEM((CHANS[1], batch * HW), jnp.float32),   # stage-1 feats
            pltpu.VMEM((CHANS[2], batch * HW), jnp.float32),   # stage-2 feats
            pltpu.VMEM((CHANS[3], batch * HW), jnp.float32),   # stage-3 feats
            pltpu.VMEM((9 * CHANS[2], HW), jnp.float32),       # im2col scratch
        ],
    )(mask, tap_masks, *ws)
    return out[0, 0], out[0, 1]


# --------------------------- synthetic extractor ----------------------------

def init_extractor_params(key):
    # Stand-in for the VGG-style extractor the reference receives in __init__.
    chans = list(CHANS)
    params = []
    for i in range(3):
        key, k = jax.random.split(key)
        w = 0.1 * jax.random.normal(k, (3, 3, chans[i], chans[i + 1]),
                                    jnp.float32)
        params.append(w)
    return params


# --------------------------- forward pass -----------------------------------

def inpainting_loss_forward(inp, gt, params):
    B = gt.shape[0]
    xgt = gt[:, :, 0]
    ygt = gt[:, :, 1]
    assert xgt.shape == (B, N_POINTS)
    assert ygt.shape == (B, N_POINTS)

    # Predicted coordinate slices exist in the reference but are never used
    # downstream (the reference scatters gt coords into BOTH images).
    xpred = inp[:, :N_POINTS]
    ypred = inp[:, -N_POINTS:]
    del xpred, ypred

    # Scatter-free mask build (replaces the torch .at[b, x, y].set(1.0)
    # scatter); .long()-style truncation == astype(int32) for >=0 coords.
    xi = xgt.astype(jnp.int32)
    yi = ygt.astype(jnp.int32)
    flat = xi * side + yi                                       # (B, 1000)
    pos = jnp.arange(HW, dtype=jnp.int32)
    mask = jnp.any(flat[:, :, None] == pos[None, None, :], axis=1)
    mask = mask.astype(jnp.float32)                             # (B, HW)

    # Per-tap 'same'-padding validity masks, (9, HW) f32 (static constants).
    p = jnp.arange(HW, dtype=jnp.int32)
    h, w = p // side, p % side
    tms = []
    for dy in (-1, 0, 1):
        for dx in (-1, 0, 1):
            valid = ((h + dy >= 0) & (h + dy < side) &
                     (w + dx >= 0) & (w + dx < side))
            tms.append(valid.astype(jnp.float32))
    tap_masks = jnp.stack(tms, axis=0)                          # (9, HW)

    # Conv weights flattened to (Cout, 9*Cin) bf16, tap-major / Cin-minor,
    # matching the in-kernel patch row layout.
    ws = [jnp.transpose(wk, (3, 0, 1, 2)).reshape(wk.shape[3], -1)
          .astype(jnp.bfloat16) for wk in params]

    # pred_img == gt_img in the reference (same coords, same value), so the
    # extractor runs once and its features feed both loss branches.
    prc, style = _run_fused(mask, tap_masks, ws)

    # TODO(synk): the reference's host-side print of image sums and the
    # .cuda() placement are not reproduced; the reference returns only 'prc'.
    return prc, style


# --------------------------- main --------------------------------------------

if __name__ == "__main__":
    key = jax.random.PRNGKey(0)
    kgt, kin, kw = jax.random.split(key, 3)

    B = 2
    # gt: (B, 1000, 2) float coordinates in [0, side)
    gt = jax.random.randint(kgt, (B, N_POINTS, 2), 0, side).astype(jnp.float32)
    # input: (B, 2000) predicted x/y coordinate logits (unused downstream)
    inp = jax.random.normal(kin, (B, 2 * N_POINTS), jnp.float32)
    params = init_extractor_params(kw)

    prc, style = jax.jit(inpainting_loss_forward)(inp, gt, params)
    jax.block_until_ready((prc, style))
    print("KERNEL_OK")
</pallas_src>

<mosaic_0001>
module attributes {stable_mosaic.version = 11 : i64} {
  func.func @_fused_inpainting_kernel(%arg0: memref<2x1024xf32, #tpu.memory_space<vmem>>, %arg1: memref<9x1024xf32, #tpu.memory_space<vmem>>, %arg2: memref<8x27xbf16, #tpu.memory_space<vmem>>, %arg3: memref<16x72xbf16, #tpu.memory_space<vmem>>, %arg4: memref<32x144xbf16, #tpu.memory_space<vmem>>, %arg5: memref<1x2xf32, #tpu.memory_space<smem>>, %arg6: memref<8x2048xf32, #tpu.memory_space<vmem>>, %arg7: memref<16x2048xf32, #tpu.memory_space<vmem>>, %arg8: memref<32x2048xf32, #tpu.memory_space<vmem>>, %arg9: memref<144x1024xf32, #tpu.memory_space<vmem>>) attributes {dimension_semantics = [], scalar_prefetch = 0 : i64, scratch_operands = 4 : i64, tpu.core_type = #tpu.core_type<tc>} {
    %c0 = arith.constant 0 : index
    %c0_0 = arith.constant 0 : index
    %0 = vector.load %arg0[%c0, %c0_0] : memref<2x1024xf32, #tpu.memory_space<vmem>>, vector<1x1024xf32>
    %1 = vector.shape_cast %0 : vector<1x1024xf32> to vector<1x1024xf32>
    %2 = vector.broadcast %1 : vector<1x1024xf32> to vector<3x1024xf32>
    %c33_i32 = arith.constant 33 : i32
    %3 = tpu.dynamic_rotate %2 by %c33_i32 dim 1 : vector<3x1024xf32>, i32 -> vector<3x1024xf32>
    %c0_1 = arith.constant 0 : index
    %c0_2 = arith.constant 0 : index
    %4 = vector.load %arg1[%c0_1, %c0_2] : memref<9x1024xf32, #tpu.memory_space<vmem>>, vector<1x1024xf32>
    %5 = vector.broadcast %4 : vector<1x1024xf32> to vector<3x1024xf32>
    %6 = arith.mulf %3, %5 : vector<3x1024xf32>
    %c0_3 = arith.constant 0 : index
    %c0_4 = arith.constant 0 : index
    %7 = vector.load %arg9[%c0_3, %c0_4] : memref<144x1024xf32, #tpu.memory_space<vmem>>, vector<3x1024xf32>
    tpu.vector_store %arg9[%c0_3, %c0_4], %6 {strides = array<i32>} : memref<144x1024xf32, #tpu.memory_space<vmem>>, vector<3x1024xf32>,
    %c0_5 = arith.constant 0 : index
    %c0_6 = arith.constant 0 : index
    %8 = vector.load %arg0[%c0_5, %c0_6] : memref<2x1024xf32, #tpu.memory_space<vmem>>, vector<1x1024xf32>
    %9 = vector.shape_cast %8 : vector<1x1024xf32> to vector<1x1024xf32>
    %10 = vector.broadcast %9 : vector<1x1024xf32> to vector<3x1024xf32>
    %c32_i32 = arith.constant 32 : i32
    %11 = tpu.dynamic_rotate %10 by %c32_i32 dim 1 : vector<3x1024xf32>, i32 -> vector<3x1024xf32>
    %c1 = arith.constant 1 : index
    %c0_7 = arith.constant 0 : index
    %12 = vector.load %arg1[%c1, %c0_7] : memref<9x1024xf32, #tpu.memory_space<vmem>>, vector<1x1024xf32>
    %13 = vector.broadcast %12 : vector<1x1024xf32> to vector<3x1024xf32>
    %14 = arith.mulf %11, %13 : vector<3x1024xf32>
    %c3 = arith.constant 3 : index
    %c0_8 = arith.constant 0 : index
    %15 = vector.load %arg9[%c3, %c0_8] : memref<144x1024xf32, #tpu.memory_space<vmem>>, vector<3x1024xf32>
    tpu.vector_store %arg9[%c3, %c0_8], %14 {strides = array<i32>} : memref<144x1024xf32, #tpu.memory_space<vmem>>, vector<3x1024xf32>,
    %c0_9 = arith.constant 0 : index
    %c0_10 = arith.constant 0 : index
    %16 = vector.load %arg0[%c0_9, %c0_10] : memref<2x1024xf32, #tpu.memory_space<vmem>>, vector<1x1024xf32>
    %17 = vector.shape_cast %16 : vector<1x1024xf32> to vector<1x1024xf32>
    %18 = vector.broadcast %17 : vector<1x1024xf32> to vector<3x1024xf32>
    %c31_i32 = arith.constant 31 : i32
    %19 = tpu.dynamic_rotate %18 by %c31_i32 dim 1 : vector<3x1024xf32>, i32 -> vector<3x1024xf32>
    %c2 = arith.constant 2 : index
    %c0_11 = arith.constant 0 : index
    %20 = vector.load %arg1[%c2, %c0_11] : memref<9x1024xf32, #tpu.memory_space<vmem>>, vector<1x1024xf32>
    %21 = vector.broadcast %20 : vector<1x1024xf32> to vector<3x1024xf32>
    %22 = arith.mulf %19, %21 : vector<3x1024xf32>
    %c6 = arith.constant 6 : index
    %c0_12 = arith.constant 0 : index
    %23 = vector.load %arg9[%c6, %c0_12] : memref<144x1024xf32, #tpu.memory_space<vmem>>, vector<3x1024xf32>
    tpu.vector_store %arg9[%c6, %c0_12], %22 {strides = array<i32>} : memref<144x1024xf32, #tpu.memory_space<vmem>>, vector<3x1024xf32>,
    %c0_13 = arith.constant 0 : index
    %c0_14 = arith.constant 0 : index
    %24 = vector.load %arg0[%c0_13, %c0_14] : memref<2x1024xf32, #tpu.memory_space<vmem>>, vector<1x1024xf32>
    %25 = vector.shape_cast %24 : vector<1x1024xf32> to vector<1x1024xf32>
    %26 = vector.broadcast %25 : vector<1x1024xf32> to vector<3x1024xf32>
    %c1_i32 = arith.constant 1 : i32
    %27 = tpu.dynamic_rotate %26 by %c1_i32 dim 1 : vector<3x1024xf32>, i32 -> vector<3x1024xf32>
    %c3_15 = arith.constant 3 : index
    %c0_16 = arith.constant 0 : index
    %28 = vector.load %arg1[%c3_15, %c0_16] : memref<9x1024xf32, #tpu.memory_space<vmem>>, vector<1x1024xf32>
    %29 = vector.broadcast %28 : vector<1x1024xf32> to vector<3x1024xf32>
    %30 = arith.mulf %27, %29 : vector<3x1024xf32>
    %c9 = arith.constant 9 : index
    %c0_17 = arith.constant 0 : index
    %31 = vector.load %arg9[%c9, %c0_17] : memref<144x1024xf32, #tpu.memory_space<vmem>>, vector<3x1024xf32>
    tpu.vector_store %arg9[%c9, %c0_17], %30 {strides = array<i32>} : memref<144x1024xf32, #tpu.memory_space<vmem>>, vector<3x1024xf32>,
    %c0_18 = arith.constant 0 : index
    %c0_19 = arith.constant 0 : index
    %32 = vector.load %arg0[%c0_18, %c0_19] : memref<2x1024xf32, #tpu.memory_space<vmem>>, vector<1x1024xf32>
    %33 = vector.shape_cast %32 : vector<1x1024xf32> to vector<1x1024xf32>
    %34 = vector.broadcast %33 : vector<1x1024xf32> to vector<3x1024xf32>
    %c4 = arith.constant 4 : index
    %c0_20 = arith.constant 0 : index
    %35 = vector.load %arg1[%c4, %c0_20] : memref<9x1024xf32, #tpu.memory_space<vmem>>, vector<1x1024xf32>
    %36 = vector.broadcast %35 : vector<1x1024xf32> to vector<3x1024xf32>
    %37 = arith.mulf %34, %36 : vector<3x1024xf32>
    %c12 = arith.constant 12 : index
    %c0_21 = arith.constant 0 : index
    %38 = vector.load %arg9[%c12, %c0_21] : memref<144x1024xf32, #tpu.memory_space<vmem>>, vector<3x1024xf32>
    tpu.vector_store %arg9[%c12, %c0_21], %37 {strides = array<i32>} : memref<144x1024xf32, #tpu.memory_space<vmem>>, vector<3x1024xf32>,
    %c0_22 = arith.constant 0 : index
    %c0_23 = arith.constant 0 : index
    %39 = vector.load %arg0[%c0_22, %c0_23] : memref<2x1024xf32, #tpu.memory_space<vmem>>, vector<1x1024xf32>
    %40 = vector.shape_cast %39 : vector<1x1024xf32> to vector<1x1024xf32>
    %41 = vector.broadcast %40 : vector<1x1024xf32> to vector<3x1024xf32>
    %c1023_i32 = arith.constant 1023 : i32
    %42 = tpu.dynamic_rotate %41 by %c1023_i32 dim 1 : vector<3x1024xf32>, i32 -> vector<3x1024xf32>
    %c5 = arith.constant 5 : index
    %c0_24 = arith.constant 0 : index
    %43 = vector.load %arg1[%c5, %c0_24] : memref<9x1024xf32, #tpu.memory_space<vmem>>, vector<1x1024xf32>
    %44 = vector.broadcast %43 : vector<1x1024xf32> to vector<3x1024xf32>
    %45 = arith.mulf %42, %44 : vector<3x1024xf32>
    %c15 = arith.constant 15 : index
    %c0_25 = arith.constant 0 : index
    %46 = vector.load %arg9[%c15, %c0_25] : memref<144x1024xf32, #tpu.memory_space<vmem>>, vector<3x1024xf32>
    tpu.vector_store %arg9[%c15, %c0_25], %45 {strides = array<i32>} : memref<144x1024xf32, #tpu.memory_space<vmem>>, vector<3x1024xf32>,
    %c0_26 = arith.constant 0 : index
    %c0_27 = arith.constant 0 : index
    %47 = vector.load %arg0[%c0_26, %c0_27] : memref<2x1024xf32, #tpu.memory_space<vmem>>, vector<1x1024xf32>
    %48 = vector.shape_cast %47 : vector<1x1024xf32> to vector<1x1024xf32>
    %49 = vector.broadcast %48 : vector<1x1024xf32> to vector<3x1024xf32>
    %c993_i32 = arith.constant 993 : i32
    %50 = tpu.dynamic_rotate %49 by %c993_i32 dim 1 : vector<3x1024xf32>, i32 -> vector<3x1024xf32>
    %c6_28 = arith.constant 6 : index
    %c0_29 = arith.constant 0 : index
    %51 = vector.load %arg1[%c6_28, %c0_29] : memref<9x1024xf32, #tpu.memory_space<vmem>>, vector<1x1024xf32>
    %52 = vector.broadcast %51 : vector<1x1024xf32> to vector<3x1024xf32>
    %53 = arith.mulf %50, %52 : vector<3x1024xf32>
    %c18 = arith.constant 18 : index
    %c0_30 = arith.constant 0 : index
    %54 = vector.load %arg9[%c18, %c0_30] : memref<144x1024xf32, #tpu.memory_space<vmem>>, vector<3x1024xf32>
    tpu.vector_store %arg9[%c18, %c0_30], %53 {strides = array<i32>} : memref<144x1024xf32, #tpu.memory_space<vmem>>, vector<3x1024xf32>,
    %c0_31 = arith.constant 0 : index
    %c0_32 = arith.constant 0 : index
    %55 = vector.load %arg0[%c0_31, %c0_32] : memref<2x1024xf32, #tpu.memory_space<vmem>>, vector<1x1024xf32>
    %56 = vector.shape_cast %55 : vector<1x1024xf32> to vector<1x1024xf32>
    %57 = vector.broadcast %56 : vector<1x1024xf32> to vector<3x1024xf32>
    %c992_i32 = arith.constant 992 : i32
    %58 = tpu.dynamic_rotate %57 by %c992_i32 dim 1 : vector<3x1024xf32>, i32 -> vector<3x1024xf32>
    %c7 = arith.constant 7 : index
    %c0_33 = arith.constant 0 : index
    %59 = vector.load %arg1[%c7, %c0_33] : memref<9x1024xf32, #tpu.memory_space<vmem>>, vector<1x1024xf32>
    %60 = vector.broadcast %59 : vector<1x1024xf32> to vector<3x1024xf32>
    %61 = arith.mulf %58, %60 : vector<3x1024xf32>
    %c21 = arith.constant 21 : index
    %c0_34 = arith.constant 0 : index
    %62 = vector.load %arg9[%c21, %c0_34] : memref<144x1024xf32, #tpu.memory_space<vmem>>, vector<3x1024xf32>
    tpu.vector_store %arg9[%c21, %c0_34], %61 {strides = array<i32>} : memref<144x1024xf32, #tpu.memory_space<vmem>>, vector<3x1024xf32>,
    %c0_35 = arith.constant 0 : index
    %c0_36 = arith.constant 0 : index
    %63 = vector.load %arg0[%c0_35, %c0_36] : memref<2x1024xf32, #tpu.memory_space<vmem>>, vector<1x1024xf32>
    %64 = vector.shape_cast %63 : vector<1x1024xf32> to vector<1x1024xf32>
    %65 = vector.broadcast %64 : vector<1x1024xf32> to vector<3x1024xf32>
    %c991_i32 = arith.constant 991 : i32
    %66 = tpu.dynamic_rotate %65 by %c991_i32 dim 1 : vector<3x1024xf32>, i32 -> vector<3x1024xf32>
    %c8 = arith.constant 8 : index
    %c0_37 = arith.constant 0 : index
    %67 = vector.load %arg1[%c8, %c0_37] : memref<9x1024xf32, #tpu.memory_space<vmem>>, vector<1x1024xf32>
    %68 = vector.broadcast %67 : vector<1x1024xf32> to vector<3x1024xf32>
    %69 = arith.mulf %66, %68 : vector<3x1024xf32>
    %c24 = arith.constant 24 : index
    %c0_38 = arith.constant 0 : index
    %70 = vector.load %arg9[%c24, %c0_38] : memref<144x1024xf32, #tpu.memory_space<vmem>>, vector<3x1024xf32>
    tpu.vector_store %arg9[%c24, %c0_38], %69 {strides = array<i32>} : memref<144x1024xf32, #tpu.memory_space<vmem>>, vector<3x1024xf32>,
    %c0_39 = arith.constant 0 : index
    %c0_40 = arith.constant 0 : index
    %71 = vector.load %arg9[%c0_39, %c0_40] : memref<144x1024xf32, #tpu.memory_space<vmem>>, vector<27x256xf32>
    %c0_41 = arith.constant 0 : index
    %c0_42 = arith.constant 0 : index
    %72 = vector.load %arg2[%c0_41, %c0_42] : memref<8x27xbf16, #tpu.memory_space<vmem>>, vector<8x27xbf16>
    %73 = arith.truncf %71 : vector<27x256xf32> to vector<27x256xbf16>
    %cst = arith.constant dense<0.000000e+00> : vector<8x256xf32>
    %74 = tpu.matmul %72, %73, %cst {dimension_numbers = #tpu.dot_dimension_numbers<[1], [0], [0], [1], [0, 0, 1, 1], [], []>} : vector<8x27xbf16>, vector<27x256xbf16>, vector<8x256xf32> -> vector<8x256xf32>
    %cst_43 = arith.constant 0.000000e+00 : f32
    %75 = vector.broadcast %cst_43 : f32 to vector<8x256xf32>
    %76 = arith.maximumf %74, %75 : vector<8x256xf32>
    %c0_44 = arith.constant 0 : index
    %c0_45 = arith.constant 0 : index
    %77 = vector.load %arg6[%c0_44, %c0_45] : memref<8x2048xf32, #tpu.memory_space<vmem>>, vector<8x256xf32>
    tpu.vector_store %arg6[%c0_44, %c0_45], %76 {strides = array<i32>} : memref<8x2048xf32, #tpu.memory_space<vmem>>, vector<8x256xf32>,
    %c0_46 = arith.constant 0 : index
    %c256 = arith.constant 256 : index
    %78 = vector.load %arg9[%c0_46, %c256] : memref<144x1024xf32, #tpu.memory_space<vmem>>, vector<27x256xf32>
    %c0_47 = arith.constant 0 : index
    %c0_48 = arith.constant 0 : index
    %79 = vector.load %arg2[%c0_47, %c0_48] : memref<8x27xbf16, #tpu.memory_space<vmem>>, vector<8x27xbf16>
    %80 = arith.truncf %78 : vector<27x256xf32> to vector<27x256xbf16>
    %cst_49 = arith.constant dense<0.000000e+00> : vector<8x256xf32>
    %81 = tpu.matmul %79, %80, %cst_49 {dimension_numbers = #tpu.dot_dimension_numbers<[1], [0], [0], [1], [0, 0, 1, 1], [], []>} : vector<8x27xbf16>, vector<27x256xbf16>, vector<8x256xf32> -> vector<8x256xf32>
    %cst_50 = arith.constant 0.000000e+00 : f32
    %82 = vector.broadcast %cst_50 : f32 to vector<8x256xf32>
    %83 = arith.maximumf %81, %82 : vector<8x256xf32>
    %c0_51 = arith.constant 0 : index
    %c256_52 = arith.constant 256 : index
    %84 = vector.load %arg6[%c0_51, %c256_52] : memref<8x2048xf32, #tpu.memory_space<vmem>>, vector<8x256xf32>
    tpu.vector_store %arg6[%c0_51, %c256_52], %83 {strides = array<i32>} : memref<8x2048xf32, #tpu.memory_space<vmem>>, vector<8x256xf32>,
    %c0_53 = arith.constant 0 : index
    %c512 = arith.constant 512 : index
    %85 = vector.load %arg9[%c0_53, %c512] : memref<144x1024xf32, #tpu.memory_space<vmem>>, vector<27x256xf32>
    %c0_54 = arith.constant 0 : index
    %c0_55 = arith.constant 0 : index
    %86 = vector.load %arg2[%c0_54, %c0_55] : memref<8x27xbf16, #tpu.memory_space<vmem>>, vector<8x27xbf16>
    %87 = arith.truncf %85 : vector<27x256xf32> to vector<27x256xbf16>
    %cst_56 = arith.constant dense<0.000000e+00> : vector<8x256xf32>
    %88 = tpu.matmul %86, %87, %cst_56 {dimension_numbers = #tpu.dot_dimension_numbers<[1], [0], [0], [1], [0, 0, 1, 1], [], []>} : vector<8x27xbf16>, vector<27x256xbf16>, vector<8x256xf32> -> vector<8x256xf32>
    %cst_57 = arith.constant 0.000000e+00 : f32
    %89 = vector.broadcast %cst_57 : f32 to vector<8x256xf32>
    %90 = arith.maximumf %88, %89 : vector<8x256xf32>
    %c0_58 = arith.constant 0 : index
    %c512_59 = arith.constant 512 : index
    %91 = vector.load %arg6[%c0_58, %c512_59] : memref<8x2048xf32, #tpu.memory_space<vmem>>, vector<8x256xf32>
    tpu.vector_store %arg6[%c0_58, %c512_59], %90 {strides = array<i32>} : memref<8x2048xf32, #tpu.memory_space<vmem>>, vector<8x256xf32>,
    %c0_60 = arith.constant 0 : index
    %c768 = arith.constant 768 : index
    %92 = vector.load %arg9[%c0_60, %c768] : memref<144x1024xf32, #tpu.memory_space<vmem>>, vector<27x256xf32>
    %c0_61 = arith.constant 0 : index
    %c0_62 = arith.constant 0 : index
    %93 = vector.load %arg2[%c0_61, %c0_62] : memref<8x27xbf16, #tpu.memory_space<vmem>>, vector<8x27xbf16>
    %94 = arith.truncf %92 : vector<27x256xf32> to vector<27x256xbf16>
    %cst_63 = arith.constant dense<0.000000e+00> : vector<8x256xf32>
    %95 = tpu.matmul %93, %94, %cst_63 {dimension_numbers = #tpu.dot_dimension_numbers<[1], [0], [0], [1], [0, 0, 1, 1], [], []>} : vector<8x27xbf16>, vector<27x256xbf16>, vector<8x256xf32> -> vector<8x256xf32>
    %cst_64 = arith.constant 0.000000e+00 : f32
    %96 = vector.broadcast %cst_64 : f32 to vector<8x256xf32>
    %97 = arith.maximumf %95, %96 : vector<8x256xf32>
    %c0_65 = arith.constant 0 : index
    %c768_66 = arith.constant 768 : index
    %98 = vector.load %arg6[%c0_65, %c768_66] : memref<8x2048xf32, #tpu.memory_space<vmem>>, vector<8x256xf32>
    tpu.vector_store %arg6[%c0_65, %c768_66], %97 {strides = array<i32>} : memref<8x2048xf32, #tpu.memory_space<vmem>>, vector<8x256xf32>,
    %c1_67 = arith.constant 1 : index
    %c0_68 = arith.constant 0 : index
    %99 = vector.load %arg0[%c1_67, %c0_68] : memref<2x1024xf32, #tpu.memory_space<vmem>>, vector<1x1024xf32>
    %100 = vector.shape_cast %99 : vector<1x1024xf32> to vector<1x1024xf32>
    %101 = vector.broadcast %100 : vector<1x1024xf32> to vector<3x1024xf32>
    %c33_i32_69 = arith.constant 33 : i32
    %102 = tpu.dynamic_rotate %101 by %c33_i32_69 dim 1 : vector<3x1024xf32>, i32 -> vector<3x1024xf32>
    %c0_70 = arith.constant 0 : index
    %c0_71 = arith.constant 0 : index
    %103 = vector.load %arg1[%c0_70, %c0_71] : memref<9x1024xf32, #tpu.memory_space<vmem>>, vector<1x1024xf32>
    %104 = vector.broadcast %103 : vector<1x1024xf32> to vector<3x1024xf32>
    %105 = arith.mulf %102, %104 : vector<3x1024xf32>
    %c0_72 = arith.constant 0 : index
    %c0_73 = arith.constant 0 : index
    %106 = vector.load %arg9[%c0_72, %c0_73] : memref<144x1024xf32, #tpu.memory_space<vmem>>, vector<3x1024xf32>
    tpu.vector_store %arg9[%c0_72, %c0_73], %105 {strides = array<i32>} : memref<144x1024xf32, #tpu.memory_space<vmem>>, vector<3x1024xf32>,
    %c1_74 = arith.constant 1 : index
    %c0_75 = arith.constant 0 : index
    %107 = vector.load %arg0[%c1_74, %c0_75] : memref<2x1024xf32, #tpu.memory_space<vmem>>, vector<1x1024xf32>
    %108 = vector.shape_cast %107 : vector<1x1024xf32> to vector<1x1024xf32>
    %109 = vector.broadcast %108 : vector<1x1024xf32> to vector<3x1024xf32>
    %c32_i32_76 = arith.constant 32 : i32
    %110 = tpu.dynamic_rotate %109 by %c32_i32_76 dim 1 : vector<3x1024xf32>, i32 -> vector<3x1024xf32>
    %c1_77 = arith.constant 1 : index
    %c0_78 = arith.constant 0 : index
    %111 = vector.load %arg1[%c1_77, %c0_78] : memref<9x1024xf32, #tpu.memory_space<vmem>>, vector<1x1024xf32>
    %112 = vector.broadcast %111 : vector<1x1024xf32> to vector<3x1024xf32>
    %113 = arith.mulf %110, %112 : vector<3x1024xf32>
    %c3_79 = arith.constant 3 : index
    %c0_80 = arith.constant 0 : index
    %114 = vector.load %arg9[%c3_79, %c0_80] : memref<144x1024xf32, #tpu.memory_space<vmem>>, vector<3x1024xf32>
    tpu.vector_store %arg9[%c3_79, %c0_80], %113 {strides = array<i32>} : memref<144x1024xf32, #tpu.memory_space<vmem>>, vector<3x1024xf32>,
    %c1_81 = arith.constant 1 : index
    %c0_82 = arith.constant 0 : index
    %115 = vector.load %arg0[%c1_81, %c0_82] : memref<2x1024xf32, #tpu.memory_space<vmem>>, vector<1x1024xf32>
    %116 = vector.shape_cast %115 : vector<1x1024xf32> to vector<1x1024xf32>
    %117 = vector.broadcast %116 : vector<1x1024xf32> to vector<3x1024xf32>
    %c31_i32_83 = arith.constant 31 : i32
    %118 = tpu.dynamic_rotate %117 by %c31_i32_83 dim 1 : vector<3x1024xf32>, i32 -> vector<3x1024xf32>
    %c2_84 = arith.constant 2 : index
    %c0_85 = arith.constant 0 : index
    %119 = vector.load %arg1[%c2_84, %c0_85] : memref<9x1024xf32, #tpu.memory_space<vmem>>, vector<1x1024xf32>
    %120 = vector.broadcast %119 : vector<1x1024xf32> to vector<3x1024xf32>
    %121 = arith.mulf %118, %120 : vector<3x1024xf32>
    %c6_86 = arith.constant 6 : index
    %c0_87 = arith.constant 0 : index
    %122 = vector.load %arg9[%c6_86, %c0_87] : memref<144x1024xf32, #tpu.memory_space<vmem>>, vector<3x1024xf32>
    tpu.vector_store %arg9[%c6_86, %c0_87], %121 {strides = array<i32>} : memref<144x1024xf32, #tpu.memory_space<vmem>>, vector<3x1024xf32>,
    %c1_88 = arith.constant 1 : index
    %c0_89 = arith.constant 0 : index
    %123 = vector.load %arg0[%c1_88, %c0_89] : memref<2x1024xf32, #tpu.memory_space<vmem>>, vector<1x1024xf32>
    %124 = vector.shape_cast %123 : vector<1x1024xf32> to vector<1x1024xf32>
    %125 = vector.broadcast %124 : vector<1x1024xf32> to vector<3x1024xf32>
    %c1_i32_90 = arith.constant 1 : i32
    %126 = tpu.dynamic_rotate %125 by %c1_i32_90 dim 1 : vector<3x1024xf32>, i32 -> vector<3x1024xf32>
    %c3_91 = arith.constant 3 : index
    %c0_92 = arith.constant 0 : index
    %127 = vector.load %arg1[%c3_91, %c0_92] : memref<9x1024xf32, #tpu.memory_space<vmem>>, vector<1x1024xf32>
    %128 = vector.broadcast %127 : vector<1x1024xf32> to vector<3x1024xf32>
    %129 = arith.mulf %126, %128 : vector<3x1024xf32>
    %c9_93 = arith.constant 9 : index
    %c0_94 = arith.constant 0 : index
    %130 = vector.load %arg9[%c9_93, %c0_94] : memref<144x1024xf32, #tpu.memory_space<vmem>>, vector<3x1024xf32>
    tpu.vector_store %arg9[%c9_93, %c0_94], %129 {strides = array<i32>} : memref<144x1024xf32, #tpu.memory_space<vmem>>, vector<3x1024xf32>,
    %c1_95 = arith.constant 1 : index
    %c0_96 = arith.constant 0 : index
    %131 = vector.load %arg0[%c1_95, %c0_96] : memref<2x1024xf32, #tpu.memory_space<vmem>>, vector<1x1024xf32>
    %132 = vector.shape_cast %131 : vector<1x1024xf32> to vector<1x1024xf32>
    %133 = vector.broadcast %132 : vector<1x1024xf32> to vector<3x1024xf32>
    %c4_97 = arith.constant 4 : index
    %c0_98 = arith.constant 0 : index
    %134 = vector.load %arg1[%c4_97, %c0_98] : memref<9x1024xf32, #tpu.memory_space<vmem>>, vector<1x1024xf32>
    %135 = vector.broadcast %134 : vector<1x1024xf32> to vector<3x1024xf32>
    %136 = arith.mulf %133, %135 : vector<3x1024xf32>
    %c12_99 = arith.constant 12 : index
    %c0_100 = arith.constant 0 : index
    %137 = vector.load %arg9[%c12_99, %c0_100] : memref<144x1024xf32, #tpu.memory_space<vmem>>, vector<3x1024xf32>
    tpu.vector_store %arg9[%c12_99, %c0_100], %136 {strides = array<i32>} : memref<144x1024xf32, #tpu.memory_space<vmem>>, vector<3x1024xf32>,
    %c1_101 = arith.constant 1 : index
    %c0_102 = arith.constant 0 : index
    %138 = vector.load %arg0[%c1_101, %c0_102] : memref<2x1024xf32, #tpu.memory_space<vmem>>, vector<1x1024xf32>
    %139 = vector.shape_cast %138 : vector<1x1024xf32> to vector<1x1024xf32>
    %140 = vector.broadcast %139 : vector<1x1024xf32> to vector<3x1024xf32>
    %c1023_i32_103 = arith.constant 1023 : i32
    %141 = tpu.dynamic_rotate %140 by %c1023_i32_103 dim 1 : vector<3x1024xf32>, i32 -> vector<3x1024xf32>
    %c5_104 = arith.constant 5 : index
    %c0_105 = arith.constant 0 : index
    %142 = vector.load %arg1[%c5_104, %c0_105] : memref<9x1024xf32, #tpu.memory_space<vmem>>, vector<1x1024xf32>
    %143 = vector.broadcast %142 : vector<1x1024xf32> to vector<3x1024xf32>
    %144 = arith.mulf %141, %143 : vector<3x1024xf32>
    %c15_106 = arith.constant 15 : index
    %c0_107 = arith.constant 0 : index
    %145 = vector.load %arg9[%c15_106, %c0_107] : memref<144x1024xf32, #tpu.memory_space<vmem>>, vector<3x1024xf32>
    tpu.vector_store %arg9[%c15_106, %c0_107], %144 {strides = array<i32>} : memref<144x1024xf32, #tpu.memory_space<vmem>>, vector<3x1024xf32>,
    %c1_108 = arith.constant 1 : index
    %c0_109 = arith.constant 0 : index
    %146 = vector.load %arg0[%c1_108, %c0_109] : memref<2x1024xf32, #tpu.memory_space<vmem>>, vector<1x1024xf32>
    %147 = vector.shape_cast %146 : vector<1x1024xf32> to vector<1x1024xf32>
    %148 = vector.broadcast %147 : vector<1x1024xf32> to vector<3x1024xf32>
    %c993_i32_110 = arith.constant 993 : i32
    %149 = tpu.dynamic_rotate %148 by %c993_i32_110 dim 1 : vector<3x1024xf32>, i32 -> vector<3x1024xf32>
    %c6_111 = arith.constant 6 : index
    %c0_112 = arith.constant 0 : index
    %150 = vector.load %arg1[%c6_111, %c0_112] : memref<9x1024xf32, #tpu.memory_space<vmem>>, vector<1x1024xf32>
    %151 = vector.broadcast %150 : vector<1x1024xf32> to vector<3x1024xf32>
    %152 = arith.mulf %149, %151 : vector<3x1024xf32>
    %c18_113 = arith.constant 18 : index
    %c0_114 = arith.constant 0 : index
    %153 = vector.load %arg9[%c18_113, %c0_114] : memref<144x1024xf32, #tpu.memory_space<vmem>>, vector<3x1024xf32>
    tpu.vector_store %arg9[%c18_113, %c0_114], %152 {strides = array<i32>} : memref<144x1024xf32, #tpu.memory_space<vmem>>, vector<3x1024xf32>,
    %c1_115 = arith.constant 1 : index
    %c0_116 = arith.constant 0 : index
    %154 = vector.load %arg0[%c1_115, %c0_116] : memref<2x1024xf32, #tpu.memory_space<vmem>>, vector<1x1024xf32>
    %155 = vector.shape_cast %154 : vector<1x1024xf32> to vector<1x1024xf32>
    %156 = vector.broadcast %155 : vector<1x1024xf32> to vector<3x1024xf32>
    %c992_i32_117 = arith.constant 992 : i32
    %157 = tpu.dynamic_rotate %156 by %c992_i32_117 dim 1 : vector<3x1024xf32>, i32 -> vector<3x1024xf32>
    %c7_118 = arith.constant 7 : index
    %c0_119 = arith.constant 0 : index
    %158 = vector.load %arg1[%c7_118, %c0_119] : memref<9x1024xf32, #tpu.memory_space<vmem>>, vector<1x1024xf32>
    %159 = vector.broadcast %158 : vector<1x1024xf32> to vector<3x1024xf32>
    %160 = arith.mulf %157, %159 : vector<3x1024xf32>
    %c21_120 = arith.constant 21 : index
    %c0_121 = arith.constant 0 : index
    %161 = vector.load %arg9[%c21_120, %c0_121] : memref<144x1024xf32, #tpu.memory_space<vmem>>, vector<3x1024xf32>
    tpu.vector_store %arg9[%c21_120, %c0_121], %160 {strides = array<i32>} : memref<144x1024xf32, #tpu.memory_space<vmem>>, vector<3x1024xf32>,
    %c1_122 = arith.constant 1 : index
    %c0_123 = arith.constant 0 : index
    %162 = vector.load %arg0[%c1_122, %c0_123] : memref<2x1024xf32, #tpu.memory_space<vmem>>, vector<1x1024xf32>
    %163 = vector.shape_cast %162 : vector<1x1024xf32> to vector<1x1024xf32>
    %164 = vector.broadcast %163 : vector<1x1024xf32> to vector<3x1024xf32>
    %c991_i32_124 = arith.constant 991 : i32
    %165 = tpu.dynamic_rotate %164 by %c991_i32_124 dim 1 : vector<3x1024xf32>, i32 -> vector<3x1024xf32>
    %c8_125 = arith.constant 8 : index
    %c0_126 = arith.constant 0 : index
    %166 = vector.load %arg1[%c8_125, %c0_126] : memref<9x1024xf32, #tpu.memory_space<vmem>>, vector<1x1024xf32>
    %167 = vector.broadcast %166 : vector<1x1024xf32> to vector<3x1024xf32>
    %168 = arith.mulf %165, %167 : vector<3x1024xf32>
    %c24_127 = arith.constant 24 : index
    %c0_128 = arith.constant 0 : index
    %169 = vector.load %arg9[%c24_127, %c0_128] : memref<144x1024xf32, #tpu.memory_space<vmem>>, vector<3x1024xf32>
    tpu.vector_store %arg9[%c24_127, %c0_128], %168 {strides = array<i32>} : memref<144x1024xf32, #tpu.memory_space<vmem>>, vector<3x1024xf32>,
    %c0_129 = arith.constant 0 : index
    %c0_130 = arith.constant 0 : index
    %170 = vector.load %arg9[%c0_129, %c0_130] : memref<144x1024xf32, #tpu.memory_space<vmem>>, vector<27x256xf32>
    %c0_131 = arith.constant 0 : index
    %c0_132 = arith.constant 0 : index
    %171 = vector.load %arg2[%c0_131, %c0_132] : memref<8x27xbf16, #tpu.memory_space<vmem>>, vector<8x27xbf16>
    %172 = arith.truncf %170 : vector<27x256xf32> to vector<27x256xbf16>
    %cst_133 = arith.constant dense<0.000000e+00> : vector<8x256xf32>
    %173 = tpu.matmul %171, %172, %cst_133 {dimension_numbers = #tpu.dot_dimension_numbers<[1], [0], [0], [1], [0, 0, 1, 1], [], []>} : vector<8x27xbf16>, vector<27x256xbf16>, vector<8x256xf32> -> vector<8x256xf32>
    %cst_134 = arith.constant 0.000000e+00 : f32
    %174 = vector.broadcast %cst_134 : f32 to vector<8x256xf32>
    %175 = arith.maximumf %173, %174 : vector<8x256xf32>
    %c0_135 = arith.constant 0 : index
    %c1024 = arith.constant 1024 : index
    %176 = vector.load %arg6[%c0_135, %c1024] : memref<8x2048xf32, #tpu.memory_space<vmem>>, vector<8x256xf32>
    tpu.vector_store %arg6[%c0_135, %c1024], %175 {strides = array<i32>} : memref<8x2048xf32, #tpu.memory_space<vmem>>, vector<8x256xf32>,
    %c0_136 = arith.constant 0 : index
    %c256_137 = arith.constant 256 : index
    %177 = vector.load %arg9[%c0_136, %c256_137] : memref<144x1024xf32, #tpu.memory_space<vmem>>, vector<27x256xf32>
    %c0_138 = arith.constant 0 : index
    %c0_139 = arith.constant 0 : index
    %178 = vector.load %arg2[%c0_138, %c0_139] : memref<8x27xbf16, #tpu.memory_space<vmem>>, vector<8x27xbf16>
    %179 = arith.truncf %177 : vector<27x256xf32> to vector<27x256xbf16>
    %cst_140 = arith.constant dense<0.000000e+00> : vector<8x256xf32>
    %180 = tpu.matmul %178, %179, %cst_140 {dimension_numbers = #tpu.dot_dimension_numbers<[1], [0], [0], [1], [0, 0, 1, 1], [], []>} : vector<8x27xbf16>, vector<27x256xbf16>, vector<8x256xf32> -> vector<8x256xf32>
    %cst_141 = arith.constant 0.000000e+00 : f32
    %181 = vector.broadcast %cst_141 : f32 to vector<8x256xf32>
    %182 = arith.maximumf %180, %181 : vector<8x256xf32>
    %c0_142 = arith.constant 0 : index
    %c1280 = arith.constant 1280 : index
    %183 = vector.load %arg6[%c0_142, %c1280] : memref<8x2048xf32, #tpu.memory_space<vmem>>, vector<8x256xf32>
    tpu.vector_store %arg6[%c0_142, %c1280], %182 {strides = array<i32>} : memref<8x2048xf32, #tpu.memory_space<vmem>>, vector<8x256xf32>,
    %c0_143 = arith.constant 0 : index
    %c512_144 = arith.constant 512 : index
    %184 = vector.load %arg9[%c0_143, %c512_144] : memref<144x1024xf32, #tpu.memory_space<vmem>>, vector<27x256xf32>
    %c0_145 = arith.constant 0 : index
    %c0_146 = arith.constant 0 : index
    %185 = vector.load %arg2[%c0_145, %c0_146] : memref<8x27xbf16, #tpu.memory_space<vmem>>, vector<8x27xbf16>
    %186 = arith.truncf %184 : vector<27x256xf32> to vector<27x256xbf16>
    %cst_147 = arith.constant dense<0.000000e+00> : vector<8x256xf32>
    %187 = tpu.matmul %185, %186, %cst_147 {dimension_numbers = #tpu.dot_dimension_numbers<[1], [0], [0], [1], [0, 0, 1, 1], [], []>} : vector<8x27xbf16>, vector<27x256xbf16>, vector<8x256xf32> -> vector<8x256xf32>
    %cst_148 = arith.constant 0.000000e+00 : f32
    %188 = vector.broadcast %cst_148 : f32 to vector<8x256xf32>
    %189 = arith.maximumf %187, %188 : vector<8x256xf32>
    %c0_149 = arith.constant 0 : index
    %c1536 = arith.constant 1536 : index
    %190 = vector.load %arg6[%c0_149, %c1536] : memref<8x2048xf32, #tpu.memory_space<vmem>>, vector<8x256xf32>
    tpu.vector_store %arg6[%c0_149, %c1536], %189 {strides = array<i32>} : memref<8x2048xf32, #tpu.memory_space<vmem>>, vector<8x256xf32>,
    %c0_150 = arith.constant 0 : index
    %c768_151 = arith.constant 768 : index
    %191 = vector.load %arg9[%c0_150, %c768_151] : memref<144x1024xf32, #tpu.memory_space<vmem>>, vector<27x256xf32>
    %c0_152 = arith.constant 0 : index
    %c0_153 = arith.constant 0 : index
    %192 = vector.load %arg2[%c0_152, %c0_153] : memref<8x27xbf16, #tpu.memory_space<vmem>>, vector<8x27xbf16>
    %193 = arith.truncf %191 : vector<27x256xf32> to vector<27x256xbf16>
    %cst_154 = arith.constant dense<0.000000e+00> : vector<8x256xf32>
    %194 = tpu.matmul %192, %193, %cst_154 {dimension_numbers = #tpu.dot_dimension_numbers<[1], [0], [0], [1], [0, 0, 1, 1], [], []>} : vector<8x27xbf16>, vector<27x256xbf16>, vector<8x256xf32> -> vector<8x256xf32>
    %cst_155 = arith.constant 0.000000e+00 : f32
    %195 = vector.broadcast %cst_155 : f32 to vector<8x256xf32>
    %196 = arith.maximumf %194, %195 : vector<8x256xf32>
    %c0_156 = arith.constant 0 : index
    %c1792 = arith.constant 1792 : index
    %197 = vector.load %arg6[%c0_156, %c1792] : memref<8x2048xf32, #tpu.memory_space<vmem>>, vector<8x256xf32>
    tpu.vector_store %arg6[%c0_156, %c1792], %196 {strides = array<i32>} : memref<8x2048xf32, #tpu.memory_space<vmem>>, vector<8x256xf32>,
    %c0_157 = arith.constant 0 : index
    %c0_158 = arith.constant 0 : index
    %198 = vector.load %arg6[%c0_157, %c0_158] : memref<8x2048xf32, #tpu.memory_space<vmem>>, vector<8x1024xf32>
    %c33_i32_159 = arith.constant 33 : i32
    %199 = tpu.dynamic_rotate %198 by %c33_i32_159 dim 1 : vector<8x1024xf32>, i32 -> vector<8x1024xf32>
    %c0_160 = arith.constant 0 : index
    %c0_161 = arith.constant 0 : index
    %200 = vector.load %arg1[%c0_160, %c0_161] : memref<9x1024xf32, #tpu.memory_space<vmem>>, vector<1x1024xf32>
    %201 = vector.broadcast %200 : vector<1x1024xf32> to vector<8x1024xf32>
    %202 = arith.mulf %199, %201 : vector<8x1024xf32>
    %c0_162 = arith.constant 0 : index
    %c0_163 = arith.constant 0 : index
    %203 = vector.load %arg9[%c0_162, %c0_163] : memref<144x1024xf32, #tpu.memory_space<vmem>>, vector<8x1024xf32>
    tpu.vector_store %arg9[%c0_162, %c0_163], %202 {strides = array<i32>} : memref<144x1024xf32, #tpu.memory_space<vmem>>, vector<8x1024xf32>,
    %c0_164 = arith.constant 0 : index
    %c0_165 = arith.constant 0 : index
    %204 = vector.load %arg6[%c0_164, %c0_165] : memref<8x2048xf32, #tpu.memory_space<vmem>>, vector<8x1024xf32>
    %c32_i32_166 = arith.constant 32 : i32
    %205 = tpu.dynamic_rotate %204 by %c32_i32_166 dim 1 : vector<8x1024xf32>, i32 -> vector<8x1024xf32>
    %c1_167 = arith.constant 1 : index
    %c0_168 = arith.constant 0 : index
    %206 = vector.load %arg1[%c1_167, %c0_168] : memref<9x1024xf32, #tpu.memory_space<vmem>>, vector<1x1024xf32>
    %207 = vector.broadcast %206 : vector<1x1024xf32> to vector<8x1024xf32>
    %208 = arith.mulf %205, %207 : vector<8x1024xf32>
    %c8_169 = arith.constant 8 : index
    %c0_170 = arith.constant 0 : index
    %209 = vector.load %arg9[%c8_169, %c0_170] : memref<144x1024xf32, #tpu.memory_space<vmem>>, vector<8x1024xf32>
    tpu.vector_store %arg9[%c8_169, %c0_170], %208 {strides = array<i32>} : memref<144x1024xf32, #tpu.memory_space<vmem>>, vector<8x1024xf32>,
    %c0_171 = arith.constant 0 : index
    %c0_172 = arith.constant 0 : index
    %210 = vector.load %arg6[%c0_171, %c0_172] : memref<8x2048xf32, #tpu.memory_space<vmem>>, vector<8x1024xf32>
    %c31_i32_173 = arith.constant 31 : i32
    %211 = tpu.dynamic_rotate %210 by %c31_i32_173 dim 1 : vector<8x1024xf32>, i32 -> vector<8x1024xf32>
    %c2_174 = arith.constant 2 : index
    %c0_175 = arith.constant 0 : index
    %212 = vector.load %arg1[%c2_174, %c0_175] : memref<9x1024xf32, #tpu.memory_space<vmem>>, vector<1x1024xf32>
    %213 = vector.broadcast %212 : vector<1x1024xf32> to vector<8x1024xf32>
    %214 = arith.mulf %211, %213 : vector<8x1024xf32>
    %c16 = arith.constant 16 : index
    %c0_176 = arith.constant 0 : index
    %215 = vector.load %arg9[%c16, %c0_176] : memref<144x1024xf32, #tpu.memory_space<vmem>>, vector<8x1024xf32>
    tpu.vector_store %arg9[%c16, %c0_176], %214 {strides = array<i32>} : memref<144x1024xf32, #tpu.memory_space<vmem>>, vector<8x1024xf32>,
    %c0_177 = arith.constant 0 : index
    %c0_178 = arith.constant 0 : index
    %216 = vector.load %arg6[%c0_177, %c0_178] : memref<8x2048xf32, #tpu.memory_space<vmem>>, vector<8x1024xf32>
    %c1_i32_179 = arith.constant 1 : i32
    %217 = tpu.dynamic_rotate %216 by %c1_i32_179 dim 1 : vector<8x1024xf32>, i32 -> vector<8x1024xf32>
    %c3_180 = arith.constant 3 : index
    %c0_181 = arith.constant 0 : index
    %218 = vector.load %arg1[%c3_180, %c0_181] : memref<9x1024xf32, #tpu.memory_space<vmem>>, vector<1x1024xf32>
    %219 = vector.broadcast %218 : vector<1x1024xf32> to vector<8x1024xf32>
    %220 = arith.mulf %217, %219 : vector<8x1024xf32>
    %c24_182 = arith.constant 24 : index
    %c0_183 = arith.constant 0 : index
    %221 = vector.load %arg9[%c24_182, %c0_183] : memref<144x1024xf32, #tpu.memory_space<vmem>>, vector<8x1024xf32>
    tpu.vector_store %arg9[%c24_182, %c0_183], %220 {strides = array<i32>} : memref<144x1024xf32, #tpu.memory_space<vmem>>, vector<8x1024xf32>,
    %c0_184 = arith.constant 0 : index
    %c0_185 = arith.constant 0 : index
    %222 = vector.load %arg6[%c0_184, %c0_185] : memref<8x2048xf32, #tpu.memory_space<vmem>>, vector<8x1024xf32>
    %c4_186 = arith.constant 4 : index
    %c0_187 = arith.constant 0 : index
    %223 = vector.load %arg1[%c4_186, %c0_187] : memref<9x1024xf32, #tpu.memory_space<vmem>>, vector<1x1024xf32>
    %224 = vector.broadcast %223 : vector<1x1024xf32> to vector<8x1024xf32>
    %225 = arith.mulf %222, %224 : vector<8x1024xf32>
    %c32 = arith.constant 32 : index
    %c0_188 = arith.constant 0 : index
    %226 = vector.load %arg9[%c32, %c0_188] : memref<144x1024xf32, #tpu.memory_space<vmem>>, vector<8x1024xf32>
    tpu.vector_store %arg9[%c32, %c0_188], %225 {strides = array<i32>} : memref<144x1024xf32, #tpu.memory_space<vmem>>, vector<8x1024xf32>,
    %c0_189 = arith.constant 0 : index
    %c0_190 = arith.constant 0 : index
    %227 = vector.load %arg6[%c0_189, %c0_190] : memref<8x2048xf32, #tpu.memory_space<vmem>>, vector<8x1024xf32>
    %c1023_i32_191 = arith.constant 1023 : i32
    %228 = tpu.dynamic_rotate %227 by %c1023_i32_191 dim 1 : vector<8x1024xf32>, i32 -> vector<8x1024xf32>
    %c5_192 = arith.constant 5 : index
    %c0_193 = arith.constant 0 : index
    %229 = vector.load %arg1[%c5_192, %c0_193] : memref<9x1024xf32, #tpu.memory_space<vmem>>, vector<1x1024xf32>
    %230 = vector.broadcast %229 : vector<1x1024xf32> to vector<8x1024xf32>
    %231 = arith.mulf %228, %230 : vector<8x1024xf32>
    %c40 = arith.constant 40 : index
    %c0_194 = arith.constant 0 : index
    %232 = vector.load %arg9[%c40, %c0_194] : memref<144x1024xf32, #tpu.memory_space<vmem>>, vector<8x1024xf32>
    tpu.vector_store %arg9[%c40, %c0_194], %231 {strides = array<i32>} : memref<144x1024xf32, #tpu.memory_space<vmem>>, vector<8x1024xf32>,
    %c0_195 = arith.constant 0 : index
    %c0_196 = arith.constant 0 : index
    %233 = vector.load %arg6[%c0_195, %c0_196] : memref<8x2048xf32, #tpu.memory_space<vmem>>, vector<8x1024xf32>
    %c993_i32_197 = arith.constant 993 : i32
    %234 = tpu.dynamic_rotate %233 by %c993_i32_197 dim 1 : vector<8x1024xf32>, i32 -> vector<8x1024xf32>
    %c6_198 = arith.constant 6 : index
    %c0_199 = arith.constant 0 : index
    %235 = vector.load %arg1[%c6_198, %c0_199] : memref<9x1024xf32, #tpu.memory_space<vmem>>, vector<1x1024xf32>
    %236 = vector.broadcast %235 : vector<1x1024xf32> to vector<8x1024xf32>
    %237 = arith.mulf %234, %236 : vector<8x1024xf32>
    %c48 = arith.constant 48 : index
    %c0_200 = arith.constant 0 : index
    %238 = vector.load %arg9[%c48, %c0_200] : memref<144x1024xf32, #tpu.memory_space<vmem>>, vector<8x1024xf32>
    tpu.vector_store %arg9[%c48, %c0_200], %237 {strides = array<i32>} : memref<144x1024xf32, #tpu.memory_space<vmem>>, vector<8x1024xf32>,
    %c0_201 = arith.constant 0 : index
    %c0_202 = arith.constant 0 : index
    %239 = vector.load %arg6[%c0_201, %c0_202] : memref<8x2048xf32, #tpu.memory_space<vmem>>, vector<8x1024xf32>
    %c992_i32_203 = arith.constant 992 : i32
    %240 = tpu.dynamic_rotate %239 by %c992_i32_203 dim 1 : vector<8x1024xf32>, i32 -> vector<8x1024xf32>
    %c7_204 = arith.constant 7 : index
    %c0_205 = arith.constant 0 : index
    %241 = vector.load %arg1[%c7_204, %c0_205] : memref<9x1024xf32, #tpu.memory_space<vmem>>, vector<1x1024xf32>
    %242 = vector.broadcast %241 : vector<1x1024xf32> to vector<8x1024xf32>
    %243 = arith.mulf %240, %242 : vector<8x1024xf32>
    %c56 = arith.constant 56 : index
    %c0_206 = arith.constant 0 : index
    %244 = vector.load %arg9[%c56, %c0_206] : memref<144x1024xf32, #tpu.memory_space<vmem>>, vector<8x1024xf32>
    tpu.vector_store %arg9[%c56, %c0_206], %243 {strides = array<i32>} : memref<144x1024xf32, #tpu.memory_space<vmem>>, vector<8x1024xf32>,
    %c0_207 = arith.constant 0 : index
    %c0_208 = arith.constant 0 : index
    %245 = vector.load %arg6[%c0_207, %c0_208] : memref<8x2048xf32, #tpu.memory_space<vmem>>, vector<8x1024xf32>
    %c991_i32_209 = arith.constant 991 : i32
    %246 = tpu.dynamic_rotate %245 by %c991_i32_209 dim 1 : vector<8x1024xf32>, i32 -> vector<8x1024xf32>
    %c8_210 = arith.constant 8 : index
    %c0_211 = arith.constant 0 : index
    %247 = vector.load %arg1[%c8_210, %c0_211] : memref<9x1024xf32, #tpu.memory_space<vmem>>, vector<1x1024xf32>
    %248 = vector.broadcast %247 : vector<1x1024xf32> to vector<8x1024xf32>
    %249 = arith.mulf %246, %248 : vector<8x1024xf32>
    %c64 = arith.constant 64 : index
    %c0_212 = arith.constant 0 : index
    %250 = vector.load %arg9[%c64, %c0_212] : memref<144x1024xf32, #tpu.memory_space<vmem>>, vector<8x1024xf32>
    tpu.vector_store %arg9[%c64, %c0_212], %249 {strides = array<i32>} : memref<144x1024xf32, #tpu.memory_space<vmem>>, vector<8x1024xf32>,
    %c0_213 = arith.constant 0 : index
    %c0_214 = arith.constant 0 : index
    %251 = vector.load %arg9[%c0_213, %c0_214] : memref<144x1024xf32, #tpu.memory_space<vmem>>, vector<72x256xf32>
    %c0_215 = arith.constant 0 : index
    %c0_216 = arith.constant 0 : index
    %252 = vector.load %arg3[%c0_215, %c0_216] : memref<16x72xbf16, #tpu.memory_space<vmem>>, vector<16x72xbf16>
    %253 = arith.truncf %251 : vector<72x256xf32> to vector<72x256xbf16>
    %cst_217 = arith.constant dense<0.000000e+00> : vector<16x256xf32>
    %254 = tpu.matmul %252, %253, %cst_217 {dimension_numbers = #tpu.dot_dimension_numbers<[1], [0], [0], [1], [0, 0, 1, 1], [], []>} : vector<16x72xbf16>, vector<72x256xbf16>, vector<16x256xf32> -> vector<16x256xf32>
    %cst_218 = arith.constant 0.000000e+00 : f32
    %255 = vector.broadcast %cst_218 : f32 to vector<16x256xf32>
    %256 = arith.maximumf %254, %255 : vector<16x256xf32>
    %c0_219 = arith.constant 0 : index
    %c0_220 = arith.constant 0 : index
    %257 = vector.load %arg7[%c0_219, %c0_220] : memref<16x2048xf32, #tpu.memory_space<vmem>>, vector<16x256xf32>
    tpu.vector_store %arg7[%c0_219, %c0_220], %256 {strides = array<i32>} : memref<16x2048xf32, #tpu.memory_space<vmem>>, vector<16x256xf32>,
    %c0_221 = arith.constant 0 : index
    %c256_222 = arith.constant 256 : index
    %258 = vector.load %arg9[%c0_221, %c256_222] : memref<144x1024xf32, #tpu.memory_space<vmem>>, vector<72x256xf32>
    %c0_223 = arith.constant 0 : index
    %c0_224 = arith.constant 0 : index
    %259 = vector.load %arg3[%c0_223, %c0_224] : memref<16x72xbf16, #tpu.memory_space<vmem>>, vector<16x72xbf16>
    %260 = arith.truncf %258 : vector<72x256xf32> to vector<72x256xbf16>
    %cst_225 = arith.constant dense<0.000000e+00> : vector<16x256xf32>
    %261 = tpu.matmul %259, %260, %cst_225 {dimension_numbers = #tpu.dot_dimension_numbers<[1], [0], [0], [1], [0, 0, 1, 1], [], []>} : vector<16x72xbf16>, vector<72x256xbf16>, vector<16x256xf32> -> vector<16x256xf32>
    %cst_226 = arith.constant 0.000000e+00 : f32
    %262 = vector.broadcast %cst_226 : f32 to vector<16x256xf32>
    %263 = arith.maximumf %261, %262 : vector<16x256xf32>
    %c0_227 = arith.constant 0 : index
    %c256_228 = arith.constant 256 : index
    %264 = vector.load %arg7[%c0_227, %c256_228] : memref<16x2048xf32, #tpu.memory_space<vmem>>, vector<16x256xf32>
    tpu.vector_store %arg7[%c0_227, %c256_228], %263 {strides = array<i32>} : memref<16x2048xf32, #tpu.memory_space<vmem>>, vector<16x256xf32>,
    %c0_229 = arith.constant 0 : index
    %c512_230 = arith.constant 512 : index
    %265 = vector.load %arg9[%c0_229, %c512_230] : memref<144x1024xf32, #tpu.memory_space<vmem>>, vector<72x256xf32>
    %c0_231 = arith.constant 0 : index
    %c0_232 = arith.constant 0 : index
    %266 = vector.load %arg3[%c0_231, %c0_232] : memref<16x72xbf16, #tpu.memory_space<vmem>>, vector<16x72xbf16>
    %267 = arith.truncf %265 : vector<72x256xf32> to vector<72x256xbf16>
    %cst_233 = arith.constant dense<0.000000e+00> : vector<16x256xf32>
    %268 = tpu.matmul %266, %267, %cst_233 {dimension_numbers = #tpu.dot_dimension_numbers<[1], [0], [0], [1], [0, 0, 1, 1], [], []>} : vector<16x72xbf16>, vector<72x256xbf16>, vector<16x256xf32> -> vector<16x256xf32>
    %cst_234 = arith.constant 0.000000e+00 : f32
    %269 = vector.broadcast %cst_234 : f32 to vector<16x256xf32>
    %270 = arith.maximumf %268, %269 : vector<16x256xf32>
    %c0_235 = arith.constant 0 : index
    %c512_236 = arith.constant 512 : index
    %271 = vector.load %arg7[%c0_235, %c512_236] : memref<16x2048xf32, #tpu.memory_space<vmem>>, vector<16x256xf32>
    tpu.vector_store %arg7[%c0_235, %c512_236], %270 {strides = array<i32>} : memref<16x2048xf32, #tpu.memory_space<vmem>>, vector<16x256xf32>,
    %c0_237 = arith.constant 0 : index
    %c768_238 = arith.constant 768 : index
    %272 = vector.load %arg9[%c0_237, %c768_238] : memref<144x1024xf32, #tpu.memory_space<vmem>>, vector<72x256xf32>
    %c0_239 = arith.constant 0 : index
    %c0_240 = arith.constant 0 : index
    %273 = vector.load %arg3[%c0_239, %c0_240] : memref<16x72xbf16, #tpu.memory_space<vmem>>, vector<16x72xbf16>
    %274 = arith.truncf %272 : vector<72x256xf32> to vector<72x256xbf16>
    %cst_241 = arith.constant dense<0.000000e+00> : vector<16x256xf32>
    %275 = tpu.matmul %273, %274, %cst_241 {dimension_numbers = #tpu.dot_dimension_numbers<[1], [0], [0], [1], [0, 0, 1, 1], [], []>} : vector<16x72xbf16>, vector<72x256xbf16>, vector<16x256xf32> -> vector<16x256xf32>
    %cst_242 = arith.constant 0.000000e+00 : f32
    %276 = vector.broadcast %cst_242 : f32 to vector<16x256xf32>
    %277 = arith.maximumf %275, %276 : vector<16x256xf32>
    %c0_243 = arith.constant 0 : index
    %c768_244 = arith.constant 768 : index
    %278 = vector.load %arg7[%c0_243, %c768_244] : memref<16x2048xf32, #tpu.memory_space<vmem>>, vector<16x256xf32>
    tpu.vector_store %arg7[%c0_243, %c768_244], %277 {strides = array<i32>} : memref<16x2048xf32, #tpu.memory_space<vmem>>, vector<16x256xf32>,
    %c0_245 = arith.constant 0 : index
    %c1024_246 = arith.constant 1024 : index
    %279 = vector.load %arg6[%c0_245, %c1024_246] : memref<8x2048xf32, #tpu.memory_space<vmem>>, vector<8x1024xf32>
    %c33_i32_247 = arith.constant 33 : i32
    %280 = tpu.dynamic_rotate %279 by %c33_i32_247 dim 1 : vector<8x1024xf32>, i32 -> vector<8x1024xf32>
    %c0_248 = arith.constant 0 : index
    %c0_249 = arith.constant 0 : index
    %281 = vector.load %arg1[%c0_248, %c0_249] : memref<9x1024xf32, #tpu.memory_space<vmem>>, vector<1x1024xf32>
    %282 = vector.broadcast %281 : vector<1x1024xf32> to vector<8x1024xf32>
    %283 = arith.mulf %280, %282 : vector<8x1024xf32>
    %c0_250 = arith.constant 0 : index
    %c0_251 = arith.constant 0 : index
    %284 = vector.load %arg9[%c0_250, %c0_251] : memref<144x1024xf32, #tpu.memory_space<vmem>>, vector<8x1024xf32>
    tpu.vector_store %arg9[%c0_250, %c0_251], %283 {strides = array<i32>} : memref<144x1024xf32, #tpu.memory_space<vmem>>, vector<8x1024xf32>,
    %c0_252 = arith.constant 0 : index
    %c1024_253 = arith.constant 1024 : index
    %285 = vector.load %arg6[%c0_252, %c1024_253] : memref<8x2048xf32, #tpu.memory_space<vmem>>, vector<8x1024xf32>
    %c32_i32_254 = arith.constant 32 : i32
    %286 = tpu.dynamic_rotate %285 by %c32_i32_254 dim 1 : vector<8x1024xf32>, i32 -> vector<8x1024xf32>
    %c1_255 = arith.constant 1 : index
    %c0_256 = arith.constant 0 : index
    %287 = vector.load %arg1[%c1_255, %c0_256] : memref<9x1024xf32, #tpu.memory_space<vmem>>, vector<1x1024xf32>
    %288 = vector.broadcast %287 : vector<1x1024xf32> to vector<8x1024xf32>
    %289 = arith.mulf %286, %288 : vector<8x1024xf32>
    %c8_257 = arith.constant 8 : index
    %c0_258 = arith.constant 0 : index
    %290 = vector.load %arg9[%c8_257, %c0_258] : memref<144x1024xf32, #tpu.memory_space<vmem>>, vector<8x1024xf32>
    tpu.vector_store %arg9[%c8_257, %c0_258], %289 {strides = array<i32>} : memref<144x1024xf32, #tpu.memory_space<vmem>>, vector<8x1024xf32>,
    %c0_259 = arith.constant 0 : index
    %c1024_260 = arith.constant 1024 : index
    %291 = vector.load %arg6[%c0_259, %c1024_260] : memref<8x2048xf32, #tpu.memory_space<vmem>>, vector<8x1024xf32>
    %c31_i32_261 = arith.constant 31 : i32
    %292 = tpu.dynamic_rotate %291 by %c31_i32_261 dim 1 : vector<8x1024xf32>, i32 -> vector<8x1024xf32>
    %c2_262 = arith.constant 2 : index
    %c0_263 = arith.constant 0 : index
    %293 = vector.load %arg1[%c2_262, %c0_263] : memref<9x1024xf32, #tpu.memory_space<vmem>>, vector<1x1024xf32>
    %294 = vector.broadcast %293 : vector<1x1024xf32> to vector<8x1024xf32>
    %295 = arith.mulf %292, %294 : vector<8x1024xf32>
    %c16_264 = arith.constant 16 : index
    %c0_265 = arith.constant 0 : index
    %296 = vector.load %arg9[%c16_264, %c0_265] : memref<144x1024xf32, #tpu.memory_space<vmem>>, vector<8x1024xf32>
    tpu.vector_store %arg9[%c16_264, %c0_265], %295 {strides = array<i32>} : memref<144x1024xf32, #tpu.memory_space<vmem>>, vector<8x1024xf32>,
    %c0_266 = arith.constant 0 : index
    %c1024_267 = arith.constant 1024 : index
    %297 = vector.load %arg6[%c0_266, %c1024_267] : memref<8x2048xf32, #tpu.memory_space<vmem>>, vector<8x1024xf32>
    %c1_i32_268 = arith.constant 1 : i32
    %298 = tpu.dynamic_rotate %297 by %c1_i32_268 dim 1 : vector<8x1024xf32>, i32 -> vector<8x1024xf32>
    %c3_269 = arith.constant 3 : index
    %c0_270 = arith.constant 0 : index
    %299 = vector.load %arg1[%c3_269, %c0_270] : memref<9x1024xf32, #tpu.memory_space<vmem>>, vector<1x1024xf32>
    %300 = vector.broadcast %299 : vector<1x1024xf32> to vector<8x1024xf32>
    %301 = arith.mulf %298, %300 : vector<8x1024xf32>
    %c24_271 = arith.constant 24 : index
    %c0_272 = arith.constant 0 : index
    %302 = vector.load %arg9[%c24_271, %c0_272] : memref<144x1024xf32, #tpu.memory_space<vmem>>, vector<8x1024xf32>
    tpu.vector_store %arg9[%c24_271, %c0_272], %301 {strides = array<i32>} : memref<144x1024xf32, #tpu.memory_space<vmem>>, vector<8x1024xf32>,
    %c0_273 = arith.constant 0 : index
    %c1024_274 = arith.constant 1024 : index
    %303 = vector.load %arg6[%c0_273, %c1024_274] : memref<8x2048xf32, #tpu.memory_space<vmem>>, vector<8x1024xf32>
    %c4_275 = arith.constant 4 : index
    %c0_276 = arith.constant 0 : index
    %304 = vector.load %arg1[%c4_275, %c0_276] : memref<9x1024xf32, #tpu.memory_space<vmem>>, vector<1x1024xf32>
    %305 = vector.broadcast %304 : vector<1x1024xf32> to vector<8x1024xf32>
    %306 = arith.mulf %303, %305 : vector<8x1024xf32>
    %c32_277 = arith.constant 32 : index
    %c0_278 = arith.constant 0 : index
    %307 = vector.load %arg9[%c32_277, %c0_278] : memref<144x1024xf32, #tpu.memory_space<vmem>>, vector<8x1024xf32>
    tpu.vector_store %arg9[%c32_277, %c0_278], %306 {strides = array<i32>} : memref<144x1024xf32, #tpu.memory_space<vmem>>, vector<8x1024xf32>,
    %c0_279 = arith.constant 0 : index
    %c1024_280 = arith.constant 1024 : index
    %308 = vector.load %arg6[%c0_279, %c1024_280] : memref<8x2048xf32, #tpu.memory_space<vmem>>, vector<8x1024xf32>
    %c1023_i32_281 = arith.constant 1023 : i32
    %309 = tpu.dynamic_rotate %308 by %c1023_i32_281 dim 1 : vector<8x1024xf32>, i32 -> vector<8x1024xf32>
    %c5_282 = arith.constant 5 : index
    %c0_283 = arith.constant 0 : index
    %310 = vector.load %arg1[%c5_282, %c0_283] : memref<9x1024xf32, #tpu.memory_space<vmem>>, vector<1x1024xf32>
    %311 = vector.broadcast %310 : vector<1x1024xf32> to vector<8x1024xf32>
    %312 = arith.mulf %309, %311 : vector<8x1024xf32>
    %c40_284 = arith.constant 40 : index
    %c0_285 = arith.constant 0 : index
    %313 = vector.load %arg9[%c40_284, %c0_285] : memref<144x1024xf32, #tpu.memory_space<vmem>>, vector<8x1024xf32>
    tpu.vector_store %arg9[%c40_284, %c0_285], %312 {strides = array<i32>} : memref<144x1024xf32, #tpu.memory_space<vmem>>, vector<8x1024xf32>,
    %c0_286 = arith.constant 0 : index
    %c1024_287 = arith.constant 1024 : index
    %314 = vector.load %arg6[%c0_286, %c1024_287] : memref<8x2048xf32, #tpu.memory_space<vmem>>, vector<8x1024xf32>
    %c993_i32_288 = arith.constant 993 : i32
    %315 = tpu.dynamic_rotate %314 by %c993_i32_288 dim 1 : vector<8x1024xf32>, i32 -> vector<8x1024xf32>
    %c6_289 = arith.constant 6 : index
    %c0_290 = arith.constant 0 : index
    %316 = vector.load %arg1[%c6_289, %c0_290] : memref<9x1024xf32, #tpu.memory_space<vmem>>, vector<1x1024xf32>
    %317 = vector.broadcast %316 : vector<1x1024xf32> to vector<8x1024xf32>
    %318 = arith.mulf %315, %317 : vector<8x1024xf32>
    %c48_291 = arith.constant 48 : index
    %c0_292 = arith.constant 0 : index
    %319 = vector.load %arg9[%c48_291, %c0_292] : memref<144x1024xf32, #tpu.memory_space<vmem>>, vector<8x1024xf32>
    tpu.vector_store %arg9[%c48_291, %c0_292], %318 {strides = array<i32>} : memref<144x1024xf32, #tpu.memory_space<vmem>>, vector<8x1024xf32>,
    %c0_293 = arith.constant 0 : index
    %c1024_294 = arith.constant 1024 : index
    %320 = vector.load %arg6[%c0_293, %c1024_294] : memref<8x2048xf32, #tpu.memory_space<vmem>>, vector<8x1024xf32>
    %c992_i32_295 = arith.constant 992 : i32
    %321 = tpu.dynamic_rotate %320 by %c992_i32_295 dim 1 : vector<8x1024xf32>, i32 -> vector<8x1024xf32>
    %c7_296 = arith.constant 7 : index
    %c0_297 = arith.constant 0 : index
    %322 = vector.load %arg1[%c7_296, %c0_297] : memref<9x1024xf32, #tpu.memory_space<vmem>>, vector<1x1024xf32>
    %323 = vector.broadcast %322 : vector<1x1024xf32> to vector<8x1024xf32>
    %324 = arith.mulf %321, %323 : vector<8x1024xf32>
    %c56_298 = arith.constant 56 : index
    %c0_299 = arith.constant 0 : index
    %325 = vector.load %arg9[%c56_298, %c0_299] : memref<144x1024xf32, #tpu.memory_space<vmem>>, vector<8x1024xf32>
    tpu.vector_store %arg9[%c56_298, %c0_299], %324 {strides = array<i32>} : memref<144x1024xf32, #tpu.memory_space<vmem>>, vector<8x1024xf32>,
    %c0_300 = arith.constant 0 : index
    %c1024_301 = arith.constant 1024 : index
    %326 = vector.load %arg6[%c0_300, %c1024_301] : memref<8x2048xf32, #tpu.memory_space<vmem>>, vector<8x1024xf32>
    %c991_i32_302 = arith.constant 991 : i32
    %327 = tpu.dynamic_rotate %326 by %c991_i32_302 dim 1 : vector<8x1024xf32>, i32 -> vector<8x1024xf32>
    %c8_303 = arith.constant 8 : index
    %c0_304 = arith.constant 0 : index
    %328 = vector.load %arg1[%c8_303, %c0_304] : memref<9x1024xf32, #tpu.memory_space<vmem>>, vector<1x1024xf32>
    %329 = vector.broadcast %328 : vector<1x1024xf32> to vector<8x1024xf32>
    %330 = arith.mulf %327, %329 : vector<8x1024xf32>
    %c64_305 = arith.constant 64 : index
    %c0_306 = arith.constant 0 : index
    %331 = vector.load %arg9[%c64_305, %c0_306] : memref<144x1024xf32, #tpu.memory_space<vmem>>, vector<8x1024xf32>
    tpu.vector_store %arg9[%c64_305, %c0_306], %330 {strides = array<i32>} : memref<144x1024xf32, #tpu.memory_space<vmem>>, vector<8x1024xf32>,
    %c0_307 = arith.constant 0 : index
    %c0_308 = arith.constant 0 : index
    %332 = vector.load %arg9[%c0_307, %c0_308] : memref<144x1024xf32, #tpu.memory_space<vmem>>, vector<72x256xf32>
    %c0_309 = arith.constant 0 : index
    %c0_310 = arith.constant 0 : index
    %333 = vector.load %arg3[%c0_309, %c0_310] : memref<16x72xbf16, #tpu.memory_space<vmem>>, vector<16x72xbf16>
    %334 = arith.truncf %332 : vector<72x256xf32> to vector<72x256xbf16>
    %cst_311 = arith.constant dense<0.000000e+00> : vector<16x256xf32>
    %335 = tpu.matmul %333, %334, %cst_311 {dimension_numbers = #tpu.dot_dimension_numbers<[1], [0], [0], [1], [0, 0, 1, 1], [], []>} : vector<16x72xbf16>, vector<72x256xbf16>, vector<16x256xf32> -> vector<16x256xf32>
    %cst_312 = arith.constant 0.000000e+00 : f32
    %336 = vector.broadcast %cst_312 : f32 to vector<16x256xf32>
    %337 = arith.maximumf %335, %336 : vector<16x256xf32>
    %c0_313 = arith.constant 0 : index
    %c1024_314 = arith.constant 1024 : index
    %338 = vector.load %arg7[%c0_313, %c1024_314] : memref<16x2048xf32, #tpu.memory_space<vmem>>, vector<16x256xf32>
    tpu.vector_store %arg7[%c0_313, %c1024_314], %337 {strides = array<i32>} : memref<16x2048xf32, #tpu.memory_space<vmem>>, vector<16x256xf32>,
    %c0_315 = arith.constant 0 : index
    %c256_316 = arith.constant 256 : index
    %339 = vector.load %arg9[%c0_315, %c256_316] : memref<144x1024xf32, #tpu.memory_space<vmem>>, vector<72x256xf32>
    %c0_317 = arith.constant 0 : index
    %c0_318 = arith.constant 0 : index
    %340 = vector.load %arg3[%c0_317, %c0_318] : memref<16x72xbf16, #tpu.memory_space<vmem>>, vector<16x72xbf16>
    %341 = arith.truncf %339 : vector<72x256xf32> to vector<72x256xbf16>
    %cst_319 = arith.constant dense<0.000000e+00> : vector<16x256xf32>
    %342 = tpu.matmul %340, %341, %cst_319 {dimension_numbers = #tpu.dot_dimension_numbers<[1], [0], [0], [1], [0, 0, 1, 1], [], []>} : vector<16x72xbf16>, vector<72x256xbf16>, vector<16x256xf32> -> vector<16x256xf32>
    %cst_320 = arith.constant 0.000000e+00 : f32
    %343 = vector.broadcast %cst_320 : f32 to vector<16x256xf32>
    %344 = arith.maximumf %342, %343 : vector<16x256xf32>
    %c0_321 = arith.constant 0 : index
    %c1280_322 = arith.constant 1280 : index
    %345 = vector.load %arg7[%c0_321, %c1280_322] : memref<16x2048xf32, #tpu.memory_space<vmem>>, vector<16x256xf32>
    tpu.vector_store %arg7[%c0_321, %c1280_322], %344 {strides = array<i32>} : memref<16x2048xf32, #tpu.memory_space<vmem>>, vector<16x256xf32>,
    %c0_323 = arith.constant 0 : index
    %c512_324 = arith.constant 512 : index
    %346 = vector.load %arg9[%c0_323, %c512_324] : memref<144x1024xf32, #tpu.memory_space<vmem>>, vector<72x256xf32>
    %c0_325 = arith.constant 0 : index
    %c0_326 = arith.constant 0 : index
    %347 = vector.load %arg3[%c0_325, %c0_326] : memref<16x72xbf16, #tpu.memory_space<vmem>>, vector<16x72xbf16>
    %348 = arith.truncf %346 : vector<72x256xf32> to vector<72x256xbf16>
    %cst_327 = arith.constant dense<0.000000e+00> : vector<16x256xf32>
    %349 = tpu.matmul %347, %348, %cst_327 {dimension_numbers = #tpu.dot_dimension_numbers<[1], [0], [0], [1], [0, 0, 1, 1], [], []>} : vector<16x72xbf16>, vector<72x256xbf16>, vector<16x256xf32> -> vector<16x256xf32>
    %cst_328 = arith.constant 0.000000e+00 : f32
    %350 = vector.broadcast %cst_328 : f32 to vector<16x256xf32>
    %351 = arith.maximumf %349, %350 : vector<16x256xf32>
    %c0_329 = arith.constant 0 : index
    %c1536_330 = arith.constant 1536 : index
    %352 = vector.load %arg7[%c0_329, %c1536_330] : memref<16x2048xf32, #tpu.memory_space<vmem>>, vector<16x256xf32>
    tpu.vector_store %arg7[%c0_329, %c1536_330], %351 {strides = array<i32>} : memref<16x2048xf32, #tpu.memory_space<vmem>>, vector<16x256xf32>,
    %c0_331 = arith.constant 0 : index
    %c768_332 = arith.constant 768 : index
    %353 = vector.load %arg9[%c0_331, %c768_332] : memref<144x1024xf32, #tpu.memory_space<vmem>>, vector<72x256xf32>
    %c0_333 = arith.constant 0 : index
    %c0_334 = arith.constant 0 : index
    %354 = vector.load %arg3[%c0_333, %c0_334] : memref<16x72xbf16, #tpu.memory_space<vmem>>, vector<16x72xbf16>
    %355 = arith.truncf %353 : vector<72x256xf32> to vector<72x256xbf16>
    %cst_335 = arith.constant dense<0.000000e+00> : vector<16x256xf32>
    %356 = tpu.matmul %354, %355, %cst_335 {dimension_numbers = #tpu.dot_dimension_numbers<[1], [0], [0], [1], [0, 0, 1, 1], [], []>} : vector<16x72xbf16>, vector<72x256xbf16>, vector<16x256xf32> -> vector<16x256xf32>
    %cst_336 = arith.constant 0.000000e+00 : f32
    %357 = vector.broadcast %cst_336 : f32 to vector<16x256xf32>
    %358 = arith.maximumf %356, %357 : vector<16x256xf32>
    %c0_337 = arith.constant 0 : index
    %c1792_338 = arith.constant 1792 : index
    %359 = vector.load %arg7[%c0_337, %c1792_338] : memref<16x2048xf32, #tpu.memory_space<vmem>>, vector<16x256xf32>
    tpu.vector_store %arg7[%c0_337, %c1792_338], %358 {strides = array<i32>} : memref<16x2048xf32, #tpu.memory_space<vmem>>, vector<16x256xf32>,
    %c0_339 = arith.constant 0 : index
    %c0_340 = arith.constant 0 : index
    %360 = vector.load %arg7[%c0_339, %c0_340] : memref<16x2048xf32, #tpu.memory_space<vmem>>, vector<16x1024xf32>
    %c33_i32_341 = arith.constant 33 : i32
    %361 = tpu.dynamic_rotate %360 by %c33_i32_341 dim 1 : vector<16x1024xf32>, i32 -> vector<16x1024xf32>
    %c0_342 = arith.constant 0 : index
    %c0_343 = arith.constant 0 : index
    %362 = vector.load %arg1[%c0_342, %c0_343] : memref<9x1024xf32, #tpu.memory_space<vmem>>, vector<1x1024xf32>
    %363 = vector.broadcast %362 : vector<1x1024xf32> to vector<16x1024xf32>
    %364 = arith.mulf %361, %363 : vector<16x1024xf32>
    %c0_344 = arith.constant 0 : index
    %c0_345 = arith.constant 0 : index
    %365 = vector.load %arg9[%c0_344, %c0_345] : memref<144x1024xf32, #tpu.memory_space<vmem>>, vector<16x1024xf32>
    tpu.vector_store %arg9[%c0_344, %c0_345], %364 {strides = array<i32>} : memref<144x1024xf32, #tpu.memory_space<vmem>>, vector<16x1024xf32>,
    %c0_346 = arith.constant 0 : index
    %c0_347 = arith.constant 0 : index
    %366 = vector.load %arg7[%c0_346, %c0_347] : memref<16x2048xf32, #tpu.memory_space<vmem>>, vector<16x1024xf32>
    %c32_i32_348 = arith.constant 32 : i32
    %367 = tpu.dynamic_rotate %366 by %c32_i32_348 dim 1 : vector<16x1024xf32>, i32 -> vector<16x1024xf32>
    %c1_349 = arith.constant 1 : index
    %c0_350 = arith.constant 0 : index
    %368 = vector.load %arg1[%c1_349, %c0_350] : memref<9x1024xf32, #tpu.memory_space<vmem>>, vector<1x1024xf32>
    %369 = vector.broadcast %368 : vector<1x1024xf32> to vector<16x1024xf32>
    %370 = arith.mulf %367, %369 : vector<16x1024xf32>
    %c16_351 = arith.constant 16 : index
    %c0_352 = arith.constant 0 : index
    %371 = vector.load %arg9[%c16_351, %c0_352] : memref<144x1024xf32, #tpu.memory_space<vmem>>, vector<16x1024xf32>
    tpu.vector_store %arg9[%c16_351, %c0_352], %370 {strides = array<i32>} : memref<144x1024xf32, #tpu.memory_space<vmem>>, vector<16x1024xf32>,
    %c0_353 = arith.constant 0 : index
    %c0_354 = arith.constant 0 : index
    %372 = vector.load %arg7[%c0_353, %c0_354] : memref<16x2048xf32, #tpu.memory_space<vmem>>, vector<16x1024xf32>
    %c31_i32_355 = arith.constant 31 : i32
    %373 = tpu.dynamic_rotate %372 by %c31_i32_355 dim 1 : vector<16x1024xf32>, i32 -> vector<16x1024xf32>
    %c2_356 = arith.constant 2 : index
    %c0_357 = arith.constant 0 : index
    %374 = vector.load %arg1[%c2_356, %c0_357] : memref<9x1024xf32, #tpu.memory_space<vmem>>, vector<1x1024xf32>
    %375 = vector.broadcast %374 : vector<1x1024xf32> to vector<16x1024xf32>
    %376 = arith.mulf %373, %375 : vector<16x1024xf32>
    %c32_358 = arith.constant 32 : index
    %c0_359 = arith.constant 0 : index
    %377 = vector.load %arg9[%c32_358, %c0_359] : memref<144x1024xf32, #tpu.memory_space<vmem>>, vector<16x1024xf32>
    tpu.vector_store %arg9[%c32_358, %c0_359], %376 {strides = array<i32>} : memref<144x1024xf32, #tpu.memory_space<vmem>>, vector<16x1024xf32>,
    %c0_360 = arith.constant 0 : index
    %c0_361 = arith.constant 0 : index
    %378 = vector.load %arg7[%c0_360, %c0_361] : memref<16x2048xf32, #tpu.memory_space<vmem>>, vector<16x1024xf32>
    %c1_i32_362 = arith.constant 1 : i32
    %379 = tpu.dynamic_rotate %378 by %c1_i32_362 dim 1 : vector<16x1024xf32>, i32 -> vector<16x1024xf32>
    %c3_363 = arith.constant 3 : index
    %c0_364 = arith.constant 0 : index
    %380 = vector.load %arg1[%c3_363, %c0_364] : memref<9x1024xf32, #tpu.memory_space<vmem>>, vector<1x1024xf32>
    %381 = vector.broadcast %380 : vector<1x1024xf32> to vector<16x1024xf32>
    %382 = arith.mulf %379, %381 : vector<16x1024xf32>
    %c48_365 = arith.constant 48 : index
    %c0_366 = arith.constant 0 : index
    %383 = vector.load %arg9[%c48_365, %c0_366] : memref<144x1024xf32, #tpu.memory_space<vmem>>, vector<16x1024xf32>
    tpu.vector_store %arg9[%c48_365, %c0_366], %382 {strides = array<i32>} : memref<144x1024xf32, #tpu.memory_space<vmem>>, vector<16x1024xf32>,
    %c0_367 = arith.constant 0 : index
    %c0_368 = arith.constant 0 : index
    %384 = vector.load %arg7[%c0_367, %c0_368] : memref<16x2048xf32, #tpu.memory_space<vmem>>, vector<16x1024xf32>
    %c4_369 = arith.constant 4 : index
    %c0_370 = arith.constant 0 : index
    %385 = vector.load %arg1[%c4_369, %c0_370] : memref<9x1024xf32, #tpu.memory_space<vmem>>, vector<1x1024xf32>
    %386 = vector.broadcast %385 : vector<1x1024xf32> to vector<16x1024xf32>
    %387 = arith.mulf %384, %386 : vector<16x1024xf32>
    %c64_371 = arith.constant 64 : index
    %c0_372 = arith.constant 0 : index
    %388 = vector.load %arg9[%c64_371, %c0_372] : memref<144x1024xf32, #tpu.memory_space<vmem>>, vector<16x1024xf32>
    tpu.vector_store %arg9[%c64_371, %c0_372], %387 {strides = array<i32>} : memref<144x1024xf32, #tpu.memory_space<vmem>>, vector<16x1024xf32>,
    %c0_373 = arith.constant 0 : index
    %c0_374 = arith.constant 0 : index
    %389 = vector.load %arg7[%c0_373, %c0_374] : memref<16x2048xf32, #tpu.memory_space<vmem>>, vector<16x1024xf32>
    %c1023_i32_375 = arith.constant 1023 : i32
    %390 = tpu.dynamic_rotate %389 by %c1023_i32_375 dim 1 : vector<16x1024xf32>, i32 -> vector<16x1024xf32>
    %c5_376 = arith.constant 5 : index
    %c0_377 = arith.constant 0 : index
    %391 = vector.load %arg1[%c5_376, %c0_377] : memref<9x1024xf32, #tpu.memory_space<vmem>>, vector<1x1024xf32>
    %392 = vector.broadcast %391 : vector<1x1024xf32> to vector<16x1024xf32>
    %393 = arith.mulf %390, %392 : vector<16x1024xf32>
    %c80 = arith.constant 80 : index
    %c0_378 = arith.constant 0 : index
    %394 = vector.load %arg9[%c80, %c0_378] : memref<144x1024xf32, #tpu.memory_space<vmem>>, vector<16x1024xf32>
    tpu.vector_store %arg9[%c80, %c0_378], %393 {strides = array<i32>} : memref<144x1024xf32, #tpu.memory_space<vmem>>, vector<16x1024xf32>,
    %c0_379 = arith.constant 0 : index
    %c0_380 = arith.constant 0 : index
    %395 = vector.load %arg7[%c0_379, %c0_380] : memref<16x2048xf32, #tpu.memory_space<vmem>>, vector<16x1024xf32>
    %c993_i32_381 = arith.constant 993 : i32
    %396 = tpu.dynamic_rotate %395 by %c993_i32_381 dim 1 : vector<16x1024xf32>, i32 -> vector<16x1024xf32>
    %c6_382 = arith.constant 6 : index
    %c0_383 = arith.constant 0 : index
    %397 = vector.load %arg1[%c6_382, %c0_383] : memref<9x1024xf32, #tpu.memory_space<vmem>>, vector<1x1024xf32>
    %398 = vector.broadcast %397 : vector<1x1024xf32> to vector<16x1024xf32>
    %399 = arith.mulf %396, %398 : vector<16x1024xf32>
    %c96 = arith.constant 96 : index
    %c0_384 = arith.constant 0 : index
    %400 = vector.load %arg9[%c96, %c0_384] : memref<144x1024xf32, #tpu.memory_space<vmem>>, vector<16x1024xf32>
    tpu.vector_store %arg9[%c96, %c0_384], %399 {strides = array<i32>} : memref<144x1024xf32, #tpu.memory_space<vmem>>, vector<16x1024xf32>,
    %c0_385 = arith.constant 0 : index
    %c0_386 = arith.constant 0 : index
    %401 = vector.load %arg7[%c0_385, %c0_386] : memref<16x2048xf32, #tpu.memory_space<vmem>>, vector<16x1024xf32>
    %c992_i32_387 = arith.constant 992 : i32
    %402 = tpu.dynamic_rotate %401 by %c992_i32_387 dim 1 : vector<16x1024xf32>, i32 -> vector<16x1024xf32>
    %c7_388 = arith.constant 7 : index
    %c0_389 = arith.constant 0 : index
    %403 = vector.load %arg1[%c7_388, %c0_389] : memref<9x1024xf32, #tpu.memory_space<vmem>>, vector<1x1024xf32>
    %404 = vector.broadcast %403 : vector<1x1024xf32> to vector<16x1024xf32>
    %405 = arith.mulf %402, %404 : vector<16x1024xf32>
    %c112 = arith.constant 112 : index
    %c0_390 = arith.constant 0 : index
    %406 = vector.load %arg9[%c112, %c0_390] : memref<144x1024xf32, #tpu.memory_space<vmem>>, vector<16x1024xf32>
    tpu.vector_store %arg9[%c112, %c0_390], %405 {strides = array<i32>} : memref<144x1024xf32, #tpu.memory_space<vmem>>, vector<16x1024xf32>,
    %c0_391 = arith.constant 0 : index
    %c0_392 = arith.constant 0 : index
    %407 = vector.load %arg7[%c0_391, %c0_392] : memref<16x2048xf32, #tpu.memory_space<vmem>>, vector<16x1024xf32>
    %c991_i32_393 = arith.constant 991 : i32
    %408 = tpu.dynamic_rotate %407 by %c991_i32_393 dim 1 : vector<16x1024xf32>, i32 -> vector<16x1024xf32>
    %c8_394 = arith.constant 8 : index
    %c0_395 = arith.constant 0 : index
    %409 = vector.load %arg1[%c8_394, %c0_395] : memref<9x1024xf32, #tpu.memory_space<vmem>>, vector<1x1024xf32>
    %410 = vector.broadcast %409 : vector<1x1024xf32> to vector<16x1024xf32>
    %411 = arith.mulf %408, %410 : vector<16x1024xf32>
    %c128 = arith.constant 128 : index
    %c0_396 = arith.constant 0 : index
    %412 = vector.load %arg9[%c128, %c0_396] : memref<144x1024xf32, #tpu.memory_space<vmem>>, vector<16x1024xf32>
    tpu.vector_store %arg9[%c128, %c0_396], %411 {strides = array<i32>} : memref<144x1024xf32, #tpu.memory_space<vmem>>, vector<16x1024xf32>,
    %c0_397 = arith.constant 0 : index
    %c0_398 = arith.constant 0 : index
    %413 = vector.load %arg9[%c0_397, %c0_398] : memref<144x1024xf32, #tpu.memory_space<vmem>>, vector<144x256xf32>
    %c0_399 = arith.constant 0 : index
    %c0_400 = arith.constant 0 : index
    %414 = vector.load %arg4[%c0_399, %c0_400] : memref<32x144xbf16, #tpu.memory_space<vmem>>, vector<32x144xbf16>
    %415 = arith.truncf %413 : vector<144x256xf32> to vector<144x256xbf16>
    %cst_401 = arith.constant dense<0.000000e+00> : vector<32x256xf32>
    %416 = tpu.matmul %414, %415, %cst_401 {dimension_numbers = #tpu.dot_dimension_numbers<[1], [0], [0], [1], [0, 0, 1, 1], [], []>} : vector<32x144xbf16>, vector<144x256xbf16>, vector<32x256xf32> -> vector<32x256xf32>
    %cst_402 = arith.constant 0.000000e+00 : f32
    %417 = vector.broadcast %cst_402 : f32 to vector<32x256xf32>
    %418 = arith.maximumf %416, %417 : vector<32x256xf32>
    %c0_403 = arith.constant 0 : index
    %c0_404 = arith.constant 0 : index
    %419 = vector.load %arg8[%c0_403, %c0_404] : memref<32x2048xf32, #tpu.memory_space<vmem>>, vector<32x256xf32>
    tpu.vector_store %arg8[%c0_403, %c0_404], %418 {strides = array<i32>} : memref<32x2048xf32, #tpu.memory_space<vmem>>, vector<32x256xf32>,
    %c0_405 = arith.constant 0 : index
    %c256_406 = arith.constant 256 : index
    %420 = vector.load %arg9[%c0_405, %c256_406] : memref<144x1024xf32, #tpu.memory_space<vmem>>, vector<144x256xf32>
    %c0_407 = arith.constant 0 : index
    %c0_408 = arith.constant 0 : index
    %421 = vector.load %arg4[%c0_407, %c0_408] : memref<32x144xbf16, #tpu.memory_space<vmem>>, vector<32x144xbf16>
    %422 = arith.truncf %420 : vector<144x256xf32> to vector<144x256xbf16>
    %cst_409 = arith.constant dense<0.000000e+00> : vector<32x256xf32>
    %423 = tpu.matmul %421, %422, %cst_409 {dimension_numbers = #tpu.dot_dimension_numbers<[1], [0], [0], [1], [0, 0, 1, 1], [], []>} : vector<32x144xbf16>, vector<144x256xbf16>, vector<32x256xf32> -> vector<32x256xf32>
    %cst_410 = arith.constant 0.000000e+00 : f32
    %424 = vector.broadcast %cst_410 : f32 to vector<32x256xf32>
    %425 = arith.maximumf %423, %424 : vector<32x256xf32>
    %c0_411 = arith.constant 0 : index
    %c256_412 = arith.constant 256 : index
    %426 = vector.load %arg8[%c0_411, %c256_412] : memref<32x2048xf32, #tpu.memory_space<vmem>>, vector<32x256xf32>
    tpu.vector_store %arg8[%c0_411, %c256_412], %425 {strides = array<i32>} : memref<32x2048xf32, #tpu.memory_space<vmem>>, vector<32x256xf32>,
    %c0_413 = arith.constant 0 : index
    %c512_414 = arith.constant 512 : index
    %427 = vector.load %arg9[%c0_413, %c512_414] : memref<144x1024xf32, #tpu.memory_space<vmem>>, vector<144x256xf32>
    %c0_415 = arith.constant 0 : index
    %c0_416 = arith.constant 0 : index
    %428 = vector.load %arg4[%c0_415, %c0_416] : memref<32x144xbf16, #tpu.memory_space<vmem>>, vector<32x144xbf16>
    %429 = arith.truncf %427 : vector<144x256xf32> to vector<144x256xbf16>
    %cst_417 = arith.constant dense<0.000000e+00> : vector<32x256xf32>
    %430 = tpu.matmul %428, %429, %cst_417 {dimension_numbers = #tpu.dot_dimension_numbers<[1], [0], [0], [1], [0, 0, 1, 1], [], []>} : vector<32x144xbf16>, vector<144x256xbf16>, vector<32x256xf32> -> vector<32x256xf32>
    %cst_418 = arith.constant 0.000000e+00 : f32
    %431 = vector.broadcast %cst_418 : f32 to vector<32x256xf32>
    %432 = arith.maximumf %430, %431 : vector<32x256xf32>
    %c0_419 = arith.constant 0 : index
    %c512_420 = arith.constant 512 : index
    %433 = vector.load %arg8[%c0_419, %c512_420] : memref<32x2048xf32, #tpu.memory_space<vmem>>, vector<32x256xf32>
    tpu.vector_store %arg8[%c0_419, %c512_420], %432 {strides = array<i32>} : memref<32x2048xf32, #tpu.memory_space<vmem>>, vector<32x256xf32>,
    %c0_421 = arith.constant 0 : index
    %c768_422 = arith.constant 768 : index
    %434 = vector.load %arg9[%c0_421, %c768_422] : memref<144x1024xf32, #tpu.memory_space<vmem>>, vector<144x256xf32>
    %c0_423 = arith.constant 0 : index
    %c0_424 = arith.constant 0 : index
    %435 = vector.load %arg4[%c0_423, %c0_424] : memref<32x144xbf16, #tpu.memory_space<vmem>>, vector<32x144xbf16>
    %436 = arith.truncf %434 : vector<144x256xf32> to vector<144x256xbf16>
    %cst_425 = arith.constant dense<0.000000e+00> : vector<32x256xf32>
    %437 = tpu.matmul %435, %436, %cst_425 {dimension_numbers = #tpu.dot_dimension_numbers<[1], [0], [0], [1], [0, 0, 1, 1], [], []>} : vector<32x144xbf16>, vector<144x256xbf16>, vector<32x256xf32> -> vector<32x256xf32>
    %cst_426 = arith.constant 0.000000e+00 : f32
    %438 = vector.broadcast %cst_426 : f32 to vector<32x256xf32>
    %439 = arith.maximumf %437, %438 : vector<32x256xf32>
    %c0_427 = arith.constant 0 : index
    %c768_428 = arith.constant 768 : index
    %440 = vector.load %arg8[%c0_427, %c768_428] : memref<32x2048xf32, #tpu.memory_space<vmem>>, vector<32x256xf32>
    tpu.vector_store %arg8[%c0_427, %c768_428], %439 {strides = array<i32>} : memref<32x2048xf32, #tpu.memory_space<vmem>>, vector<32x256xf32>,
    %c0_429 = arith.constant 0 : index
    %c1024_430 = arith.constant 1024 : index
    %441 = vector.load %arg7[%c0_429, %c1024_430] : memref<16x2048xf32, #tpu.memory_space<vmem>>, vector<16x1024xf32>
    %c33_i32_431 = arith.constant 33 : i32
    %442 = tpu.dynamic_rotate %441 by %c33_i32_431 dim 1 : vector<16x1024xf32>, i32 -> vector<16x1024xf32>
    %c0_432 = arith.constant 0 : index
    %c0_433 = arith.constant 0 : index
    %443 = vector.load %arg1[%c0_432, %c0_433] : memref<9x1024xf32, #tpu.memory_space<vmem>>, vector<1x1024xf32>
    %444 = vector.broadcast %443 : vector<1x1024xf32> to vector<16x1024xf32>
    %445 = arith.mulf %442, %444 : vector<16x1024xf32>
    %c0_434 = arith.constant 0 : index
    %c0_435 = arith.constant 0 : index
    %446 = vector.load %arg9[%c0_434, %c0_435] : memref<144x1024xf32, #tpu.memory_space<vmem>>, vector<16x1024xf32>
    tpu.vector_store %arg9[%c0_434, %c0_435], %445 {strides = array<i32>} : memref<144x1024xf32, #tpu.memory_space<vmem>>, vector<16x1024xf32>,
    %c0_436 = arith.constant 0 : index
    %c1024_437 = arith.constant 1024 : index
    %447 = vector.load %arg7[%c0_436, %c1024_437] : memref<16x2048xf32, #tpu.memory_space<vmem>>, vector<16x1024xf32>
    %c32_i32_438 = arith.constant 32 : i32
    %448 = tpu.dynamic_rotate %447 by %c32_i32_438 dim 1 : vector<16x1024xf32>, i32 -> vector<16x1024xf32>
    %c1_439 = arith.constant 1 : index
    %c0_440 = arith.constant 0 : index
    %449 = vector.load %arg1[%c1_439, %c0_440] : memref<9x1024xf32, #tpu.memory_space<vmem>>, vector<1x1024xf32>
    %450 = vector.broadcast %449 : vector<1x1024xf32> to vector<16x1024xf32>
    %451 = arith.mulf %448, %450 : vector<16x1024xf32>
    %c16_441 = arith.constant 16 : index
    %c0_442 = arith.constant 0 : index
    %452 = vector.load %arg9[%c16_441, %c0_442] : memref<144x1024xf32, #tpu.memory_space<vmem>>, vector<16x1024xf32>
    tpu.vector_store %arg9[%c16_441, %c0_442], %451 {strides = array<i32>} : memref<144x1024xf32, #tpu.memory_space<vmem>>, vector<16x1024xf32>,
    %c0_443 = arith.constant 0 : index
    %c1024_444 = arith.constant 1024 : index
    %453 = vector.load %arg7[%c0_443, %c1024_444] : memref<16x2048xf32, #tpu.memory_space<vmem>>, vector<16x1024xf32>
    %c31_i32_445 = arith.constant 31 : i32
    %454 = tpu.dynamic_rotate %453 by %c31_i32_445 dim 1 : vector<16x1024xf32>, i32 -> vector<16x1024xf32>
    %c2_446 = arith.constant 2 : index
    %c0_447 = arith.constant 0 : index
    %455 = vector.load %arg1[%c2_446, %c0_447] : memref<9x1024xf32, #tpu.memory_space<vmem>>, vector<1x1024xf32>
    %456 = vector.broadcast %455 : vector<1x1024xf32> to vector<16x1024xf32>
    %457 = arith.mulf %454, %456 : vector<16x1024xf32>
    %c32_448 = arith.constant 32 : index
    %c0_449 = arith.constant 0 : index
    %458 = vector.load %arg9[%c32_448, %c0_449] : memref<144x1024xf32, #tpu.memory_space<vmem>>, vector<16x1024xf32>
    tpu.vector_store %arg9[%c32_448, %c0_449], %457 {strides = array<i32>} : memref<144x1024xf32, #tpu.memory_space<vmem>>, vector<16x1024xf32>,
    %c0_450 = arith.constant 0 : index
    %c1024_451 = arith.constant 1024 : index
    %459 = vector.load %arg7[%c0_450, %c1024_451] : memref<16x2048xf32, #tpu.memory_space<vmem>>, vector<16x1024xf32>
    %c1_i32_452 = arith.constant 1 : i32
    %460 = tpu.dynamic_rotate %459 by %c1_i32_452 dim 1 : vector<16x1024xf32>, i32 -> vector<16x1024xf32>
    %c3_453 = arith.constant 3 : index
    %c0_454 = arith.constant 0 : index
    %461 = vector.load %arg1[%c3_453, %c0_454] : memref<9x1024xf32, #tpu.memory_space<vmem>>, vector<1x1024xf32>
    %462 = vector.broadcast %461 : vector<1x1024xf32> to vector<16x1024xf32>
    %463 = arith.mulf %460, %462 : vector<16x1024xf32>
    %c48_455 = arith.constant 48 : index
    %c0_456 = arith.constant 0 : index
    %464 = vector.load %arg9[%c48_455, %c0_456] : memref<144x1024xf32, #tpu.memory_space<vmem>>, vector<16x1024xf32>
    tpu.vector_store %arg9[%c48_455, %c0_456], %463 {strides = array<i32>} : memref<144x1024xf32, #tpu.memory_space<vmem>>, vector<16x1024xf32>,
    %c0_457 = arith.constant 0 : index
    %c1024_458 = arith.constant 1024 : index
    %465 = vector.load %arg7[%c0_457, %c1024_458] : memref<16x2048xf32, #tpu.memory_space<vmem>>, vector<16x1024xf32>
    %c4_459 = arith.constant 4 : index
    %c0_460 = arith.constant 0 : index
    %466 = vector.load %arg1[%c4_459, %c0_460] : memref<9x1024xf32, #tpu.memory_space<vmem>>, vector<1x1024xf32>
    %467 = vector.broadcast %466 : vector<1x1024xf32> to vector<16x1024xf32>
    %468 = arith.mulf %465, %467 : vector<16x1024xf32>
    %c64_461 = arith.constant 64 : index
    %c0_462 = arith.constant 0 : index
    %469 = vector.load %arg9[%c64_461, %c0_462] : memref<144x1024xf32, #tpu.memory_space<vmem>>, vector<16x1024xf32>
    tpu.vector_store %arg9[%c64_461, %c0_462], %468 {strides = array<i32>} : memref<144x1024xf32, #tpu.memory_space<vmem>>, vector<16x1024xf32>,
    %c0_463 = arith.constant 0 : index
    %c1024_464 = arith.constant 1024 : index
    %470 = vector.load %arg7[%c0_463, %c1024_464] : memref<16x2048xf32, #tpu.memory_space<vmem>>, vector<16x1024xf32>
    %c1023_i32_465 = arith.constant 1023 : i32
    %471 = tpu.dynamic_rotate %470 by %c1023_i32_465 dim 1 : vector<16x1024xf32>, i32 -> vector<16x1024xf32>
    %c5_466 = arith.constant 5 : index
    %c0_467 = arith.constant 0 : index
    %472 = vector.load %arg1[%c5_466, %c0_467] : memref<9x1024xf32, #tpu.memory_space<vmem>>, vector<1x1024xf32>
    %473 = vector.broadcast %472 : vector<1x1024xf32> to vector<16x1024xf32>
    %474 = arith.mulf %471, %473 : vector<16x1024xf32>
    %c80_468 = arith.constant 80 : index
    %c0_469 = arith.constant 0 : index
    %475 = vector.load %arg9[%c80_468, %c0_469] : memref<144x1024xf32, #tpu.memory_space<vmem>>, vector<16x1024xf32>
    tpu.vector_store %arg9[%c80_468, %c0_469], %474 {strides = array<i32>} : memref<144x1024xf32, #tpu.memory_space<vmem>>, vector<16x1024xf32>,
    %c0_470 = arith.constant 0 : index
    %c1024_471 = arith.constant 1024 : index
    %476 = vector.load %arg7[%c0_470, %c1024_471] : memref<16x2048xf32, #tpu.memory_space<vmem>>, vector<16x1024xf32>
    %c993_i32_472 = arith.constant 993 : i32
    %477 = tpu.dynamic_rotate %476 by %c993_i32_472 dim 1 : vector<16x1024xf32>, i32 -> vector<16x1024xf32>
    %c6_473 = arith.constant 6 : index
    %c0_474 = arith.constant 0 : index
    %478 = vector.load %arg1[%c6_473, %c0_474] : memref<9x1024xf32, #tpu.memory_space<vmem>>, vector<1x1024xf32>
    %479 = vector.broadcast %478 : vector<1x1024xf32> to vector<16x1024xf32>
    %480 = arith.mulf %477, %479 : vector<16x1024xf32>
    %c96_475 = arith.constant 96 : index
    %c0_476 = arith.constant 0 : index
    %481 = vector.load %arg9[%c96_475, %c0_476] : memref<144x1024xf32, #tpu.memory_space<vmem>>, vector<16x1024xf32>
    tpu.vector_store %arg9[%c96_475, %c0_476], %480 {strides = array<i32>} : memref<144x1024xf32, #tpu.memory_space<vmem>>, vector<16x1024xf32>,
    %c0_477 = arith.constant 0 : index
    %c1024_478 = arith.constant 1024 : index
    %482 = vector.load %arg7[%c0_477, %c1024_478] : memref<16x2048xf32, #tpu.memory_space<vmem>>, vector<16x1024xf32>
    %c992_i32_479 = arith.constant 992 : i32
    %483 = tpu.dynamic_rotate %482 by %c992_i32_479 dim 1 : vector<16x1024xf32>, i32 -> vector<16x1024xf32>
    %c7_480 = arith.constant 7 : index
    %c0_481 = arith.constant 0 : index
    %484 = vector.load %arg1[%c7_480, %c0_481] : memref<9x1024xf32, #tpu.memory_space<vmem>>, vector<1x1024xf32>
    %485 = vector.broadcast %484 : vector<1x1024xf32> to vector<16x1024xf32>
    %486 = arith.mulf %483, %485 : vector<16x1024xf32>
    %c112_482 = arith.constant 112 : index
    %c0_483 = arith.constant 0 : index
    %487 = vector.load %arg9[%c112_482, %c0_483] : memref<144x1024xf32, #tpu.memory_space<vmem>>, vector<16x1024xf32>
    tpu.vector_store %arg9[%c112_482, %c0_483], %486 {strides = array<i32>} : memref<144x1024xf32, #tpu.memory_space<vmem>>, vector<16x1024xf32>,
    %c0_484 = arith.constant 0 : index
    %c1024_485 = arith.constant 1024 : index
    %488 = vector.load %arg7[%c0_484, %c1024_485] : memref<16x2048xf32, #tpu.memory_space<vmem>>, vector<16x1024xf32>
    %c991_i32_486 = arith.constant 991 : i32
    %489 = tpu.dynamic_rotate %488 by %c991_i32_486 dim 1 : vector<16x1024xf32>, i32 -> vector<16x1024xf32>
    %c8_487 = arith.constant 8 : index
    %c0_488 = arith.constant 0 : index
    %490 = vector.load %arg1[%c8_487, %c0_488] : memref<9x1024xf32, #tpu.memory_space<vmem>>, vector<1x1024xf32>
    %491 = vector.broadcast %490 : vector<1x1024xf32> to vector<16x1024xf32>
    %492 = arith.mulf %489, %491 : vector<16x1024xf32>
    %c128_489 = arith.constant 128 : index
    %c0_490 = arith.constant 0 : index
    %493 = vector.load %arg9[%c128_489, %c0_490] : memref<144x1024xf32, #tpu.memory_space<vmem>>, vector<16x1024xf32>
    tpu.vector_store %arg9[%c128_489, %c0_490], %492 {strides = array<i32>} : memref<144x1024xf32, #tpu.memory_space<vmem>>, vector<16x1024xf32>,
    %c0_491 = arith.constant 0 : index
    %c0_492 = arith.constant 0 : index
    %494 = vector.load %arg9[%c0_491, %c0_492] : memref<144x1024xf32, #tpu.memory_space<vmem>>, vector<144x256xf32>
    %c0_493 = arith.constant 0 : index
    %c0_494 = arith.constant 0 : index
    %495 = vector.load %arg4[%c0_493, %c0_494] : memref<32x144xbf16, #tpu.memory_space<vmem>>, vector<32x144xbf16>
    %496 = arith.truncf %494 : vector<144x256xf32> to vector<144x256xbf16>
    %cst_495 = arith.constant dense<0.000000e+00> : vector<32x256xf32>
    %497 = tpu.matmul %495, %496, %cst_495 {dimension_numbers = #tpu.dot_dimension_numbers<[1], [0], [0], [1], [0, 0, 1, 1], [], []>} : vector<32x144xbf16>, vector<144x256xbf16>, vector<32x256xf32> -> vector<32x256xf32>
    %cst_496 = arith.constant 0.000000e+00 : f32
    %498 = vector.broadcast %cst_496 : f32 to vector<32x256xf32>
    %499 = arith.maximumf %497, %498 : vector<32x256xf32>
    %c0_497 = arith.constant 0 : index
    %c1024_498 = arith.constant 1024 : index
    %500 = vector.load %arg8[%c0_497, %c1024_498] : memref<32x2048xf32, #tpu.memory_space<vmem>>, vector<32x256xf32>
    tpu.vector_store %arg8[%c0_497, %c1024_498], %499 {strides = array<i32>} : memref<32x2048xf32, #tpu.memory_space<vmem>>, vector<32x256xf32>,
    %c0_499 = arith.constant 0 : index
    %c256_500 = arith.constant 256 : index
    %501 = vector.load %arg9[%c0_499, %c256_500] : memref<144x1024xf32, #tpu.memory_space<vmem>>, vector<144x256xf32>
    %c0_501 = arith.constant 0 : index
    %c0_502 = arith.constant 0 : index
    %502 = vector.load %arg4[%c0_501, %c0_502] : memref<32x144xbf16, #tpu.memory_space<vmem>>, vector<32x144xbf16>
    %503 = arith.truncf %501 : vector<144x256xf32> to vector<144x256xbf16>
    %cst_503 = arith.constant dense<0.000000e+00> : vector<32x256xf32>
    %504 = tpu.matmul %502, %503, %cst_503 {dimension_numbers = #tpu.dot_dimension_numbers<[1], [0], [0], [1], [0, 0, 1, 1], [], []>} : vector<32x144xbf16>, vector<144x256xbf16>, vector<32x256xf32> -> vector<32x256xf32>
    %cst_504 = arith.constant 0.000000e+00 : f32
    %505 = vector.broadcast %cst_504 : f32 to vector<32x256xf32>
    %506 = arith.maximumf %504, %505 : vector<32x256xf32>
    %c0_505 = arith.constant 0 : index
    %c1280_506 = arith.constant 1280 : index
    %507 = vector.load %arg8[%c0_505, %c1280_506] : memref<32x2048xf32, #tpu.memory_space<vmem>>, vector<32x256xf32>
    tpu.vector_store %arg8[%c0_505, %c1280_506], %506 {strides = array<i32>} : memref<32x2048xf32, #tpu.memory_space<vmem>>, vector<32x256xf32>,
    %c0_507 = arith.constant 0 : index
    %c512_508 = arith.constant 512 : index
    %508 = vector.load %arg9[%c0_507, %c512_508] : memref<144x1024xf32, #tpu.memory_space<vmem>>, vector<144x256xf32>
    %c0_509 = arith.constant 0 : index
    %c0_510 = arith.constant 0 : index
    %509 = vector.load %arg4[%c0_509, %c0_510] : memref<32x144xbf16, #tpu.memory_space<vmem>>, vector<32x144xbf16>
    %510 = arith.truncf %508 : vector<144x256xf32> to vector<144x256xbf16>
    %cst_511 = arith.constant dense<0.000000e+00> : vector<32x256xf32>
    %511 = tpu.matmul %509, %510, %cst_511 {dimension_numbers = #tpu.dot_dimension_numbers<[1], [0], [0], [1], [0, 0, 1, 1], [], []>} : vector<32x144xbf16>, vector<144x256xbf16>, vector<32x256xf32> -> vector<32x256xf32>
    %cst_512 = arith.constant 0.000000e+00 : f32
    %512 = vector.broadcast %cst_512 : f32 to vector<32x256xf32>
    %513 = arith.maximumf %511, %512 : vector<32x256xf32>
    %c0_513 = arith.constant 0 : index
    %c1536_514 = arith.constant 1536 : index
    %514 = vector.load %arg8[%c0_513, %c1536_514] : memref<32x2048xf32, #tpu.memory_space<vmem>>, vector<32x256xf32>
    tpu.vector_store %arg8[%c0_513, %c1536_514], %513 {strides = array<i32>} : memref<32x2048xf32, #tpu.memory_space<vmem>>, vector<32x256xf32>,
    %c0_515 = arith.constant 0 : index
    %c768_516 = arith.constant 768 : index
    %515 = vector.load %arg9[%c0_515, %c768_516] : memref<144x1024xf32, #tpu.memory_space<vmem>>, vector<144x256xf32>
    %c0_517 = arith.constant 0 : index
    %c0_518 = arith.constant 0 : index
    %516 = vector.load %arg4[%c0_517, %c0_518] : memref<32x144xbf16, #tpu.memory_space<vmem>>, vector<32x144xbf16>
    %517 = arith.truncf %515 : vector<144x256xf32> to vector<144x256xbf16>
    %cst_519 = arith.constant dense<0.000000e+00> : vector<32x256xf32>
    %518 = tpu.matmul %516, %517, %cst_519 {dimension_numbers = #tpu.dot_dimension_numbers<[1], [0], [0], [1], [0, 0, 1, 1], [], []>} : vector<32x144xbf16>, vector<144x256xbf16>, vector<32x256xf32> -> vector<32x256xf32>
    %cst_520 = arith.constant 0.000000e+00 : f32
    %519 = vector.broadcast %cst_520 : f32 to vector<32x256xf32>
    %520 = arith.maximumf %518, %519 : vector<32x256xf32>
    %c0_521 = arith.constant 0 : index
    %c1792_522 = arith.constant 1792 : index
    %521 = vector.load %arg8[%c0_521, %c1792_522] : memref<32x2048xf32, #tpu.memory_space<vmem>>, vector<32x256xf32>
    tpu.vector_store %arg8[%c0_521, %c1792_522], %520 {strides = array<i32>} : memref<32x2048xf32, #tpu.memory_space<vmem>>, vector<32x256xf32>,
    %cst_523 = arith.constant 0.000000e+00 : f32
    %522 = vector.broadcast %cst_523 : f32 to vector<8x8xf32>
    %c0_524 = arith.constant 0 : index
    %c0_525 = arith.constant 0 : index
    %523 = vector.load %arg6[%c0_524, %c0_525] : memref<8x2048xf32, #tpu.memory_space<vmem>>, vector<8x256xf32>
    %524 = arith.subf %523, %523 : vector<8x256xf32>
    %525 = math.absf %524 : vector<8x256xf32>
    %526 = vector.shape_cast %525 : vector<8x256xf32> to vector<1x8x256xf32>
    %cst_526 = arith.constant dense<0.000000e+00> : vector<1xf32>
    %527 = vector.multi_reduction <add>, %526, %cst_526 [1, 2] : vector<1x8x256xf32> to vector<1xf32>
    %528 = vector.shape_cast %527 : vector<1xf32> to vector<1x1x1xf32>
    %529 = vector.extract %528[0, 0, 0] : f32 from vector<1x1x1xf32>
    %cst_527 = arith.constant 0.000000e+00 : f32
    %530 = arith.addf %cst_527, %529 : f32
    %531 = arith.truncf %523 : vector<8x256xf32> to vector<8x256xbf16>
    %cst_528 = arith.constant dense<0.000000e+00> : vector<8x8xf32>
    %532 = tpu.matmul %531, %531, %cst_528 {dimension_numbers = #tpu.dot_dimension_numbers<[1], [1], [0], [0], [0, 0, 1, 0], [], []>} : vector<8x256xbf16>, vector<8x256xbf16>, vector<8x8xf32> -> vector<8x8xf32>
    %533 = arith.addf %522, %532 : vector<8x8xf32>
    %c0_529 = arith.constant 0 : index
    %c256_530 = arith.constant 256 : index
    %534 = vector.load %arg6[%c0_529, %c256_530] : memref<8x2048xf32, #tpu.memory_space<vmem>>, vector<8x256xf32>
    %535 = arith.subf %534, %534 : vector<8x256xf32>
    %536 = math.absf %535 : vector<8x256xf32>
    %537 = vector.shape_cast %536 : vector<8x256xf32> to vector<1x8x256xf32>
    %cst_531 = arith.constant dense<0.000000e+00> : vector<1xf32>
    %538 = vector.multi_reduction <add>, %537, %cst_531 [1, 2] : vector<1x8x256xf32> to vector<1xf32>
    %539 = vector.shape_cast %538 : vector<1xf32> to vector<1x1x1xf32>
    %540 = vector.extract %539[0, 0, 0] : f32 from vector<1x1x1xf32>
    %541 = arith.addf %530, %540 : f32
    %542 = arith.truncf %534 : vector<8x256xf32> to vector<8x256xbf16>
    %cst_532 = arith.constant dense<0.000000e+00> : vector<8x8xf32>
    %543 = tpu.matmul %542, %542, %cst_532 {dimension_numbers = #tpu.dot_dimension_numbers<[1], [1], [0], [0], [0, 0, 1, 0], [], []>} : vector<8x256xbf16>, vector<8x256xbf16>, vector<8x8xf32> -> vector<8x8xf32>
    %544 = arith.addf %533, %543 : vector<8x8xf32>
    %c0_533 = arith.constant 0 : index
    %c512_534 = arith.constant 512 : index
    %545 = vector.load %arg6[%c0_533, %c512_534] : memref<8x2048xf32, #tpu.memory_space<vmem>>, vector<8x256xf32>
    %546 = arith.subf %545, %545 : vector<8x256xf32>
    %547 = math.absf %546 : vector<8x256xf32>
    %548 = vector.shape_cast %547 : vector<8x256xf32> to vector<1x8x256xf32>
    %cst_535 = arith.constant dense<0.000000e+00> : vector<1xf32>
    %549 = vector.multi_reduction <add>, %548, %cst_535 [1, 2] : vector<1x8x256xf32> to vector<1xf32>
    %550 = vector.shape_cast %549 : vector<1xf32> to vector<1x1x1xf32>
    %551 = vector.extract %550[0, 0, 0] : f32 from vector<1x1x1xf32>
    %552 = arith.addf %541, %551 : f32
    %553 = arith.truncf %545 : vector<8x256xf32> to vector<8x256xbf16>
    %cst_536 = arith.constant dense<0.000000e+00> : vector<8x8xf32>
    %554 = tpu.matmul %553, %553, %cst_536 {dimension_numbers = #tpu.dot_dimension_numbers<[1], [1], [0], [0], [0, 0, 1, 0], [], []>} : vector<8x256xbf16>, vector<8x256xbf16>, vector<8x8xf32> -> vector<8x8xf32>
    %555 = arith.addf %544, %554 : vector<8x8xf32>
    %c0_537 = arith.constant 0 : index
    %c768_538 = arith.constant 768 : index
    %556 = vector.load %arg6[%c0_537, %c768_538] : memref<8x2048xf32, #tpu.memory_space<vmem>>, vector<8x256xf32>
    %557 = arith.subf %556, %556 : vector<8x256xf32>
    %558 = math.absf %557 : vector<8x256xf32>
    %559 = vector.shape_cast %558 : vector<8x256xf32> to vector<1x8x256xf32>
    %cst_539 = arith.constant dense<0.000000e+00> : vector<1xf32>
    %560 = vector.multi_reduction <add>, %559, %cst_539 [1, 2] : vector<1x8x256xf32> to vector<1xf32>
    %561 = vector.shape_cast %560 : vector<1xf32> to vector<1x1x1xf32>
    %562 = vector.extract %561[0, 0, 0] : f32 from vector<1x1x1xf32>
    %563 = arith.addf %552, %562 : f32
    %564 = arith.truncf %556 : vector<8x256xf32> to vector<8x256xbf16>
    %cst_540 = arith.constant dense<0.000000e+00> : vector<8x8xf32>
    %565 = tpu.matmul %564, %564, %cst_540 {dimension_numbers = #tpu.dot_dimension_numbers<[1], [1], [0], [0], [0, 0, 1, 0], [], []>} : vector<8x256xbf16>, vector<8x256xbf16>, vector<8x8xf32> -> vector<8x8xf32>
    %566 = arith.addf %555, %565 : vector<8x8xf32>
    %cst_541 = arith.constant 1.22070313E-4 : f32
    %567 = vector.broadcast %cst_541 : f32 to vector<8x8xf32>
    %568 = arith.mulf %566, %567 : vector<8x8xf32>
    %569 = arith.subf %568, %568 : vector<8x8xf32>
    %570 = math.absf %569 : vector<8x8xf32>
    %571 = vector.shape_cast %570 : vector<8x8xf32> to vector<1x8x8xf32>
    %cst_542 = arith.constant dense<0.000000e+00> : vector<1xf32>
    %572 = vector.multi_reduction <add>, %571, %cst_542 [1, 2] : vector<1x8x8xf32> to vector<1xf32>
    %573 = vector.shape_cast %572 : vector<1xf32> to vector<1x1x1xf32>
    %574 = vector.extract %573[0, 0, 0] : f32 from vector<1x1x1xf32>
    %cst_543 = arith.constant 0.000000e+00 : f32
    %575 = arith.addf %cst_543, %574 : f32
    %cst_544 = arith.constant 0.000000e+00 : f32
    %576 = vector.broadcast %cst_544 : f32 to vector<8x8xf32>
    %c0_545 = arith.constant 0 : index
    %c1024_546 = arith.constant 1024 : index
    %577 = vector.load %arg6[%c0_545, %c1024_546] : memref<8x2048xf32, #tpu.memory_space<vmem>>, vector<8x256xf32>
    %578 = arith.subf %577, %577 : vector<8x256xf32>
    %579 = math.absf %578 : vector<8x256xf32>
    %580 = vector.shape_cast %579 : vector<8x256xf32> to vector<1x8x256xf32>
    %cst_547 = arith.constant dense<0.000000e+00> : vector<1xf32>
    %581 = vector.multi_reduction <add>, %580, %cst_547 [1, 2] : vector<1x8x256xf32> to vector<1xf32>
    %582 = vector.shape_cast %581 : vector<1xf32> to vector<1x1x1xf32>
    %583 = vector.extract %582[0, 0, 0] : f32 from vector<1x1x1xf32>
    %584 = arith.addf %563, %583 : f32
    %585 = arith.truncf %577 : vector<8x256xf32> to vector<8x256xbf16>
    %cst_548 = arith.constant dense<0.000000e+00> : vector<8x8xf32>
    %586 = tpu.matmul %585, %585, %cst_548 {dimension_numbers = #tpu.dot_dimension_numbers<[1], [1], [0], [0], [0, 0, 1, 0], [], []>} : vector<8x256xbf16>, vector<8x256xbf16>, vector<8x8xf32> -> vector<8x8xf32>
    %587 = arith.addf %576, %586 : vector<8x8xf32>
    %c0_549 = arith.constant 0 : index
    %c1280_550 = arith.constant 1280 : index
    %588 = vector.load %arg6[%c0_549, %c1280_550] : memref<8x2048xf32, #tpu.memory_space<vmem>>, vector<8x256xf32>
    %589 = arith.subf %588, %588 : vector<8x256xf32>
    %590 = math.absf %589 : vector<8x256xf32>
    %591 = vector.shape_cast %590 : vector<8x256xf32> to vector<1x8x256xf32>
    %cst_551 = arith.constant dense<0.000000e+00> : vector<1xf32>
    %592 = vector.multi_reduction <add>, %591, %cst_551 [1, 2] : vector<1x8x256xf32> to vector<1xf32>
    %593 = vector.shape_cast %592 : vector<1xf32> to vector<1x1x1xf32>
    %594 = vector.extract %593[0, 0, 0] : f32 from vector<1x1x1xf32>
    %595 = arith.addf %584, %594 : f32
    %596 = arith.truncf %588 : vector<8x256xf32> to vector<8x256xbf16>
    %cst_552 = arith.constant dense<0.000000e+00> : vector<8x8xf32>
    %597 = tpu.matmul %596, %596, %cst_552 {dimension_numbers = #tpu.dot_dimension_numbers<[1], [1], [0], [0], [0, 0, 1, 0], [], []>} : vector<8x256xbf16>, vector<8x256xbf16>, vector<8x8xf32> -> vector<8x8xf32>
    %598 = arith.addf %587, %597 : vector<8x8xf32>
    %c0_553 = arith.constant 0 : index
    %c1536_554 = arith.constant 1536 : index
    %599 = vector.load %arg6[%c0_553, %c1536_554] : memref<8x2048xf32, #tpu.memory_space<vmem>>, vector<8x256xf32>
    %600 = arith.subf %599, %599 : vector<8x256xf32>
    %601 = math.absf %600 : vector<8x256xf32>
    %602 = vector.shape_cast %601 : vector<8x256xf32> to vector<1x8x256xf32>
    %cst_555 = arith.constant dense<0.000000e+00> : vector<1xf32>
    %603 = vector.multi_reduction <add>, %602, %cst_555 [1, 2] : vector<1x8x256xf32> to vector<1xf32>
    %604 = vector.shape_cast %603 : vector<1xf32> to vector<1x1x1xf32>
    %605 = vector.extract %604[0, 0, 0] : f32 from vector<1x1x1xf32>
    %606 = arith.addf %595, %605 : f32
    %607 = arith.truncf %599 : vector<8x256xf32> to vector<8x256xbf16>
    %cst_556 = arith.constant dense<0.000000e+00> : vector<8x8xf32>
    %608 = tpu.matmul %607, %607, %cst_556 {dimension_numbers = #tpu.dot_dimension_numbers<[1], [1], [0], [0], [0, 0, 1, 0], [], []>} : vector<8x256xbf16>, vector<8x256xbf16>, vector<8x8xf32> -> vector<8x8xf32>
    %609 = arith.addf %598, %608 : vector<8x8xf32>
    %c0_557 = arith.constant 0 : index
    %c1792_558 = arith.constant 1792 : index
    %610 = vector.load %arg6[%c0_557, %c1792_558] : memref<8x2048xf32, #tpu.memory_space<vmem>>, vector<8x256xf32>
    %611 = arith.subf %610, %610 : vector<8x256xf32>
    %612 = math.absf %611 : vector<8x256xf32>
    %613 = vector.shape_cast %612 : vector<8x256xf32> to vector<1x8x256xf32>
    %cst_559 = arith.constant dense<0.000000e+00> : vector<1xf32>
    %614 = vector.multi_reduction <add>, %613, %cst_559 [1, 2] : vector<1x8x256xf32> to vector<1xf32>
    %615 = vector.shape_cast %614 : vector<1xf32> to vector<1x1x1xf32>
    %616 = vector.extract %615[0, 0, 0] : f32 from vector<1x1x1xf32>
    %617 = arith.addf %606, %616 : f32
    %618 = arith.truncf %610 : vector<8x256xf32> to vector<8x256xbf16>
    %cst_560 = arith.constant dense<0.000000e+00> : vector<8x8xf32>
    %619 = tpu.matmul %618, %618, %cst_560 {dimension_numbers = #tpu.dot_dimension_numbers<[1], [1], [0], [0], [0, 0, 1, 0], [], []>} : vector<8x256xbf16>, vector<8x256xbf16>, vector<8x8xf32> -> vector<8x8xf32>
    %620 = arith.addf %609, %619 : vector<8x8xf32>
    %cst_561 = arith.constant 1.22070313E-4 : f32
    %621 = vector.broadcast %cst_561 : f32 to vector<8x8xf32>
    %622 = arith.mulf %620, %621 : vector<8x8xf32>
    %623 = arith.subf %622, %622 : vector<8x8xf32>
    %624 = math.absf %623 : vector<8x8xf32>
    %625 = vector.shape_cast %624 : vector<8x8xf32> to vector<1x8x8xf32>
    %cst_562 = arith.constant dense<0.000000e+00> : vector<1xf32>
    %626 = vector.multi_reduction <add>, %625, %cst_562 [1, 2] : vector<1x8x8xf32> to vector<1xf32>
    %627 = vector.shape_cast %626 : vector<1xf32> to vector<1x1x1xf32>
    %628 = vector.extract %627[0, 0, 0] : f32 from vector<1x1x1xf32>
    %629 = arith.addf %575, %628 : f32
    %cst_563 = arith.constant 1.638400e+04 : f32
    %630 = arith.divf %617, %cst_563 : f32
    %cst_564 = arith.constant 0.000000e+00 : f32
    %631 = arith.addf %cst_564, %630 : f32
    %cst_565 = arith.constant 1.280000e+02 : f32
    %632 = arith.divf %629, %cst_565 : f32
    %cst_566 = arith.constant 0.000000e+00 : f32
    %633 = arith.addf %cst_566, %632 : f32
    %cst_567 = arith.constant 0.000000e+00 : f32
    %634 = vector.broadcast %cst_567 : f32 to vector<16x16xf32>
    %c0_568 = arith.constant 0 : index
    %c0_569 = arith.constant 0 : index
    %635 = vector.load %arg7[%c0_568, %c0_569] : memref<16x2048xf32, #tpu.memory_space<vmem>>, vector<16x256xf32>
    %636 = arith.subf %635, %635 : vector<16x256xf32>
    %637 = math.absf %636 : vector<16x256xf32>
    %638 = vector.shape_cast %637 : vector<16x256xf32> to vector<1x16x256xf32>
    %cst_570 = arith.constant dense<0.000000e+00> : vector<1xf32>
    %639 = vector.multi_reduction <add>, %638, %cst_570 [1, 2] : vector<1x16x256xf32> to vector<1xf32>
    %640 = vector.shape_cast %639 : vector<1xf32> to vector<1x1x1xf32>
    %641 = vector.extract %640[0, 0, 0] : f32 from vector<1x1x1xf32>
    %cst_571 = arith.constant 0.000000e+00 : f32
    %642 = arith.addf %cst_571, %641 : f32
    %643 = arith.truncf %635 : vector<16x256xf32> to vector<16x256xbf16>
    %cst_572 = arith.constant dense<0.000000e+00> : vector<16x16xf32>
    %644 = tpu.matmul %643, %643, %cst_572 {dimension_numbers = #tpu.dot_dimension_numbers<[1], [1], [0], [0], [0, 0, 1, 0], [], []>} : vector<16x256xbf16>, vector<16x256xbf16>, vector<16x16xf32> -> vector<16x16xf32>
    %645 = arith.addf %634, %644 : vector<16x16xf32>
    %c0_573 = arith.constant 0 : index
    %c256_574 = arith.constant 256 : index
    %646 = vector.load %arg7[%c0_573, %c256_574] : memref<16x2048xf32, #tpu.memory_space<vmem>>, vector<16x256xf32>
    %647 = arith.subf %646, %646 : vector<16x256xf32>
    %648 = math.absf %647 : vector<16x256xf32>
    %649 = vector.shape_cast %648 : vector<16x256xf32> to vector<1x16x256xf32>
    %cst_575 = arith.constant dense<0.000000e+00> : vector<1xf32>
    %650 = vector.multi_reduction <add>, %649, %cst_575 [1, 2] : vector<1x16x256xf32> to vector<1xf32>
    %651 = vector.shape_cast %650 : vector<1xf32> to vector<1x1x1xf32>
    %652 = vector.extract %651[0, 0, 0] : f32 from vector<1x1x1xf32>
    %653 = arith.addf %642, %652 : f32
    %654 = arith.truncf %646 : vector<16x256xf32> to vector<16x256xbf16>
    %cst_576 = arith.constant dense<0.000000e+00> : vector<16x16xf32>
    %655 = tpu.matmul %654, %654, %cst_576 {dimension_numbers = #tpu.dot_dimension_numbers<[1], [1], [0], [0], [0, 0, 1, 0], [], []>} : vector<16x256xbf16>, vector<16x256xbf16>, vector<16x16xf32> -> vector<16x16xf32>
    %656 = arith.addf %645, %655 : vector<16x16xf32>
    %c0_577 = arith.constant 0 : index
    %c512_578 = arith.constant 512 : index
    %657 = vector.load %arg7[%c0_577, %c512_578] : memref<16x2048xf32, #tpu.memory_space<vmem>>, vector<16x256xf32>
    %658 = arith.subf %657, %657 : vector<16x256xf32>
    %659 = math.absf %658 : vector<16x256xf32>
    %660 = vector.shape_cast %659 : vector<16x256xf32> to vector<1x16x256xf32>
    %cst_579 = arith.constant dense<0.000000e+00> : vector<1xf32>
    %661 = vector.multi_reduction <add>, %660, %cst_579 [1, 2] : vector<1x16x256xf32> to vector<1xf32>
    %662 = vector.shape_cast %661 : vector<1xf32> to vector<1x1x1xf32>
    %663 = vector.extract %662[0, 0, 0] : f32 from vector<1x1x1xf32>
    %664 = arith.addf %653, %663 : f32
    %665 = arith.truncf %657 : vector<16x256xf32> to vector<16x256xbf16>
    %cst_580 = arith.constant dense<0.000000e+00> : vector<16x16xf32>
    %666 = tpu.matmul %665, %665, %cst_580 {dimension_numbers = #tpu.dot_dimension_numbers<[1], [1], [0], [0], [0, 0, 1, 0], [], []>} : vector<16x256xbf16>, vector<16x256xbf16>, vector<16x16xf32> -> vector<16x16xf32>
    %667 = arith.addf %656, %666 : vector<16x16xf32>
    %c0_581 = arith.constant 0 : index
    %c768_582 = arith.constant 768 : index
    %668 = vector.load %arg7[%c0_581, %c768_582] : memref<16x2048xf32, #tpu.memory_space<vmem>>, vector<16x256xf32>
    %669 = arith.subf %668, %668 : vector<16x256xf32>
    %670 = math.absf %669 : vector<16x256xf32>
    %671 = vector.shape_cast %670 : vector<16x256xf32> to vector<1x16x256xf32>
    %cst_583 = arith.constant dense<0.000000e+00> : vector<1xf32>
    %672 = vector.multi_reduction <add>, %671, %cst_583 [1, 2] : vector<1x16x256xf32> to vector<1xf32>
    %673 = vector.shape_cast %672 : vector<1xf32> to vector<1x1x1xf32>
    %674 = vector.extract %673[0, 0, 0] : f32 from vector<1x1x1xf32>
    %675 = arith.addf %664, %674 : f32
    %676 = arith.truncf %668 : vector<16x256xf32> to vector<16x256xbf16>
    %cst_584 = arith.constant dense<0.000000e+00> : vector<16x16xf32>
    %677 = tpu.matmul %676, %676, %cst_584 {dimension_numbers = #tpu.dot_dimension_numbers<[1], [1], [0], [0], [0, 0, 1, 0], [], []>} : vector<16x256xbf16>, vector<16x256xbf16>, vector<16x16xf32> -> vector<16x16xf32>
    %678 = arith.addf %667, %677 : vector<16x16xf32>
    %cst_585 = arith.constant 6.10351563E-5 : f32
    %679 = vector.broadcast %cst_585 : f32 to vector<16x16xf32>
    %680 = arith.mulf %678, %679 : vector<16x16xf32>
    %681 = arith.subf %680, %680 : vector<16x16xf32>
    %682 = math.absf %681 : vector<16x16xf32>
    %683 = vector.shape_cast %682 : vector<16x16xf32> to vector<1x16x16xf32>
    %cst_586 = arith.constant dense<0.000000e+00> : vector<1xf32>
    %684 = vector.multi_reduction <add>, %683, %cst_586 [1, 2] : vector<1x16x16xf32> to vector<1xf32>
    %685 = vector.shape_cast %684 : vector<1xf32> to vector<1x1x1xf32>
    %686 = vector.extract %685[0, 0, 0] : f32 from vector<1x1x1xf32>
    %cst_587 = arith.constant 0.000000e+00 : f32
    %687 = arith.addf %cst_587, %686 : f32
    %cst_588 = arith.constant 0.000000e+00 : f32
    %688 = vector.broadcast %cst_588 : f32 to vector<16x16xf32>
    %c0_589 = arith.constant 0 : index
    %c1024_590 = arith.constant 1024 : index
    %689 = vector.load %arg7[%c0_589, %c1024_590] : memref<16x2048xf32, #tpu.memory_space<vmem>>, vector<16x256xf32>
    %690 = arith.subf %689, %689 : vector<16x256xf32>
    %691 = math.absf %690 : vector<16x256xf32>
    %692 = vector.shape_cast %691 : vector<16x256xf32> to vector<1x16x256xf32>
    %cst_591 = arith.constant dense<0.000000e+00> : vector<1xf32>
    %693 = vector.multi_reduction <add>, %692, %cst_591 [1, 2] : vector<1x16x256xf32> to vector<1xf32>
    %694 = vector.shape_cast %693 : vector<1xf32> to vector<1x1x1xf32>
    %695 = vector.extract %694[0, 0, 0] : f32 from vector<1x1x1xf32>
    %696 = arith.addf %675, %695 : f32
    %697 = arith.truncf %689 : vector<16x256xf32> to vector<16x256xbf16>
    %cst_592 = arith.constant dense<0.000000e+00> : vector<16x16xf32>
    %698 = tpu.matmul %697, %697, %cst_592 {dimension_numbers = #tpu.dot_dimension_numbers<[1], [1], [0], [0], [0, 0, 1, 0], [], []>} : vector<16x256xbf16>, vector<16x256xbf16>, vector<16x16xf32> -> vector<16x16xf32>
    %699 = arith.addf %688, %698 : vector<16x16xf32>
    %c0_593 = arith.constant 0 : index
    %c1280_594 = arith.constant 1280 : index
    %700 = vector.load %arg7[%c0_593, %c1280_594] : memref<16x2048xf32, #tpu.memory_space<vmem>>, vector<16x256xf32>
    %701 = arith.subf %700, %700 : vector<16x256xf32>
    %702 = math.absf %701 : vector<16x256xf32>
    %703 = vector.shape_cast %702 : vector<16x256xf32> to vector<1x16x256xf32>
    %cst_595 = arith.constant dense<0.000000e+00> : vector<1xf32>
    %704 = vector.multi_reduction <add>, %703, %cst_595 [1, 2] : vector<1x16x256xf32> to vector<1xf32>
    %705 = vector.shape_cast %704 : vector<1xf32> to vector<1x1x1xf32>
    %706 = vector.extract %705[0, 0, 0] : f32 from vector<1x1x1xf32>
    %707 = arith.addf %696, %706 : f32
    %708 = arith.truncf %700 : vector<16x256xf32> to vector<16x256xbf16>
    %cst_596 = arith.constant dense<0.000000e+00> : vector<16x16xf32>
    %709 = tpu.matmul %708, %708, %cst_596 {dimension_numbers = #tpu.dot_dimension_numbers<[1], [1], [0], [0], [0, 0, 1, 0], [], []>} : vector<16x256xbf16>, vector<16x256xbf16>, vector<16x16xf32> -> vector<16x16xf32>
    %710 = arith.addf %699, %709 : vector<16x16xf32>
    %c0_597 = arith.constant 0 : index
    %c1536_598 = arith.constant 1536 : index
    %711 = vector.load %arg7[%c0_597, %c1536_598] : memref<16x2048xf32, #tpu.memory_space<vmem>>, vector<16x256xf32>
    %712 = arith.subf %711, %711 : vector<16x256xf32>
    %713 = math.absf %712 : vector<16x256xf32>
    %714 = vector.shape_cast %713 : vector<16x256xf32> to vector<1x16x256xf32>
    %cst_599 = arith.constant dense<0.000000e+00> : vector<1xf32>
    %715 = vector.multi_reduction <add>, %714, %cst_599 [1, 2] : vector<1x16x256xf32> to vector<1xf32>
    %716 = vector.shape_cast %715 : vector<1xf32> to vector<1x1x1xf32>
    %717 = vector.extract %716[0, 0, 0] : f32 from vector<1x1x1xf32>
    %718 = arith.addf %707, %717 : f32
    %719 = arith.truncf %711 : vector<16x256xf32> to vector<16x256xbf16>
    %cst_600 = arith.constant dense<0.000000e+00> : vector<16x16xf32>
    %720 = tpu.matmul %719, %719, %cst_600 {dimension_numbers = #tpu.dot_dimension_numbers<[1], [1], [0], [0], [0, 0, 1, 0], [], []>} : vector<16x256xbf16>, vector<16x256xbf16>, vector<16x16xf32> -> vector<16x16xf32>
    %721 = arith.addf %710, %720 : vector<16x16xf32>
    %c0_601 = arith.constant 0 : index
    %c1792_602 = arith.constant 1792 : index
    %722 = vector.load %arg7[%c0_601, %c1792_602] : memref<16x2048xf32, #tpu.memory_space<vmem>>, vector<16x256xf32>
    %723 = arith.subf %722, %722 : vector<16x256xf32>
    %724 = math.absf %723 : vector<16x256xf32>
    %725 = vector.shape_cast %724 : vector<16x256xf32> to vector<1x16x256xf32>
    %cst_603 = arith.constant dense<0.000000e+00> : vector<1xf32>
    %726 = vector.multi_reduction <add>, %725, %cst_603 [1, 2] : vector<1x16x256xf32> to vector<1xf32>
    %727 = vector.shape_cast %726 : vector<1xf32> to vector<1x1x1xf32>
    %728 = vector.extract %727[0, 0, 0] : f32 from vector<1x1x1xf32>
    %729 = arith.addf %718, %728 : f32
    %730 = arith.truncf %722 : vector<16x256xf32> to vector<16x256xbf16>
    %cst_604 = arith.constant dense<0.000000e+00> : vector<16x16xf32>
    %731 = tpu.matmul %730, %730, %cst_604 {dimension_numbers = #tpu.dot_dimension_numbers<[1], [1], [0], [0], [0, 0, 1, 0], [], []>} : vector<16x256xbf16>, vector<16x256xbf16>, vector<16x16xf32> -> vector<16x16xf32>
    %732 = arith.addf %721, %731 : vector<16x16xf32>
    %cst_605 = arith.constant 6.10351563E-5 : f32
    %733 = vector.broadcast %cst_605 : f32 to vector<16x16xf32>
    %734 = arith.mulf %732, %733 : vector<16x16xf32>
    %735 = arith.subf %734, %734 : vector<16x16xf32>
    %736 = math.absf %735 : vector<16x16xf32>
    %737 = vector.shape_cast %736 : vector<16x16xf32> to vector<1x16x16xf32>
    %cst_606 = arith.constant dense<0.000000e+00> : vector<1xf32>
    %738 = vector.multi_reduction <add>, %737, %cst_606 [1, 2] : vector<1x16x16xf32> to vector<1xf32>
    %739 = vector.shape_cast %738 : vector<1xf32> to vector<1x1x1xf32>
    %740 = vector.extract %739[0, 0, 0] : f32 from vector<1x1x1xf32>
    %741 = arith.addf %687, %740 : f32
    %cst_607 = arith.constant 3.276800e+04 : f32
    %742 = arith.divf %729, %cst_607 : f32
    %743 = arith.addf %631, %742 : f32
    %cst_608 = arith.constant 5.120000e+02 : f32
    %744 = arith.divf %741, %cst_608 : f32
    %745 = arith.addf %633, %744 : f32
    %cst_609 = arith.constant 0.000000e+00 : f32
    %746 = vector.broadcast %cst_609 : f32 to vector<32x32xf32>
    %c0_610 = arith.constant 0 : index
    %c0_611 = arith.constant 0 : index
    %747 = vector.load %arg8[%c0_610, %c0_611] : memref<32x2048xf32, #tpu.memory_space<vmem>>, vector<32x256xf32>
    %748 = arith.subf %747, %747 : vector<32x256xf32>
    %749 = math.absf %748 : vector<32x256xf32>
    %750 = vector.shape_cast %749 : vector<32x256xf32> to vector<1x32x256xf32>
    %cst_612 = arith.constant dense<0.000000e+00> : vector<1xf32>
    %751 = vector.multi_reduction <add>, %750, %cst_612 [1, 2] : vector<1x32x256xf32> to vector<1xf32>
    %752 = vector.shape_cast %751 : vector<1xf32> to vector<1x1x1xf32>
    %753 = vector.extract %752[0, 0, 0] : f32 from vector<1x1x1xf32>
    %cst_613 = arith.constant 0.000000e+00 : f32
    %754 = arith.addf %cst_613, %753 : f32
    %755 = arith.truncf %747 : vector<32x256xf32> to vector<32x256xbf16>
    %cst_614 = arith.constant dense<0.000000e+00> : vector<32x32xf32>
    %756 = tpu.matmul %755, %755, %cst_614 {dimension_numbers = #tpu.dot_dimension_numbers<[1], [1], [0], [0], [0, 0, 1, 0], [], []>} : vector<32x256xbf16>, vector<32x256xbf16>, vector<32x32xf32> -> vector<32x32xf32>
    %757 = arith.addf %746, %756 : vector<32x32xf32>
    %c0_615 = arith.constant 0 : index
    %c256_616 = arith.constant 256 : index
    %758 = vector.load %arg8[%c0_615, %c256_616] : memref<32x2048xf32, #tpu.memory_space<vmem>>, vector<32x256xf32>
    %759 = arith.subf %758, %758 : vector<32x256xf32>
    %760 = math.absf %759 : vector<32x256xf32>
    %761 = vector.shape_cast %760 : vector<32x256xf32> to vector<1x32x256xf32>
    %cst_617 = arith.constant dense<0.000000e+00> : vector<1xf32>
    %762 = vector.multi_reduction <add>, %761, %cst_617 [1, 2] : vector<1x32x256xf32> to vector<1xf32>
    %763 = vector.shape_cast %762 : vector<1xf32> to vector<1x1x1xf32>
    %764 = vector.extract %763[0, 0, 0] : f32 from vector<1x1x1xf32>
    %765 = arith.addf %754, %764 : f32
    %766 = arith.truncf %758 : vector<32x256xf32> to vector<32x256xbf16>
    %cst_618 = arith.constant dense<0.000000e+00> : vector<32x32xf32>
    %767 = tpu.matmul %766, %766, %cst_618 {dimension_numbers = #tpu.dot_dimension_numbers<[1], [1], [0], [0], [0, 0, 1, 0], [], []>} : vector<32x256xbf16>, vector<32x256xbf16>, vector<32x32xf32> -> vector<32x32xf32>
    %768 = arith.addf %757, %767 : vector<32x32xf32>
    %c0_619 = arith.constant 0 : index
    %c512_620 = arith.constant 512 : index
    %769 = vector.load %arg8[%c0_619, %c512_620] : memref<32x2048xf32, #tpu.memory_space<vmem>>, vector<32x256xf32>
    %770 = arith.subf %769, %769 : vector<32x256xf32>
    %771 = math.absf %770 : vector<32x256xf32>
    %772 = vector.shape_cast %771 : vector<32x256xf32> to vector<1x32x256xf32>
    %cst_621 = arith.constant dense<0.000000e+00> : vector<1xf32>
    %773 = vector.multi_reduction <add>, %772, %cst_621 [1, 2] : vector<1x32x256xf32> to vector<1xf32>
    %774 = vector.shape_cast %773 : vector<1xf32> to vector<1x1x1xf32>
    %775 = vector.extract %774[0, 0, 0] : f32 from vector<1x1x1xf32>
    %776 = arith.addf %765, %775 : f32
    %777 = arith.truncf %769 : vector<32x256xf32> to vector<32x256xbf16>
    %cst_622 = arith.constant dense<0.000000e+00> : vector<32x32xf32>
    %778 = tpu.matmul %777, %777, %cst_622 {dimension_numbers = #tpu.dot_dimension_numbers<[1], [1], [0], [0], [0, 0, 1, 0], [], []>} : vector<32x256xbf16>, vector<32x256xbf16>, vector<32x32xf32> -> vector<32x32xf32>
    %779 = arith.addf %768, %778 : vector<32x32xf32>
    %c0_623 = arith.constant 0 : index
    %c768_624 = arith.constant 768 : index
    %780 = vector.load %arg8[%c0_623, %c768_624] : memref<32x2048xf32, #tpu.memory_space<vmem>>, vector<32x256xf32>
    %781 = arith.subf %780, %780 : vector<32x256xf32>
    %782 = math.absf %781 : vector<32x256xf32>
    %783 = vector.shape_cast %782 : vector<32x256xf32> to vector<1x32x256xf32>
    %cst_625 = arith.constant dense<0.000000e+00> : vector<1xf32>
    %784 = vector.multi_reduction <add>, %783, %cst_625 [1, 2] : vector<1x32x256xf32> to vector<1xf32>
    %785 = vector.shape_cast %784 : vector<1xf32> to vector<1x1x1xf32>
    %786 = vector.extract %785[0, 0, 0] : f32 from vector<1x1x1xf32>
    %787 = arith.addf %776, %786 : f32
    %788 = arith.truncf %780 : vector<32x256xf32> to vector<32x256xbf16>
    %cst_626 = arith.constant dense<0.000000e+00> : vector<32x32xf32>
    %789 = tpu.matmul %788, %788, %cst_626 {dimension_numbers = #tpu.dot_dimension_numbers<[1], [1], [0], [0], [0, 0, 1, 0], [], []>} : vector<32x256xbf16>, vector<32x256xbf16>, vector<32x32xf32> -> vector<32x32xf32>
    %790 = arith.addf %779, %789 : vector<32x32xf32>
    %cst_627 = arith.constant 3.05175781E-5 : f32
    %791 = vector.broadcast %cst_627 : f32 to vector<32x32xf32>
    %792 = arith.mulf %790, %791 : vector<32x32xf32>
    %793 = arith.subf %792, %792 : vector<32x32xf32>
    %794 = math.absf %793 : vector<32x32xf32>
    %795 = vector.shape_cast %794 : vector<32x32xf32> to vector<1x32x32xf32>
    %cst_628 = arith.constant dense<0.000000e+00> : vector<1xf32>
    %796 = vector.multi_reduction <add>, %795, %cst_628 [1, 2] : vector<1x32x32xf32> to vector<1xf32>
    %797 = vector.shape_cast %796 : vector<1xf32> to vector<1x1x1xf32>
    %798 = vector.extract %797[0, 0, 0] : f32 from vector<1x1x1xf32>
    %cst_629 = arith.constant 0.000000e+00 : f32
    %799 = arith.addf %cst_629, %798 : f32
    %cst_630 = arith.constant 0.000000e+00 : f32
    %800 = vector.broadcast %cst_630 : f32 to vector<32x32xf32>
    %c0_631 = arith.constant 0 : index
    %c1024_632 = arith.constant 1024 : index
    %801 = vector.load %arg8[%c0_631, %c1024_632] : memref<32x2048xf32, #tpu.memory_space<vmem>>, vector<32x256xf32>
    %802 = arith.subf %801, %801 : vector<32x256xf32>
    %803 = math.absf %802 : vector<32x256xf32>
    %804 = vector.shape_cast %803 : vector<32x256xf32> to vector<1x32x256xf32>
    %cst_633 = arith.constant dense<0.000000e+00> : vector<1xf32>
    %805 = vector.multi_reduction <add>, %804, %cst_633 [1, 2] : vector<1x32x256xf32> to vector<1xf32>
    %806 = vector.shape_cast %805 : vector<1xf32> to vector<1x1x1xf32>
    %807 = vector.extract %806[0, 0, 0] : f32 from vector<1x1x1xf32>
    %808 = arith.addf %787, %807 : f32
    %809 = arith.truncf %801 : vector<32x256xf32> to vector<32x256xbf16>
    %cst_634 = arith.constant dense<0.000000e+00> : vector<32x32xf32>
    %810 = tpu.matmul %809, %809, %cst_634 {dimension_numbers = #tpu.dot_dimension_numbers<[1], [1], [0], [0], [0, 0, 1, 0], [], []>} : vector<32x256xbf16>, vector<32x256xbf16>, vector<32x32xf32> -> vector<32x32xf32>
    %811 = arith.addf %800, %810 : vector<32x32xf32>
    %c0_635 = arith.constant 0 : index
    %c1280_636 = arith.constant 1280 : index
    %812 = vector.load %arg8[%c0_635, %c1280_636] : memref<32x2048xf32, #tpu.memory_space<vmem>>, vector<32x256xf32>
    %813 = arith.subf %812, %812 : vector<32x256xf32>
    %814 = math.absf %813 : vector<32x256xf32>
    %815 = vector.shape_cast %814 : vector<32x256xf32> to vector<1x32x256xf32>
    %cst_637 = arith.constant dense<0.000000e+00> : vector<1xf32>
    %816 = vector.multi_reduction <add>, %815, %cst_637 [1, 2] : vector<1x32x256xf32> to vector<1xf32>
    %817 = vector.shape_cast %816 : vector<1xf32> to vector<1x1x1xf32>
    %818 = vector.extract %817[0, 0, 0] : f32 from vector<1x1x1xf32>
    %819 = arith.addf %808, %818 : f32
    %820 = arith.truncf %812 : vector<32x256xf32> to vector<32x256xbf16>
    %cst_638 = arith.constant dense<0.000000e+00> : vector<32x32xf32>
    %821 = tpu.matmul %820, %820, %cst_638 {dimension_numbers = #tpu.dot_dimension_numbers<[1], [1], [0], [0], [0, 0, 1, 0], [], []>} : vector<32x256xbf16>, vector<32x256xbf16>, vector<32x32xf32> -> vector<32x32xf32>
    %822 = arith.addf %811, %821 : vector<32x32xf32>
    %c0_639 = arith.constant 0 : index
    %c1536_640 = arith.constant 1536 : index
    %823 = vector.load %arg8[%c0_639, %c1536_640] : memref<32x2048xf32, #tpu.memory_space<vmem>>, vector<32x256xf32>
    %824 = arith.subf %823, %823 : vector<32x256xf32>
    %825 = math.absf %824 : vector<32x256xf32>
    %826 = vector.shape_cast %825 : vector<32x256xf32> to vector<1x32x256xf32>
    %cst_641 = arith.constant dense<0.000000e+00> : vector<1xf32>
    %827 = vector.multi_reduction <add>, %826, %cst_641 [1, 2] : vector<1x32x256xf32> to vector<1xf32>
    %828 = vector.shape_cast %827 : vector<1xf32> to vector<1x1x1xf32>
    %829 = vector.extract %828[0, 0, 0] : f32 from vector<1x1x1xf32>
    %830 = arith.addf %819, %829 : f32
    %831 = arith.truncf %823 : vector<32x256xf32> to vector<32x256xbf16>
    %cst_642 = arith.constant dense<0.000000e+00> : vector<32x32xf32>
    %832 = tpu.matmul %831, %831, %cst_642 {dimension_numbers = #tpu.dot_dimension_numbers<[1], [1], [0], [0], [0, 0, 1, 0], [], []>} : vector<32x256xbf16>, vector<32x256xbf16>, vector<32x32xf32> -> vector<32x32xf32>
    %833 = arith.addf %822, %832 : vector<32x32xf32>
    %c0_643 = arith.constant 0 : index
    %c1792_644 = arith.constant 1792 : index
    %834 = vector.load %arg8[%c0_643, %c1792_644] : memref<32x2048xf32, #tpu.memory_space<vmem>>, vector<32x256xf32>
    %835 = arith.subf %834, %834 : vector<32x256xf32>
    %836 = math.absf %835 : vector<32x256xf32>
    %837 = vector.shape_cast %836 : vector<32x256xf32> to vector<1x32x256xf32>
    %cst_645 = arith.constant dense<0.000000e+00> : vector<1xf32>
    %838 = vector.multi_reduction <add>, %837, %cst_645 [1, 2] : vector<1x32x256xf32> to vector<1xf32>
    %839 = vector.shape_cast %838 : vector<1xf32> to vector<1x1x1xf32>
    %840 = vector.extract %839[0, 0, 0] : f32 from vector<1x1x1xf32>
    %841 = arith.addf %830, %840 : f32
    %842 = arith.truncf %834 : vector<32x256xf32> to vector<32x256xbf16>
    %cst_646 = arith.constant dense<0.000000e+00> : vector<32x32xf32>
    %843 = tpu.matmul %842, %842, %cst_646 {dimension_numbers = #tpu.dot_dimension_numbers<[1], [1], [0], [0], [0, 0, 1, 0], [], []>} : vector<32x256xbf16>, vector<32x256xbf16>, vector<32x32xf32> -> vector<32x32xf32>
    %844 = arith.addf %833, %843 : vector<32x32xf32>
    %cst_647 = arith.constant 3.05175781E-5 : f32
    %845 = vector.broadcast %cst_647 : f32 to vector<32x32xf32>
    %846 = arith.mulf %844, %845 : vector<32x32xf32>
    %847 = arith.subf %846, %846 : vector<32x32xf32>
    %848 = math.absf %847 : vector<32x32xf32>
    %849 = vector.shape_cast %848 : vector<32x32xf32> to vector<1x32x32xf32>
    %cst_648 = arith.constant dense<0.000000e+00> : vector<1xf32>
    %850 = vector.multi_reduction <add>, %849, %cst_648 [1, 2] : vector<1x32x32xf32> to vector<1xf32>
    %851 = vector.shape_cast %850 : vector<1xf32> to vector<1x1x1xf32>
    %852 = vector.extract %851[0, 0, 0] : f32 from vector<1x1x1xf32>
    %853 = arith.addf %799, %852 : f32
    %cst_649 = arith.constant 6.553600e+04 : f32
    %854 = arith.divf %841, %cst_649 : f32
    %855 = arith.addf %743, %854 : f32
    %cst_650 = arith.constant 2.048000e+03 : f32
    %856 = arith.divf %853, %cst_650 : f32
    %857 = arith.addf %745, %856 : f32
    %c0_651 = arith.constant 0 : index
    %c0_652 = arith.constant 0 : index
    %858 = memref.load %arg5[%c0_651, %c0_652] : memref<1x2xf32, #tpu.memory_space<smem>>
    memref.store %855, %arg5[%c0_651, %c0_652] : memref<1x2xf32, #tpu.memory_space<smem>>
    %c0_653 = arith.constant 0 : index
    %c1_654 = arith.constant 1 : index
    %859 = memref.load %arg5[%c0_653, %c1_654] : memref<1x2xf32, #tpu.memory_space<smem>>
    memref.store %857, %arg5[%c0_653, %c1_654] : memref<1x2xf32, #tpu.memory_space<smem>>
    return
  }
}

</mosaic_0001>

<llo_original>
// kernel: inpainting_loss_forward.1
$region0: #{inpainting_loss_forward.1}
  #allocation0 [shape = 'u32[]', space=smem, size = 0x4, offset = 0x4, fixed_abs, tag = 'smem constant byte address 0x4 - core index']
  #allocation1 [shape = 'u32[72,128]{1,0:T(1,128)}', space=vmem, size = 0x9000, scoped, tag = 'internal scratch']
  #allocation2 [shape = 'f32[8,2048]{1,0:T(8,128)}', space=vmem, size = 0x10000, scoped, tag = 'scratch operand']
  #allocation3 [shape = 'f32[16,2048]{1,0:T(8,128)}', space=vmem, size = 0x20000, scoped, tag = 'scratch operand']
  #allocation4 [shape = 'f32[32,2048]{1,0:T(8,128)}', space=vmem, size = 0x40000, scoped, tag = 'scratch operand']
  #allocation5 [shape = 'f32[144,1024]{1,0:T(8,128)}', space=vmem, size = 0x90000, scoped, tag = 'scratch operand']
  %s0 = inlined_call_operand.vmem [shape: f32[2,1024], index: 0, kind: input, shape index: {}]
  %s1 = inlined_call_operand.vmem [shape: f32[9,1024], index: 1, kind: input, shape index: {}]
  %s2 = inlined_call_operand.vmem [shape: bf16[8,27], index: 2, kind: input, shape index: {}]
  %s3 = inlined_call_operand.vmem [shape: bf16[16,72], index: 3, kind: input, shape index: {}]
  %s4 = inlined_call_operand.vmem [shape: bf16[32,144], index: 4, kind: input, shape index: {}]
  %s5 = inlined_call_operand.vmem [shape: f32[1,2], index: 5, kind: output, shape index: {}]
  %s6 = sld [smem:[#allocation0]]
  $region30: #{inpainting_loss_forward.1} parent=0
    _
  %s8 = ssub.s32 1, %s6
  %s9 = scalar_select 0, %s8, %s6
  $region1: #{inpainting_loss_forward.1} parent=0
    #allocation6 [shape = 'u8[512]{0}', space=smem, size = 0x200, scoped, tag = 'output window, operand 0, single buffered']
    #allocation7 [shape = 's32[1]{0}', space=sflag, size = 0x4, scoped, tag = 'scoped memory for inpainting_loss_forward.1']
    %10 = vsyncpa [#allocation7], 0
    // Predicated region
    $region2: #{inpainting_loss_forward.1} parent=1 // pred_check
      _
    $region3: #{inpainting_loss_forward.1} parent=1 // pred_check_branch
      %12 = sbr.rel (0) target = $region5
    $region4: #{inpainting_loss_forward.1} parent=1 // pred_region
      _
    $region5: #{inpainting_loss_forward.1} parent=1 // pred_fallthru
      _
    // Predicated region
    $region6: #{inpainting_loss_forward.1} parent=1 // pred_check
      _
    $region7: #{inpainting_loss_forward.1} parent=1 // pred_check_branch
      %14 = sbr.rel (0) target = $region9
    $region8: #{inpainting_loss_forward.1} parent=1 // pred_region
      _
    $region9: #{inpainting_loss_forward.1} parent=1 // pred_fallthru
      _
    // Predicated region
    $region10: #{inpainting_loss_forward.1} parent=1 // pred_check
      _
    $region11: #{inpainting_loss_forward.1} parent=1 // pred_check_branch
      %16 = sbr.rel (0) target = $region13
    $region12: #{inpainting_loss_forward.1} parent=1 // pred_region
      _
    $region13: #{inpainting_loss_forward.1} parent=1 // pred_fallthru
      _
    // Predicated region
    $region14: #{inpainting_loss_forward.1} parent=1 // pred_check
      _
    $region15: #{inpainting_loss_forward.1} parent=1 // pred_check_branch
      %18 = sbr.rel (0) target = $region17
    $region16: #{inpainting_loss_forward.1} parent=1 // pred_region
      _
    $region17: #{inpainting_loss_forward.1} parent=1 // pred_fallthru
      _
    // Predicated region
    $region18: #{inpainting_loss_forward.1} parent=1 // pred_check
      _
    $region19: #{inpainting_loss_forward.1} parent=1 // pred_check_branch
      %20 = sbr.rel (0) target = $region21
    $region20: #{inpainting_loss_forward.1} parent=1 // pred_region
      _
    $region21: #{inpainting_loss_forward.1} parent=1 // pred_fallthru
      _
    %v22 = vld [vmem:[%s0] ss:$2 sm:$0xff]
    %v24 = vperm.slane %v22, 0
    %v25 = vperm.slane %v22, 1
    %v26 = vperm.slane %v22, 2
    %v27 = vperm.slane %v22, 3
    %v28 = vperm.slane %v22, 4
    %v29 = vperm.slane %v22, 5
    %v30 = vperm.slane %v22, 6
    %v31 = vperm.slane %v22, 7
    %40 = vrot.lane.b32.xlu0 %v24, 33
    %v41 = vpop.permute.xlu0 %40
    %42 = vrot.lane.b32.xlu0 %v25, 33
    %v43 = vpop.permute.xlu0 %42
    %44 = vrot.lane.b32.xlu0 %v26, 33
    %v45 = vpop.permute.xlu0 %44
    %46 = vrot.lane.b32.xlu0 %v27, 33
    %v47 = vpop.permute.xlu0 %46
    %48 = vrot.lane.b32.xlu0 %v28, 33
    %v49 = vpop.permute.xlu0 %48
    %50 = vrot.lane.b32.xlu0 %v29, 33
    %v51 = vpop.permute.xlu0 %50
    %52 = vrot.lane.b32.xlu0 %v30, 33
    %v53 = vpop.permute.xlu0 %52
    %54 = vrot.lane.b32.xlu0 %v31, 33
    %v55 = vpop.permute.xlu0 %54
    %v56 = vlaneseq
    %v57 = vand.u32 %v56, 127
    %vm58 = vcmp.lt.s32.totalorder %v57, 33
    %v59 = vsel %vm58, %v53, %v55
    %v60 = vsel %vm58, %v51, %v53
    %v61 = vsel %vm58, %v49, %v51
    %v62 = vsel %vm58, %v47, %v49
    %v63 = vsel %vm58, %v45, %v47
    %v64 = vsel %vm58, %v43, %v45
    %v65 = vsel %vm58, %v41, %v43
    %v66 = vsel %vm58, %v55, %v41
    %v67 = vld [vmem:[%s1] ss:$8 sm:$0xf]
    %v68 = vld [vmem:[%s1] ss:$8 sm:$0xf0]
    %v69 = vor.u32 %v67, %v68
    %v71 = vperm.slane %v69, 0
    %v72 = vperm.slane %v69, 1
    %v73 = vperm.slane %v69, 2
    %v74 = vperm.slane %v69, 3
    %v75 = vperm.slane %v69, 4
    %v76 = vperm.slane %v69, 5
    %v77 = vperm.slane %v69, 6
    %v78 = vperm.slane %v69, 7
    %v87 = vmul.f32 %v66, %v71
    %v88 = vmul.f32 %v65, %v72
    %v89 = vmul.f32 %v64, %v73
    %v90 = vmul.f32 %v63, %v74
    %v91 = vmul.f32 %v62, %v75
    %v92 = vmul.f32 %v61, %v76
    %v93 = vmul.f32 %v60, %v77
    %v94 = vmul.f32 %v59, %v78
    %95 = vst [vmem:[#allocation5] sm:$0x7] %v87
    %96 = vst [vmem:[#allocation5 + $0x8] sm:$0x7] %v88
    %97 = vst [vmem:[#allocation5 + $0x10] sm:$0x7] %v89
    %98 = vst [vmem:[#allocation5 + $0x18] sm:$0x7] %v90
    %99 = vst [vmem:[#allocation5 + $0x20] sm:$0x7] %v91
    %100 = vst [vmem:[#allocation5 + $0x28] sm:$0x7] %v92
    %101 = vst [vmem:[#allocation5 + $0x30] sm:$0x7] %v93
    %102 = vst [vmem:[#allocation5 + $0x38] sm:$0x7] %v94
    %v103 = vld [vmem:[%s0] ss:$2 sm:$0xff]
    %v105 = vperm.slane %v103, 0
    %v106 = vperm.slane %v103, 1
    %v107 = vperm.slane %v103, 2
    %v108 = vperm.slane %v103, 3
    %v109 = vperm.slane %v103, 4
    %v110 = vperm.slane %v103, 5
    %v111 = vperm.slane %v103, 6
    %v112 = vperm.slane %v103, 7
    %121 = vrot.lane.b32.xlu0 %v105, 32
    %v122 = vpop.permute.xlu0 %121
    %123 = vrot.lane.b32.xlu0 %v106, 32
    %v124 = vpop.permute.xlu0 %123
    %125 = vrot.lane.b32.xlu0 %v107, 32
    %v126 = vpop.permute.xlu0 %125
    %127 = vrot.lane.b32.xlu0 %v108, 32
    %v128 = vpop.permute.xlu0 %127
    %129 = vrot.lane.b32.xlu0 %v109, 32
    %v130 = vpop.permute.xlu0 %129
    %131 = vrot.lane.b32.xlu0 %v110, 32
    %v132 = vpop.permute.xlu0 %131
    %133 = vrot.lane.b32.xlu0 %v111, 32
    %v134 = vpop.permute.xlu0 %133
    %135 = vrot.lane.b32.xlu0 %v112, 32
    %v136 = vpop.permute.xlu0 %135
    %vm137 = vcmp.lt.s32.totalorder %v57, 32
    %v138 = vsel %vm137, %v134, %v136
    %v139 = vsel %vm137, %v132, %v134
    %v140 = vsel %vm137, %v130, %v132
    %v141 = vsel %vm137, %v128, %v130
    %v142 = vsel %vm137, %v126, %v128
    %v143 = vsel %vm137, %v124, %v126
    %v144 = vsel %vm137, %v122, %v124
    %v145 = vsel %vm137, %v136, %v122
    %s146 = scalar_lea.vmem %s1, 1
    %v147 = vld [vmem:[%s146] ss:$8 sm:$0xf]
    %v148 = vld [vmem:[%s146] ss:$8 sm:$0xf0]
    %v149 = vor.u32 %v147, %v148
    %v151 = vperm.slane %v149, 0
    %v152 = vperm.slane %v149, 1
    %v153 = vperm.slane %v149, 2
    %v154 = vperm.slane %v149, 3
    %v155 = vperm.slane %v149, 4
    %v156 = vperm.slane %v149, 5
    %v157 = vperm.slane %v149, 6
    %v158 = vperm.slane %v149, 7
    %v167 = vmul.f32 %v145, %v151
    %v168 = vmul.f32 %v144, %v152
    %v169 = vmul.f32 %v143, %v153
    %v170 = vmul.f32 %v142, %v154
    %v171 = vmul.f32 %v141, %v155
    %v172 = vmul.f32 %v140, %v156
    %v173 = vmul.f32 %v139, %v157
    %v174 = vmul.f32 %v138, %v158
    %v183 = vrot.slane %v167, 5
    %v184 = vrot.slane %v168, 5
    %v185 = vrot.slane %v169, 5
    %v186 = vrot.slane %v170, 5
    %v187 = vrot.slane %v171, 5
    %v188 = vrot.slane %v172, 5
    %v189 = vrot.slane %v173, 5
    %v190 = vrot.slane %v174, 5
    %199 = vst [vmem:[#allocation5] sm:$0x38] %v183
    %200 = vst [vmem:[#allocation5 + $0x8] sm:$0x38] %v184
    %201 = vst [vmem:[#allocation5 + $0x10] sm:$0x38] %v185
    %202 = vst [vmem:[#allocation5 + $0x18] sm:$0x38] %v186
    %203 = vst [vmem:[#allocation5 + $0x20] sm:$0x38] %v187
    %204 = vst [vmem:[#allocation5 + $0x28] sm:$0x38] %v188
    %205 = vst [vmem:[#allocation5 + $0x30] sm:$0x38] %v189
    %206 = vst [vmem:[#allocation5 + $0x38] sm:$0x38] %v190
    %v207 = vld [vmem:[%s0] ss:$2 sm:$0xff]
    %v209 = vperm.slane %v207, 0
    %v210 = vperm.slane %v207, 1
    %v211 = vperm.slane %v207, 2
    %v212 = vperm.slane %v207, 3
    %v213 = vperm.slane %v207, 4
    %v214 = vperm.slane %v207, 5
    %v215 = vperm.slane %v207, 6
    %v216 = vperm.slane %v207, 7
    %225 = vrot.lane.b32.xlu0 %v209, 31
    %v226 = vpop.permute.xlu0 %225
    %227 = vrot.lane.b32.xlu0 %v210, 31
    %v228 = vpop.permute.xlu0 %227
    %229 = vrot.lane.b32.xlu0 %v211, 31
    %v230 = vpop.permute.xlu0 %229
    %231 = vrot.lane.b32.xlu0 %v212, 31
    %v232 = vpop.permute.xlu0 %231
    %233 = vrot.lane.b32.xlu0 %v213, 31
    %v234 = vpop.permute.xlu0 %233
    %235 = vrot.lane.b32.xlu0 %v214, 31
    %v236 = vpop.permute.xlu0 %235
    %237 = vrot.lane.b32.xlu0 %v215, 31
    %v238 = vpop.permute.xlu0 %237
    %239 = vrot.lane.b32.xlu0 %v216, 31
    %v240 = vpop.permute.xlu0 %239
    %vm241 = vcmp.lt.s32.totalorder %v57, 31
    %v242 = vsel %vm241, %v238, %v240
    %v243 = vsel %vm241, %v236, %v238
    %v244 = vsel %vm241, %v234, %v236
    %v245 = vsel %vm241, %v232, %v234
    %v246 = vsel %vm241, %v230, %v232
    %v247 = vsel %vm241, %v228, %v230
    %v248 = vsel %vm241, %v226, %v228
    %v249 = vsel %vm241, %v240, %v226
    %s250 = scalar_lea.vmem %s1, 2
    %v251 = vld [vmem:[%s250] ss:$8 sm:$0xf]
    %v252 = vld [vmem:[%s250] ss:$8 sm:$0xf0]
    %v253 = vor.u32 %v251, %v252
    %v255 = vperm.slane %v253, 0
    %v256 = vperm.slane %v253, 1
    %v257 = vperm.slane %v253, 2
    %v258 = vperm.slane %v253, 3
    %v259 = vperm.slane %v253, 4
    %v260 = vperm.slane %v253, 5
    %v261 = vperm.slane %v253, 6
    %v262 = vperm.slane %v253, 7
    %v271 = vmul.f32 %v249, %v255
    %v272 = vmul.f32 %v248, %v256
    %v273 = vmul.f32 %v247, %v257
    %v274 = vmul.f32 %v246, %v258
    %v275 = vmul.f32 %v245, %v259
    %v276 = vmul.f32 %v244, %v260
    %v277 = vmul.f32 %v243, %v261
    %v278 = vmul.f32 %v242, %v262
    %v287 = vrot.slane %v271, 2
    %v288 = vrot.slane %v272, 2
    %v289 = vrot.slane %v273, 2
    %v290 = vrot.slane %v274, 2
    %v291 = vrot.slane %v275, 2
    %v292 = vrot.slane %v276, 2
    %v293 = vrot.slane %v277, 2
    %v294 = vrot.slane %v278, 2
    %303 = vst [vmem:[#allocation5] sm:$0xc0] %v287
    %304 = vst [vmem:[#allocation5 + $0x8] sm:$0xc0] %v288
    %305 = vst [vmem:[#allocation5 + $0x10] sm:$0xc0] %v289
    %306 = vst [vmem:[#allocation5 + $0x18] sm:$0xc0] %v290
    %307 = vst [vmem:[#allocation5 + $0x20] sm:$0xc0] %v291
    %308 = vst [vmem:[#allocation5 + $0x28] sm:$0xc0] %v292
    %309 = vst [vmem:[#allocation5 + $0x30] sm:$0xc0] %v293
    %310 = vst [vmem:[#allocation5 + $0x38] sm:$0xc0] %v294
    %311 = vst [vmem:[#allocation5 + $0x40] sm:$0x1] %v287
    %312 = vst [vmem:[#allocation5 + $0x48] sm:$0x1] %v288
    %313 = vst [vmem:[#allocation5 + $0x50] sm:$0x1] %v289
    %314 = vst [vmem:[#allocation5 + $0x58] sm:$0x1] %v290
    %315 = vst [vmem:[#allocation5 + $0x60] sm:$0x1] %v291
    %316 = vst [vmem:[#allocation5 + $0x68] sm:$0x1] %v292
    %317 = vst [vmem:[#allocation5 + $0x70] sm:$0x1] %v293
    %318 = vst [vmem:[#allocation5 + $0x78] sm:$0x1] %v294
    %v319 = vld [vmem:[%s0] ss:$2 sm:$0xff]
    %v321 = vperm.slane %v319, 0
    %v322 = vperm.slane %v319, 1
    %v323 = vperm.slane %v319, 2
    %v324 = vperm.slane %v319, 3
    %v325 = vperm.slane %v319, 4
    %v326 = vperm.slane %v319, 5
    %v327 = vperm.slane %v319, 6
    %v328 = vperm.slane %v319, 7
    %337 = vrot.lane.b32.xlu0 %v321, 1
    %v338 = vpop.permute.xlu0 %337
    %339 = vrot.lane.b32.xlu0 %v322, 1
    %v340 = vpop.permute.xlu0 %339
    %341 = vrot.lane.b32.xlu0 %v323, 1
    %v342 = vpop.permute.xlu0 %341
    %343 = vrot.lane.b32.xlu0 %v324, 1
    %v344 = vpop.permute.xlu0 %343
    %345 = vrot.lane.b32.xlu0 %v325, 1
    %v346 = vpop.permute.xlu0 %345
    %347 = vrot.lane.b32.xlu0 %v326, 1
    %v348 = vpop.permute.xlu0 %347
    %349 = vrot.lane.b32.xlu0 %v327, 1
    %v350 = vpop.permute.xlu0 %349
    %351 = vrot.lane.b32.xlu0 %v328, 1
    %v352 = vpop.permute.xlu0 %351
    %vm353 = vcmp.lt.s32.totalorder %v57, 1
    %v354 = vsel %vm353, %v350, %v352
    %v355 = vsel %vm353, %v348, %v350
    %v356 = vsel %vm353, %v346, %v348
    %v357 = vsel %vm353, %v344, %v346
    %v358 = vsel %vm353, %v342, %v344
    %v359 = vsel %vm353, %v340, %v342
    %v360 = vsel %vm353, %v338, %v340
    %v361 = vsel %vm353, %v352, %v338
    %s362 = scalar_lea.vmem %s1, 3
    %v363 = vld [vmem:[%s362] ss:$8 sm:$0xf]
    %v364 = vld [vmem:[%s362] ss:$8 sm:$0xf0]
    %v365 = vor.u32 %v363, %v364
    %v367 = vperm.slane %v365, 0
    %v368 = vperm.slane %v365, 1
    %v369 = vperm.slane %v365, 2
    %v370 = vperm.slane %v365, 3
    %v371 = vperm.slane %v365, 4
    %v372 = vperm.slane %v365, 5
    %v373 = vperm.slane %v365, 6
    %v374 = vperm.slane %v365, 7
    %v383 = vmul.f32 %v361, %v367
    %v384 = vmul.f32 %v360, %v368
    %v385 = vmul.f32 %v359, %v369
    %v386 = vmul.f32 %v358, %v370
    %v387 = vmul.f32 %v357, %v371
    %v388 = vmul.f32 %v356, %v372
    %v389 = vmul.f32 %v355, %v373
    %v390 = vmul.f32 %v354, %v374
    %v399 = vrot.slane %v383, 7
    %v400 = vrot.slane %v384, 7
    %v401 = vrot.slane %v385, 7
    %v402 = vrot.slane %v386, 7
    %v403 = vrot.slane %v387, 7
    %v404 = vrot.slane %v388, 7
    %v405 = vrot.slane %v389, 7
    %v406 = vrot.slane %v390, 7
    %415 = vst [vmem:[#allocation5 + $0x40] sm:$0xe] %v399
    %416 = vst [vmem:[#allocation5 + $0x48] sm:$0xe] %v400
    %417 = vst [vmem:[#allocation5 + $0x50] sm:$0xe] %v401
    %418 = vst [vmem:[#allocation5 + $0x58] sm:$0xe] %v402
    %419 = vst [vmem:[#allocation5 + $0x60] sm:$0xe] %v403
    %420 = vst [vmem:[#allocation5 + $0x68] sm:$0xe] %v404
    %421 = vst [vmem:[#allocation5 + $0x70] sm:$0xe] %v405
    %422 = vst [vmem:[#allocation5 + $0x78] sm:$0xe] %v406
    %v423 = vld [vmem:[%s0] ss:$2 sm:$0xff]
    %v425 = vperm.slane %v423, 0
    %v426 = vperm.slane %v423, 1
    %v427 = vperm.slane %v423, 2
    %v428 = vperm.slane %v423, 3
    %v429 = vperm.slane %v423, 4
    %v430 = vperm.slane %v423, 5
    %v431 = vperm.slane %v423, 6
    %v432 = vperm.slane %v423, 7
    %s441 = scalar_lea.vmem %s1, 4
    %v442 = vld [vmem:[%s441] ss:$8 sm:$0xf]
    %v443 = vld [vmem:[%s441] ss:$8 sm:$0xf0]
    %v444 = vor.u32 %v442, %v443
    %v446 = vperm.slane %v444, 0
    %v447 = vperm.slane %v444, 1
    %v448 = vperm.slane %v444, 2
    %v449 = vperm.slane %v444, 3
    %v450 = vperm.slane %v444, 4
    %v451 = vperm.slane %v444, 5
    %v452 = vperm.slane %v444, 6
    %v453 = vperm.slane %v444, 7
    %v462 = vmul.f32 %v425, %v446
    %v463 = vmul.f32 %v426, %v447
    %v464 = vmul.f32 %v427, %v448
    %v465 = vmul.f32 %v428, %v449
    %v466 = vmul.f32 %v429, %v450
    %v467 = vmul.f32 %v430, %v451
    %v468 = vmul.f32 %v431, %v452
    %v469 = vmul.f32 %v432, %v453
    %470 = vst [vmem:[#allocation5 + $0x40] sm:$0x70] %v462
    %471 = vst [vmem:[#allocation5 + $0x48] sm:$0x70] %v463
    %472 = vst [vmem:[#allocation5 + $0x50] sm:$0x70] %v464
    %473 = vst [vmem:[#allocation5 + $0x58] sm:$0x70] %v465
    %474 = vst [vmem:[#allocation5 + $0x60] sm:$0x70] %v466
    %475 = vst [vmem:[#allocation5 + $0x68] sm:$0x70] %v467
    %476 = vst [vmem:[#allocation5 + $0x70] sm:$0x70] %v468
    %477 = vst [vmem:[#allocation5 + $0x78] sm:$0x70] %v469
    %v478 = vld [vmem:[%s0] ss:$2 sm:$0xff]
    %v480 = vperm.slane %v478, 0
    %v481 = vperm.slane %v478, 1
    %v482 = vperm.slane %v478, 2
    %v483 = vperm.slane %v478, 3
    %v484 = vperm.slane %v478, 4
    %v485 = vperm.slane %v478, 5
    %v486 = vperm.slane %v478, 6
    %v487 = vperm.slane %v478, 7
    %496 = vrot.lane.b32.xlu0 %v480, 127
    %v497 = vpop.permute.xlu0 %496
    %498 = vrot.lane.b32.xlu0 %v481, 127
    %v499 = vpop.permute.xlu0 %498
    %500 = vrot.lane.b32.xlu0 %v482, 127
    %v501 = vpop.permute.xlu0 %500
    %502 = vrot.lane.b32.xlu0 %v483, 127
    %v503 = vpop.permute.xlu0 %502
    %504 = vrot.lane.b32.xlu0 %v484, 127
    %v505 = vpop.permute.xlu0 %504
    %506 = vrot.lane.b32.xlu0 %v485, 127
    %v507 = vpop.permute.xlu0 %506
    %508 = vrot.lane.b32.xlu0 %v486, 127
    %v509 = vpop.permute.xlu0 %508
    %510 = vrot.lane.b32.xlu0 %v487, 127
    %v511 = vpop.permute.xlu0 %510
    %vm512 = vcmp.lt.s32.totalorder %v57, 127
    %v513 = vsel %vm512, %v509, %v511
    %v514 = vsel %vm512, %v507, %v509
    %v515 = vsel %vm512, %v505, %v507
    %v516 = vsel %vm512, %v503, %v505
    %v517 = vsel %vm512, %v501, %v503
    %v518 = vsel %vm512, %v499, %v501
    %v519 = vsel %vm512, %v497, %v499
    %v520 = vsel %vm512, %v511, %v497
    %s521 = scalar_lea.vmem %s1, 5
    %v522 = vld [vmem:[%s521] ss:$8 sm:$0xf]
    %v523 = vld [vmem:[%s521] ss:$8 sm:$0xf0]
    %v524 = vor.u32 %v522, %v523
    %v526 = vperm.slane %v524, 0
    %v527 = vperm.slane %v524, 1
    %v528 = vperm.slane %v524, 2
    %v529 = vperm.slane %v524, 3
    %v530 = vperm.slane %v524, 4
    %v531 = vperm.slane %v524, 5
    %v532 = vperm.slane %v524, 6
    %v533 = vperm.slane %v524, 7
    %v542 = vmul.f32 %v519, %v526
    %v543 = vmul.f32 %v518, %v527
    %v544 = vmul.f32 %v517, %v528
    %v545 = vmul.f32 %v516, %v529
    %v546 = vmul.f32 %v515, %v530
    %v547 = vmul.f32 %v514, %v531
    %v548 = vmul.f32 %v513, %v532
    %v549 = vmul.f32 %v520, %v533
    %v558 = vrot.slane %v542, 1
    %v559 = vrot.slane %v543, 1
    %v560 = vrot.slane %v544, 1
    %v561 = vrot.slane %v545, 1
    %v562 = vrot.slane %v546, 1
    %v563 = vrot.slane %v547, 1
    %v564 = vrot.slane %v548, 1
    %v565 = vrot.slane %v549, 1
    %574 = vst [vmem:[#allocation5 + $0x40] sm:$0x80] %v558
    %575 = vst [vmem:[#allocation5 + $0x48] sm:$0x80] %v559
    %576 = vst [vmem:[#allocation5 + $0x50] sm:$0x80] %v560
    %577 = vst [vmem:[#allocation5 + $0x58] sm:$0x80] %v561
    %578 = vst [vmem:[#allocation5 + $0x60] sm:$0x80] %v562
    %579 = vst [vmem:[#allocation5 + $0x68] sm:$0x80] %v563
    %580 = vst [vmem:[#allocation5 + $0x70] sm:$0x80] %v564
    %581 = vst [vmem:[#allocation5 + $0x78] sm:$0x80] %v565
    %582 = vst [vmem:[#allocation5 + $0x80] sm:$0x3] %v558
    %583 = vst [vmem:[#allocation5 + $0x88] sm:$0x3] %v559
    %584 = vst [vmem:[#allocation5 + $0x90] sm:$0x3] %v560
    %585 = vst [vmem:[#allocation5 + $0x98] sm:$0x3] %v561
    %586 = vst [vmem:[#allocation5 + $0xa0] sm:$0x3] %v562
    %587 = vst [vmem:[#allocation5 + $0xa8] sm:$0x3] %v563
    %588 = vst [vmem:[#allocation5 + $0xb0] sm:$0x3] %v564
    %589 = vst [vmem:[#allocation5 + $0xb8] sm:$0x3] %v565
    %v590 = vld [vmem:[%s0] ss:$2 sm:$0xff]
    %v592 = vperm.slane %v590, 0
    %v593 = vperm.slane %v590, 1
    %v594 = vperm.slane %v590, 2
    %v595 = vperm.slane %v590, 3
    %v596 = vperm.slane %v590, 4
    %v597 = vperm.slane %v590, 5
    %v598 = vperm.slane %v590, 6
    %v599 = vperm.slane %v590, 7
    %608 = vrot.lane.b32.xlu0 %v592, 97
    %v609 = vpop.permute.xlu0 %608
    %610 = vrot.lane.b32.xlu0 %v593, 97
    %v611 = vpop.permute.xlu0 %610
    %612 = vrot.lane.b32.xlu0 %v594, 97
    %v613 = vpop.permute.xlu0 %612
    %614 = vrot.lane.b32.xlu0 %v595, 97
    %v615 = vpop.permute.xlu0 %614
    %616 = vrot.lane.b32.xlu0 %v596, 97
    %v617 = vpop.permute.xlu0 %616
    %618 = vrot.lane.b32.xlu0 %v597, 97
    %v619 = vpop.permute.xlu0 %618
    %620 = vrot.lane.b32.xlu0 %v598, 97
    %v621 = vpop.permute.xlu0 %620
    %622 = vrot.lane.b32.xlu0 %v599, 97
    %v623 = vpop.permute.xlu0 %622
    %vm624 = vcmp.lt.s32.totalorder %v57, 97
    %v625 = vsel %vm624, %v621, %v623
    %v626 = vsel %vm624, %v619, %v621
    %v627 = vsel %vm624, %v617, %v619
    %v628 = vsel %vm624, %v615, %v617
    %v629 = vsel %vm624, %v613, %v615
    %v630 = vsel %vm624, %v611, %v613
    %v631 = vsel %vm624, %v609, %v611
    %v632 = vsel %vm624, %v623, %v609
    %s633 = scalar_lea.vmem %s1, 6
    %v634 = vld [vmem:[%s633] ss:$8 sm:$0xf]
    %v635 = vld [vmem:[%s633] ss:$8 sm:$0xf0]
    %v636 = vor.u32 %v634, %v635
    %v638 = vperm.slane %v636, 0
    %v639 = vperm.slane %v636, 1
    %v640 = vperm.slane %v636, 2
    %v641 = vperm.slane %v636, 3
    %v642 = vperm.slane %v636, 4
    %v643 = vperm.slane %v636, 5
    %v644 = vperm.slane %v636, 6
    %v645 = vperm.slane %v636, 7
    %v654 = vmul.f32 %v631, %v638
    %v655 = vmul.f32 %v630, %v639
    %v656 = vmul.f32 %v629, %v640
    %v657 = vmul.f32 %v628, %v641
    %v658 = vmul.f32 %v627, %v642
    %v659 = vmul.f32 %v626, %v643
    %v660 = vmul.f32 %v625, %v644
    %v661 = vmul.f32 %v632, %v645
    %v670 = vrot.slane %v654, 6
    %v671 = vrot.slane %v655, 6
    %v672 = vrot.slane %v656, 6
    %v673 = vrot.slane %v657, 6
    %v674 = vrot.slane %v658, 6
    %v675 = vrot.slane %v659, 6
    %v676 = vrot.slane %v660, 6
    %v677 = vrot.slane %v661, 6
    %686 = vst [vmem:[#allocation5 + $0x80] sm:$0x1c] %v670
    %687 = vst [vmem:[#allocation5 + $0x88] sm:$0x1c] %v671
    %688 = vst [vmem:[#allocation5 + $0x90] sm:$0x1c] %v672
    %689 = vst [vmem:[#allocation5 + $0x98] sm:$0x1c] %v673
    %690 = vst [vmem:[#allocation5 + $0xa0] sm:$0x1c] %v674
    %691 = vst [vmem:[#allocation5 + $0xa8] sm:$0x1c] %v675
    %692 = vst [vmem:[#allocation5 + $0xb0] sm:$0x1c] %v676
    %693 = vst [vmem:[#allocation5 + $0xb8] sm:$0x1c] %v677
    %v694 = vld [vmem:[%s0] ss:$2 sm:$0xff]
    %v696 = vperm.slane %v694, 0
    %v697 = vperm.slane %v694, 1
    %v698 = vperm.slane %v694, 2
    %v699 = vperm.slane %v694, 3
    %v700 = vperm.slane %v694, 4
    %v701 = vperm.slane %v694, 5
    %v702 = vperm.slane %v694, 6
    %v703 = vperm.slane %v694, 7
    %712 = vrot.lane.b32.xlu0 %v696, 96
    %v713 = vpop.permute.xlu0 %712
    %714 = vrot.lane.b32.xlu0 %v697, 96
    %v715 = vpop.permute.xlu0 %714
    %716 = vrot.lane.b32.xlu0 %v698, 96
    %v717 = vpop.permute.xlu0 %716
    %718 = vrot.lane.b32.xlu0 %v699, 96
    %v719 = vpop.permute.xlu0 %718
    %720 = vrot.lane.b32.xlu0 %v700, 96
    %v721 = vpop.permute.xlu0 %720
    %722 = vrot.lane.b32.xlu0 %v701, 96
    %v723 = vpop.permute.xlu0 %722
    %724 = vrot.lane.b32.xlu0 %v702, 96
    %v725 = vpop.permute.xlu0 %724
    %726 = vrot.lane.b32.xlu0 %v703, 96
    %v727 = vpop.permute.xlu0 %726
    %vm728 = vcmp.lt.s32.totalorder %v57, 96
    %v729 = vsel %vm728, %v725, %v727
    %v730 = vsel %vm728, %v723, %v725
    %v731 = vsel %vm728, %v721, %v723
    %v732 = vsel %vm728, %v719, %v721
    %v733 = vsel %vm728, %v717, %v719
    %v734 = vsel %vm728, %v715, %v717
    %v735 = vsel %vm728, %v713, %v715
    %v736 = vsel %vm728, %v727, %v713
    %s737 = scalar_lea.vmem %s1, 7
    %v738 = vld [vmem:[%s737] ss:$8 sm:$0xf]
    %v739 = vld [vmem:[%s737] ss:$8 sm:$0xf0]
    %v740 = vor.u32 %v738, %v739
    %v742 = vperm.slane %v740, 0
    %v743 = vperm.slane %v740, 1
    %v744 = vperm.slane %v740, 2
    %v745 = vperm.slane %v740, 3
    %v746 = vperm.slane %v740, 4
    %v747 = vperm.slane %v740, 5
    %v748 = vperm.slane %v740, 6
    %v749 = vperm.slane %v740, 7
    %v758 = vmul.f32 %v735, %v742
    %v759 = vmul.f32 %v734, %v743
    %v760 = vmul.f32 %v733, %v744
    %v761 = vmul.f32 %v732, %v745
    %v762 = vmul.f32 %v731, %v746
    %v763 = vmul.f32 %v730, %v747
    %v764 = vmul.f32 %v729, %v748
    %v765 = vmul.f32 %v736, %v749
    %v774 = vrot.slane %v758, 3
    %v775 = vrot.slane %v759, 3
    %v776 = vrot.slane %v760, 3
    %v777 = vrot.slane %v761, 3
    %v778 = vrot.slane %v762, 3
    %v779 = vrot.slane %v763, 3
    %v780 = vrot.slane %v764, 3
    %v781 = vrot.slane %v765, 3
    %790 = vst [vmem:[#allocation5 + $0x80] sm:$0xe0] %v774
    %791 = vst [vmem:[#allocation5 + $0x88] sm:$0xe0] %v775
    %792 = vst [vmem:[#allocation5 + $0x90] sm:$0xe0] %v776
    %793 = vst [vmem:[#allocation5 + $0x98] sm:$0xe0] %v777
    %794 = vst [vmem:[#allocation5 + $0xa0] sm:$0xe0] %v778
    %795 = vst [vmem:[#allocation5 + $0xa8] sm:$0xe0] %v779
    %796 = vst [vmem:[#allocation5 + $0xb0] sm:$0xe0] %v780
    %797 = vst [vmem:[#allocation5 + $0xb8] sm:$0xe0] %v781
    %v798 = vld [vmem:[%s0] ss:$2 sm:$0xff]
    %v800 = vperm.slane %v798, 0
    %v801 = vperm.slane %v798, 1
    %v802 = vperm.slane %v798, 2
    %v803 = vperm.slane %v798, 3
    %v804 = vperm.slane %v798, 4
    %v805 = vperm.slane %v798, 5
    %v806 = vperm.slane %v798, 6
    %v807 = vperm.slane %v798, 7
    %816 = vrot.lane.b32.xlu0 %v800, 95
    %v817 = vpop.permute.xlu0 %816
    %818 = vrot.lane.b32.xlu0 %v801, 95
    %v819 = vpop.permute.xlu0 %818
    %820 = vrot.lane.b32.xlu0 %v802, 95
    %v821 = vpop.permute.xlu0 %820
    %822 = vrot.lane.b32.xlu0 %v803, 95
    %v823 = vpop.permute.xlu0 %822
    %824 = vrot.lane.b32.xlu0 %v804, 95
    %v825 = vpop.permute.xlu0 %824
    %826 = vrot.lane.b32.xlu0 %v805, 95
    %v827 = vpop.permute.xlu0 %826
    %828 = vrot.lane.b32.xlu0 %v806, 95
    %v829 = vpop.permute.xlu0 %828
    %830 = vrot.lane.b32.xlu0 %v807, 95
    %v831 = vpop.permute.xlu0 %830
    %vm832 = vcmp.lt.s32.totalorder %v57, 95
    %v833 = vsel %vm832, %v829, %v831
    %v834 = vsel %vm832, %v827, %v829
    %v835 = vsel %vm832, %v825, %v827
    %v836 = vsel %vm832, %v823, %v825
    %v837 = vsel %vm832, %v821, %v823
    %v838 = vsel %vm832, %v819, %v821
    %v839 = vsel %vm832, %v817, %v819
    %v840 = vsel %vm832, %v831, %v817
    %s841 = scalar_lea.vmem %s1, 64
    %v842 = vld [vmem:[%s841] ss:$8 sm:$0xf]
    %v843 = vld [vmem:[%s841] ss:$8 sm:$0xf0]
    %v844 = vor.u32 %v842, %v843
    %v846 = vperm.slane %v844, 0
    %v847 = vperm.slane %v844, 1
    %v848 = vperm.slane %v844, 2
    %v849 = vperm.slane %v844, 3
    %v850 = vperm.slane %v844, 4
    %v851 = vperm.slane %v844, 5
    %v852 = vperm.slane %v844, 6
    %v853 = vperm.slane %v844, 7
    %v862 = vmul.f32 %v839, %v846
    %v863 = vmul.f32 %v838, %v847
    %v864 = vmul.f32 %v837, %v848
    %v865 = vmul.f32 %v836, %v849
    %v866 = vmul.f32 %v835, %v850
    %v867 = vmul.f32 %v834, %v851
    %v868 = vmul.f32 %v833, %v852
    %v869 = vmul.f32 %v840, %v853
    %870 = vst [vmem:[#allocation5 + $0xc0] sm:$0x7] %v862
    %871 = vst [vmem:[#allocation5 + $0xc8] sm:$0x7] %v863
    %872 = vst [vmem:[#allocation5 + $0xd0] sm:$0x7] %v864
    %873 = vst [vmem:[#allocation5 + $0xd8] sm:$0x7] %v865
    %874 = vst [vmem:[#allocation5 + $0xe0] sm:$0x7] %v866
    %875 = vst [vmem:[#allocation5 + $0xe8] sm:$0x7] %v867
    %876 = vst [vmem:[#allocation5 + $0xf0] sm:$0x7] %v868
    %877 = vst [vmem:[#allocation5 + $0xf8] sm:$0x7] %v869
    %v878 = vld [vmem:[#allocation5] sm:$0xff]
    %v879 = vld [vmem:[#allocation5 + $0x8] sm:$0xff]
    %v880 = vld [vmem:[#allocation5 + $0x40] sm:$0xff]
    %v881 = vld [vmem:[#allocation5 + $0x48] sm:$0xff]
    %v882 = vld [vmem:[#allocation5 + $0x80] sm:$0xff]
    %v883 = vld [vmem:[#allocation5 + $0x88] sm:$0xff]
    %v884 = vld [vmem:[#allocation5 + $0xc0] sm:$0x7]
    %v885 = vld [vmem:[#allocation5 + $0xc8] sm:$0x7]
    %v886 = vld [vmem:[%s2] sm:$0xf]
    %v887 = vpack.c.bf16 %v880, %v878
    %v888 = vpack.c.bf16 %v881, %v879
    %v889 = vpack.c.bf16 %v884, %v882
    %v890 = vpack.c.bf16 %v885, %v883
    %vm891 = vcmask 220160
    %v893 = vsel %vm891, %v886, 0
    %vm895 = vcmask 1044480
    %vm896 = vcmask 1045504
    %v897 = vsel %vm895, 4294967295, 65535
    %v898 = vsel %vm896, %v897, 0
    %v900 = vand.u32 %v889, %v898
    %v903 = vand.u32 %v890, %v898
    %905 = vmatpush.bf16.msra.mxu0 0
    %906 = vmatpush.bf16.msra.mxu0 0
    %907 = vmatpush.bf16.msra.mxu0 0
    %908 = vmatpush.bf16.msra.mxu0 0
    %909 = vmatpush.bf16.msra.mxu0 0
    %910 = vmatpush.bf16.msra.mxu0 0
    %911 = vmatpush.bf16.msra.mxu0 %v900
    %912 = vmatpush.bf16.msra.mxu0 %v887
    %913 = vmatmul.bf16.gmra.mxu0 %v893
    %v914 = vpop.f32.mrf.mxu0
    %v915 = vadd.f32 0.0, %v914
    %v916 = vpop.f32.mrf.mxu0
    %917 = vdwg.mxu0
    %918 = vmatpush.bf16.msra.mxu0 0
    %919 = vmatpush.bf16.msra.mxu0 0
    %920 = vmatpush.bf16.msra.mxu0 0
    %921 = vmatpush.bf16.msra.mxu0 0
    %922 = vmatpush.bf16.msra.mxu0 0
    %923 = vmatpush.bf16.msra.mxu0 0
    %924 = vmatpush.bf16.msra.mxu0 %v903
    %925 = vmatpush.bf16.msra.mxu0 %v888
    %926 = vmatmul.bf16.gmra.mxu0 %v893
    %v927 = vpop.f32.mrf.mxu0
    %v928 = vadd.f32 0.0, %v927
    %v929 = vpop.f32.mrf.mxu0
    %930 = vdwg.mxu0
    %v931 = vmax.f32 %v915, 0.0
    %v932 = vmax.f32 %v928, 0.0
    %933 = vst [vmem:[#allocation2] sm:$0xff] %v931
    %934 = vst [vmem:[#allocation2 + $0x8] sm:$0xff] %v932
    %v935 = vld [vmem:[#allocation5 + $0x10] sm:$0xff]
    %v936 = vld [vmem:[#allocation5 + $0x18] sm:$0xff]
    %v937 = vld [vmem:[#allocation5 + $0x50] sm:$0xff]
    %v938 = vld [vmem:[#allocation5 + $0x58] sm:$0xff]
    %v939 = vld [vmem:[#allocation5 + $0x90] sm:$0xff]
    %v940 = vld [vmem:[#allocation5 + $0x98] sm:$0xff]
    %v941 = vld [vmem:[#allocation5 + $0xd0] sm:$0x7]
    %v942 = vld [vmem:[#allocation5 + $0xd8] sm:$0x7]
    %v943 = vld [vmem:[%s2] sm:$0xf]
    %v944 = vpack.c.bf16 %v937, %v935
    %v945 = vpack.c.bf16 %v938, %v936
    %v946 = vpack.c.bf16 %v941, %v939
    %v947 = vpack.c.bf16 %v942, %v940
    %v949 = vsel %vm891, %v943, 0
    %v952 = vand.u32 %v946, %v898
    %v955 = vand.u32 %v947, %v898
    %957 = vmatpush.bf16.msra.mxu0 0
    %958 = vmatpush.bf16.msra.mxu0 0
    %959 = vmatpush.bf16.msra.mxu0 0
    %960 = vmatpush.bf16.msra.mxu0 0
    %961 = vmatpush.bf16.msra.mxu0 0
    %962 = vmatpush.bf16.msra.mxu0 0
    %963 = vmatpush.bf16.msra.mxu0 %v952
    %964 = vmatpush.bf16.msra.mxu0 %v944
    %965 = vmatmul.bf16.gmra.mxu0 %v949
    %v966 = vpop.f32.mrf.mxu0
    %v967 = vadd.f32 0.0, %v966
    %v968 = vpop.f32.mrf.mxu0
    %969 = vdwg.mxu0
    %970 = vmatpush.bf16.msra.mxu0 0
    %971 = vmatpush.bf16.msra.mxu0 0
    %972 = vmatpush.bf16.msra.mxu0 0
    %973 = vmatpush.bf16.msra.mxu0 0
    %974 = vmatpush.bf16.msra.mxu0 0
    %975 = vmatpush.bf16.msra.mxu0 0
    %976 = vmatpush.bf16.msra.mxu0 %v955
    %977 = vmatpush.bf16.msra.mxu0 %v945
    %978 = vmatmul.bf16.gmra.mxu0 %v949
    %v979 = vpop.f32.mrf.mxu0
    %v980 = vadd.f32 0.0, %v979
    %v981 = vpop.f32.mrf.mxu0
    %982 = vdwg.mxu0
    %v983 = vmax.f32 %v967, 0.0
    %v984 = vmax.f32 %v980, 0.0
    %985 = vst [vmem:[#allocation2 + $0x10] sm:$0xff] %v983
    %986 = vst [vmem:[#allocation2 + $0x18] sm:$0xff] %v984
    %v987 = vld [vmem:[#allocation5 + $0x20] sm:$0xff]
    %v988 = vld [vmem:[#allocation5 + $0x28] sm:$0xff]
    %v989 = vld [vmem:[#allocation5 + $0x60] sm:$0xff]
    %v990 = vld [vmem:[#allocation5 + $0x68] sm:$0xff]
    %v991 = vld [vmem:[#allocation5 + $0xa0] sm:$0xff]
    %v992 = vld [vmem:[#allocation5 + $0xa8] sm:$0xff]
    %v993 = vld [vmem:[#allocation5 + $0xe0] sm:$0x7]
    %v994 = vld [vmem:[#allocation5 + $0xe8] sm:$0x7]
    %v995 = vld [vmem:[%s2] sm:$0xf]
    %v996 = vpack.c.bf16 %v989, %v987
    %v997 = vpack.c.bf16 %v990, %v988
    %v998 = vpack.c.bf16 %v993, %v991
    %v999 = vpack.c.bf16 %v994, %v992
    %v1001 = vsel %vm891, %v995, 0
    %v1004 = vand.u32 %v998, %v898
    %v1007 = vand.u32 %v999, %v898
    %1009 = vmatpush.bf16.msra.mxu0 0
    %1010 = vmatpush.bf16.msra.mxu0 0
    %1011 = vmatpush.bf16.msra.mxu0 0
    %1012 = vmatpush.bf16.msra.mxu0 0
    %1013 = vmatpush.bf16.msra.mxu0 0
    %1014 = vmatpush.bf16.msra.mxu0 0
    %1015 = vmatpush.bf16.msra.mxu0 %v1004
    %1016 = vmatpush.bf16.msra.mxu0 %v996
    %1017 = vmatmul.bf16.gmra.mxu0 %v1001
    %v1018 = vpop.f32.mrf.mxu0
    %v1019 = vadd.f32 0.0, %v1018
    %v1020 = vpop.f32.mrf.mxu0
    %1021 = vdwg.mxu0
    %1022 = vmatpush.bf16.msra.mxu0 0
    %1023 = vmatpush.bf16.msra.mxu0 0
    %1024 = vmatpush.bf16.msra.mxu0 0
    %1025 = vmatpush.bf16.msra.mxu0 0
    %1026 = vmatpush.bf16.msra.mxu0 0
    %1027 = vmatpush.bf16.msra.mxu0 0
    %1028 = vmatpush.bf16.msra.mxu0 %v1007
    %1029 = vmatpush.bf16.msra.mxu0 %v997
    %1030 = vmatmul.bf16.gmra.mxu0 %v1001
    %v1031 = vpop.f32.mrf.mxu0
    %v1032 = vadd.f32 0.0, %v1031
    %v1033 = vpop.f32.mrf.mxu0
    %1034 = vdwg.mxu0
    %v1035 = vmax.f32 %v1019, 0.0
    %v1036 = vmax.f32 %v1032, 0.0
    %1037 = vst [vmem:[#allocation2 + $0x20] sm:$0xff] %v1035
    %1038 = vst [vmem:[#allocation2 + $0x28] sm:$0xff] %v1036
    %v1039 = vld [vmem:[#allocation5 + $0x30] sm:$0xff]
    %v1040 = vld [vmem:[#allocation5 + $0x38] sm:$0xff]
    %v1041 = vld [vmem:[#allocation5 + $0x70] sm:$0xff]
    %v1042 = vld [vmem:[#allocation5 + $0x78] sm:$0xff]
    %v1043 = vld [vmem:[#allocation5 + $0xb0] sm:$0xff]
    %v1044 = vld [vmem:[#allocation5 + $0xb8] sm:$0xff]
    %v1045 = vld [vmem:[#allocation5 + $0xf0] sm:$0x7]
    %v1046 = vld [vmem:[#allocation5 + $0xf8] sm:$0x7]
    %v1047 = vld [vmem:[%s2] sm:$0xf]
    %v1048 = vpack.c.bf16 %v1041, %v1039
    %v1049 = vpack.c.bf16 %v1042, %v1040
    %v1050 = vpack.c.bf16 %v1045, %v1043
    %v1051 = vpack.c.bf16 %v1046, %v1044
    %v1053 = vsel %vm891, %v1047, 0
    %v1056 = vand.u32 %v1050, %v898
    %v1059 = vand.u32 %v1051, %v898
    %1061 = vmatpush.bf16.msra.mxu0 0
    %1062 = vmatpush.bf16.msra.mxu0 0
    %1063 = vmatpush.bf16.msra.mxu0 0
    %1064 = vmatpush.bf16.msra.mxu0 0
    %1065 = vmatpush.bf16.msra.mxu0 0
    %1066 = vmatpush.bf16.msra.mxu0 0
    %1067 = vmatpush.bf16.msra.mxu0 %v1056
    %1068 = vmatpush.bf16.msra.mxu0 %v1048
    %1069 = vmatmul.bf16.gmra.mxu0 %v1053
    %v1070 = vpop.f32.mrf.mxu0
    %v1071 = vadd.f32 0.0, %v1070
    %v1072 = vpop.f32.mrf.mxu0
    %1073 = vdwg.mxu0
    %1074 = vmatpush.bf16.msra.mxu0 0
    %1075 = vmatpush.bf16.msra.mxu0 0
    %1076 = vmatpush.bf16.msra.mxu0 0
    %1077 = vmatpush.bf16.msra.mxu0 0
    %1078 = vmatpush.bf16.msra.mxu0 0
    %1079 = vmatpush.bf16.msra.mxu0 0
    %1080 = vmatpush.bf16.msra.mxu0 %v1059
    %1081 = vmatpush.bf16.msra.mxu0 %v1049
    %1082 = vmatmul.bf16.gmra.mxu0 %v1053
    %v1083 = vpop.f32.mrf.mxu0
    %v1084 = vadd.f32 0.0, %v1083
    %v1085 = vpop.f32.mrf.mxu0
    %1086 = vdwg.mxu0
    %v1087 = vmax.f32 %v1071, 0.0
    %v1088 = vmax.f32 %v1084, 0.0
    %1089 = vst [vmem:[#allocation2 + $0x30] sm:$0xff] %v1087
    %1090 = vst [vmem:[#allocation2 + $0x38] sm:$0xff] %v1088
    %s1091 = scalar_lea.vmem %s0, 1
    %v1092 = vld [vmem:[%s1091] ss:$2 sm:$0xff]
    %v1094 = vperm.slane %v1092, 0
    %v1095 = vperm.slane %v1092, 1
    %v1096 = vperm.slane %v1092, 2
    %v1097 = vperm.slane %v1092, 3
    %v1098 = vperm.slane %v1092, 4
    %v1099 = vperm.slane %v1092, 5
    %v1100 = vperm.slane %v1092, 6
    %v1101 = vperm.slane %v1092, 7
    %1110 = vrot.lane.b32.xlu0 %v1094, 33
    %v1111 = vpop.permute.xlu0 %1110
    %1112 = vrot.lane.b32.xlu0 %v1095, 33
    %v1113 = vpop.permute.xlu0 %1112
    %1114 = vrot.lane.b32.xlu0 %v1096, 33
    %v1115 = vpop.permute.xlu0 %1114
    %1116 = vrot.lane.b32.xlu0 %v1097, 33
    %v1117 = vpop.permute.xlu0 %1116
    %1118 = vrot.lane.b32.xlu0 %v1098, 33
    %v1119 = vpop.permute.xlu0 %1118
    %1120 = vrot.lane.b32.xlu0 %v1099, 33
    %v1121 = vpop.permute.xlu0 %1120
    %1122 = vrot.lane.b32.xlu0 %v1100, 33
    %v1123 = vpop.permute.xlu0 %1122
    %1124 = vrot.lane.b32.xlu0 %v1101, 33
    %v1125 = vpop.permute.xlu0 %1124
    %v1126 = vsel %vm58, %v1123, %v1125
    %v1127 = vsel %vm58, %v1121, %v1123
    %v1128 = vsel %vm58, %v1119, %v1121
    %v1129 = vsel %vm58, %v1117, %v1119
    %v1130 = vsel %vm58, %v1115, %v1117
    %v1131 = vsel %vm58, %v1113, %v1115
    %v1132 = vsel %vm58, %v1111, %v1113
    %v1133 = vsel %vm58, %v1125, %v1111
    %v1134 = vld [vmem:[%s1] ss:$8 sm:$0xf]
    %v1135 = vld [vmem:[%s1] ss:$8 sm:$0xf0]
    %v1136 = vor.u32 %v1134, %v1135
    %v1138 = vperm.slane %v1136, 0
    %v1139 = vperm.slane %v1136, 1
    %v1140 = vperm.slane %v1136, 2
    %v1141 = vperm.slane %v1136, 3
    %v1142 = vperm.slane %v1136, 4
    %v1143 = vperm.slane %v1136, 5
    %v1144 = vperm.slane %v1136, 6
    %v1145 = vperm.slane %v1136, 7
    %v1154 = vmul.f32 %v1133, %v1138
    %v1155 = vmul.f32 %v1132, %v1139
    %v1156 = vmul.f32 %v1131, %v1140
    %v1157 = vmul.f32 %v1130, %v1141
    %v1158 = vmul.f32 %v1129, %v1142
    %v1159 = vmul.f32 %v1128, %v1143
    %v1160 = vmul.f32 %v1127, %v1144
    %v1161 = vmul.f32 %v1126, %v1145
    %1162 = vst [vmem:[#allocation5] sm:$0x7] %v1154
    %1163 = vst [vmem:[#allocation5 + $0x8] sm:$0x7] %v1155
    %1164 = vst [vmem:[#allocation5 + $0x10] sm:$0x7] %v1156
    %1165 = vst [vmem:[#allocation5 + $0x18] sm:$0x7] %v1157
    %1166 = vst [vmem:[#allocation5 + $0x20] sm:$0x7] %v1158
    %1167 = vst [vmem:[#allocation5 + $0x28] sm:$0x7] %v1159
    %1168 = vst [vmem:[#allocation5 + $0x30] sm:$0x7] %v1160
    %1169 = vst [vmem:[#allocation5 + $0x38] sm:$0x7] %v1161
    %v1170 = vld [vmem:[%s1091] ss:$2 sm:$0xff]
    %v1172 = vperm.slane %v1170, 0
    %v1173 = vperm.slane %v1170, 1
    %v1174 = vperm.slane %v1170, 2
    %v1175 = vperm.slane %v1170, 3
    %v1176 = vperm.slane %v1170, 4
    %v1177 = vperm.slane %v1170, 5
    %v1178 = vperm.slane %v1170, 6
    %v1179 = vperm.slane %v1170, 7
    %1188 = vrot.lane.b32.xlu0 %v1172, 32
    %v1189 = vpop.permute.xlu0 %1188
    %1190 = vrot.lane.b32.xlu0 %v1173, 32
    %v1191 = vpop.permute.xlu0 %1190
    %1192 = vrot.lane.b32.xlu0 %v1174, 32
    %v1193 = vpop.permute.xlu0 %1192
    %1194 = vrot.lane.b32.xlu0 %v1175, 32
    %v1195 = vpop.permute.xlu0 %1194
    %1196 = vrot.lane.b32.xlu0 %v1176, 32
    %v1197 = vpop.permute.xlu0 %1196
    %1198 = vrot.lane.b32.xlu0 %v1177, 32
    %v1199 = vpop.permute.xlu0 %1198
    %1200 = vrot.lane.b32.xlu0 %v1178, 32
    %v1201 = vpop.permute.xlu0 %1200
    %1202 = vrot.lane.b32.xlu0 %v1179, 32
    %v1203 = vpop.permute.xlu0 %1202
    %v1204 = vsel %vm137, %v1201, %v1203
    %v1205 = vsel %vm137, %v1199, %v1201
    %v1206 = vsel %vm137, %v1197, %v1199
    %v1207 = vsel %vm137, %v1195, %v1197
    %v1208 = vsel %vm137, %v1193, %v1195
    %v1209 = vsel %vm137, %v1191, %v1193
    %v1210 = vsel %vm137, %v1189, %v1191
    %v1211 = vsel %vm137, %v1203, %v1189
    %v1212 = vld [vmem:[%s146] ss:$8 sm:$0xf]
    %v1213 = vld [vmem:[%s146] ss:$8 sm:$0xf0]
    %v1214 = vor.u32 %v1212, %v1213
    %v1216 = vperm.slane %v1214, 0
    %v1217 = vperm.slane %v1214, 1
    %v1218 = vperm.slane %v1214, 2
    %v1219 = vperm.slane %v1214, 3
    %v1220 = vperm.slane %v1214, 4
    %v1221 = vperm.slane %v1214, 5
    %v1222 = vperm.slane %v1214, 6
    %v1223 = vperm.slane %v1214, 7
    %v1232 = vmul.f32 %v1211, %v1216
    %v1233 = vmul.f32 %v1210, %v1217
    %v1234 = vmul.f32 %v1209, %v1218
    %v1235 = vmul.f32 %v1208, %v1219
    %v1236 = vmul.f32 %v1207, %v1220
    %v1237 = vmul.f32 %v1206, %v1221
    %v1238 = vmul.f32 %v1205, %v1222
    %v1239 = vmul.f32 %v1204, %v1223
    %v1248 = vrot.slane %v1232, 5
    %v1249 = vrot.slane %v1233, 5
    %v1250 = vrot.slane %v1234, 5
    %v1251 = vrot.slane %v1235, 5
    %v1252 = vrot.slane %v1236, 5
    %v1253 = vrot.slane %v1237, 5
    %v1254 = vrot.slane %v1238, 5
    %v1255 = vrot.slane %v1239, 5
    %1264 = vst [vmem:[#allocation5] sm:$0x38] %v1248
    %1265 = vst [vmem:[#allocation5 + $0x8] sm:$0x38] %v1249
    %1266 = vst [vmem:[#allocation5 + $0x10] sm:$0x38] %v1250
    %1267 = vst [vmem:[#allocation5 + $0x18] sm:$0x38] %v1251
    %1268 = vst [vmem:[#allocation5 + $0x20] sm:$0x38] %v1252
    %1269 = vst [vmem:[#allocation5 + $0x28] sm:$0x38] %v1253
    %1270 = vst [vmem:[#allocation5 + $0x30] sm:$0x38] %v1254
    %1271 = vst [vmem:[#allocation5 + $0x38] sm:$0x38] %v1255
    %v1272 = vld [vmem:[%s1091] ss:$2 sm:$0xff]
    %v1274 = vperm.slane %v1272, 0
    %v1275 = vperm.slane %v1272, 1
    %v1276 = vperm.slane %v1272, 2
    %v1277 = vperm.slane %v1272, 3
    %v1278 = vperm.slane %v1272, 4
    %v1279 = vperm.slane %v1272, 5
    %v1280 = vperm.slane %v1272, 6
    %v1281 = vperm.slane %v1272, 7
    %1290 = vrot.lane.b32.xlu0 %v1274, 31
    %v1291 = vpop.permute.xlu0 %1290
    %1292 = vrot.lane.b32.xlu0 %v1275, 31
    %v1293 = vpop.permute.xlu0 %1292
    %1294 = vrot.lane.b32.xlu0 %v1276, 31
    %v1295 = vpop.permute.xlu0 %1294
    %1296 = vrot.lane.b32.xlu0 %v1277, 31
    %v1297 = vpop.permute.xlu0 %1296
    %1298 = vrot.lane.b32.xlu0 %v1278, 31
    %v1299 = vpop.permute.xlu0 %1298
    %1300 = vrot.lane.b32.xlu0 %v1279, 31
    %v1301 = vpop.permute.xlu0 %1300
    %1302 = vrot.lane.b32.xlu0 %v1280, 31
    %v1303 = vpop.permute.xlu0 %1302
    %1304 = vrot.lane.b32.xlu0 %v1281, 31
    %v1305 = vpop.permute.xlu0 %1304
    %v1306 = vsel %vm241, %v1303, %v1305
    %v1307 = vsel %vm241, %v1301, %v1303
    %v1308 = vsel %vm241, %v1299, %v1301
    %v1309 = vsel %vm241, %v1297, %v1299
    %v1310 = vsel %vm241, %v1295, %v1297
    %v1311 = vsel %vm241, %v1293, %v1295
    %v1312 = vsel %vm241, %v1291, %v1293
    %v1313 = vsel %vm241, %v1305, %v1291
    %v1314 = vld [vmem:[%s250] ss:$8 sm:$0xf]
    %v1315 = vld [vmem:[%s250] ss:$8 sm:$0xf0]
    %v1316 = vor.u32 %v1314, %v1315
    %v1318 = vperm.slane %v1316, 0
    %v1319 = vperm.slane %v1316, 1
    %v1320 = vperm.slane %v1316, 2
    %v1321 = vperm.slane %v1316, 3
    %v1322 = vperm.slane %v1316, 4
    %v1323 = vperm.slane %v1316, 5
    %v1324 = vperm.slane %v1316, 6
    %v1325 = vperm.slane %v1316, 7
    %v1334 = vmul.f32 %v1313, %v1318
    %v1335 = vmul.f32 %v1312, %v1319
    %v1336 = vmul.f32 %v1311, %v1320
    %v1337 = vmul.f32 %v1310, %v1321
    %v1338 = vmul.f32 %v1309, %v1322
    %v1339 = vmul.f32 %v1308, %v1323
    %v1340 = vmul.f32 %v1307, %v1324
    %v1341 = vmul.f32 %v1306, %v1325
    %v1350 = vrot.slane %v1334, 2
    %v1351 = vrot.slane %v1335, 2
    %v1352 = vrot.slane %v1336, 2
    %v1353 = vrot.slane %v1337, 2
    %v1354 = vrot.slane %v1338, 2
    %v1355 = vrot.slane %v1339, 2
    %v1356 = vrot.slane %v1340, 2
    %v1357 = vrot.slane %v1341, 2
    %1366 = vst [vmem:[#allocation5] sm:$0xc0] %v1350
    %1367 = vst [vmem:[#allocation5 + $0x8] sm:$0xc0] %v1351
    %1368 = vst [vmem:[#allocation5 + $0x10] sm:$0xc0] %v1352
    %1369 = vst [vmem:[#allocation5 + $0x18] sm:$0xc0] %v1353
    %1370 = vst [vmem:[#allocation5 + $0x20] sm:$0xc0] %v1354
    %1371 = vst [vmem:[#allocation5 + $0x28] sm:$0xc0] %v1355
    %1372 = vst [vmem:[#allocation5 + $0x30] sm:$0xc0] %v1356
    %1373 = vst [vmem:[#allocation5 + $0x38] sm:$0xc0] %v1357
    %1374 = vst [vmem:[#allocation5 + $0x40] sm:$0x1] %v1350
    %1375 = vst [vmem:[#allocation5 + $0x48] sm:$0x1] %v1351
    %1376 = vst [vmem:[#allocation5 + $0x50] sm:$0x1] %v1352
    %1377 = vst [vmem:[#allocation5 + $0x58] sm:$0x1] %v1353
    %1378 = vst [vmem:[#allocation5 + $0x60] sm:$0x1] %v1354
    %1379 = vst [vmem:[#allocation5 + $0x68] sm:$0x1] %v1355
    %1380 = vst [vmem:[#allocation5 + $0x70] sm:$0x1] %v1356
    %1381 = vst [vmem:[#allocation5 + $0x78] sm:$0x1] %v1357
    %v1382 = vld [vmem:[%s1091] ss:$2 sm:$0xff]
    %v1384 = vperm.slane %v1382, 0
    %v1385 = vperm.slane %v1382, 1
    %v1386 = vperm.slane %v1382, 2
    %v1387 = vperm.slane %v1382, 3
    %v1388 = vperm.slane %v1382, 4
    %v1389 = vperm.slane %v1382, 5
    %v1390 = vperm.slane %v1382, 6
    %v1391 = vperm.slane %v1382, 7
    %1400 = vrot.lane.b32.xlu0 %v1384, 1
    %v1401 = vpop.permute.xlu0 %1400
    %1402 = vrot.lane.b32.xlu0 %v1385, 1
    %v1403 = vpop.permute.xlu0 %1402
    %1404 = vrot.lane.b32.xlu0 %v1386, 1
    %v1405 = vpop.permute.xlu0 %1404
    %1406 = vrot.lane.b32.xlu0 %v1387, 1
    %v1407 = vpop.permute.xlu0 %1406
    %1408 = vrot.lane.b32.xlu0 %v1388, 1
    %v1409 = vpop.permute.xlu0 %1408
    %1410 = vrot.lane.b32.xlu0 %v1389, 1
    %v1411 = vpop.permute.xlu0 %1410
    %1412 = vrot.lane.b32.xlu0 %v1390, 1
    %v1413 = vpop.permute.xlu0 %1412
    %1414 = vrot.lane.b32.xlu0 %v1391, 1
    %v1415 = vpop.permute.xlu0 %1414
    %v1416 = vsel %vm353, %v1413, %v1415
    %v1417 = vsel %vm353, %v1411, %v1413
    %v1418 = vsel %vm353, %v1409, %v1411
    %v1419 = vsel %vm353, %v1407, %v1409
    %v1420 = vsel %vm353, %v1405, %v1407
    %v1421 = vsel %vm353, %v1403, %v1405
    %v1422 = vsel %vm353, %v1401, %v1403
    %v1423 = vsel %vm353, %v1415, %v1401
    %v1424 = vld [vmem:[%s362] ss:$8 sm:$0xf]
    %v1425 = vld [vmem:[%s362] ss:$8 sm:$0xf0]
    %v1426 = vor.u32 %v1424, %v1425
    %v1428 = vperm.slane %v1426, 0
    %v1429 = vperm.slane %v1426, 1
    %v1430 = vperm.slane %v1426, 2
    %v1431 = vperm.slane %v1426, 3
    %v1432 = vperm.slane %v1426, 4
    %v1433 = vperm.slane %v1426, 5
    %v1434 = vperm.slane %v1426, 6
    %v1435 = vperm.slane %v1426, 7
    %v1444 = vmul.f32 %v1423, %v1428
    %v1445 = vmul.f32 %v1422, %v1429
    %v1446 = vmul.f32 %v1421, %v1430
    %v1447 = vmul.f32 %v1420, %v1431
    %v1448 = vmul.f32 %v1419, %v1432
    %v1449 = vmul.f32 %v1418, %v1433
    %v1450 = vmul.f32 %v1417, %v1434
    %v1451 = vmul.f32 %v1416, %v1435
    %v1460 = vrot.slane %v1444, 7
    %v1461 = vrot.slane %v1445, 7
    %v1462 = vrot.slane %v1446, 7
    %v1463 = vrot.slane %v1447, 7
    %v1464 = vrot.slane %v1448, 7
    %v1465 = vrot.slane %v1449, 7
    %v1466 = vrot.slane %v1450, 7
    %v1467 = vrot.slane %v1451, 7
    %1476 = vst [vmem:[#allocation5 + $0x40] sm:$0xe] %v1460
    %1477 = vst [vmem:[#allocation5 + $0x48] sm:$0xe] %v1461
    %1478 = vst [vmem:[#allocation5 + $0x50] sm:$0xe] %v1462
    %1479 = vst [vmem:[#allocation5 + $0x58] sm:$0xe] %v1463
    %1480 = vst [vmem:[#allocation5 + $0x60] sm:$0xe] %v1464
    %1481 = vst [vmem:[#allocation5 + $0x68] sm:$0xe] %v1465
    %1482 = vst [vmem:[#allocation5 + $0x70] sm:$0xe] %v1466
    %1483 = vst [vmem:[#allocation5 + $0x78] sm:$0xe] %v1467
    %v1484 = vld [vmem:[%s1091] ss:$2 sm:$0xff]
    %v1486 = vperm.slane %v1484, 0
    %v1487 = vperm.slane %v1484, 1
    %v1488 = vperm.slane %v1484, 2
    %v1489 = vperm.slane %v1484, 3
    %v1490 = vperm.slane %v1484, 4
    %v1491 = vperm.slane %v1484, 5
    %v1492 = vperm.slane %v1484, 6
    %v1493 = vperm.slane %v1484, 7
    %v1502 = vld [vmem:[%s441] ss:$8 sm:$0xf]
    %v1503 = vld [vmem:[%s441] ss:$8 sm:$0xf0]
    %v1504 = vor.u32 %v1502, %v1503
    %v1506 = vperm.slane %v1504, 0
    %v1507 = vperm.slane %v1504, 1
    %v1508 = vperm.slane %v1504, 2
    %v1509 = vperm.slane %v1504, 3
    %v1510 = vperm.slane %v1504, 4
    %v1511 = vperm.slane %v1504, 5
    %v1512 = vperm.slane %v1504, 6
    %v1513 = vperm.slane %v1504, 7
    %v1522 = vmul.f32 %v1486, %v1506
    %v1523 = vmul.f32 %v1487, %v1507
    %v1524 = vmul.f32 %v1488, %v1508
    %v1525 = vmul.f32 %v1489, %v1509
    %v1526 = vmul.f32 %v1490, %v1510
    %v1527 = vmul.f32 %v1491, %v1511
    %v1528 = vmul.f32 %v1492, %v1512
    %v1529 = vmul.f32 %v1493, %v1513
    %1530 = vst [vmem:[#allocation5 + $0x40] sm:$0x70] %v1522
    %1531 = vst [vmem:[#allocation5 + $0x48] sm:$0x70] %v1523
    %1532 = vst [vmem:[#allocation5 + $0x50] sm:$0x70] %v1524
    %1533 = vst [vmem:[#allocation5 + $0x58] sm:$0x70] %v1525
    %1534 = vst [vmem:[#allocation5 + $0x60] sm:$0x70] %v1526
    %1535 = vst [vmem:[#allocation5 + $0x68] sm:$0x70] %v1527
    %1536 = vst [vmem:[#allocation5 + $0x70] sm:$0x70] %v1528
    %1537 = vst [vmem:[#allocation5 + $0x78] sm:$0x70] %v1529
    %v1538 = vld [vmem:[%s1091] ss:$2 sm:$0xff]
    %v1540 = vperm.slane %v1538, 0
    %v1541 = vperm.slane %v1538, 1
    %v1542 = vperm.slane %v1538, 2
    %v1543 = vperm.slane %v1538, 3
    %v1544 = vperm.slane %v1538, 4
    %v1545 = vperm.slane %v1538, 5
    %v1546 = vperm.slane %v1538, 6
    %v1547 = vperm.slane %v1538, 7
    %1556 = vrot.lane.b32.xlu0 %v1540, 127
    %v1557 = vpop.permute.xlu0 %1556
    %1558 = vrot.lane.b32.xlu0 %v1541, 127
    %v1559 = vpop.permute.xlu0 %1558
    %1560 = vrot.lane.b32.xlu0 %v1542, 127
    %v1561 = vpop.permute.xlu0 %1560
    %1562 = vrot.lane.b32.xlu0 %v1543, 127
    %v1563 = vpop.permute.xlu0 %1562
    %1564 = vrot.lane.b32.xlu0 %v1544, 127
    %v1565 = vpop.permute.xlu0 %1564
    %1566 = vrot.lane.b32.xlu0 %v1545, 127
    %v1567 = vpop.permute.xlu0 %1566
    %1568 = vrot.lane.b32.xlu0 %v1546, 127
    %v1569 = vpop.permute.xlu0 %1568
    %1570 = vrot.lane.b32.xlu0 %v1547, 127
    %v1571 = vpop.permute.xlu0 %1570
    %v1572 = vsel %vm512, %v1569, %v1571
    %v1573 = vsel %vm512, %v1567, %v1569
    %v1574 = vsel %vm512, %v1565, %v1567
    %v1575 = vsel %vm512, %v1563, %v1565
    %v1576 = vsel %vm512, %v1561, %v1563
    %v1577 = vsel %vm512, %v1559, %v1561
    %v1578 = vsel %vm512, %v1557, %v1559
    %v1579 = vsel %vm512, %v1571, %v1557
    %v1580 = vld [vmem:[%s521] ss:$8 sm:$0xf]
    %v1581 = vld [vmem:[%s521] ss:$8 sm:$0xf0]
    %v1582 = vor.u32 %v1580, %v1581
    %v1584 = vperm.slane %v1582, 0
    %v1585 = vperm.slane %v1582, 1
    %v1586 = vperm.slane %v1582, 2
    %v1587 = vperm.slane %v1582, 3
    %v1588 = vperm.slane %v1582, 4
    %v1589 = vperm.slane %v1582, 5
    %v1590 = vperm.slane %v1582, 6
    %v1591 = vperm.slane %v1582, 7
    %v1600 = vmul.f32 %v1578, %v1584
    %v1601 = vmul.f32 %v1577, %v1585
    %v1602 = vmul.f32 %v1576, %v1586
    %v1603 = vmul.f32 %v1575, %v1587
    %v1604 = vmul.f32 %v1574, %v1588
    %v1605 = vmul.f32 %v1573, %v1589
    %v1606 = vmul.f32 %v1572, %v1590
    %v1607 = vmul.f32 %v1579, %v1591
    %v1616 = vrot.slane %v1600, 1
    %v1617 = vrot.slane %v1601, 1
    %v1618 = vrot.slane %v1602, 1
    %v1619 = vrot.slane %v1603, 1
    %v1620 = vrot.slane %v1604, 1
    %v1621 = vrot.slane %v1605, 1
    %v1622 = vrot.slane %v1606, 1
    %v1623 = vrot.slane %v1607, 1
    %1632 = vst [vmem:[#allocation5 + $0x40] sm:$0x80] %v1616
    %1633 = vst [vmem:[#allocation5 + $0x48] sm:$0x80] %v1617
    %1634 = vst [vmem:[#allocation5 + $0x50] sm:$0x80] %v1618
    %1635 = vst [vmem:[#allocation5 + $0x58] sm:$0x80] %v1619
    %1636 = vst [vmem:[#allocation5 + $0x60] sm:$0x80] %v1620
    %1637 = vst [vmem:[#allocation5 + $0x68] sm:$0x80] %v1621
    %1638 = vst [vmem:[#allocation5 + $0x70] sm:$0x80] %v1622
    %1639 = vst [vmem:[#allocation5 + $0x78] sm:$0x80] %v1623
    %1640 = vst [vmem:[#allocation5 + $0x80] sm:$0x3] %v1616
    %1641 = vst [vmem:[#allocation5 + $0x88] sm:$0x3] %v1617
    %1642 = vst [vmem:[#allocation5 + $0x90] sm:$0x3] %v1618
    %1643 = vst [vmem:[#allocation5 + $0x98] sm:$0x3] %v1619
    %1644 = vst [vmem:[#allocation5 + $0xa0] sm:$0x3] %v1620
    %1645 = vst [vmem:[#allocation5 + $0xa8] sm:$0x3] %v1621
    %1646 = vst [vmem:[#allocation5 + $0xb0] sm:$0x3] %v1622
    %1647 = vst [vmem:[#allocation5 + $0xb8] sm:$0x3] %v1623
    %v1648 = vld [vmem:[%s1091] ss:$2 sm:$0xff]
    %v1650 = vperm.slane %v1648, 0
    %v1651 = vperm.slane %v1648, 1
    %v1652 = vperm.slane %v1648, 2
    %v1653 = vperm.slane %v1648, 3
    %v1654 = vperm.slane %v1648, 4
    %v1655 = vperm.slane %v1648, 5
    %v1656 = vperm.slane %v1648, 6
    %v1657 = vperm.slane %v1648, 7
    %1666 = vrot.lane.b32.xlu0 %v1650, 97
    %v1667 = vpop.permute.xlu0 %1666
    %1668 = vrot.lane.b32.xlu0 %v1651, 97
    %v1669 = vpop.permute.xlu0 %1668
    %1670 = vrot.lane.b32.xlu0 %v1652, 97
    %v1671 = vpop.permute.xlu0 %1670
    %1672 = vrot.lane.b32.xlu0 %v1653, 97
    %v1673 = vpop.permute.xlu0 %1672
    %1674 = vrot.lane.b32.xlu0 %v1654, 97
    %v1675 = vpop.permute.xlu0 %1674
    %1676 = vrot.lane.b32.xlu0 %v1655, 97
    %v1677 = vpop.permute.xlu0 %1676
    %1678 = vrot.lane.b32.xlu0 %v1656, 97
    %v1679 = vpop.permute.xlu0 %1678
    %1680 = vrot.lane.b32.xlu0 %v1657, 97
    %v1681 = vpop.permute.xlu0 %1680
    %v1682 = vsel %vm624, %v1679, %v1681
    %v1683 = vsel %vm624, %v1677, %v1679
    %v1684 = vsel %vm624, %v1675, %v1677
    %v1685 = vsel %vm624, %v1673, %v1675
    %v1686 = vsel %vm624, %v1671, %v1673
    %v1687 = vsel %vm624, %v1669, %v1671
    %v1688 = vsel %vm624, %v1667, %v1669
    %v1689 = vsel %vm624, %v1681, %v1667
    %v1690 = vld [vmem:[%s633] ss:$8 sm:$0xf]
    %v1691 = vld [vmem:[%s633] ss:$8 sm:$0xf0]
    %v1692 = vor.u32 %v1690, %v1691
    %v1694 = vperm.slane %v1692, 0
    %v1695 = vperm.slane %v1692, 1
    %v1696 = vperm.slane %v1692, 2
    %v1697 = vperm.slane %v1692, 3
    %v1698 = vperm.slane %v1692, 4
    %v1699 = vperm.slane %v1692, 5
    %v1700 = vperm.slane %v1692, 6
    %v1701 = vperm.slane %v1692, 7
    %v1710 = vmul.f32 %v1688, %v1694
    %v1711 = vmul.f32 %v1687, %v1695
    %v1712 = vmul.f32 %v1686, %v1696
    %v1713 = vmul.f32 %v1685, %v1697
    %v1714 = vmul.f32 %v1684, %v1698
    %v1715 = vmul.f32 %v1683, %v1699
    %v1716 = vmul.f32 %v1682, %v1700
    %v1717 = vmul.f32 %v1689, %v1701
    %v1726 = vrot.slane %v1710, 6
    %v1727 = vrot.slane %v1711, 6
    %v1728 = vrot.slane %v1712, 6
    %v1729 = vrot.slane %v1713, 6
    %v1730 = vrot.slane %v1714, 6
    %v1731 = vrot.slane %v1715, 6
    %v1732 = vrot.slane %v1716, 6
    %v1733 = vrot.slane %v1717, 6
    %1742 = vst [vmem:[#allocation5 + $0x80] sm:$0x1c] %v1726
    %1743 = vst [vmem:[#allocation5 + $0x88] sm:$0x1c] %v1727
    %1744 = vst [vmem:[#allocation5 + $0x90] sm:$0x1c] %v1728
    %1745 = vst [vmem:[#allocation5 + $0x98] sm:$0x1c] %v1729
    %1746 = vst [vmem:[#allocation5 + $0xa0] sm:$0x1c] %v1730
    %1747 = vst [vmem:[#allocation5 + $0xa8] sm:$0x1c] %v1731
    %1748 = vst [vmem:[#allocation5 + $0xb0] sm:$0x1c] %v1732
    %1749 = vst [vmem:[#allocation5 + $0xb8] sm:$0x1c] %v1733
    %v1750 = vld [vmem:[%s1091] ss:$2 sm:$0xff]
    %v1752 = vperm.slane %v1750, 0
    %v1753 = vperm.slane %v1750, 1
    %v1754 = vperm.slane %v1750, 2
    %v1755 = vperm.slane %v1750, 3
    %v1756 = vperm.slane %v1750, 4
    %v1757 = vperm.slane %v1750, 5
    %v1758 = vperm.slane %v1750, 6
    %v1759 = vperm.slane %v1750, 7
    %1768 = vrot.lane.b32.xlu0 %v1752, 96
    %v1769 = vpop.permute.xlu0 %1768
    %1770 = vrot.lane.b32.xlu0 %v1753, 96
    %v1771 = vpop.permute.xlu0 %1770
    %1772 = vrot.lane.b32.xlu0 %v1754, 96
    %v1773 = vpop.permute.xlu0 %1772
    %1774 = vrot.lane.b32.xlu0 %v1755, 96
    %v1775 = vpop.permute.xlu0 %1774
    %1776 = vrot.lane.b32.xlu0 %v1756, 96
    %v1777 = vpop.permute.xlu0 %1776
    %1778 = vrot.lane.b32.xlu0 %v1757, 96
    %v1779 = vpop.permute.xlu0 %1778
    %1780 = vrot.lane.b32.xlu0 %v1758, 96
    %v1781 = vpop.permute.xlu0 %1780
    %1782 = vrot.lane.b32.xlu0 %v1759, 96
    %v1783 = vpop.permute.xlu0 %1782
    %v1784 = vsel %vm728, %v1781, %v1783
    %v1785 = vsel %vm728, %v1779, %v1781
    %v1786 = vsel %vm728, %v1777, %v1779
    %v1787 = vsel %vm728, %v1775, %v1777
    %v1788 = vsel %vm728, %v1773, %v1775
    %v1789 = vsel %vm728, %v1771, %v1773
    %v1790 = vsel %vm728, %v1769, %v1771
    %v1791 = vsel %vm728, %v1783, %v1769
    %v1792 = vld [vmem:[%s737] ss:$8 sm:$0xf]
    %v1793 = vld [vmem:[%s737] ss:$8 sm:$0xf0]
    %v1794 = vor.u32 %v1792, %v1793
    %v1796 = vperm.slane %v1794, 0
    %v1797 = vperm.slane %v1794, 1
    %v1798 = vperm.slane %v1794, 2
    %v1799 = vperm.slane %v1794, 3
    %v1800 = vperm.slane %v1794, 4
    %v1801 = vperm.slane %v1794, 5
    %v1802 = vperm.slane %v1794, 6
    %v1803 = vperm.slane %v1794, 7
    %v1812 = vmul.f32 %v1790, %v1796
    %v1813 = vmul.f32 %v1789, %v1797
    %v1814 = vmul.f32 %v1788, %v1798
    %v1815 = vmul.f32 %v1787, %v1799
    %v1816 = vmul.f32 %v1786, %v1800
    %v1817 = vmul.f32 %v1785, %v1801
    %v1818 = vmul.f32 %v1784, %v1802
    %v1819 = vmul.f32 %v1791, %v1803
    %v1828 = vrot.slane %v1812, 3
    %v1829 = vrot.slane %v1813, 3
    %v1830 = vrot.slane %v1814, 3
    %v1831 = vrot.slane %v1815, 3
    %v1832 = vrot.slane %v1816, 3
    %v1833 = vrot.slane %v1817, 3
    %v1834 = vrot.slane %v1818, 3
    %v1835 = vrot.slane %v1819, 3
    %1844 = vst [vmem:[#allocation5 + $0x80] sm:$0xe0] %v1828
    %1845 = vst [vmem:[#allocation5 + $0x88] sm:$0xe0] %v1829
    %1846 = vst [vmem:[#allocation5 + $0x90] sm:$0xe0] %v1830
    %1847 = vst [vmem:[#allocation5 + $0x98] sm:$0xe0] %v1831
    %1848 = vst [vmem:[#allocation5 + $0xa0] sm:$0xe0] %v1832
    %1849 = vst [vmem:[#allocation5 + $0xa8] sm:$0xe0] %v1833
    %1850 = vst [vmem:[#allocation5 + $0xb0] sm:$0xe0] %v1834
    %1851 = vst [vmem:[#allocation5 + $0xb8] sm:$0xe0] %v1835
    %v1852 = vld [vmem:[%s1091] ss:$2 sm:$0xff]
    %v1854 = vperm.slane %v1852, 0
    %v1855 = vperm.slane %v1852, 1
    %v1856 = vperm.slane %v1852, 2
    %v1857 = vperm.slane %v1852, 3
    %v1858 = vperm.slane %v1852, 4
    %v1859 = vperm.slane %v1852, 5
    %v1860 = vperm.slane %v1852, 6
    %v1861 = vperm.slane %v1852, 7
    %1870 = vrot.lane.b32.xlu0 %v1854, 95
    %v1871 = vpop.permute.xlu0 %1870
    %1872 = vrot.lane.b32.xlu0 %v1855, 95
    %v1873 = vpop.permute.xlu0 %1872
    %1874 = vrot.lane.b32.xlu0 %v1856, 95
    %v1875 = vpop.permute.xlu0 %1874
    %1876 = vrot.lane.b32.xlu0 %v1857, 95
    %v1877 = vpop.permute.xlu0 %1876
    %1878 = vrot.lane.b32.xlu0 %v1858, 95
    %v1879 = vpop.permute.xlu0 %1878
    %1880 = vrot.lane.b32.xlu0 %v1859, 95
    %v1881 = vpop.permute.xlu0 %1880
    %1882 = vrot.lane.b32.xlu0 %v1860, 95
    %v1883 = vpop.permute.xlu0 %1882
    %1884 = vrot.lane.b32.xlu0 %v1861, 95
    %v1885 = vpop.permute.xlu0 %1884
    %v1886 = vsel %vm832, %v1883, %v1885
    %v1887 = vsel %vm832, %v1881, %v1883
    %v1888 = vsel %vm832, %v1879, %v1881
    %v1889 = vsel %vm832, %v1877, %v1879
    %v1890 = vsel %vm832, %v1875, %v1877
    %v1891 = vsel %vm832, %v1873, %v1875
    %v1892 = vsel %vm832, %v1871, %v1873
    %v1893 = vsel %vm832, %v1885, %v1871
    %v1894 = vld [vmem:[%s841] ss:$8 sm:$0xf]
    %v1895 = vld [vmem:[%s841] ss:$8 sm:$0xf0]
    %v1896 = vor.u32 %v1894, %v1895
    %v1898 = vperm.slane %v1896, 0
    %v1899 = vperm.slane %v1896, 1
    %v1900 = vperm.slane %v1896, 2
    %v1901 = vperm.slane %v1896, 3
    %v1902 = vperm.slane %v1896, 4
    %v1903 = vperm.slane %v1896, 5
    %v1904 = vperm.slane %v1896, 6
    %v1905 = vperm.slane %v1896, 7
    %v1914 = vmul.f32 %v1892, %v1898
    %v1915 = vmul.f32 %v1891, %v1899
    %v1916 = vmul.f32 %v1890, %v1900
    %v1917 = vmul.f32 %v1889, %v1901
    %v1918 = vmul.f32 %v1888, %v1902
    %v1919 = vmul.f32 %v1887, %v1903
    %v1920 = vmul.f32 %v1886, %v1904
    %v1921 = vmul.f32 %v1893, %v1905
    %1922 = vst [vmem:[#allocation5 + $0xc0] sm:$0x7] %v1914
    %1923 = vst [vmem:[#allocation5 + $0xc8] sm:$0x7] %v1915
    %1924 = vst [vmem:[#allocation5 + $0xd0] sm:$0x7] %v1916
    %1925 = vst [vmem:[#allocation5 + $0xd8] sm:$0x7] %v1917
    %1926 = vst [vmem:[#allocation5 + $0xe0] sm:$0x7] %v1918
    %1927 = vst [vmem:[#allocation5 + $0xe8] sm:$0x7] %v1919
    %1928 = vst [vmem:[#allocation5 + $0xf0] sm:$0x7] %v1920
    %1929 = vst [vmem:[#allocation5 + $0xf8] sm:$0x7] %v1921
    %v1930 = vld [vmem:[#allocation5] sm:$0xff]
    %v1931 = vld [vmem:[#allocation5 + $0x8] sm:$0xff]
    %v1932 = vld [vmem:[#allocation5 + $0x40] sm:$0xff]
    %v1933 = vld [vmem:[#allocation5 + $0x48] sm:$0xff]
    %v1934 = vld [vmem:[#allocation5 + $0x80] sm:$0xff]
    %v1935 = vld [vmem:[#allocation5 + $0x88] sm:$0xff]
    %v1936 = vld [vmem:[#allocation5 + $0xc0] sm:$0x7]
    %v1937 = vld [vmem:[#allocation5 + $0xc8] sm:$0x7]
    %v1938 = vld [vmem:[%s2] sm:$0xf]
    %v1939 = vpack.c.bf16 %v1932, %v1930
    %v1940 = vpack.c.bf16 %v1933, %v1931
    %v1941 = vpack.c.bf16 %v1936, %v1934
    %v1942 = vpack.c.bf16 %v1937, %v1935
    %v1944 = vsel %vm891, %v1938, 0
    %v1947 = vand.u32 %v1941, %v898
    %v1950 = vand.u32 %v1942, %v898
    %1952 = vmatpush.bf16.msra.mxu0 0
    %1953 = vmatpush.bf16.msra.mxu0 0
    %1954 = vmatpush.bf16.msra.mxu0 0
    %1955 = vmatpush.bf16.msra.mxu0 0
    %1956 = vmatpush.bf16.msra.mxu0 0
    %1957 = vmatpush.bf16.msra.mxu0 0
    %1958 = vmatpush.bf16.msra.mxu0 %v1947
    %1959 = vmatpush.bf16.msra.mxu0 %v1939
    %1960 = vmatmul.bf16.gmra.mxu0 %v1944
    %v1961 = vpop.f32.mrf.mxu0
    %v1962 = vadd.f32 0.0, %v1961
    %v1963 = vpop.f32.mrf.mxu0
    %1964 = vdwg.mxu0
    %1965 = vmatpush.bf16.msra.mxu0 0
    %1966 = vmatpush.bf16.msra.mxu0 0
    %1967 = vmatpush.bf16.msra.mxu0 0
    %1968 = vmatpush.bf16.msra.mxu0 0
    %1969 = vmatpush.bf16.msra.mxu0 0
    %1970 = vmatpush.bf16.msra.mxu0 0
    %1971 = vmatpush.bf16.msra.mxu0 %v1950
    %1972 = vmatpush.bf16.msra.mxu0 %v1940
    %1973 = vmatmul.bf16.gmra.mxu0 %v1944
    %v1974 = vpop.f32.mrf.mxu0
    %v1975 = vadd.f32 0.0, %v1974
    %v1976 = vpop.f32.mrf.mxu0
    %1977 = vdwg.mxu0
    %v1978 = vmax.f32 %v1962, 0.0
    %v1979 = vmax.f32 %v1975, 0.0
    %1980 = vst [vmem:[#allocation2 + $0x40] sm:$0xff] %v1978
    %1981 = vst [vmem:[#allocation2 + $0x48] sm:$0xff] %v1979
    %v1982 = vld [vmem:[#allocation5 + $0x10] sm:$0xff]
    %v1983 = vld [vmem:[#allocation5 + $0x18] sm:$0xff]
    %v1984 = vld [vmem:[#allocation5 + $0x50] sm:$0xff]
    %v1985 = vld [vmem:[#allocation5 + $0x58] sm:$0xff]
    %v1986 = vld [vmem:[#allocation5 + $0x90] sm:$0xff]
    %v1987 = vld [vmem:[#allocation5 + $0x98] sm:$0xff]
    %v1988 = vld [vmem:[#allocation5 + $0xd0] sm:$0x7]
    %v1989 = vld [vmem:[#allocation5 + $0xd8] sm:$0x7]
    %v1990 = vld [vmem:[%s2] sm:$0xf]
    %v1991 = vpack.c.bf16 %v1984, %v1982
    %v1992 = vpack.c.bf16 %v1985, %v1983
    %v1993 = vpack.c.bf16 %v1988, %v1986
    %v1994 = vpack.c.bf16 %v1989, %v1987
    %v1996 = vsel %vm891, %v1990, 0
    %v1999 = vand.u32 %v1993, %v898
    %v2002 = vand.u32 %v1994, %v898
    %2004 = vmatpush.bf16.msra.mxu0 0
    %2005 = vmatpush.bf16.msra.mxu0 0
    %2006 = vmatpush.bf16.msra.mxu0 0
    %2007 = vmatpush.bf16.msra.mxu0 0
    %2008 = vmatpush.bf16.msra.mxu0 0
    %2009 = vmatpush.bf16.msra.mxu0 0
    %2010 = vmatpush.bf16.msra.mxu0 %v1999
    %2011 = vmatpush.bf16.msra.mxu0 %v1991
    %2012 = vmatmul.bf16.gmra.mxu0 %v1996
    %v2013 = vpop.f32.mrf.mxu0
    %v2014 = vadd.f32 0.0, %v2013
    %v2015 = vpop.f32.mrf.mxu0
    %2016 = vdwg.mxu0
    %2017 = vmatpush.bf16.msra.mxu0 0
    %2018 = vmatpush.bf16.msra.mxu0 0
    %2019 = vmatpush.bf16.msra.mxu0 0
    %2020 = vmatpush.bf16.msra.mxu0 0
    %2021 = vmatpush.bf16.msra.mxu0 0
    %2022 = vmatpush.bf16.msra.mxu0 0
    %2023 = vmatpush.bf16.msra.mxu0 %v2002
    %2024 = vmatpush.bf16.msra.mxu0 %v1992
    %2025 = vmatmul.bf16.gmra.mxu0 %v1996
    %v2026 = vpop.f32.mrf.mxu0
    %v2027 = vadd.f32 0.0, %v2026
    %v2028 = vpop.f32.mrf.mxu0
    %2029 = vdwg.mxu0
    %v2030 = vmax.f32 %v2014, 0.0
    %v2031 = vmax.f32 %v2027, 0.0
    %2032 = vst [vmem:[#allocation2 + $0x50] sm:$0xff] %v2030
    %2033 = vst [vmem:[#allocation2 + $0x58] sm:$0xff] %v2031
    %v2034 = vld [vmem:[#allocation5 + $0x20] sm:$0xff]
    %v2035 = vld [vmem:[#allocation5 + $0x28] sm:$0xff]
    %v2036 = vld [vmem:[#allocation5 + $0x60] sm:$0xff]
    %v2037 = vld [vmem:[#allocation5 + $0x68] sm:$0xff]
    %v2038 = vld [vmem:[#allocation5 + $0xa0] sm:$0xff]
    %v2039 = vld [vmem:[#allocation5 + $0xa8] sm:$0xff]
    %v2040 = vld [vmem:[#allocation5 + $0xe0] sm:$0x7]
    %v2041 = vld [vmem:[#allocation5 + $0xe8] sm:$0x7]
    %v2042 = vld [vmem:[%s2] sm:$0xf]
    %v2043 = vpack.c.bf16 %v2036, %v2034
    %v2044 = vpack.c.bf16 %v2037, %v2035
    %v2045 = vpack.c.bf16 %v2040, %v2038
    %v2046 = vpack.c.bf16 %v2041, %v2039
    %v2048 = vsel %vm891, %v2042, 0
    %v2051 = vand.u32 %v2045, %v898
    %v2054 = vand.u32 %v2046, %v898
    %2056 = vmatpush.bf16.msra.mxu0 0
    %2057 = vmatpush.bf16.msra.mxu0 0
    %2058 = vmatpush.bf16.msra.mxu0 0
    %2059 = vmatpush.bf16.msra.mxu0 0
    %2060 = vmatpush.bf16.msra.mxu0 0
    %2061 = vmatpush.bf16.msra.mxu0 0
    %2062 = vmatpush.bf16.msra.mxu0 %v2051
    %2063 = vmatpush.bf16.msra.mxu0 %v2043
    %2064 = vmatmul.bf16.gmra.mxu0 %v2048
    %v2065 = vpop.f32.mrf.mxu0
    %v2066 = vadd.f32 0.0, %v2065
    %v2067 = vpop.f32.mrf.mxu0
    %2068 = vdwg.mxu0
    %2069 = vmatpush.bf16.msra.mxu0 0
    %2070 = vmatpush.bf16.msra.mxu0 0
    %2071 = vmatpush.bf16.msra.mxu0 0
    %2072 = vmatpush.bf16.msra.mxu0 0
    %2073 = vmatpush.bf16.msra.mxu0 0
    %2074 = vmatpush.bf16.msra.mxu0 0
    %2075 = vmatpush.bf16.msra.mxu0 %v2054
    %2076 = vmatpush.bf16.msra.mxu0 %v2044
    %2077 = vmatmul.bf16.gmra.mxu0 %v2048
    %v2078 = vpop.f32.mrf.mxu0
    %v2079 = vadd.f32 0.0, %v2078
    %v2080 = vpop.f32.mrf.mxu0
    %2081 = vdwg.mxu0
    %v2082 = vmax.f32 %v2066, 0.0
    %v2083 = vmax.f32 %v2079, 0.0
    %2084 = vst [vmem:[#allocation2 + $0x60] sm:$0xff] %v2082
    %2085 = vst [vmem:[#allocation2 + $0x68] sm:$0xff] %v2083
    %v2086 = vld [vmem:[#allocation5 + $0x30] sm:$0xff]
    %v2087 = vld [vmem:[#allocation5 + $0x38] sm:$0xff]
    %v2088 = vld [vmem:[#allocation5 + $0x70] sm:$0xff]
    %v2089 = vld [vmem:[#allocation5 + $0x78] sm:$0xff]
    %v2090 = vld [vmem:[#allocation5 + $0xb0] sm:$0xff]
    %v2091 = vld [vmem:[#allocation5 + $0xb8] sm:$0xff]
    %v2092 = vld [vmem:[#allocation5 + $0xf0] sm:$0x7]
    %v2093 = vld [vmem:[#allocation5 + $0xf8] sm:$0x7]
    %v2094 = vld [vmem:[%s2] sm:$0xf]
    %v2095 = vpack.c.bf16 %v2088, %v2086
    %v2096 = vpack.c.bf16 %v2089, %v2087
    %v2097 = vpack.c.bf16 %v2092, %v2090
    %v2098 = vpack.c.bf16 %v2093, %v2091
    %v2100 = vsel %vm891, %v2094, 0
    %v2103 = vand.u32 %v2097, %v898
    %v2106 = vand.u32 %v2098, %v898
    %2108 = vmatpush.bf16.msra.mxu0 0
    %2109 = vmatpush.bf16.msra.mxu0 0
    %2110 = vmatpush.bf16.msra.mxu0 0
    %2111 = vmatpush.bf16.msra.mxu0 0
    %2112 = vmatpush.bf16.msra.mxu0 0
    %2113 = vmatpush.bf16.msra.mxu0 0
    %2114 = vmatpush.bf16.msra.mxu0 %v2103
    %2115 = vmatpush.bf16.msra.mxu0 %v2095
    %2116 = vmatmul.bf16.gmra.mxu0 %v2100
    %v2117 = vpop.f32.mrf.mxu0
    %v2118 = vadd.f32 0.0, %v2117
    %v2119 = vpop.f32.mrf.mxu0
    %2120 = vdwg.mxu0
    %2121 = vmatpush.bf16.msra.mxu0 0
    %2122 = vmatpush.bf16.msra.mxu0 0
    %2123 = vmatpush.bf16.msra.mxu0 0
    %2124 = vmatpush.bf16.msra.mxu0 0
    %2125 = vmatpush.bf16.msra.mxu0 0
    %2126 = vmatpush.bf16.msra.mxu0 0
    %2127 = vmatpush.bf16.msra.mxu0 %v2106
    %2128 = vmatpush.bf16.msra.mxu0 %v2096
    %2129 = vmatmul.bf16.gmra.mxu0 %v2100
    %v2130 = vpop.f32.mrf.mxu0
    %v2131 = vadd.f32 0.0, %v2130
    %v2132 = vpop.f32.mrf.mxu0
    %2133 = vdwg.mxu0
    %v2134 = vmax.f32 %v2118, 0.0
    %v2135 = vmax.f32 %v2131, 0.0
    %2136 = vst [vmem:[#allocation2 + $0x70] sm:$0xff] %v2134
    %2137 = vst [vmem:[#allocation2 + $0x78] sm:$0xff] %v2135
    %v2138 = vld [vmem:[#allocation2] sm:$0xff]
    %v2139 = vld [vmem:[#allocation2 + $0x8] sm:$0xff]
    %v2140 = vld [vmem:[#allocation2 + $0x10] sm:$0xff]
    %v2141 = vld [vmem:[#allocation2 + $0x18] sm:$0xff]
    %v2142 = vld [vmem:[#allocation2 + $0x20] sm:$0xff]
    %v2143 = vld [vmem:[#allocation2 + $0x28] sm:$0xff]
    %v2144 = vld [vmem:[#allocation2 + $0x30] sm:$0xff]
    %v2145 = vld [vmem:[#allocation2 + $0x38] sm:$0xff]
    %2146 = vrot.lane.b32.xlu0 %v2138, 33
    %v2147 = vpop.permute.xlu0 %2146
    %2148 = vrot.lane.b32.xlu0 %v2139, 33
    %v2149 = vpop.permute.xlu0 %2148
    %2150 = vrot.lane.b32.xlu0 %v2140, 33
    %v2151 = vpop.permute.xlu0 %2150
    %2152 = vrot.lane.b32.xlu0 %v2141, 33
    %v2153 = vpop.permute.xlu0 %2152
    %2154 = vrot.lane.b32.xlu0 %v2142, 33
    %v2155 = vpop.permute.xlu0 %2154
    %2156 = vrot.lane.b32.xlu0 %v2143, 33
    %v2157 = vpop.permute.xlu0 %2156
    %2158 = vrot.lane.b32.xlu0 %v2144, 33
    %v2159 = vpop.permute.xlu0 %2158
    %2160 = vrot.lane.b32.xlu0 %v2145, 33
    %v2161 = vpop.permute.xlu0 %2160
    %v2162 = vsel %vm58, %v2159, %v2161
    %v2163 = vsel %vm58, %v2157, %v2159
    %v2164 = vsel %vm58, %v2155, %v2157
    %v2165 = vsel %vm58, %v2153, %v2155
    %v2166 = vsel %vm58, %v2151, %v2153
    %v2167 = vsel %vm58, %v2149, %v2151
    %v2168 = vsel %vm58, %v2147, %v2149
    %v2169 = vsel %vm58, %v2161, %v2147
    %v2170 = vld [vmem:[%s1] ss:$8 sm:$0xf]
    %v2171 = vld [vmem:[%s1] ss:$8 sm:$0xf0]
    %v2172 = vor.u32 %v2170, %v2171
    %v2174 = vperm.slane %v2172, 0
    %v2175 = vperm.slane %v2172, 1
    %v2176 = vperm.slane %v2172, 2
    %v2177 = vperm.slane %v2172, 3
    %v2178 = vperm.slane %v2172, 4
    %v2179 = vperm.slane %v2172, 5
    %v2180 = vperm.slane %v2172, 6
    %v2181 = vperm.slane %v2172, 7
    %v2190 = vmul.f32 %v2169, %v2174
    %v2191 = vmul.f32 %v2168, %v2175
    %v2192 = vmul.f32 %v2167, %v2176
    %v2193 = vmul.f32 %v2166, %v2177
    %v2194 = vmul.f32 %v2165, %v2178
    %v2195 = vmul.f32 %v2164, %v2179
    %v2196 = vmul.f32 %v2163, %v2180
    %v2197 = vmul.f32 %v2162, %v2181
    %2198 = vst [vmem:[#allocation5] sm:$0xff] %v2190
    %2199 = vst [vmem:[#allocation5 + $0x8] sm:$0xff] %v2191
    %2200 = vst [vmem:[#allocation5 + $0x10] sm:$0xff] %v2192
    %2201 = vst [vmem:[#allocation5 + $0x18] sm:$0xff] %v2193
    %2202 = vst [vmem:[#allocation5 + $0x20] sm:$0xff] %v2194
    %2203 = vst [vmem:[#allocation5 + $0x28] sm:$0xff] %v2195
    %2204 = vst [vmem:[#allocation5 + $0x30] sm:$0xff] %v2196
    %2205 = vst [vmem:[#allocation5 + $0x38] sm:$0xff] %v2197
    %v2206 = vld [vmem:[#allocation2] sm:$0xff]
    %v2207 = vld [vmem:[#allocation2 + $0x8] sm:$0xff]
    %v2208 = vld [vmem:[#allocation2 + $0x10] sm:$0xff]
    %v2209 = vld [vmem:[#allocation2 + $0x18] sm:$0xff]
    %v2210 = vld [vmem:[#allocation2 + $0x20] sm:$0xff]
    %v2211 = vld [vmem:[#allocation2 + $0x28] sm:$0xff]
    %v2212 = vld [vmem:[#allocation2 + $0x30] sm:$0xff]
    %v2213 = vld [vmem:[#allocation2 + $0x38] sm:$0xff]
    %2214 = vrot.lane.b32.xlu0 %v2206, 32
    %v2215 = vpop.permute.xlu0 %2214
    %2216 = vrot.lane.b32.xlu0 %v2207, 32
    %v2217 = vpop.permute.xlu0 %2216
    %2218 = vrot.lane.b32.xlu0 %v2208, 32
    %v2219 = vpop.permute.xlu0 %2218
    %2220 = vrot.lane.b32.xlu0 %v2209, 32
    %v2221 = vpop.permute.xlu0 %2220
    %2222 = vrot.lane.b32.xlu0 %v2210, 32
    %v2223 = vpop.permute.xlu0 %2222
    %2224 = vrot.lane.b32.xlu0 %v2211, 32
    %v2225 = vpop.permute.xlu0 %2224
    %2226 = vrot.lane.b32.xlu0 %v2212, 32
    %v2227 = vpop.permute.xlu0 %2226
    %2228 = vrot.lane.b32.xlu0 %v2213, 32
    %v2229 = vpop.permute.xlu0 %2228
    %v2230 = vsel %vm137, %v2227, %v2229
    %v2231 = vsel %vm137, %v2225, %v2227
    %v2232 = vsel %vm137, %v2223, %v2225
    %v2233 = vsel %vm137, %v2221, %v2223
    %v2234 = vsel %vm137, %v2219, %v2221
    %v2235 = vsel %vm137, %v2217, %v2219
    %v2236 = vsel %vm137, %v2215, %v2217
    %v2237 = vsel %vm137, %v2229, %v2215
    %v2238 = vld [vmem:[%s146] ss:$8 sm:$0xf]
    %v2239 = vld [vmem:[%s146] ss:$8 sm:$0xf0]
    %v2240 = vor.u32 %v2238, %v2239
    %v2242 = vperm.slane %v2240, 0
    %v2243 = vperm.slane %v2240, 1
    %v2244 = vperm.slane %v2240, 2
    %v2245 = vperm.slane %v2240, 3
    %v2246 = vperm.slane %v2240, 4
    %v2247 = vperm.slane %v2240, 5
    %v2248 = vperm.slane %v2240, 6
    %v2249 = vperm.slane %v2240, 7
    %v2258 = vmul.f32 %v2237, %v2242
    %v2259 = vmul.f32 %v2236, %v2243
    %v2260 = vmul.f32 %v2235, %v2244
    %v2261 = vmul.f32 %v2234, %v2245
    %v2262 = vmul.f32 %v2233, %v2246
    %v2263 = vmul.f32 %v2232, %v2247
    %v2264 = vmul.f32 %v2231, %v2248
    %v2265 = vmul.f32 %v2230, %v2249
    %2266 = vst [vmem:[#allocation5 + $0x40] sm:$0xff] %v2258
    %2267 = vst [vmem:[#allocation5 + $0x48] sm:$0xff] %v2259
    %2268 = vst [vmem:[#allocation5 + $0x50] sm:$0xff] %v2260
    %2269 = vst [vmem:[#allocation5 + $0x58] sm:$0xff] %v2261
    %2270 = vst [vmem:[#allocation5 + $0x60] sm:$0xff] %v2262
    %2271 = vst [vmem:[#allocation5 + $0x68] sm:$0xff] %v2263
    %2272 = vst [vmem:[#allocation5 + $0x70] sm:$0xff] %v2264
    %2273 = vst [vmem:[#allocation5 + $0x78] sm:$0xff] %v2265
    %v2274 = vld [vmem:[#allocation2] sm:$0xff]
    %v2275 = vld [vmem:[#allocation2 + $0x8] sm:$0xff]
    %v2276 = vld [vmem:[#allocation2 + $0x10] sm:$0xff]
    %v2277 = vld [vmem:[#allocation2 + $0x18] sm:$0xff]
    %v2278 = vld [vmem:[#allocation2 + $0x20] sm:$0xff]
    %v2279 = vld [vmem:[#allocation2 + $0x28] sm:$0xff]
    %v2280 = vld [vmem:[#allocation2 + $0x30] sm:$0xff]
    %v2281 = vld [vmem:[#allocation2 + $0x38] sm:$0xff]
    %2282 = vrot.lane.b32.xlu0 %v2274, 31
    %v2283 = vpop.permute.xlu0 %2282
    %2284 = vrot.lane.b32.xlu0 %v2275, 31
    %v2285 = vpop.permute.xlu0 %2284
    %2286 = vrot.lane.b32.xlu0 %v2276, 31
    %v2287 = vpop.permute.xlu0 %2286
    %2288 = vrot.lane.b32.xlu0 %v2277, 31
    %v2289 = vpop.permute.xlu0 %2288
    %2290 = vrot.lane.b32.xlu0 %v2278, 31
    %v2291 = vpop.permute.xlu0 %2290
    %2292 = vrot.lane.b32.xlu0 %v2279, 31
    %v2293 = vpop.permute.xlu0 %2292
    %2294 = vrot.lane.b32.xlu0 %v2280, 31
    %v2295 = vpop.permute.xlu0 %2294
    %2296 = vrot.lane.b32.xlu0 %v2281, 31
    %v2297 = vpop.permute.xlu0 %2296
    %v2298 = vsel %vm241, %v2295, %v2297
    %v2299 = vsel %vm241, %v2293, %v2295
    %v2300 = vsel %vm241, %v2291, %v2293
    %v2301 = vsel %vm241, %v2289, %v2291
    %v2302 = vsel %vm241, %v2287, %v2289
    %v2303 = vsel %vm241, %v2285, %v2287
    %v2304 = vsel %vm241, %v2283, %v2285
    %v2305 = vsel %vm241, %v2297, %v2283
    %v2306 = vld [vmem:[%s250] ss:$8 sm:$0xf]
    %v2307 = vld [vmem:[%s250] ss:$8 sm:$0xf0]
    %v2308 = vor.u32 %v2306, %v2307
    %v2310 = vperm.slane %v2308, 0
    %v2311 = vperm.slane %v2308, 1
    %v2312 = vperm.slane %v2308, 2
    %v2313 = vperm.slane %v2308, 3
    %v2314 = vperm.slane %v2308, 4
    %v2315 = vperm.slane %v2308, 5
    %v2316 = vperm.slane %v2308, 6
    %v2317 = vperm.slane %v2308, 7
    %v2326 = vmul.f32 %v2305, %v2310
    %v2327 = vmul.f32 %v2304, %v2311
    %v2328 = vmul.f32 %v2303, %v2312
    %v2329 = vmul.f32 %v2302, %v2313
    %v2330 = vmul.f32 %v2301, %v2314
    %v2331 = vmul.f32 %v2300, %v2315
    %v2332 = vmul.f32 %v2299, %v2316
    %v2333 = vmul.f32 %v2298, %v2317
    %2334 = vst [vmem:[#allocation5 + $0x80] sm:$0xff] %v2326
    %2335 = vst [vmem:[#allocation5 + $0x88] sm:$0xff] %v2327
    %2336 = vst [vmem:[#allocation5 + $0x90] sm:$0xff] %v2328
    %2337 = vst [vmem:[#allocation5 + $0x98] sm:$0xff] %v2329
    %2338 = vst [vmem:[#allocation5 + $0xa0] sm:$0xff] %v2330
    %2339 = vst [vmem:[#allocation5 + $0xa8] sm:$0xff] %v2331
    %2340 = vst [vmem:[#allocation5 + $0xb0] sm:$0xff] %v2332
    %2341 = vst [vmem:[#allocation5 + $0xb8] sm:$0xff] %v2333
    %v2342 = vld [vmem:[#allocation2] sm:$0xff]
    %v2343 = vld [vmem:[#allocation2 + $0x8] sm:$0xff]
    %v2344 = vld [vmem:[#allocation2 + $0x10] sm:$0xff]
    %v2345 = vld [vmem:[#allocation2 + $0x18] sm:$0xff]
    %v2346 = vld [vmem:[#allocation2 + $0x20] sm:$0xff]
    %v2347 = vld [vmem:[#allocation2 + $0x28] sm:$0xff]
    %v2348 = vld [vmem:[#allocation2 + $0x30] sm:$0xff]
    %v2349 = vld [vmem:[#allocation2 + $0x38] sm:$0xff]
    %2350 = vrot.lane.b32.xlu0 %v2342, 1
    %v2351 = vpop.permute.xlu0 %2350
    %2352 = vrot.lane.b32.xlu0 %v2343, 1
    %v2353 = vpop.permute.xlu0 %2352
    %2354 = vrot.lane.b32.xlu0 %v2344, 1
    %v2355 = vpop.permute.xlu0 %2354
    %2356 = vrot.lane.b32.xlu0 %v2345, 1
    %v2357 = vpop.permute.xlu0 %2356
    %2358 = vrot.lane.b32.xlu0 %v2346, 1
    %v2359 = vpop.permute.xlu0 %2358
    %2360 = vrot.lane.b32.xlu0 %v2347, 1
    %v2361 = vpop.permute.xlu0 %2360
    %2362 = vrot.lane.b32.xlu0 %v2348, 1
    %v2363 = vpop.permute.xlu0 %2362
    %2364 = vrot.lane.b32.xlu0 %v2349, 1
    %v2365 = vpop.permute.xlu0 %2364
    %v2366 = vsel %vm353, %v2363, %v2365
    %v2367 = vsel %vm353, %v2361, %v2363
    %v2368 = vsel %vm353, %v2359, %v2361
    %v2369 = vsel %vm353, %v2357, %v2359
    %v2370 = vsel %vm353, %v2355, %v2357
    %v2371 = vsel %vm353, %v2353, %v2355
    %v2372 = vsel %vm353, %v2351, %v2353
    %v2373 = vsel %vm353, %v2365, %v2351
    %v2374 = vld [vmem:[%s362] ss:$8 sm:$0xf]
    %v2375 = vld [vmem:[%s362] ss:$8 sm:$0xf0]
    %v2376 = vor.u32 %v2374, %v2375
    %v2378 = vperm.slane %v2376, 0
    %v2379 = vperm.slane %v2376, 1
    %v2380 = vperm.slane %v2376, 2
    %v2381 = vperm.slane %v2376, 3
    %v2382 = vperm.slane %v2376, 4
    %v2383 = vperm.slane %v2376, 5
    %v2384 = vperm.slane %v2376, 6
    %v2385 = vperm.slane %v2376, 7
    %v2394 = vmul.f32 %v2373, %v2378
    %v2395 = vmul.f32 %v2372, %v2379
    %v2396 = vmul.f32 %v2371, %v2380
    %v2397 = vmul.f32 %v2370, %v2381
    %v2398 = vmul.f32 %v2369, %v2382
    %v2399 = vmul.f32 %v2368, %v2383
    %v2400 = vmul.f32 %v2367, %v2384
    %v2401 = vmul.f32 %v2366, %v2385
    %2402 = vst [vmem:[#allocation5 + $0xc0] sm:$0xff] %v2394
    %2403 = vst [vmem:[#allocation5 + $0xc8] sm:$0xff] %v2395
    %2404 = vst [vmem:[#allocation5 + $0xd0] sm:$0xff] %v2396
    %2405 = vst [vmem:[#allocation5 + $0xd8] sm:$0xff] %v2397
    %2406 = vst [vmem:[#allocation5 + $0xe0] sm:$0xff] %v2398
    %2407 = vst [vmem:[#allocation5 + $0xe8] sm:$0xff] %v2399
    %2408 = vst [vmem:[#allocation5 + $0xf0] sm:$0xff] %v2400
    %2409 = vst [vmem:[#allocation5 + $0xf8] sm:$0xff] %v2401
    %v2410 = vld [vmem:[#allocation2] sm:$0xff]
    %v2411 = vld [vmem:[#allocation2 + $0x8] sm:$0xff]
    %v2412 = vld [vmem:[#allocation2 + $0x10] sm:$0xff]
    %v2413 = vld [vmem:[#allocation2 + $0x18] sm:$0xff]
    %v2414 = vld [vmem:[#allocation2 + $0x20] sm:$0xff]
    %v2415 = vld [vmem:[#allocation2 + $0x28] sm:$0xff]
    %v2416 = vld [vmem:[#allocation2 + $0x30] sm:$0xff]
    %v2417 = vld [vmem:[#allocation2 + $0x38] sm:$0xff]
    %v2418 = vld [vmem:[%s441] ss:$8 sm:$0xf]
    %v2419 = vld [vmem:[%s441] ss:$8 sm:$0xf0]
    %v2420 = vor.u32 %v2418, %v2419
    %v2422 = vperm.slane %v2420, 0
    %v2423 = vperm.slane %v2420, 1
    %v2424 = vperm.slane %v2420, 2
    %v2425 = vperm.slane %v2420, 3
    %v2426 = vperm.slane %v2420, 4
    %v2427 = vperm.slane %v2420, 5
    %v2428 = vperm.slane %v2420, 6
    %v2429 = vperm.slane %v2420, 7
    %v2438 = vmul.f32 %v2410, %v2422
    %v2439 = vmul.f32 %v2411, %v2423
    %v2440 = vmul.f32 %v2412, %v2424
    %v2441 = vmul.f32 %v2413, %v2425
    %v2442 = vmul.f32 %v2414, %v2426
    %v2443 = vmul.f32 %v2415, %v2427
    %v2444 = vmul.f32 %v2416, %v2428
    %v2445 = vmul.f32 %v2417, %v2429
    %2446 = vst [vmem:[#allocation5 + $0x100] sm:$0xff] %v2438
    %2447 = vst [vmem:[#allocation5 + $0x108] sm:$0xff] %v2439
    %2448 = vst [vmem:[#allocation5 + $0x110] sm:$0xff] %v2440
    %2449 = vst [vmem:[#allocation5 + $0x118] sm:$0xff] %v2441
    %2450 = vst [vmem:[#allocation5 + $0x120] sm:$0xff] %v2442
    %2451 = vst [vmem:[#allocation5 + $0x128] sm:$0xff] %v2443
    %2452 = vst [vmem:[#allocation5 + $0x130] sm:$0xff] %v2444
    %2453 = vst [vmem:[#allocation5 + $0x138] sm:$0xff] %v2445
    %v2454 = vld [vmem:[#allocation2] sm:$0xff]
    %v2455 = vld [vmem:[#allocation2 + $0x8] sm:$0xff]
    %v2456 = vld [vmem:[#allocation2 + $0x10] sm:$0xff]
    %v2457 = vld [vmem:[#allocation2 + $0x18] sm:$0xff]
    %v2458 = vld [vmem:[#allocation2 + $0x20] sm:$0xff]
    %v2459 = vld [vmem:[#allocation2 + $0x28] sm:$0xff]
    %v2460 = vld [vmem:[#allocation2 + $0x30] sm:$0xff]
    %v2461 = vld [vmem:[#allocation2 + $0x38] sm:$0xff]
    %2462 = vrot.lane.b32.xlu0 %v2454, 127
    %v2463 = vpop.permute.xlu0 %2462
    %2464 = vrot.lane.b32.xlu0 %v2455, 127
    %v2465 = vpop.permute.xlu0 %2464
    %2466 = vrot.lane.b32.xlu0 %v2456, 127
    %v2467 = vpop.permute.xlu0 %2466
    %2468 = vrot.lane.b32.xlu0 %v2457, 127
    %v2469 = vpop.permute.xlu0 %2468
    %2470 = vrot.lane.b32.xlu0 %v2458, 127
    %v2471 = vpop.permute.xlu0 %2470
    %2472 = vrot.lane.b32.xlu0 %v2459, 127
    %v2473 = vpop.permute.xlu0 %2472
    %2474 = vrot.lane.b32.xlu0 %v2460, 127
    %v2475 = vpop.permute.xlu0 %2474
    %2476 = vrot.lane.b32.xlu0 %v2461, 127
    %v2477 = vpop.permute.xlu0 %2476
    %v2478 = vsel %vm512, %v2475, %v2477
    %v2479 = vsel %vm512, %v2473, %v2475
    %v2480 = vsel %vm512, %v2471, %v2473
    %v2481 = vsel %vm512, %v2469, %v2471
    %v2482 = vsel %vm512, %v2467, %v2469
    %v2483 = vsel %vm512, %v2465, %v2467
    %v2484 = vsel %vm512, %v2463, %v2465
    %v2485 = vsel %vm512, %v2477, %v2463
    %v2486 = vld [vmem:[%s521] ss:$8 sm:$0xf]
    %v2487 = vld [vmem:[%s521] ss:$8 sm:$0xf0]
    %v2488 = vor.u32 %v2486, %v2487
    %v2490 = vperm.slane %v2488, 0
    %v2491 = vperm.slane %v2488, 1
    %v2492 = vperm.slane %v2488, 2
    %v2493 = vperm.slane %v2488, 3
    %v2494 = vperm.slane %v2488, 4
    %v2495 = vperm.slane %v2488, 5
    %v2496 = vperm.slane %v2488, 6
    %v2497 = vperm.slane %v2488, 7
    %v2506 = vmul.f32 %v2484, %v2490
    %v2507 = vmul.f32 %v2483, %v2491
    %v2508 = vmul.f32 %v2482, %v2492
    %v2509 = vmul.f32 %v2481, %v2493
    %v2510 = vmul.f32 %v2480, %v2494
    %v2511 = vmul.f32 %v2479, %v2495
    %v2512 = vmul.f32 %v2478, %v2496
    %v2513 = vmul.f32 %v2485, %v2497
    %2514 = vst [vmem:[#allocation5 + $0x140] sm:$0xff] %v2506
    %2515 = vst [vmem:[#allocation5 + $0x148] sm:$0xff] %v2507
    %2516 = vst [vmem:[#allocation5 + $0x150] sm:$0xff] %v2508
    %2517 = vst [vmem:[#allocation5 + $0x158] sm:$0xff] %v2509
    %2518 = vst [vmem:[#allocation5 + $0x160] sm:$0xff] %v2510
    %2519 = vst [vmem:[#allocation5 + $0x168] sm:$0xff] %v2511
    %2520 = vst [vmem:[#allocation5 + $0x170] sm:$0xff] %v2512
    %2521 = vst [vmem:[#allocation5 + $0x178] sm:$0xff] %v2513
    %v2522 = vld [vmem:[#allocation2] sm:$0xff]
    %v2523 = vld [vmem:[#allocation2 + $0x8] sm:$0xff]
    %v2524 = vld [vmem:[#allocation2 + $0x10] sm:$0xff]
    %v2525 = vld [vmem:[#allocation2 + $0x18] sm:$0xff]
    %v2526 = vld [vmem:[#allocation2 + $0x20] sm:$0xff]
    %v2527 = vld [vmem:[#allocation2 + $0x28] sm:$0xff]
    %v2528 = vld [vmem:[#allocation2 + $0x30] sm:$0xff]
    %v2529 = vld [vmem:[#allocation2 + $0x38] sm:$0xff]
    %2530 = vrot.lane.b32.xlu0 %v2522, 97
    %v2531 = vpop.permute.xlu0 %2530
    %2532 = vrot.lane.b32.xlu0 %v2523, 97
    %v2533 = vpop.permute.xlu0 %2532
    %2534 = vrot.lane.b32.xlu0 %v2524, 97
    %v2535 = vpop.permute.xlu0 %2534
    %2536 = vrot.lane.b32.xlu0 %v2525, 97
    %v2537 = vpop.permute.xlu0 %2536
    %2538 = vrot.lane.b32.xlu0 %v2526, 97
    %v2539 = vpop.permute.xlu0 %2538
    %2540 = vrot.lane.b32.xlu0 %v2527, 97
    %v2541 = vpop.permute.xlu0 %2540
    %2542 = vrot.lane.b32.xlu0 %v2528, 97
    %v2543 = vpop.permute.xlu0 %2542
    %2544 = vrot.lane.b32.xlu0 %v2529, 97
    %v2545 = vpop.permute.xlu0 %2544
    %v2546 = vsel %vm624, %v2543, %v2545
    %v2547 = vsel %vm624, %v2541, %v2543
    %v2548 = vsel %vm624, %v2539, %v2541
    %v2549 = vsel %vm624, %v2537, %v2539
    %v2550 = vsel %vm624, %v2535, %v2537
    %v2551 = vsel %vm624, %v2533, %v2535
    %v2552 = vsel %vm624, %v2531, %v2533
    %v2553 = vsel %vm624, %v2545, %v2531
    %v2554 = vld [vmem:[%s633] ss:$8 sm:$0xf]
    %v2555 = vld [vmem:[%s633] ss:$8 sm:$0xf0]
    %v2556 = vor.u32 %v2554, %v2555
    %v2558 = vperm.slane %v2556, 0
    %v2559 = vperm.slane %v2556, 1
    %v2560 = vperm.slane %v2556, 2
    %v2561 = vperm.slane %v2556, 3
    %v2562 = vperm.slane %v2556, 4
    %v2563 = vperm.slane %v2556, 5
    %v2564 = vperm.slane %v2556, 6
    %v2565 = vperm.slane %v2556, 7
    %v2574 = vmul.f32 %v2552, %v2558
    %v2575 = vmul.f32 %v2551, %v2559
    %v2576 = vmul.f32 %v2550, %v2560
    %v2577 = vmul.f32 %v2549, %v2561
    %v2578 = vmul.f32 %v2548, %v2562
    %v2579 = vmul.f32 %v2547, %v2563
    %v2580 = vmul.f32 %v2546, %v2564
    %v2581 = vmul.f32 %v2553, %v2565
    %2582 = vst [vmem:[#allocation5 + $0x180] sm:$0xff] %v2574
    %2583 = vst [vmem:[#allocation5 + $0x188] sm:$0xff] %v2575
    %2584 = vst [vmem:[#allocation5 + $0x190] sm:$0xff] %v2576
    %2585 = vst [vmem:[#allocation5 + $0x198] sm:$0xff] %v2577
    %2586 = vst [vmem:[#allocation5 + $0x1a0] sm:$0xff] %v2578
    %2587 = vst [vmem:[#allocation5 + $0x1a8] sm:$0xff] %v2579
    %2588 = vst [vmem:[#allocation5 + $0x1b0] sm:$0xff] %v2580
    %2589 = vst [vmem:[#allocation5 + $0x1b8] sm:$0xff] %v2581
    %v2590 = vld [vmem:[#allocation2] sm:$0xff]
    %v2591 = vld [vmem:[#allocation2 + $0x8] sm:$0xff]
    %v2592 = vld [vmem:[#allocation2 + $0x10] sm:$0xff]
    %v2593 = vld [vmem:[#allocation2 + $0x18] sm:$0xff]
    %v2594 = vld [vmem:[#allocation2 + $0x20] sm:$0xff]
    %v2595 = vld [vmem:[#allocation2 + $0x28] sm:$0xff]
    %v2596 = vld [vmem:[#allocation2 + $0x30] sm:$0xff]
    %v2597 = vld [vmem:[#allocation2 + $0x38] sm:$0xff]
    %2598 = vrot.lane.b32.xlu0 %v2590, 96
    %v2599 = vpop.permute.xlu0 %2598
    %2600 = vrot.lane.b32.xlu0 %v2591, 96
    %v2601 = vpop.permute.xlu0 %2600
    %2602 = vrot.lane.b32.xlu0 %v2592, 96
    %v2603 = vpop.permute.xlu0 %2602
    %2604 = vrot.lane.b32.xlu0 %v2593, 96
    %v2605 = vpop.permute.xlu0 %2604
    %2606 = vrot.lane.b32.xlu0 %v2594, 96
    %v2607 = vpop.permute.xlu0 %2606
    %2608 = vrot.lane.b32.xlu0 %v2595, 96
    %v2609 = vpop.permute.xlu0 %2608
    %2610 = vrot.lane.b32.xlu0 %v2596, 96
    %v2611 = vpop.permute.xlu0 %2610
    %2612 = vrot.lane.b32.xlu0 %v2597, 96
    %v2613 = vpop.permute.xlu0 %2612
    %v2614 = vsel %vm728, %v2611, %v2613
    %v2615 = vsel %vm728, %v2609, %v2611
    %v2616 = vsel %vm728, %v2607, %v2609
    %v2617 = vsel %vm728, %v2605, %v2607
    %v2618 = vsel %vm728, %v2603, %v2605
    %v2619 = vsel %vm728, %v2601, %v2603
    %v2620 = vsel %vm728, %v2599, %v2601
    %v2621 = vsel %vm728, %v2613, %v2599
    %v2622 = vld [vmem:[%s737] ss:$8 sm:$0xf]
    %v2623 = vld [vmem:[%s737] ss:$8 sm:$0xf0]
    %v2624 = vor.u32 %v2622, %v2623
    %v2626 = vperm.slane %v2624, 0
    %v2627 = vperm.slane %v2624, 1
    %v2628 = vperm.slane %v2624, 2
    %v2629 = vperm.slane %v2624, 3
    %v2630 = vperm.slane %v2624, 4
    %v2631 = vperm.slane %v2624, 5
    %v2632 = vperm.slane %v2624, 6
    %v2633 = vperm.slane %v2624, 7
    %v2642 = vmul.f32 %v2620, %v2626
    %v2643 = vmul.f32 %v2619, %v2627
    %v2644 = vmul.f32 %v2618, %v2628
    %v2645 = vmul.f32 %v2617, %v2629
    %v2646 = vmul.f32 %v2616, %v2630
    %v2647 = vmul.f32 %v2615, %v2631
    %v2648 = vmul.f32 %v2614, %v2632
    %v2649 = vmul.f32 %v2621, %v2633
    %2650 = vst [vmem:[#allocation5 + $0x1c0] sm:$0xff] %v2642
    %2651 = vst [vmem:[#allocation5 + $0x1c8] sm:$0xff] %v2643
    %2652 = vst [vmem:[#allocation5 + $0x1d0] sm:$0xff] %v2644
    %2653 = vst [vmem:[#allocation5 + $0x1d8] sm:$0xff] %v2645
    %2654 = vst [vmem:[#allocation5 + $0x1e0] sm:$0xff] %v2646
    %2655 = vst [vmem:[#allocation5 + $0x1e8] sm:$0xff] %v2647
    %2656 = vst [vmem:[#allocation5 + $0x1f0] sm:$0xff] %v2648
    %2657 = vst [vmem:[#allocation5 + $0x1f8] sm:$0xff] %v2649
    %v2658 = vld [vmem:[#allocation2] sm:$0xff]
    %v2659 = vld [vmem:[#allocation2 + $0x8] sm:$0xff]
    %v2660 = vld [vmem:[#allocation2 + $0x10] sm:$0xff]
    %v2661 = vld [vmem:[#allocation2 + $0x18] sm:$0xff]
    %v2662 = vld [vmem:[#allocation2 + $0x20] sm:$0xff]
    %v2663 = vld [vmem:[#allocation2 + $0x28] sm:$0xff]
    %v2664 = vld [vmem:[#allocation2 + $0x30] sm:$0xff]
    %v2665 = vld [vmem:[#allocation2 + $0x38] sm:$0xff]
    %2666 = vrot.lane.b32.xlu0 %v2658, 95
    %v2667 = vpop.permute.xlu0 %2666
    %2668 = vrot.lane.b32.xlu0 %v2659, 95
    %v2669 = vpop.permute.xlu0 %2668
    %2670 = vrot.lane.b32.xlu0 %v2660, 95
    %v2671 = vpop.permute.xlu0 %2670
    %2672 = vrot.lane.b32.xlu0 %v2661, 95
    %v2673 = vpop.permute.xlu0 %2672
    %2674 = vrot.lane.b32.xlu0 %v2662, 95
    %v2675 = vpop.permute.xlu0 %2674
    %2676 = vrot.lane.b32.xlu0 %v2663, 95
    %v2677 = vpop.permute.xlu0 %2676
    %2678 = vrot.lane.b32.xlu0 %v2664, 95
    %v2679 = vpop.permute.xlu0 %2678
    %2680 = vrot.lane.b32.xlu0 %v2665, 95
    %v2681 = vpop.permute.xlu0 %2680
    %v2682 = vsel %vm832, %v2679, %v2681
    %v2683 = vsel %vm832, %v2677, %v2679
    %v2684 = vsel %vm832, %v2675, %v2677
    %v2685 = vsel %vm832, %v2673, %v2675
    %v2686 = vsel %vm832, %v2671, %v2673
    %v2687 = vsel %vm832, %v2669, %v2671
    %v2688 = vsel %vm832, %v2667, %v2669
    %v2689 = vsel %vm832, %v2681, %v2667
    %v2690 = vld [vmem:[%s841] ss:$8 sm:$0xf]
    %v2691 = vld [vmem:[%s841] ss:$8 sm:$0xf0]
    %v2692 = vor.u32 %v2690, %v2691
    %v2694 = vperm.slane %v2692, 0
    %v2695 = vperm.slane %v2692, 1
    %v2696 = vperm.slane %v2692, 2
    %v2697 = vperm.slane %v2692, 3
    %v2698 = vperm.slane %v2692, 4
    %v2699 = vperm.slane %v2692, 5
    %v2700 = vperm.slane %v2692, 6
    %v2701 = vperm.slane %v2692, 7
    %v2710 = vmul.f32 %v2688, %v2694
    %v2711 = vmul.f32 %v2687, %v2695
    %v2712 = vmul.f32 %v2686, %v2696
    %v2713 = vmul.f32 %v2685, %v2697
    %v2714 = vmul.f32 %v2684, %v2698
    %v2715 = vmul.f32 %v2683, %v2699
    %v2716 = vmul.f32 %v2682, %v2700
    %v2717 = vmul.f32 %v2689, %v2701
    %2718 = vst [vmem:[#allocation5 + $0x200] sm:$0xff] %v2710
    %2719 = vst [vmem:[#allocation5 + $0x208] sm:$0xff] %v2711
    %2720 = vst [vmem:[#allocation5 + $0x210] sm:$0xff] %v2712
    %2721 = vst [vmem:[#allocation5 + $0x218] sm:$0xff] %v2713
    %2722 = vst [vmem:[#allocation5 + $0x220] sm:$0xff] %v2714
    %2723 = vst [vmem:[#allocation5 + $0x228] sm:$0xff] %v2715
    %2724 = vst [vmem:[#allocation5 + $0x230] sm:$0xff] %v2716
    %2725 = vst [vmem:[#allocation5 + $0x238] sm:$0xff] %v2717
    %v2726 = vld [vmem:[#allocation5] sm:$0xff]
    %v2727 = vld [vmem:[#allocation5 + $0x8] sm:$0xff]
    %v2728 = vld [vmem:[#allocation5 + $0x40] sm:$0xff]
    %v2729 = vld [vmem:[#allocation5 + $0x48] sm:$0xff]
    %v2730 = vld [vmem:[#allocation5 + $0x80] sm:$0xff]
    %v2731 = vld [vmem:[#allocation5 + $0x88] sm:$0xff]
    %v2732 = vld [vmem:[#allocation5 + $0xc0] sm:$0xff]
    %v2733 = vld [vmem:[#allocation5 + $0xc8] sm:$0xff]
    %v2734 = vld [vmem:[#allocation5 + $0x100] sm:$0xff]
    %v2735 = vld [vmem:[#allocation5 + $0x108] sm:$0xff]
    %v2736 = vld [vmem:[#allocation5 + $0x140] sm:$0xff]
    %v2737 = vld [vmem:[#allocation5 + $0x148] sm:$0xff]
    %v2738 = vld [vmem:[#allocation5 + $0x180] sm:$0xff]
    %v2739 = vld [vmem:[#allocation5 + $0x188] sm:$0xff]
    %v2740 = vld [vmem:[#allocation5 + $0x1c0] sm:$0xff]
    %v2741 = vld [vmem:[#allocation5 + $0x1c8] sm:$0xff]
    %v2742 = vld [vmem:[#allocation5 + $0x200] sm:$0xff]
    %v2743 = vld [vmem:[#allocation5 + $0x208] sm:$0xff]
    %v2744 = vld [vmem:[%s3] sm:$0xf]
    %v2745 = vld [vmem:[%s3 + $0x4] sm:$0xf]
    %v2746 = vpack.c.bf16 %v2728, %v2726
    %v2747 = vpack.c.bf16 %v2729, %v2727
    %v2748 = vpack.c.bf16 %v2732, %v2730
    %v2749 = vpack.c.bf16 %v2733, %v2731
    %v2750 = vpack.c.bf16 %v2736, %v2734
    %v2751 = vpack.c.bf16 %v2737, %v2735
    %v2752 = vpack.c.bf16 %v2740, %v2738
    %v2753 = vpack.c.bf16 %v2741, %v2739
    %v2754 = vpack.c.bf16 %v2742, %v2742
    %v2755 = vpack.c.bf16 %v2743, %v2743
    %v2758 = vunpack.c.l.b16 %v2744
    %v2759 = vunpack.c.l.b16 %v2745
    %v2760 = vpack.c.b16 %v2759, %v2758
    %vm2761 = vcmask 588800
    %v2763 = vsel %vm2761, %v2760, 0
    %vm2765 = vcmask 1043456
    %v2767 = vsel %vm2765, %v2754, 0
    %v2770 = vsel %vm2765, %v2755, 0
    %2772 = vmatpush.bf16.msra.mxu0 0
    %2773 = vmatpush.bf16.msra.mxu0 0
    %2774 = vmatpush.bf16.msra.mxu0 0
    %2775 = vmatpush.bf16.msra.mxu0 %v2767
    %2776 = vmatpush.bf16.msra.mxu0 %v2752
    %2777 = vmatpush.bf16.msra.mxu0 %v2750
    %2778 = vmatpush.bf16.msra.mxu0 %v2748
    %2779 = vmatpush.bf16.msra.mxu0 %v2746
    %2780 = vmatmul.bf16.gmra.mxu0 %v2763
    %v2781 = vpop.f32.mrf.mxu0
    %v2782 = vadd.f32 0.0, %v2781
    %v2783 = vpop.f32.mrf.mxu0
    %v2784 = vadd.f32 0.0, %v2783
    %2785 = vdwg.mxu0
    %2786 = vmatpush.bf16.msra.mxu0 0
    %2787 = vmatpush.bf16.msra.mxu0 0
    %2788 = vmatpush.bf16.msra.mxu0 0
    %2789 = vmatpush.bf16.msra.mxu0 %v2770
    %2790 = vmatpush.bf16.msra.mxu0 %v2753
    %2791 = vmatpush.bf16.msra.mxu0 %v2751
    %2792 = vmatpush.bf16.msra.mxu0 %v2749
    %2793 = vmatpush.bf16.msra.mxu0 %v2747
    %2794 = vmatmul.bf16.gmra.mxu0 %v2763
    %v2795 = vpop.f32.mrf.mxu0
    %v2796 = vadd.f32 0.0, %v2795
    %v2797 = vpop.f32.mrf.mxu0
    %v2798 = vadd.f32 0.0, %v2797
    %2799 = vdwg.mxu0
    %v2800 = vmax.f32 %v2782, 0.0
    %v2801 = vmax.f32 %v2796, 0.0
    %v2802 = vmax.f32 %v2784, 0.0
    %v2803 = vmax.f32 %v2798, 0.0
    %2804 = vst [vmem:[#allocation3] sm:$0xff] %v2800
    %2805 = vst [vmem:[#allocation3 + $0x8] sm:$0xff] %v2801
    %2806 = vst [vmem:[#allocation3 + $0x80] sm:$0xff] %v2802
    %2807 = vst [vmem:[#allocation3 + $0x88] sm:$0xff] %v2803
    %v2808 = vld [vmem:[#allocation5 + $0x10] sm:$0xff]
    %v2809 = vld [vmem:[#allocation5 + $0x18] sm:$0xff]
    %v2810 = vld [vmem:[#allocation5 + $0x50] sm:$0xff]
    %v2811 = vld [vmem:[#allocation5 + $0x58] sm:$0xff]
    %v2812 = vld [vmem:[#allocation5 + $0x90] sm:$0xff]
    %v2813 = vld [vmem:[#allocation5 + $0x98] sm:$0xff]
    %v2814 = vld [vmem:[#allocation5 + $0xd0] sm:$0xff]
    %v2815 = vld [vmem:[#allocation5 + $0xd8] sm:$0xff]
    %v2816 = vld [vmem:[#allocation5 + $0x110] sm:$0xff]
    %v2817 = vld [vmem:[#allocation5 + $0x118] sm:$0xff]
    %v2818 = vld [vmem:[#allocation5 + $0x150] sm:$0xff]
    %v2819 = vld [vmem:[#allocation5 + $0x158] sm:$0xff]
    %v2820 = vld [vmem:[#allocation5 + $0x190] sm:$0xff]
    %v2821 = vld [vmem:[#allocation5 + $0x198] sm:$0xff]
    %v2822 = vld [vmem:[#allocation5 + $0x1d0] sm:$0xff]
    %v2823 = vld [vmem:[#allocation5 + $0x1d8] sm:$0xff]
    %v2824 = vld [vmem:[#allocation5 + $0x210] sm:$0xff]
    %v2825 = vld [vmem:[#allocation5 + $0x218] sm:$0xff]
    %v2826 = vld [vmem:[%s3] sm:$0xf]
    %v2827 = vld [vmem:[%s3 + $0x4] sm:$0xf]
    %v2828 = vpack.c.bf16 %v2810, %v2808
    %v2829 = vpack.c.bf16 %v2811, %v2809
    %v2830 = vpack.c.bf16 %v2814, %v2812
    %v2831 = vpack.c.bf16 %v2815, %v2813
    %v2832 = vpack.c.bf16 %v2818, %v2816
    %v2833 = vpack.c.bf16 %v2819, %v2817
    %v2834 = vpack.c.bf16 %v2822, %v2820
    %v2835 = vpack.c.bf16 %v2823, %v2821
    %v2836 = vpack.c.bf16 %v2824, %v2824
    %v2837 = vpack.c.bf16 %v2825, %v2825
    %v2840 = vunpack.c.l.b16 %v2826
    %v2841 = vunpack.c.l.b16 %v2827
    %v2842 = vpack.c.b16 %v2841, %v2840
    %v2844 = vsel %vm2761, %v2842, 0
    %v2847 = vsel %vm2765, %v2836, 0
    %v2850 = vsel %vm2765, %v2837, 0
    %2852 = vmatpush.bf16.msra.mxu0 0
    %2853 = vmatpush.bf16.msra.mxu0 0
    %2854 = vmatpush.bf16.msra.mxu0 0
    %2855 = vmatpush.bf16.msra.mxu0 %v2847
    %2856 = vmatpush.bf16.msra.mxu0 %v2834
    %2857 = vmatpush.bf16.msra.mxu0 %v2832
    %2858 = vmatpush.bf16.msra.mxu0 %v2830
    %2859 = vmatpush.bf16.msra.mxu0 %v2828
    %2860 = vmatmul.bf16.gmra.mxu0 %v2844
    %v2861 = vpop.f32.mrf.mxu0
    %v2862 = vadd.f32 0.0, %v2861
    %v2863 = vpop.f32.mrf.mxu0
    %v2864 = vadd.f32 0.0, %v2863
    %2865 = vdwg.mxu0
    %2866 = vmatpush.bf16.msra.mxu0 0
    %2867 = vmatpush.bf16.msra.mxu0 0
    %2868 = vmatpush.bf16.msra.mxu0 0
    %2869 = vmatpush.bf16.msra.mxu0 %v2850
    %2870 = vmatpush.bf16.msra.mxu0 %v2835
    %2871 = vmatpush.bf16.msra.mxu0 %v2833
    %2872 = vmatpush.bf16.msra.mxu0 %v2831
    %2873 = vmatpush.bf16.msra.mxu0 %v2829
    %2874 = vmatmul.bf16.gmra.mxu0 %v2844
    %v2875 = vpop.f32.mrf.mxu0
    %v2876 = vadd.f32 0.0, %v2875
    %v2877 = vpop.f32.mrf.mxu0
    %v2878 = vadd.f32 0.0, %v2877
    %2879 = vdwg.mxu0
    %v2880 = vmax.f32 %v2862, 0.0
    %v2881 = vmax.f32 %v2876, 0.0
    %v2882 = vmax.f32 %v2864, 0.0
    %v2883 = vmax.f32 %v2878, 0.0
    %2884 = vst [vmem:[#allocation3 + $0x10] sm:$0xff] %v2880
    %2885 = vst [vmem:[#allocation3 + $0x18] sm:$0xff] %v2881
    %2886 = vst [vmem:[#allocation3 + $0x90] sm:$0xff] %v2882
    %2887 = vst [vmem:[#allocation3 + $0x98] sm:$0xff] %v2883
    %v2888 = vld [vmem:[#allocation5 + $0x20] sm:$0xff]
    %v2889 = vld [vmem:[#allocation5 + $0x28] sm:$0xff]
    %v2890 = vld [vmem:[#allocation5 + $0x60] sm:$0xff]
    %v2891 = vld [vmem:[#allocation5 + $0x68] sm:$0xff]
    %v2892 = vld [vmem:[#allocation5 + $0xa0] sm:$0xff]
    %v2893 = vld [vmem:[#allocation5 + $0xa8] sm:$0xff]
    %v2894 = vld [vmem:[#allocation5 + $0xe0] sm:$0xff]
    %v2895 = vld [vmem:[#allocation5 + $0xe8] sm:$0xff]
    %v2896 = vld [vmem:[#allocation5 + $0x120] sm:$0xff]
    %v2897 = vld [vmem:[#allocation5 + $0x128] sm:$0xff]
    %v2898 = vld [vmem:[#allocation5 + $0x160] sm:$0xff]
    %v2899 = vld [vmem:[#allocation5 + $0x168] sm:$0xff]
    %v2900 = vld [vmem:[#allocation5 + $0x1a0] sm:$0xff]
    %v2901 = vld [vmem:[#allocation5 + $0x1a8] sm:$0xff]
    %v2902 = vld [vmem:[#allocation5 + $0x1e0] sm:$0xff]
    %v2903 = vld [vmem:[#allocation5 + $0x1e8] sm:$0xff]
    %v2904 = vld [vmem:[#allocation5 + $0x220] sm:$0xff]
    %v2905 = vld [vmem:[#allocation5 + $0x228] sm:$0xff]
    %v2906 = vld [vmem:[%s3] sm:$0xf]
    %v2907 = vld [vmem:[%s3 + $0x4] sm:$0xf]
    %v2908 = vpack.c.bf16 %v2890, %v2888
    %v2909 = vpack.c.bf16 %v2891, %v2889
    %v2910 = vpack.c.bf16 %v2894, %v2892
    %v2911 = vpack.c.bf16 %v2895, %v2893
    %v2912 = vpack.c.bf16 %v2898, %v2896
    %v2913 = vpack.c.bf16 %v2899, %v2897
    %v2914 = vpack.c.bf16 %v2902, %v2900
    %v2915 = vpack.c.bf16 %v2903, %v2901
    %v2916 = vpack.c.bf16 %v2904, %v2904
    %v2917 = vpack.c.bf16 %v2905, %v2905
    %v2920 = vunpack.c.l.b16 %v2906
    %v2921 = vunpack.c.l.b16 %v2907
    %v2922 = vpack.c.b16 %v2921, %v2920
    %v2924 = vsel %vm2761, %v2922, 0
    %v2927 = vsel %vm2765, %v2916, 0
    %v2930 = vsel %vm2765, %v2917, 0
    %2932 = vmatpush.bf16.msra.mxu0 0
    %2933 = vmatpush.bf16.msra.mxu0 0
    %2934 = vmatpush.bf16.msra.mxu0 0
    %2935 = vmatpush.bf16.msra.mxu0 %v2927
    %2936 = vmatpush.bf16.msra.mxu0 %v2914
    %2937 = vmatpush.bf16.msra.mxu0 %v2912
    %2938 = vmatpush.bf16.msra.mxu0 %v2910
    %2939 = vmatpush.bf16.msra.mxu0 %v2908
    %2940 = vmatmul.bf16.gmra.mxu0 %v2924
    %v2941 = vpop.f32.mrf.mxu0
    %v2942 = vadd.f32 0.0, %v2941
    %v2943 = vpop.f32.mrf.mxu0
    %v2944 = vadd.f32 0.0, %v2943
    %2945 = vdwg.mxu0
    %2946 = vmatpush.bf16.msra.mxu0 0
    %2947 = vmatpush.bf16.msra.mxu0 0
    %2948 = vmatpush.bf16.msra.mxu0 0
    %2949 = vmatpush.bf16.msra.mxu0 %v2930
    %2950 = vmatpush.bf16.msra.mxu0 %v2915
    %2951 = vmatpush.bf16.msra.mxu0 %v2913
    %2952 = vmatpush.bf16.msra.mxu0 %v2911
    %2953 = vmatpush.bf16.msra.mxu0 %v2909
    %2954 = vmatmul.bf16.gmra.mxu0 %v2924
    %v2955 = vpop.f32.mrf.mxu0
    %v2956 = vadd.f32 0.0, %v2955
    %v2957 = vpop.f32.mrf.mxu0
    %v2958 = vadd.f32 0.0, %v2957
    %2959 = vdwg.mxu0
    %v2960 = vmax.f32 %v2942, 0.0
    %v2961 = vmax.f32 %v2956, 0.0
    %v2962 = vmax.f32 %v2944, 0.0
    %v2963 = vmax.f32 %v2958, 0.0
    %2964 = vst [vmem:[#allocation3 + $0x20] sm:$0xff] %v2960
    %2965 = vst [vmem:[#allocation3 + $0x28] sm:$0xff] %v2961
    %2966 = vst [vmem:[#allocation3 + $0xa0] sm:$0xff] %v2962
    %2967 = vst [vmem:[#allocation3 + $0xa8] sm:$0xff] %v2963
    %v2968 = vld [vmem:[#allocation5 + $0x30] sm:$0xff]
    %v2969 = vld [vmem:[#allocation5 + $0x38] sm:$0xff]
    %v2970 = vld [vmem:[#allocation5 + $0x70] sm:$0xff]
    %v2971 = vld [vmem:[#allocation5 + $0x78] sm:$0xff]
    %v2972 = vld [vmem:[#allocation5 + $0xb0] sm:$0xff]
    %v2973 = vld [vmem:[#allocation5 + $0xb8] sm:$0xff]
    %v2974 = vld [vmem:[#allocation5 + $0xf0] sm:$0xff]
    %v2975 = vld [vmem:[#allocation5 + $0xf8] sm:$0xff]
    %v2976 = vld [vmem:[#allocation5 + $0x130] sm:$0xff]
    %v2977 = vld [vmem:[#allocation5 + $0x138] sm:$0xff]
    %v2978 = vld [vmem:[#allocation5 + $0x170] sm:$0xff]
    %v2979 = vld [vmem:[#allocation5 + $0x178] sm:$0xff]
    %v2980 = vld [vmem:[#allocation5 + $0x1b0] sm:$0xff]
    %v2981 = vld [vmem:[#allocation5 + $0x1b8] sm:$0xff]
    %v2982 = vld [vmem:[#allocation5 + $0x1f0] sm:$0xff]
    %v2983 = vld [vmem:[#allocation5 + $0x1f8] sm:$0xff]
    %v2984 = vld [vmem:[#allocation5 + $0x230] sm:$0xff]
    %v2985 = vld [vmem:[#allocation5 + $0x238] sm:$0xff]
    %v2986 = vld [vmem:[%s3] sm:$0xf]
    %v2987 = vld [vmem:[%s3 + $0x4] sm:$0xf]
    %v2988 = vpack.c.bf16 %v2970, %v2968
    %v2989 = vpack.c.bf16 %v2971, %v2969
    %v2990 = vpack.c.bf16 %v2974, %v2972
    %v2991 = vpack.c.bf16 %v2975, %v2973
    %v2992 = vpack.c.bf16 %v2978, %v2976
    %v2993 = vpack.c.bf16 %v2979, %v2977
    %v2994 = vpack.c.bf16 %v2982, %v2980
    %v2995 = vpack.c.bf16 %v2983, %v2981
    %v2996 = vpack.c.bf16 %v2984, %v2984
    %v2997 = vpack.c.bf16 %v2985, %v2985
    %v3000 = vunpack.c.l.b16 %v2986
    %v3001 = vunpack.c.l.b16 %v2987
    %v3002 = vpack.c.b16 %v3001, %v3000
    %v3004 = vsel %vm2761, %v3002, 0
    %v3007 = vsel %vm2765, %v2996, 0
    %v3010 = vsel %vm2765, %v2997, 0
    %3012 = vmatpush.bf16.msra.mxu0 0
    %3013 = vmatpush.bf16.msra.mxu0 0
    %3014 = vmatpush.bf16.msra.mxu0 0
    %3015 = vmatpush.bf16.msra.mxu0 %v3007
    %3016 = vmatpush.bf16.msra.mxu0 %v2994
    %3017 = vmatpush.bf16.msra.mxu0 %v2992
    %3018 = vmatpush.bf16.msra.mxu0 %v2990
    %3019 = vmatpush.bf16.msra.mxu0 %v2988
    %3020 = vmatmul.bf16.gmra.mxu0 %v3004
    %v3021 = vpop.f32.mrf.mxu0
    %v3022 = vadd.f32 0.0, %v3021
    %v3023 = vpop.f32.mrf.mxu0
    %v3024 = vadd.f32 0.0, %v3023
    %3025 = vdwg.mxu0
    %3026 = vmatpush.bf16.msra.mxu0 0
    %3027 = vmatpush.bf16.msra.mxu0 0
    %3028 = vmatpush.bf16.msra.mxu0 0
    %3029 = vmatpush.bf16.msra.mxu0 %v3010
    %3030 = vmatpush.bf16.msra.mxu0 %v2995
    %3031 = vmatpush.bf16.msra.mxu0 %v2993
    %3032 = vmatpush.bf16.msra.mxu0 %v2991
    %3033 = vmatpush.bf16.msra.mxu0 %v2989
    %3034 = vmatmul.bf16.gmra.mxu0 %v3004
    %v3035 = vpop.f32.mrf.mxu0
    %v3036 = vadd.f32 0.0, %v3035
    %v3037 = vpop.f32.mrf.mxu0
    %v3038 = vadd.f32 0.0, %v3037
    %3039 = vdwg.mxu0
    %v3040 = vmax.f32 %v3022, 0.0
    %v3041 = vmax.f32 %v3036, 0.0
    %v3042 = vmax.f32 %v3024, 0.0
    %v3043 = vmax.f32 %v3038, 0.0
    %3044 = vst [vmem:[#allocation3 + $0x30] sm:$0xff] %v3040
    %3045 = vst [vmem:[#allocation3 + $0x38] sm:$0xff] %v3041
    %3046 = vst [vmem:[#allocation3 + $0xb0] sm:$0xff] %v3042
    %3047 = vst [vmem:[#allocation3 + $0xb8] sm:$0xff] %v3043
    %v3048 = vld [vmem:[#allocation2 + $0x40] sm:$0xff]
    %v3049 = vld [vmem:[#allocation2 + $0x48] sm:$0xff]
    %v3050 = vld [vmem:[#allocation2 + $0x50] sm:$0xff]
    %v3051 = vld [vmem:[#allocation2 + $0x58] sm:$0xff]
    %v3052 = vld [vmem:[#allocation2 + $0x60] sm:$0xff]
    %v3053 = vld [vmem:[#allocation2 + $0x68] sm:$0xff]
    %v3054 = vld [vmem:[#allocation2 + $0x70] sm:$0xff]
    %v3055 = vld [vmem:[#allocation2 + $0x78] sm:$0xff]
    %3056 = vrot.lane.b32.xlu0 %v3048, 33
    %v3057 = vpop.permute.xlu0 %3056
    %3058 = vrot.lane.b32.xlu0 %v3049, 33
    %v3059 = vpop.permute.xlu0 %3058
    %3060 = vrot.lane.b32.xlu0 %v3050, 33
    %v3061 = vpop.permute.xlu0 %3060
    %3062 = vrot.lane.b32.xlu0 %v3051, 33
    %v3063 = vpop.permute.xlu0 %3062
    %3064 = vrot.lane.b32.xlu0 %v3052, 33
    %v3065 = vpop.permute.xlu0 %3064
    %3066 = vrot.lane.b32.xlu0 %v3053, 33
    %v3067 = vpop.permute.xlu0 %3066
    %3068 = vrot.lane.b32.xlu0 %v3054, 33
    %v3069 = vpop.permute.xlu0 %3068
    %3070 = vrot.lane.b32.xlu0 %v3055, 33
    %v3071 = vpop.permute.xlu0 %3070
    %v3072 = vsel %vm58, %v3069, %v3071
    %v3073 = vsel %vm58, %v3067, %v3069
    %v3074 = vsel %vm58, %v3065, %v3067
    %v3075 = vsel %vm58, %v3063, %v3065
    %v3076 = vsel %vm58, %v3061, %v3063
    %v3077 = vsel %vm58, %v3059, %v3061
    %v3078 = vsel %vm58, %v3057, %v3059
    %v3079 = vsel %vm58, %v3071, %v3057
    %v3080 = vld [vmem:[%s1] ss:$8 sm:$0xf]
    %v3081 = vld [vmem:[%s1] ss:$8 sm:$0xf0]
    %v3082 = vor.u32 %v3080, %v3081
    %v3084 = vperm.slane %v3082, 0
    %v3085 = vperm.slane %v3082, 1
    %v3086 = vperm.slane %v3082, 2
    %v3087 = vperm.slane %v3082, 3
    %v3088 = vperm.slane %v3082, 4
    %v3089 = vperm.slane %v3082, 5
    %v3090 = vperm.slane %v3082, 6
    %v3091 = vperm.slane %v3082, 7
    %v3100 = vmul.f32 %v3079, %v3084
    %v3101 = vmul.f32 %v3078, %v3085
    %v3102 = vmul.f32 %v3077, %v3086
    %v3103 = vmul.f32 %v3076, %v3087
    %v3104 = vmul.f32 %v3075, %v3088
    %v3105 = vmul.f32 %v3074, %v3089
    %v3106 = vmul.f32 %v3073, %v3090
    %v3107 = vmul.f32 %v3072, %v3091
    %3108 = vst [vmem:[#allocation5] sm:$0xff] %v3100
    %3109 = vst [vmem:[#allocation5 + $0x8] sm:$0xff] %v3101
    %3110 = vst [vmem:[#allocation5 + $0x10] sm:$0xff] %v3102
    %3111 = vst [vmem:[#allocation5 + $0x18] sm:$0xff] %v3103
    %3112 = vst [vmem:[#allocation5 + $0x20] sm:$0xff] %v3104
    %3113 = vst [vmem:[#allocation5 + $0x28] sm:$0xff] %v3105
    %3114 = vst [vmem:[#allocation5 + $0x30] sm:$0xff] %v3106
    %3115 = vst [vmem:[#allocation5 + $0x38] sm:$0xff] %v3107
    %v3116 = vld [vmem:[#allocation2 + $0x40] sm:$0xff]
    %v3117 = vld [vmem:[#allocation2 + $0x48] sm:$0xff]
    %v3118 = vld [vmem:[#allocation2 + $0x50] sm:$0xff]
    %v3119 = vld [vmem:[#allocation2 + $0x58] sm:$0xff]
    %v3120 = vld [vmem:[#allocation2 + $0x60] sm:$0xff]
    %v3121 = vld [vmem:[#allocation2 + $0x68] sm:$0xff]
    %v3122 = vld [vmem:[#allocation2 + $0x70] sm:$0xff]
    %v3123 = vld [vmem:[#allocation2 + $0x78] sm:$0xff]
    %3124 = vrot.lane.b32.xlu0 %v3116, 32
    %v3125 = vpop.permute.xlu0 %3124
    %3126 = vrot.lane.b32.xlu0 %v3117, 32
    %v3127 = vpop.permute.xlu0 %3126
    %3128 = vrot.lane.b32.xlu0 %v3118, 32
    %v3129 = vpop.permute.xlu0 %3128
    %3130 = vrot.lane.b32.xlu0 %v3119, 32
    %v3131 = vpop.permute.xlu0 %3130
    %3132 = vrot.lane.b32.xlu0 %v3120, 32
    %v3133 = vpop.permute.xlu0 %3132
    %3134 = vrot.lane.b32.xlu0 %v3121, 32
    %v3135 = vpop.permute.xlu0 %3134
    %3136 = vrot.lane.b32.xlu0 %v3122, 32
    %v3137 = vpop.permute.xlu0 %3136
    %3138 = vrot.lane.b32.xlu0 %v3123, 32
    %v3139 = vpop.permute.xlu0 %3138
    %v3140 = vsel %vm137, %v3137, %v3139
    %v3141 = vsel %vm137, %v3135, %v3137
    %v3142 = vsel %vm137, %v3133, %v3135
    %v3143 = vsel %vm137, %v3131, %v3133
    %v3144 = vsel %vm137, %v3129, %v3131
    %v3145 = vsel %vm137, %v3127, %v3129
    %v3146 = vsel %vm137, %v3125, %v3127
    %v3147 = vsel %vm137, %v3139, %v3125
    %v3148 = vld [vmem:[%s146] ss:$8 sm:$0xf]
    %v3149 = vld [vmem:[%s146] ss:$8 sm:$0xf0]
    %v3150 = vor.u32 %v3148, %v3149
    %v3152 = vperm.slane %v3150, 0
    %v3153 = vperm.slane %v3150, 1
    %v3154 = vperm.slane %v3150, 2
    %v3155 = vperm.slane %v3150, 3
    %v3156 = vperm.slane %v3150, 4
    %v3157 = vperm.slane %v3150, 5
    %v3158 = vperm.slane %v3150, 6
    %v3159 = vperm.slane %v3150, 7
    %v3168 = vmul.f32 %v3147, %v3152
    %v3169 = vmul.f32 %v3146, %v3153
    %v3170 = vmul.f32 %v3145, %v3154
    %v3171 = vmul.f32 %v3144, %v3155
    %v3172 = vmul.f32 %v3143, %v3156
    %v3173 = vmul.f32 %v3142, %v3157
    %v3174 = vmul.f32 %v3141, %v3158
    %v3175 = vmul.f32 %v3140, %v3159
    %3176 = vst [vmem:[#allocation5 + $0x40] sm:$0xff] %v3168
    %3177 = vst [vmem:[#allocation5 + $0x48] sm:$0xff] %v3169
    %3178 = vst [vmem:[#allocation5 + $0x50] sm:$0xff] %v3170
    %3179 = vst [vmem:[#allocation5 + $0x58] sm:$0xff] %v3171
    %3180 = vst [vmem:[#allocation5 + $0x60] sm:$0xff] %v3172
    %3181 = vst [vmem:[#allocation5 + $0x68] sm:$0xff] %v3173
    %3182 = vst [vmem:[#allocation5 + $0x70] sm:$0xff] %v3174
    %3183 = vst [vmem:[#allocation5 + $0x78] sm:$0xff] %v3175
    %v3184 = vld [vmem:[#allocation2 + $0x40] sm:$0xff]
    %v3185 = vld [vmem:[#allocation2 + $0x48] sm:$0xff]
    %v3186 = vld [vmem:[#allocation2 + $0x50] sm:$0xff]
    %v3187 = vld [vmem:[#allocation2 + $0x58] sm:$0xff]
    %v3188 = vld [vmem:[#allocation2 + $0x60] sm:$0xff]
    %v3189 = vld [vmem:[#allocation2 + $0x68] sm:$0xff]
    %v3190 = vld [vmem:[#allocation2 + $0x70] sm:$0xff]
    %v3191 = vld [vmem:[#allocation2 + $0x78] sm:$0xff]
    %3192 = vrot.lane.b32.xlu0 %v3184, 31
    %v3193 = vpop.permute.xlu0 %3192
    %3194 = vrot.lane.b32.xlu0 %v3185, 31
    %v3195 = vpop.permute.xlu0 %3194
    %3196 = vrot.lane.b32.xlu0 %v3186, 31
    %v3197 = vpop.permute.xlu0 %3196
    %3198 = vrot.lane.b32.xlu0 %v3187, 31
    %v3199 = vpop.permute.xlu0 %3198
    %3200 = vrot.lane.b32.xlu0 %v3188, 31
    %v3201 = vpop.permute.xlu0 %3200
    %3202 = vrot.lane.b32.xlu0 %v3189, 31
    %v3203 = vpop.permute.xlu0 %3202
    %3204 = vrot.lane.b32.xlu0 %v3190, 31
    %v3205 = vpop.permute.xlu0 %3204
    %3206 = vrot.lane.b32.xlu0 %v3191, 31
    %v3207 = vpop.permute.xlu0 %3206
    %v3208 = vsel %vm241, %v3205, %v3207
    %v3209 = vsel %vm241, %v3203, %v3205
    %v3210 = vsel %vm241, %v3201, %v3203
    %v3211 = vsel %vm241, %v3199, %v3201
    %v3212 = vsel %vm241, %v3197, %v3199
    %v3213 = vsel %vm241, %v3195, %v3197
    %v3214 = vsel %vm241, %v3193, %v3195
    %v3215 = vsel %vm241, %v3207, %v3193
    %v3216 = vld [vmem:[%s250] ss:$8 sm:$0xf]
    %v3217 = vld [vmem:[%s250] ss:$8 sm:$0xf0]
    %v3218 = vor.u32 %v3216, %v3217
    %v3220 = vperm.slane %v3218, 0
    %v3221 = vperm.slane %v3218, 1
    %v3222 = vperm.slane %v3218, 2
    %v3223 = vperm.slane %v3218, 3
    %v3224 = vperm.slane %v3218, 4
    %v3225 = vperm.slane %v3218, 5
    %v3226 = vperm.slane %v3218, 6
    %v3227 = vperm.slane %v3218, 7
    %v3236 = vmul.f32 %v3215, %v3220
    %v3237 = vmul.f32 %v3214, %v3221
    %v3238 = vmul.f32 %v3213, %v3222
    %v3239 = vmul.f32 %v3212, %v3223
    %v3240 = vmul.f32 %v3211, %v3224
    %v3241 = vmul.f32 %v3210, %v3225
    %v3242 = vmul.f32 %v3209, %v3226
    %v3243 = vmul.f32 %v3208, %v3227
    %3244 = vst [vmem:[#allocation5 + $0x80] sm:$0xff] %v3236
    %3245 = vst [vmem:[#allocation5 + $0x88] sm:$0xff] %v3237
    %3246 = vst [vmem:[#allocation5 + $0x90] sm:$0xff] %v3238
    %3247 = vst [vmem:[#allocation5 + $0x98] sm:$0xff] %v3239
    %3248 = vst [vmem:[#allocation5 + $0xa0] sm:$0xff] %v3240
    %3249 = vst [vmem:[#allocation5 + $0xa8] sm:$0xff] %v3241
    %3250 = vst [vmem:[#allocation5 + $0xb0] sm:$0xff] %v3242
    %3251 = vst [vmem:[#allocation5 + $0xb8] sm:$0xff] %v3243
    %v3252 = vld [vmem:[#allocation2 + $0x40] sm:$0xff]
    %v3253 = vld [vmem:[#allocation2 + $0x48] sm:$0xff]
    %v3254 = vld [vmem:[#allocation2 + $0x50] sm:$0xff]
    %v3255 = vld [vmem:[#allocation2 + $0x58] sm:$0xff]
    %v3256 = vld [vmem:[#allocation2 + $0x60] sm:$0xff]
    %v3257 = vld [vmem:[#allocation2 + $0x68] sm:$0xff]
    %v3258 = vld [vmem:[#allocation2 + $0x70] sm:$0xff]
    %v3259 = vld [vmem:[#allocation2 + $0x78] sm:$0xff]
    %3260 = vrot.lane.b32.xlu0 %v3252, 1
    %v3261 = vpop.permute.xlu0 %3260
    %3262 = vrot.lane.b32.xlu0 %v3253, 1
    %v3263 = vpop.permute.xlu0 %3262
    %3264 = vrot.lane.b32.xlu0 %v3254, 1
    %v3265 = vpop.permute.xlu0 %3264
    %3266 = vrot.lane.b32.xlu0 %v3255, 1
    %v3267 = vpop.permute.xlu0 %3266
    %3268 = vrot.lane.b32.xlu0 %v3256, 1
    %v3269 = vpop.permute.xlu0 %3268
    %3270 = vrot.lane.b32.xlu0 %v3257, 1
    %v3271 = vpop.permute.xlu0 %3270
    %3272 = vrot.lane.b32.xlu0 %v3258, 1
    %v3273 = vpop.permute.xlu0 %3272
    %3274 = vrot.lane.b32.xlu0 %v3259, 1
    %v3275 = vpop.permute.xlu0 %3274
    %v3276 = vsel %vm353, %v3273, %v3275
    %v3277 = vsel %vm353, %v3271, %v3273
    %v3278 = vsel %vm353, %v3269, %v3271
    %v3279 = vsel %vm353, %v3267, %v3269
    %v3280 = vsel %vm353, %v3265, %v3267
    %v3281 = vsel %vm353, %v3263, %v3265
    %v3282 = vsel %vm353, %v3261, %v3263
    %v3283 = vsel %vm353, %v3275, %v3261
    %v3284 = vld [vmem:[%s362] ss:$8 sm:$0xf]
    %v3285 = vld [vmem:[%s362] ss:$8 sm:$0xf0]
    %v3286 = vor.u32 %v3284, %v3285
    %v3288 = vperm.slane %v3286, 0
    %v3289 = vperm.slane %v3286, 1
    %v3290 = vperm.slane %v3286, 2
    %v3291 = vperm.slane %v3286, 3
    %v3292 = vperm.slane %v3286, 4
    %v3293 = vperm.slane %v3286, 5
    %v3294 = vperm.slane %v3286, 6
    %v3295 = vperm.slane %v3286, 7
    %v3304 = vmul.f32 %v3283, %v3288
    %v3305 = vmul.f32 %v3282, %v3289
    %v3306 = vmul.f32 %v3281, %v3290
    %v3307 = vmul.f32 %v3280, %v3291
    %v3308 = vmul.f32 %v3279, %v3292
    %v3309 = vmul.f32 %v3278, %v3293
    %v3310 = vmul.f32 %v3277, %v3294
    %v3311 = vmul.f32 %v3276, %v3295
    %3312 = vst [vmem:[#allocation5 + $0xc0] sm:$0xff] %v3304
    %3313 = vst [vmem:[#allocation5 + $0xc8] sm:$0xff] %v3305
    %3314 = vst [vmem:[#allocation5 + $0xd0] sm:$0xff] %v3306
    %3315 = vst [vmem:[#allocation5 + $0xd8] sm:$0xff] %v3307
    %3316 = vst [vmem:[#allocation5 + $0xe0] sm:$0xff] %v3308
    %3317 = vst [vmem:[#allocation5 + $0xe8] sm:$0xff] %v3309
    %3318 = vst [vmem:[#allocation5 + $0xf0] sm:$0xff] %v3310
    %3319 = vst [vmem:[#allocation5 + $0xf8] sm:$0xff] %v3311
    %v3320 = vld [vmem:[#allocation2 + $0x40] sm:$0xff]
    %v3321 = vld [vmem:[#allocation2 + $0x48] sm:$0xff]
    %v3322 = vld [vmem:[#allocation2 + $0x50] sm:$0xff]
    %v3323 = vld [vmem:[#allocation2 + $0x58] sm:$0xff]
    %v3324 = vld [vmem:[#allocation2 + $0x60] sm:$0xff]
    %v3325 = vld [vmem:[#allocation2 + $0x68] sm:$0xff]
    %v3326 = vld [vmem:[#allocation2 + $0x70] sm:$0xff]
    %v3327 = vld [vmem:[#allocation2 + $0x78] sm:$0xff]
    %v3328 = vld [vmem:[%s441] ss:$8 sm:$0xf]
    %v3329 = vld [vmem:[%s441] ss:$8 sm:$0xf0]
    %v3330 = vor.u32 %v3328, %v3329
    %v3332 = vperm.slane %v3330, 0
    %v3333 = vperm.slane %v3330, 1
    %v3334 = vperm.slane %v3330, 2
    %v3335 = vperm.slane %v3330, 3
    %v3336 = vperm.slane %v3330, 4
    %v3337 = vperm.slane %v3330, 5
    %v3338 = vperm.slane %v3330, 6
    %v3339 = vperm.slane %v3330, 7
    %v3348 = vmul.f32 %v3320, %v3332
    %v3349 = vmul.f32 %v3321, %v3333
    %v3350 = vmul.f32 %v3322, %v3334
    %v3351 = vmul.f32 %v3323, %v3335
    %v3352 = vmul.f32 %v3324, %v3336
    %v3353 = vmul.f32 %v3325, %v3337
    %v3354 = vmul.f32 %v3326, %v3338
    %v3355 = vmul.f32 %v3327, %v3339
    %3356 = vst [vmem:[#allocation5 + $0x100] sm:$0xff] %v3348
    %3357 = vst [vmem:[#allocation5 + $0x108] sm:$0xff] %v3349
    %3358 = vst [vmem:[#allocation5 + $0x110] sm:$0xff] %v3350
    %3359 = vst [vmem:[#allocation5 + $0x118] sm:$0xff] %v3351
    %3360 = vst [vmem:[#allocation5 + $0x120] sm:$0xff] %v3352
    %3361 = vst [vmem:[#allocation5 + $0x128] sm:$0xff] %v3353
    %3362 = vst [vmem:[#allocation5 + $0x130] sm:$0xff] %v3354
    %3363 = vst [vmem:[#allocation5 + $0x138] sm:$0xff] %v3355
    %v3364 = vld [vmem:[#allocation2 + $0x40] sm:$0xff]
    %v3365 = vld [vmem:[#allocation2 + $0x48] sm:$0xff]
    %v3366 = vld [vmem:[#allocation2 + $0x50] sm:$0xff]
    %v3367 = vld [vmem:[#allocation2 + $0x58] sm:$0xff]
    %v3368 = vld [vmem:[#allocation2 + $0x60] sm:$0xff]
    %v3369 = vld [vmem:[#allocation2 + $0x68] sm:$0xff]
    %v3370 = vld [vmem:[#allocation2 + $0x70] sm:$0xff]
    %v3371 = vld [vmem:[#allocation2 + $0x78] sm:$0xff]
    %3372 = vrot.lane.b32.xlu0 %v3364, 127
    %v3373 = vpop.permute.xlu0 %3372
    %3374 = vrot.lane.b32.xlu0 %v3365, 127
    %v3375 = vpop.permute.xlu0 %3374
    %3376 = vrot.lane.b32.xlu0 %v3366, 127
    %v3377 = vpop.permute.xlu0 %3376
    %3378 = vrot.lane.b32.xlu0 %v3367, 127
    %v3379 = vpop.permute.xlu0 %3378
    %3380 = vrot.lane.b32.xlu0 %v3368, 127
    %v3381 = vpop.permute.xlu0 %3380
    %3382 = vrot.lane.b32.xlu0 %v3369, 127
    %v3383 = vpop.permute.xlu0 %3382
    %3384 = vrot.lane.b32.xlu0 %v3370, 127
    %v3385 = vpop.permute.xlu0 %3384
    %3386 = vrot.lane.b32.xlu0 %v3371, 127
    %v3387 = vpop.permute.xlu0 %3386
    %v3388 = vsel %vm512, %v3385, %v3387
    %v3389 = vsel %vm512, %v3383, %v3385
    %v3390 = vsel %vm512, %v3381, %v3383
    %v3391 = vsel %vm512, %v3379, %v3381
    %v3392 = vsel %vm512, %v3377, %v3379
    %v3393 = vsel %vm512, %v3375, %v3377
    %v3394 = vsel %vm512, %v3373, %v3375
    %v3395 = vsel %vm512, %v3387, %v3373
    %v3396 = vld [vmem:[%s521] ss:$8 sm:$0xf]
    %v3397 = vld [vmem:[%s521] ss:$8 sm:$0xf0]
    %v3398 = vor.u32 %v3396, %v3397
    %v3400 = vperm.slane %v3398, 0
    %v3401 = vperm.slane %v3398, 1
    %v3402 = vperm.slane %v3398, 2
    %v3403 = vperm.slane %v3398, 3
    %v3404 = vperm.slane %v3398, 4
    %v3405 = vperm.slane %v3398, 5
    %v3406 = vperm.slane %v3398, 6
    %v3407 = vperm.slane %v3398, 7
    %v3416 = vmul.f32 %v3394, %v3400
    %v3417 = vmul.f32 %v3393, %v3401
    %v3418 = vmul.f32 %v3392, %v3402
    %v3419 = vmul.f32 %v3391, %v3403
    %v3420 = vmul.f32 %v3390, %v3404
    %v3421 = vmul.f32 %v3389, %v3405
    %v3422 = vmul.f32 %v3388, %v3406
    %v3423 = vmul.f32 %v3395, %v3407
    %3424 = vst [vmem:[#allocation5 + $0x140] sm:$0xff] %v3416
    %3425 = vst [vmem:[#allocation5 + $0x148] sm:$0xff] %v3417
    %3426 = vst [vmem:[#allocation5 + $0x150] sm:$0xff] %v3418
    %3427 = vst [vmem:[#allocation5 + $0x158] sm:$0xff] %v3419
    %3428 = vst [vmem:[#allocation5 + $0x160] sm:$0xff] %v3420
    %3429 = vst [vmem:[#allocation5 + $0x168] sm:$0xff] %v3421
    %3430 = vst [vmem:[#allocation5 + $0x170] sm:$0xff] %v3422
    %3431 = vst [vmem:[#allocation5 + $0x178] sm:$0xff] %v3423
    %v3432 = vld [vmem:[#allocation2 + $0x40] sm:$0xff]
    %v3433 = vld [vmem:[#allocation2 + $0x48] sm:$0xff]
    %v3434 = vld [vmem:[#allocation2 + $0x50] sm:$0xff]
    %v3435 = vld [vmem:[#allocation2 + $0x58] sm:$0xff]
    %v3436 = vld [vmem:[#allocation2 + $0x60] sm:$0xff]
    %v3437 = vld [vmem:[#allocation2 + $0x68] sm:$0xff]
    %v3438 = vld [vmem:[#allocation2 + $0x70] sm:$0xff]
    %v3439 = vld [vmem:[#allocation2 + $0x78] sm:$0xff]
    %3440 = vrot.lane.b32.xlu0 %v3432, 97
    %v3441 = vpop.permute.xlu0 %3440
    %3442 = vrot.lane.b32.xlu0 %v3433, 97
    %v3443 = vpop.permute.xlu0 %3442
    %3444 = vrot.lane.b32.xlu0 %v3434, 97
    %v3445 = vpop.permute.xlu0 %3444
    %3446 = vrot.lane.b32.xlu0 %v3435, 97
    %v3447 = vpop.permute.xlu0 %3446
    %3448 = vrot.lane.b32.xlu0 %v3436, 97
    %v3449 = vpop.permute.xlu0 %3448
    %3450 = vrot.lane.b32.xlu0 %v3437, 97
    %v3451 = vpop.permute.xlu0 %3450
    %3452 = vrot.lane.b32.xlu0 %v3438, 97
    %v3453 = vpop.permute.xlu0 %3452
    %3454 = vrot.lane.b32.xlu0 %v3439, 97
    %v3455 = vpop.permute.xlu0 %3454
    %v3456 = vsel %vm624, %v3453, %v3455
    %v3457 = vsel %vm624, %v3451, %v3453
    %v3458 = vsel %vm624, %v3449, %v3451
    %v3459 = vsel %vm624, %v3447, %v3449
    %v3460 = vsel %vm624, %v3445, %v3447
    %v3461 = vsel %vm624, %v3443, %v3445
    %v3462 = vsel %vm624, %v3441, %v3443
    %v3463 = vsel %vm624, %v3455, %v3441
    %v3464 = vld [vmem:[%s633] ss:$8 sm:$0xf]
    %v3465 = vld [vmem:[%s633] ss:$8 sm:$0xf0]
    %v3466 = vor.u32 %v3464, %v3465
    %v3468 = vperm.slane %v3466, 0
    %v3469 = vperm.slane %v3466, 1
    %v3470 = vperm.slane %v3466, 2
    %v3471 = vperm.slane %v3466, 3
    %v3472 = vperm.slane %v3466, 4
    %v3473 = vperm.slane %v3466, 5
    %v3474 = vperm.slane %v3466, 6
    %v3475 = vperm.slane %v3466, 7
    %v3484 = vmul.f32 %v3462, %v3468
    %v3485 = vmul.f32 %v3461, %v3469
    %v3486 = vmul.f32 %v3460, %v3470
    %v3487 = vmul.f32 %v3459, %v3471
    %v3488 = vmul.f32 %v3458, %v3472
    %v3489 = vmul.f32 %v3457, %v3473
    %v3490 = vmul.f32 %v3456, %v3474
    %v3491 = vmul.f32 %v3463, %v3475
    %3492 = vst [vmem:[#allocation5 + $0x180] sm:$0xff] %v3484
    %3493 = vst [vmem:[#allocation5 + $0x188] sm:$0xff] %v3485
    %3494 = vst [vmem:[#allocation5 + $0x190] sm:$0xff] %v3486
    %3495 = vst [vmem:[#allocation5 + $0x198] sm:$0xff] %v3487
    %3496 = vst [vmem:[#allocation5 + $0x1a0] sm:$0xff] %v3488
    %3497 = vst [vmem:[#allocation5 + $0x1a8] sm:$0xff] %v3489
    %3498 = vst [vmem:[#allocation5 + $0x1b0] sm:$0xff] %v3490
    %3499 = vst [vmem:[#allocation5 + $0x1b8] sm:$0xff] %v3491
    %v3500 = vld [vmem:[#allocation2 + $0x40] sm:$0xff]
    %v3501 = vld [vmem:[#allocation2 + $0x48] sm:$0xff]
    %v3502 = vld [vmem:[#allocation2 + $0x50] sm:$0xff]
    %v3503 = vld [vmem:[#allocation2 + $0x58] sm:$0xff]
    %v3504 = vld [vmem:[#allocation2 + $0x60] sm:$0xff]
    %v3505 = vld [vmem:[#allocation2 + $0x68] sm:$0xff]
    %v3506 = vld [vmem:[#allocation2 + $0x70] sm:$0xff]
    %v3507 = vld [vmem:[#allocation2 + $0x78] sm:$0xff]
    %3508 = vrot.lane.b32.xlu0 %v3500, 96
    %v3509 = vpop.permute.xlu0 %3508
    %3510 = vrot.lane.b32.xlu0 %v3501, 96
    %v3511 = vpop.permute.xlu0 %3510
    %3512 = vrot.lane.b32.xlu0 %v3502, 96
    %v3513 = vpop.permute.xlu0 %3512
    %3514 = vrot.lane.b32.xlu0 %v3503, 96
    %v3515 = vpop.permute.xlu0 %3514
    %3516 = vrot.lane.b32.xlu0 %v3504, 96
    %v3517 = vpop.permute.xlu0 %3516
    %3518 = vrot.lane.b32.xlu0 %v3505, 96
    %v3519 = vpop.permute.xlu0 %3518
    %3520 = vrot.lane.b32.xlu0 %v3506, 96
    %v3521 = vpop.permute.xlu0 %3520
    %3522 = vrot.lane.b32.xlu0 %v3507, 96
    %v3523 = vpop.permute.xlu0 %3522
    %v3524 = vsel %vm728, %v3521, %v3523
    %v3525 = vsel %vm728, %v3519, %v3521
    %v3526 = vsel %vm728, %v3517, %v3519
    %v3527 = vsel %vm728, %v3515, %v3517
    %v3528 = vsel %vm728, %v3513, %v3515
    %v3529 = vsel %vm728, %v3511, %v3513
    %v3530 = vsel %vm728, %v3509, %v3511
    %v3531 = vsel %vm728, %v3523, %v3509
    %v3532 = vld [vmem:[%s737] ss:$8 sm:$0xf]
    %v3533 = vld [vmem:[%s737] ss:$8 sm:$0xf0]
    %v3534 = vor.u32 %v3532, %v3533
    %v3536 = vperm.slane %v3534, 0
    %v3537 = vperm.slane %v3534, 1
    %v3538 = vperm.slane %v3534, 2
    %v3539 = vperm.slane %v3534, 3
    %v3540 = vperm.slane %v3534, 4
    %v3541 = vperm.slane %v3534, 5
    %v3542 = vperm.slane %v3534, 6
    %v3543 = vperm.slane %v3534, 7
    %v3552 = vmul.f32 %v3530, %v3536
    %v3553 = vmul.f32 %v3529, %v3537
    %v3554 = vmul.f32 %v3528, %v3538
    %v3555 = vmul.f32 %v3527, %v3539
    %v3556 = vmul.f32 %v3526, %v3540
    %v3557 = vmul.f32 %v3525, %v3541
    %v3558 = vmul.f32 %v3524, %v3542
    %v3559 = vmul.f32 %v3531, %v3543
    %3560 = vst [vmem:[#allocation5 + $0x1c0] sm:$0xff] %v3552
    %3561 = vst [vmem:[#allocation5 + $0x1c8] sm:$0xff] %v3553
    %3562 = vst [vmem:[#allocation5 + $0x1d0] sm:$0xff] %v3554
    %3563 = vst [vmem:[#allocation5 + $0x1d8] sm:$0xff] %v3555
    %3564 = vst [vmem:[#allocation5 + $0x1e0] sm:$0xff] %v3556
    %3565 = vst [vmem:[#allocation5 + $0x1e8] sm:$0xff] %v3557
    %3566 = vst [vmem:[#allocation5 + $0x1f0] sm:$0xff] %v3558
    %3567 = vst [vmem:[#allocation5 + $0x1f8] sm:$0xff] %v3559
    %v3568 = vld [vmem:[#allocation2 + $0x40] sm:$0xff]
    %v3569 = vld [vmem:[#allocation2 + $0x48] sm:$0xff]
    %v3570 = vld [vmem:[#allocation2 + $0x50] sm:$0xff]
    %v3571 = vld [vmem:[#allocation2 + $0x58] sm:$0xff]
    %v3572 = vld [vmem:[#allocation2 + $0x60] sm:$0xff]
    %v3573 = vld [vmem:[#allocation2 + $0x68] sm:$0xff]
    %v3574 = vld [vmem:[#allocation2 + $0x70] sm:$0xff]
    %v3575 = vld [vmem:[#allocation2 + $0x78] sm:$0xff]
    %3576 = vrot.lane.b32.xlu0 %v3568, 95
    %v3577 = vpop.permute.xlu0 %3576
    %3578 = vrot.lane.b32.xlu0 %v3569, 95
    %v3579 = vpop.permute.xlu0 %3578
    %3580 = vrot.lane.b32.xlu0 %v3570, 95
    %v3581 = vpop.permute.xlu0 %3580
    %3582 = vrot.lane.b32.xlu0 %v3571, 95
    %v3583 = vpop.permute.xlu0 %3582
    %3584 = vrot.lane.b32.xlu0 %v3572, 95
    %v3585 = vpop.permute.xlu0 %3584
    %3586 = vrot.lane.b32.xlu0 %v3573, 95
    %v3587 = vpop.permute.xlu0 %3586
    %3588 = vrot.lane.b32.xlu0 %v3574, 95
    %v3589 = vpop.permute.xlu0 %3588
    %3590 = vrot.lane.b32.xlu0 %v3575, 95
    %v3591 = vpop.permute.xlu0 %3590
    %v3592 = vsel %vm832, %v3589, %v3591
    %v3593 = vsel %vm832, %v3587, %v3589
    %v3594 = vsel %vm832, %v3585, %v3587
    %v3595 = vsel %vm832, %v3583, %v3585
    %v3596 = vsel %vm832, %v3581, %v3583
    %v3597 = vsel %vm832, %v3579, %v3581
    %v3598 = vsel %vm832, %v3577, %v3579
    %v3599 = vsel %vm832, %v3591, %v3577
    %v3600 = vld [vmem:[%s841] ss:$8 sm:$0xf]
    %v3601 = vld [vmem:[%s841] ss:$8 sm:$0xf0]
    %v3602 = vor.u32 %v3600, %v3601
    %v3604 = vperm.slane %v3602, 0
    %v3605 = vperm.slane %v3602, 1
    %v3606 = vperm.slane %v3602, 2
    %v3607 = vperm.slane %v3602, 3
    %v3608 = vperm.slane %v3602, 4
    %v3609 = vperm.slane %v3602, 5
    %v3610 = vperm.slane %v3602, 6
    %v3611 = vperm.slane %v3602, 7
    %v3620 = vmul.f32 %v3598, %v3604
    %v3621 = vmul.f32 %v3597, %v3605
    %v3622 = vmul.f32 %v3596, %v3606
    %v3623 = vmul.f32 %v3595, %v3607
    %v3624 = vmul.f32 %v3594, %v3608
    %v3625 = vmul.f32 %v3593, %v3609
    %v3626 = vmul.f32 %v3592, %v3610
    %v3627 = vmul.f32 %v3599, %v3611
    %3628 = vst [vmem:[#allocation5 + $0x200] sm:$0xff] %v3620
    %3629 = vst [vmem:[#allocation5 + $0x208] sm:$0xff] %v3621
    %3630 = vst [vmem:[#allocation5 + $0x210] sm:$0xff] %v3622
    %3631 = vst [vmem:[#allocation5 + $0x218] sm:$0xff] %v3623
    %3632 = vst [vmem:[#allocation5 + $0x220] sm:$0xff] %v3624
    %3633 = vst [vmem:[#allocation5 + $0x228] sm:$0xff] %v3625
    %3634 = vst [vmem:[#allocation5 + $0x230] sm:$0xff] %v3626
    %3635 = vst [vmem:[#allocation5 + $0x238] sm:$0xff] %v3627
    %v3636 = vld [vmem:[#allocation5] sm:$0xff]
    %v3637 = vld [vmem:[#allocation5 + $0x8] sm:$0xff]
    %v3638 = vld [vmem:[#allocation5 + $0x40] sm:$0xff]
    %v3639 = vld [vmem:[#allocation5 + $0x48] sm:$0xff]
    %v3640 = vld [vmem:[#allocation5 + $0x80] sm:$0xff]
    %v3641 = vld [vmem:[#allocation5 + $0x88] sm:$0xff]
    %v3642 = vld [vmem:[#allocation5 + $0xc0] sm:$0xff]
    %v3643 = vld [vmem:[#allocation5 + $0xc8] sm:$0xff]
    %v3644 = vld [vmem:[#allocation5 + $0x100] sm:$0xff]
    %v3645 = vld [vmem:[#allocation5 + $0x108] sm:$0xff]
    %v3646 = vld [vmem:[#allocation5 + $0x140] sm:$0xff]
    %v3647 = vld [vmem:[#allocation5 + $0x148] sm:$0xff]
    %v3648 = vld [vmem:[#allocation5 + $0x180] sm:$0xff]
    %v3649 = vld [vmem:[#allocation5 + $0x188] sm:$0xff]
    %v3650 = vld [vmem:[#allocation5 + $0x1c0] sm:$0xff]
    %v3651 = vld [vmem:[#allocation5 + $0x1c8] sm:$0xff]
    %v3652 = vld [vmem:[#allocation5 + $0x200] sm:$0xff]
    %v3653 = vld [vmem:[#allocation5 + $0x208] sm:$0xff]
    %v3654 = vld [vmem:[%s3] sm:$0xf]
    %v3655 = vld [vmem:[%s3 + $0x4] sm:$0xf]
    %v3656 = vpack.c.bf16 %v3638, %v3636
    %v3657 = vpack.c.bf16 %v3639, %v3637
    %v3658 = vpack.c.bf16 %v3642, %v3640
    %v3659 = vpack.c.bf16 %v3643, %v3641
    %v3660 = vpack.c.bf16 %v3646, %v3644
    %v3661 = vpack.c.bf16 %v3647, %v3645
    %v3662 = vpack.c.bf16 %v3650, %v3648
    %v3663 = vpack.c.bf16 %v3651, %v3649
    %v3664 = vpack.c.bf16 %v3652, %v3652
    %v3665 = vpack.c.bf16 %v3653, %v3653
    %v3668 = vunpack.c.l.b16 %v3654
    %v3669 = vunpack.c.l.b16 %v3655
    %v3670 = vpack.c.b16 %v3669, %v3668
    %v3672 = vsel %vm2761, %v3670, 0
    %v3675 = vsel %vm2765, %v3664, 0
    %v3678 = vsel %vm2765, %v3665, 0
    %3680 = vmatpush.bf16.msra.mxu0 0
    %3681 = vmatpush.bf16.msra.mxu0 0
    %3682 = vmatpush.bf16.msra.mxu0 0
    %3683 = vmatpush.bf16.msra.mxu0 %v3675
    %3684 = vmatpush.bf16.msra.mxu0 %v3662
    %3685 = vmatpush.bf16.msra.mxu0 %v3660
    %3686 = vmatpush.bf16.msra.mxu0 %v3658
    %3687 = vmatpush.bf16.msra.mxu0 %v3656
    %3688 = vmatmul.bf16.gmra.mxu0 %v3672
    %v3689 = vpop.f32.mrf.mxu0
    %v3690 = vadd.f32 0.0, %v3689
    %v3691 = vpop.f32.mrf.mxu0
    %v3692 = vadd.f32 0.0, %v3691
    %3693 = vdwg.mxu0
    %3694 = vmatpush.bf16.msra.mxu0 0
    %3695 = vmatpush.bf16.msra.mxu0 0
    %3696 = vmatpush.bf16.msra.mxu0 0
    %3697 = vmatpush.bf16.msra.mxu0 %v3678
    %3698 = vmatpush.bf16.msra.mxu0 %v3663
    %3699 = vmatpush.bf16.msra.mxu0 %v3661
    %3700 = vmatpush.bf16.msra.mxu0 %v3659
    %3701 = vmatpush.bf16.msra.mxu0 %v3657
    %3702 = vmatmul.bf16.gmra.mxu0 %v3672
    %v3703 = vpop.f32.mrf.mxu0
    %v3704 = vadd.f32 0.0, %v3703
    %v3705 = vpop.f32.mrf.mxu0
    %v3706 = vadd.f32 0.0, %v3705
    %3707 = vdwg.mxu0
    %v3708 = vmax.f32 %v3690, 0.0
    %v3709 = vmax.f32 %v3704, 0.0
    %v3710 = vmax.f32 %v3692, 0.0
    %v3711 = vmax.f32 %v3706, 0.0
    %3712 = vst [vmem:[#allocation3 + $0x40] sm:$0xff] %v3708
    %3713 = vst [vmem:[#allocation3 + $0x48] sm:$0xff] %v3709
    %3714 = vst [vmem:[#allocation3 + $0xc0] sm:$0xff] %v3710
    %3715 = vst [vmem:[#allocation3 + $0xc8] sm:$0xff] %v3711
    %v3716 = vld [vmem:[#allocation5 + $0x10] sm:$0xff]
    %v3717 = vld [vmem:[#allocation5 + $0x18] sm:$0xff]
    %v3718 = vld [vmem:[#allocation5 + $0x50] sm:$0xff]
    %v3719 = vld [vmem:[#allocation5 + $0x58] sm:$0xff]
    %v3720 = vld [vmem:[#allocation5 + $0x90] sm:$0xff]
    %v3721 = vld [vmem:[#allocation5 + $0x98] sm:$0xff]
    %v3722 = vld [vmem:[#allocation5 + $0xd0] sm:$0xff]
    %v3723 = vld [vmem:[#allocation5 + $0xd8] sm:$0xff]
    %v3724 = vld [vmem:[#allocation5 + $0x110] sm:$0xff]
    %v3725 = vld [vmem:[#allocation5 + $0x118] sm:$0xff]
    %v3726 = vld [vmem:[#allocation5 + $0x150] sm:$0xff]
    %v3727 = vld [vmem:[#allocation5 + $0x158] sm:$0xff]
    %v3728 = vld [vmem:[#allocation5 + $0x190] sm:$0xff]
    %v3729 = vld [vmem:[#allocation5 + $0x198] sm:$0xff]
    %v3730 = vld [vmem:[#allocation5 + $0x1d0] sm:$0xff]
    %v3731 = vld [vmem:[#allocation5 + $0x1d8] sm:$0xff]
    %v3732 = vld [vmem:[#allocation5 + $0x210] sm:$0xff]
    %v3733 = vld [vmem:[#allocation5 + $0x218] sm:$0xff]
    %v3734 = vld [vmem:[%s3] sm:$0xf]
    %v3735 = vld [vmem:[%s3 + $0x4] sm:$0xf]
    %v3736 = vpack.c.bf16 %v3718, %v3716
    %v3737 = vpack.c.bf16 %v3719, %v3717
    %v3738 = vpack.c.bf16 %v3722, %v3720
    %v3739 = vpack.c.bf16 %v3723, %v3721
    %v3740 = vpack.c.bf16 %v3726, %v3724
    %v3741 = vpack.c.bf16 %v3727, %v3725
    %v3742 = vpack.c.bf16 %v3730, %v3728
    %v3743 = vpack.c.bf16 %v3731, %v3729
    %v3744 = vpack.c.bf16 %v3732, %v3732
    %v3745 = vpack.c.bf16 %v3733, %v3733
    %v3748 = vunpack.c.l.b16 %v3734
    %v3749 = vunpack.c.l.b16 %v3735
    %v3750 = vpack.c.b16 %v3749, %v3748
    %v3752 = vsel %vm2761, %v3750, 0
    %v3755 = vsel %vm2765, %v3744, 0
    %v3758 = vsel %vm2765, %v3745, 0
    %3760 = vmatpush.bf16.msra.mxu0 0
    %3761 = vmatpush.bf16.msra.mxu0 0
    %3762 = vmatpush.bf16.msra.mxu0 0
    %3763 = vmatpush.bf16.msra.mxu0 %v3755
    %3764 = vmatpush.bf16.msra.mxu0 %v3742
    %3765 = vmatpush.bf16.msra.mxu0 %v3740
    %3766 = vmatpush.bf16.msra.mxu0 %v3738
    %3767 = vmatpush.bf16.msra.mxu0 %v3736
    %3768 = vmatmul.bf16.gmra.mxu0 %v3752
    %v3769 = vpop.f32.mrf.mxu0
    %v3770 = vadd.f32 0.0, %v3769
    %v3771 = vpop.f32.mrf.mxu0
    %v3772 = vadd.f32 0.0, %v3771
    %3773 = vdwg.mxu0
    %3774 = vmatpush.bf16.msra.mxu0 0
    %3775 = vmatpush.bf16.msra.mxu0 0
    %3776 = vmatpush.bf16.msra.mxu0 0
    %3777 = vmatpush.bf16.msra.mxu0 %v3758
    %3778 = vmatpush.bf16.msra.mxu0 %v3743
    %3779 = vmatpush.bf16.msra.mxu0 %v3741
    %3780 = vmatpush.bf16.msra.mxu0 %v3739
    %3781 = vmatpush.bf16.msra.mxu0 %v3737
    %3782 = vmatmul.bf16.gmra.mxu0 %v3752
    %v3783 = vpop.f32.mrf.mxu0
    %v3784 = vadd.f32 0.0, %v3783
    %v3785 = vpop.f32.mrf.mxu0
    %v3786 = vadd.f32 0.0, %v3785
    %3787 = vdwg.mxu0
    %v3788 = vmax.f32 %v3770, 0.0
    %v3789 = vmax.f32 %v3784, 0.0
    %v3790 = vmax.f32 %v3772, 0.0
    %v3791 = vmax.f32 %v3786, 0.0
    %3792 = vst [vmem:[#allocation3 + $0x50] sm:$0xff] %v3788
    %3793 = vst [vmem:[#allocation3 + $0x58] sm:$0xff] %v3789
    %3794 = vst [vmem:[#allocation3 + $0xd0] sm:$0xff] %v3790
    %3795 = vst [vmem:[#allocation3 + $0xd8] sm:$0xff] %v3791
    %v3796 = vld [vmem:[#allocation5 + $0x20] sm:$0xff]
    %v3797 = vld [vmem:[#allocation5 + $0x28] sm:$0xff]
    %v3798 = vld [vmem:[#allocation5 + $0x60] sm:$0xff]
    %v3799 = vld [vmem:[#allocation5 + $0x68] sm:$0xff]
    %v3800 = vld [vmem:[#allocation5 + $0xa0] sm:$0xff]
    %v3801 = vld [vmem:[#allocation5 + $0xa8] sm:$0xff]
    %v3802 = vld [vmem:[#allocation5 + $0xe0] sm:$0xff]
    %v3803 = vld [vmem:[#allocation5 + $0xe8] sm:$0xff]
    %v3804 = vld [vmem:[#allocation5 + $0x120] sm:$0xff]
    %v3805 = vld [vmem:[#allocation5 + $0x128] sm:$0xff]
    %v3806 = vld [vmem:[#allocation5 + $0x160] sm:$0xff]
    %v3807 = vld [vmem:[#allocation5 + $0x168] sm:$0xff]
    %v3808 = vld [vmem:[#allocation5 + $0x1a0] sm:$0xff]
    %v3809 = vld [vmem:[#allocation5 + $0x1a8] sm:$0xff]
    %v3810 = vld [vmem:[#allocation5 + $0x1e0] sm:$0xff]
    %v3811 = vld [vmem:[#allocation5 + $0x1e8] sm:$0xff]
    %v3812 = vld [vmem:[#allocation5 + $0x220] sm:$0xff]
    %v3813 = vld [vmem:[#allocation5 + $0x228] sm:$0xff]
    %v3814 = vld [vmem:[%s3] sm:$0xf]
    %v3815 = vld [vmem:[%s3 + $0x4] sm:$0xf]
    %v3816 = vpack.c.bf16 %v3798, %v3796
    %v3817 = vpack.c.bf16 %v3799, %v3797
    %v3818 = vpack.c.bf16 %v3802, %v3800
    %v3819 = vpack.c.bf16 %v3803, %v3801
    %v3820 = vpack.c.bf16 %v3806, %v3804
    %v3821 = vpack.c.bf16 %v3807, %v3805
    %v3822 = vpack.c.bf16 %v3810, %v3808
    %v3823 = vpack.c.bf16 %v3811, %v3809
    %v3824 = vpack.c.bf16 %v3812, %v3812
    %v3825 = vpack.c.bf16 %v3813, %v3813
    %v3828 = vunpack.c.l.b16 %v3814
    %v3829 = vunpack.c.l.b16 %v3815
    %v3830 = vpack.c.b16 %v3829, %v3828
    %v3832 = vsel %vm2761, %v3830, 0
    %v3835 = vsel %vm2765, %v3824, 0
    %v3838 = vsel %vm2765, %v3825, 0
    %3840 = vmatpush.bf16.msra.mxu0 0
    %3841 = vmatpush.bf16.msra.mxu0 0
    %3842 = vmatpush.bf16.msra.mxu0 0
    %3843 = vmatpush.bf16.msra.mxu0 %v3835
    %3844 = vmatpush.bf16.msra.mxu0 %v3822
    %3845 = vmatpush.bf16.msra.mxu0 %v3820
    %3846 = vmatpush.bf16.msra.mxu0 %v3818
    %3847 = vmatpush.bf16.msra.mxu0 %v3816
    %3848 = vmatmul.bf16.gmra.mxu0 %v3832
    %v3849 = vpop.f32.mrf.mxu0
    %v3850 = vadd.f32 0.0, %v3849
    %v3851 = vpop.f32.mrf.mxu0
    %v3852 = vadd.f32 0.0, %v3851
    %3853 = vdwg.mxu0
    %3854 = vmatpush.bf16.msra.mxu0 0
    %3855 = vmatpush.bf16.msra.mxu0 0
    %3856 = vmatpush.bf16.msra.mxu0 0
    %3857 = vmatpush.bf16.msra.mxu0 %v3838
    %3858 = vmatpush.bf16.msra.mxu0 %v3823
    %3859 = vmatpush.bf16.msra.mxu0 %v3821
    %3860 = vmatpush.bf16.msra.mxu0 %v3819
    %3861 = vmatpush.bf16.msra.mxu0 %v3817
    %3862 = vmatmul.bf16.gmra.mxu0 %v3832
    %v3863 = vpop.f32.mrf.mxu0
    %v3864 = vadd.f32 0.0, %v3863
    %v3865 = vpop.f32.mrf.mxu0
    %v3866 = vadd.f32 0.0, %v3865
    %3867 = vdwg.mxu0
    %v3868 = vmax.f32 %v3850, 0.0
    %v3869 = vmax.f32 %v3864, 0.0
    %v3870 = vmax.f32 %v3852, 0.0
    %v3871 = vmax.f32 %v3866, 0.0
    %3872 = vst [vmem:[#allocation3 + $0x60] sm:$0xff] %v3868
    %3873 = vst [vmem:[#allocation3 + $0x68] sm:$0xff] %v3869
    %3874 = vst [vmem:[#allocation3 + $0xe0] sm:$0xff] %v3870
    %3875 = vst [vmem:[#allocation3 + $0xe8] sm:$0xff] %v3871
    %v3876 = vld [vmem:[#allocation5 + $0x30] sm:$0xff]
    %v3877 = vld [vmem:[#allocation5 + $0x38] sm:$0xff]
    %v3878 = vld [vmem:[#allocation5 + $0x70] sm:$0xff]
    %v3879 = vld [vmem:[#allocation5 + $0x78] sm:$0xff]
    %v3880 = vld [vmem:[#allocation5 + $0xb0] sm:$0xff]
    %v3881 = vld [vmem:[#allocation5 + $0xb8] sm:$0xff]
    %v3882 = vld [vmem:[#allocation5 + $0xf0] sm:$0xff]
    %v3883 = vld [vmem:[#allocation5 + $0xf8] sm:$0xff]
    %v3884 = vld [vmem:[#allocation5 + $0x130] sm:$0xff]
    %v3885 = vld [vmem:[#allocation5 + $0x138] sm:$0xff]
    %v3886 = vld [vmem:[#allocation5 + $0x170] sm:$0xff]
    %v3887 = vld [vmem:[#allocation5 + $0x178] sm:$0xff]
    %v3888 = vld [vmem:[#allocation5 + $0x1b0] sm:$0xff]
    %v3889 = vld [vmem:[#allocation5 + $0x1b8] sm:$0xff]
    %v3890 = vld [vmem:[#allocation5 + $0x1f0] sm:$0xff]
    %v3891 = vld [vmem:[#allocation5 + $0x1f8] sm:$0xff]
    %v3892 = vld [vmem:[#allocation5 + $0x230] sm:$0xff]
    %v3893 = vld [vmem:[#allocation5 + $0x238] sm:$0xff]
    %v3894 = vld [vmem:[%s3] sm:$0xf]
    %v3895 = vld [vmem:[%s3 + $0x4] sm:$0xf]
    %v3896 = vpack.c.bf16 %v3878, %v3876
    %v3897 = vpack.c.bf16 %v3879, %v3877
    %v3898 = vpack.c.bf16 %v3882, %v3880
    %v3899 = vpack.c.bf16 %v3883, %v3881
    %v3900 = vpack.c.bf16 %v3886, %v3884
    %v3901 = vpack.c.bf16 %v3887, %v3885
    %v3902 = vpack.c.bf16 %v3890, %v3888
    %v3903 = vpack.c.bf16 %v3891, %v3889
    %v3904 = vpack.c.bf16 %v3892, %v3892
    %v3905 = vpack.c.bf16 %v3893, %v3893
    %v3908 = vunpack.c.l.b16 %v3894
    %v3909 = vunpack.c.l.b16 %v3895
    %v3910 = vpack.c.b16 %v3909, %v3908
    %v3912 = vsel %vm2761, %v3910, 0
    %v3915 = vsel %vm2765, %v3904, 0
    %v3918 = vsel %vm2765, %v3905, 0
    %3920 = vmatpush.bf16.msra.mxu0 0
    %3921 = vmatpush.bf16.msra.mxu0 0
    %3922 = vmatpush.bf16.msra.mxu0 0
    %3923 = vmatpush.bf16.msra.mxu0 %v3915
    %3924 = vmatpush.bf16.msra.mxu0 %v3902
    %3925 = vmatpush.bf16.msra.mxu0 %v3900
    %3926 = vmatpush.bf16.msra.mxu0 %v3898
    %3927 = vmatpush.bf16.msra.mxu0 %v3896
    %3928 = vmatmul.bf16.gmra.mxu0 %v3912
    %v3929 = vpop.f32.mrf.mxu0
    %v3930 = vadd.f32 0.0, %v3929
    %v3931 = vpop.f32.mrf.mxu0
    %v3932 = vadd.f32 0.0, %v3931
    %3933 = vdwg.mxu0
    %3934 = vmatpush.bf16.msra.mxu0 0
    %3935 = vmatpush.bf16.msra.mxu0 0
    %3936 = vmatpush.bf16.msra.mxu0 0
    %3937 = vmatpush.bf16.msra.mxu0 %v3918
    %3938 = vmatpush.bf16.msra.mxu0 %v3903
    %3939 = vmatpush.bf16.msra.mxu0 %v3901
    %3940 = vmatpush.bf16.msra.mxu0 %v3899
    %3941 = vmatpush.bf16.msra.mxu0 %v3897
    %3942 = vmatmul.bf16.gmra.mxu0 %v3912
    %v3943 = vpop.f32.mrf.mxu0
    %v3944 = vadd.f32 0.0, %v3943
    %v3945 = vpop.f32.mrf.mxu0
    %v3946 = vadd.f32 0.0, %v3945
    %3947 = vdwg.mxu0
    %v3948 = vmax.f32 %v3930, 0.0
    %v3949 = vmax.f32 %v3944, 0.0
    %v3950 = vmax.f32 %v3932, 0.0
    %v3951 = vmax.f32 %v3946, 0.0
    %3952 = vst [vmem:[#allocation3 + $0x70] sm:$0xff] %v3948
    %3953 = vst [vmem:[#allocation3 + $0x78] sm:$0xff] %v3949
    %3954 = vst [vmem:[#allocation3 + $0xf0] sm:$0xff] %v3950
    %3955 = vst [vmem:[#allocation3 + $0xf8] sm:$0xff] %v3951
    %v3956 = vld [vmem:[#allocation3] sm:$0xff]
    %v3957 = vld [vmem:[#allocation3 + $0x8] sm:$0xff]
    %v3958 = vld [vmem:[#allocation3 + $0x10] sm:$0xff]
    %v3959 = vld [vmem:[#allocation3 + $0x18] sm:$0xff]
    %v3960 = vld [vmem:[#allocation3 + $0x20] sm:$0xff]
    %v3961 = vld [vmem:[#allocation3 + $0x28] sm:$0xff]
    %v3962 = vld [vmem:[#allocation3 + $0x30] sm:$0xff]
    %v3963 = vld [vmem:[#allocation3 + $0x38] sm:$0xff]
    %v3964 = vld [vmem:[#allocation3 + $0x80] sm:$0xff]
    %v3965 = vld [vmem:[#allocation3 + $0x88] sm:$0xff]
    %v3966 = vld [vmem:[#allocation3 + $0x90] sm:$0xff]
    %v3967 = vld [vmem:[#allocation3 + $0x98] sm:$0xff]
    %v3968 = vld [vmem:[#allocation3 + $0xa0] sm:$0xff]
    %v3969 = vld [vmem:[#allocation3 + $0xa8] sm:$0xff]
    %v3970 = vld [vmem:[#allocation3 + $0xb0] sm:$0xff]
    %v3971 = vld [vmem:[#allocation3 + $0xb8] sm:$0xff]
    %3972 = vrot.lane.b32.xlu0 %v3956, 33
    %v3973 = vpop.permute.xlu0 %3972
    %3974 = vrot.lane.b32.xlu0 %v3964, 33
    %v3975 = vpop.permute.xlu0 %3974
    %3976 = vrot.lane.b32.xlu0 %v3957, 33
    %v3977 = vpop.permute.xlu0 %3976
    %3978 = vrot.lane.b32.xlu0 %v3965, 33
    %v3979 = vpop.permute.xlu0 %3978
    %3980 = vrot.lane.b32.xlu0 %v3958, 33
    %v3981 = vpop.permute.xlu0 %3980
    %3982 = vrot.lane.b32.xlu0 %v3966, 33
    %v3983 = vpop.permute.xlu0 %3982
    %3984 = vrot.lane.b32.xlu0 %v3959, 33
    %v3985 = vpop.permute.xlu0 %3984
    %3986 = vrot.lane.b32.xlu0 %v3967, 33
    %v3987 = vpop.permute.xlu0 %3986
    %3988 = vrot.lane.b32.xlu0 %v3960, 33
    %v3989 = vpop.permute.xlu0 %3988
    %3990 = vrot.lane.b32.xlu0 %v3968, 33
    %v3991 = vpop.permute.xlu0 %3990
    %3992 = vrot.lane.b32.xlu0 %v3961, 33
    %v3993 = vpop.permute.xlu0 %3992
    %3994 = vrot.lane.b32.xlu0 %v3969, 33
    %v3995 = vpop.permute.xlu0 %3994
    %3996 = vrot.lane.b32.xlu0 %v3962, 33
    %v3997 = vpop.permute.xlu0 %3996
    %3998 = vrot.lane.b32.xlu0 %v3970, 33
    %v3999 = vpop.permute.xlu0 %3998
    %4000 = vrot.lane.b32.xlu0 %v3963, 33
    %v4001 = vpop.permute.xlu0 %4000
    %4002 = vrot.lane.b32.xlu0 %v3971, 33
    %v4003 = vpop.permute.xlu0 %4002
    %v4004 = vsel %vm58, %v3997, %v4001
    %v4005 = vsel %vm58, %v3999, %v4003
    %v4006 = vsel %vm58, %v3993, %v3997
    %v4007 = vsel %vm58, %v3995, %v3999
    %v4008 = vsel %vm58, %v3989, %v3993
    %v4009 = vsel %vm58, %v3991, %v3995
    %v4010 = vsel %vm58, %v3985, %v3989
    %v4011 = vsel %vm58, %v3987, %v3991
    %v4012 = vsel %vm58, %v3981, %v3985
    %v4013 = vsel %vm58, %v3983, %v3987
    %v4014 = vsel %vm58, %v3977, %v3981
    %v4015 = vsel %vm58, %v3979, %v3983
    %v4016 = vsel %vm58, %v3973, %v3977
    %v4017 = vsel %vm58, %v3975, %v3979
    %v4018 = vsel %vm58, %v4001, %v3973
    %v4019 = vsel %vm58, %v4003, %v3975
    %v4020 = vld [vmem:[%s1] ss:$8 sm:$0xf]
    %v4021 = vld [vmem:[%s1] ss:$8 sm:$0xf0]
    %v4022 = vor.u32 %v4020, %v4021
    %v4024 = vperm.slane %v4022, 0
    %v4025 = vperm.slane %v4022, 1
    %v4026 = vperm.slane %v4022, 2
    %v4027 = vperm.slane %v4022, 3
    %v4028 = vperm.slane %v4022, 4
    %v4029 = vperm.slane %v4022, 5
    %v4030 = vperm.slane %v4022, 6
    %v4031 = vperm.slane %v4022, 7
    %v4040 = vmul.f32 %v4018, %v4024
    %v4041 = vmul.f32 %v4016, %v4025
    %v4042 = vmul.f32 %v4014, %v4026
    %v4043 = vmul.f32 %v4012, %v4027
    %v4044 = vmul.f32 %v4010, %v4028
    %v4045 = vmul.f32 %v4008, %v4029
    %v4046 = vmul.f32 %v4006, %v4030
    %v4047 = vmul.f32 %v4004, %v4031
    %v4048 = vmul.f32 %v4019, %v4024
    %v4049 = vmul.f32 %v4017, %v4025
    %v4050 = vmul.f32 %v4015, %v4026
    %v4051 = vmul.f32 %v4013, %v4027
    %v4052 = vmul.f32 %v4011, %v4028
    %v4053 = vmul.f32 %v4009, %v4029
    %v4054 = vmul.f32 %v4007, %v4030
    %v4055 = vmul.f32 %v4005, %v4031
    %4056 = vst [vmem:[#allocation5] sm:$0xff] %v4040
    %4057 = vst [vmem:[#allocation5 + $0x8] sm:$0xff] %v4041
    %4058 = vst [vmem:[#allocation5 + $0x10] sm:$0xff] %v4042
    %4059 = vst [vmem:[#allocation5 + $0x18] sm:$0xff] %v4043
    %4060 = vst [vmem:[#allocation5 + $0x20] sm:$0xff] %v4044
    %4061 = vst [vmem:[#allocation5 + $0x28] sm:$0xff] %v4045
    %4062 = vst [vmem:[#allocation5 + $0x30] sm:$0xff] %v4046
    %4063 = vst [vmem:[#allocation5 + $0x38] sm:$0xff] %v4047
    %4064 = vst [vmem:[#allocation5 + $0x40] sm:$0xff] %v4048
    %4065 = vst [vmem:[#allocation5 + $0x48] sm:$0xff] %v4049
    %4066 = vst [vmem:[#allocation5 + $0x50] sm:$0xff] %v4050
    %4067 = vst [vmem:[#allocation5 + $0x58] sm:$0xff] %v4051
    %4068 = vst [vmem:[#allocation5 + $0x60] sm:$0xff] %v4052
    %4069 = vst [vmem:[#allocation5 + $0x68] sm:$0xff] %v4053
    %4070 = vst [vmem:[#allocation5 + $0x70] sm:$0xff] %v4054
    %4071 = vst [vmem:[#allocation5 + $0x78] sm:$0xff] %v4055
    %v4072 = vld [vmem:[#allocation3] sm:$0xff]
    %v4073 = vld [vmem:[#allocation3 + $0x8] sm:$0xff]
    %v4074 = vld [vmem:[#allocation3 + $0x10] sm:$0xff]
    %v4075 = vld [vmem:[#allocation3 + $0x18] sm:$0xff]
    %v4076 = vld [vmem:[#allocation3 + $0x20] sm:$0xff]
    %v4077 = vld [vmem:[#allocation3 + $0x28] sm:$0xff]
    %v4078 = vld [vmem:[#allocation3 + $0x30] sm:$0xff]
    %v4079 = vld [vmem:[#allocation3 + $0x38] sm:$0xff]
    %v4080 = vld [vmem:[#allocation3 + $0x80] sm:$0xff]
    %v4081 = vld [vmem:[#allocation3 + $0x88] sm:$0xff]
    %v4082 = vld [vmem:[#allocation3 + $0x90] sm:$0xff]
    %v4083 = vld [vmem:[#allocation3 + $0x98] sm:$0xff]
    %v4084 = vld [vmem:[#allocation3 + $0xa0] sm:$0xff]
    %v4085 = vld [vmem:[#allocation3 + $0xa8] sm:$0xff]
    %v4086 = vld [vmem:[#allocation3 + $0xb0] sm:$0xff]
    %v4087 = vld [vmem:[#allocation3 + $0xb8] sm:$0xff]
    %4088 = vrot.lane.b32.xlu0 %v4072, 32
    %v4089 = vpop.permute.xlu0 %4088
    %4090 = vrot.lane.b32.xlu0 %v4080, 32
    %v4091 = vpop.permute.xlu0 %4090
    %4092 = vrot.lane.b32.xlu0 %v4073, 32
    %v4093 = vpop.permute.xlu0 %4092
    %4094 = vrot.lane.b32.xlu0 %v4081, 32
    %v4095 = vpop.permute.xlu0 %4094
    %4096 = vrot.lane.b32.xlu0 %v4074, 32
    %v4097 = vpop.permute.xlu0 %4096
    %4098 = vrot.lane.b32.xlu0 %v4082, 32
    %v4099 = vpop.permute.xlu0 %4098
    %4100 = vrot.lane.b32.xlu0 %v4075, 32
    %v4101 = vpop.permute.xlu0 %4100
    %4102 = vrot.lane.b32.xlu0 %v4083, 32
    %v4103 = vpop.permute.xlu0 %4102
    %4104 = vrot.lane.b32.xlu0 %v4076, 32
    %v4105 = vpop.permute.xlu0 %4104
    %4106 = vrot.lane.b32.xlu0 %v4084, 32
    %v4107 = vpop.permute.xlu0 %4106
    %4108 = vrot.lane.b32.xlu0 %v4077, 32
    %v4109 = vpop.permute.xlu0 %4108
    %4110 = vrot.lane.b32.xlu0 %v4085, 32
    %v4111 = vpop.permute.xlu0 %4110
    %4112 = vrot.lane.b32.xlu0 %v4078, 32
    %v4113 = vpop.permute.xlu0 %4112
    %4114 = vrot.lane.b32.xlu0 %v4086, 32
    %v4115 = vpop.permute.xlu0 %4114
    %4116 = vrot.lane.b32.xlu0 %v4079, 32
    %v4117 = vpop.permute.xlu0 %4116
    %4118 = vrot.lane.b32.xlu0 %v4087, 32
    %v4119 = vpop.permute.xlu0 %4118
    %v4120 = vsel %vm137, %v4113, %v4117
    %v4121 = vsel %vm137, %v4115, %v4119
    %v4122 = vsel %vm137, %v4109, %v4113
    %v4123 = vsel %vm137, %v4111, %v4115
    %v4124 = vsel %vm137, %v4105, %v4109
    %v4125 = vsel %vm137, %v4107, %v4111
    %v4126 = vsel %vm137, %v4101, %v4105
    %v4127 = vsel %vm137, %v4103, %v4107
    %v4128 = vsel %vm137, %v4097, %v4101
    %v4129 = vsel %vm137, %v4099, %v4103
    %v4130 = vsel %vm137, %v4093, %v4097
    %v4131 = vsel %vm137, %v4095, %v4099
    %v4132 = vsel %vm137, %v4089, %v4093
    %v4133 = vsel %vm137, %v4091, %v4095
    %v4134 = vsel %vm137, %v4117, %v4089
    %v4135 = vsel %vm137, %v4119, %v4091
    %v4136 = vld [vmem:[%s146] ss:$8 sm:$0xf]
    %v4137 = vld [vmem:[%s146] ss:$8 sm:$0xf0]
    %v4138 = vor.u32 %v4136, %v4137
    %v4140 = vperm.slane %v4138, 0
    %v4141 = vperm.slane %v4138, 1
    %v4142 = vperm.slane %v4138, 2
    %v4143 = vperm.slane %v4138, 3
    %v4144 = vperm.slane %v4138, 4
    %v4145 = vperm.slane %v4138, 5
    %v4146 = vperm.slane %v4138, 6
    %v4147 = vperm.slane %v4138, 7
    %v4156 = vmul.f32 %v4134, %v4140
    %v4157 = vmul.f32 %v4132, %v4141
    %v4158 = vmul.f32 %v4130, %v4142
    %v4159 = vmul.f32 %v4128, %v4143
    %v4160 = vmul.f32 %v4126, %v4144
    %v4161 = vmul.f32 %v4124, %v4145
    %v4162 = vmul.f32 %v4122, %v4146
    %v4163 = vmul.f32 %v4120, %v4147
    %v4164 = vmul.f32 %v4135, %v4140
    %v4165 = vmul.f32 %v4133, %v4141
    %v4166 = vmul.f32 %v4131, %v4142
    %v4167 = vmul.f32 %v4129, %v4143
    %v4168 = vmul.f32 %v4127, %v4144
    %v4169 = vmul.f32 %v4125, %v4145
    %v4170 = vmul.f32 %v4123, %v4146
    %v4171 = vmul.f32 %v4121, %v4147
    %4172 = vst [vmem:[#allocation5 + $0x80] sm:$0xff] %v4156
    %4173 = vst [vmem:[#allocation5 + $0x88] sm:$0xff] %v4157
    %4174 = vst [vmem:[#allocation5 + $0x90] sm:$0xff] %v4158
    %4175 = vst [vmem:[#allocation5 + $0x98] sm:$0xff] %v4159
    %4176 = vst [vmem:[#allocation5 + $0xa0] sm:$0xff] %v4160
    %4177 = vst [vmem:[#allocation5 + $0xa8] sm:$0xff] %v4161
    %4178 = vst [vmem:[#allocation5 + $0xb0] sm:$0xff] %v4162
    %4179 = vst [vmem:[#allocation5 + $0xb8] sm:$0xff] %v4163
    %4180 = vst [vmem:[#allocation5 + $0xc0] sm:$0xff] %v4164
    %4181 = vst [vmem:[#allocation5 + $0xc8] sm:$0xff] %v4165
    %4182 = vst [vmem:[#allocation5 + $0xd0] sm:$0xff] %v4166
    %4183 = vst [vmem:[#allocation5 + $0xd8] sm:$0xff] %v4167
    %4184 = vst [vmem:[#allocation5 + $0xe0] sm:$0xff] %v4168
    %4185 = vst [vmem:[#allocation5 + $0xe8] sm:$0xff] %v4169
    %4186 = vst [vmem:[#allocation5 + $0xf0] sm:$0xff] %v4170
    %4187 = vst [vmem:[#allocation5 + $0xf8] sm:$0xff] %v4171
    %v4188 = vld [vmem:[#allocation3] sm:$0xff]
    %v4189 = vld [vmem:[#allocation3 + $0x8] sm:$0xff]
    %v4190 = vld [vmem:[#allocation3 + $0x10] sm:$0xff]
    %v4191 = vld [vmem:[#allocation3 + $0x18] sm:$0xff]
    %v4192 = vld [vmem:[#allocation3 + $0x20] sm:$0xff]
    %v4193 = vld [vmem:[#allocation3 + $0x28] sm:$0xff]
    %v4194 = vld [vmem:[#allocation3 + $0x30] sm:$0xff]
    %v4195 = vld [vmem:[#allocation3 + $0x38] sm:$0xff]
    %v4196 = vld [vmem:[#allocation3 + $0x80] sm:$0xff]
    %v4197 = vld [vmem:[#allocation3 + $0x88] sm:$0xff]
    %v4198 = vld [vmem:[#allocation3 + $0x90] sm:$0xff]
    %v4199 = vld [vmem:[#allocation3 + $0x98] sm:$0xff]
    %v4200 = vld [vmem:[#allocation3 + $0xa0] sm:$0xff]
    %v4201 = vld [vmem:[#allocation3 + $0xa8] sm:$0xff]
    %v4202 = vld [vmem:[#allocation3 + $0xb0] sm:$0xff]
    %v4203 = vld [vmem:[#allocation3 + $0xb8] sm:$0xff]
    %4204 = vrot.lane.b32.xlu0 %v4188, 31
    %v4205 = vpop.permute.xlu0 %4204
    %4206 = vrot.lane.b32.xlu0 %v4196, 31
    %v4207 = vpop.permute.xlu0 %4206
    %4208 = vrot.lane.b32.xlu0 %v4189, 31
    %v4209 = vpop.permute.xlu0 %4208
    %4210 = vrot.lane.b32.xlu0 %v4197, 31
    %v4211 = vpop.permute.xlu0 %4210
    %4212 = vrot.lane.b32.xlu0 %v4190, 31
    %v4213 = vpop.permute.xlu0 %4212
    %4214 = vrot.lane.b32.xlu0 %v4198, 31
    %v4215 = vpop.permute.xlu0 %4214
    %4216 = vrot.lane.b32.xlu0 %v4191, 31
    %v4217 = vpop.permute.xlu0 %4216
    %4218 = vrot.lane.b32.xlu0 %v4199, 31
    %v4219 = vpop.permute.xlu0 %4218
    %4220 = vrot.lane.b32.xlu0 %v4192, 31
    %v4221 = vpop.permute.xlu0 %4220
    %4222 = vrot.lane.b32.xlu0 %v4200, 31
    %v4223 = vpop.permute.xlu0 %4222
    %4224 = vrot.lane.b32.xlu0 %v4193, 31
    %v4225 = vpop.permute.xlu0 %4224
    %4226 = vrot.lane.b32.xlu0 %v4201, 31
    %v4227 = vpop.permute.xlu0 %4226
    %4228 = vrot.lane.b32.xlu0 %v4194, 31
    %v4229 = vpop.permute.xlu0 %4228
    %4230 = vrot.lane.b32.xlu0 %v4202, 31
    %v4231 = vpop.permute.xlu0 %4230
    %4232 = vrot.lane.b32.xlu0 %v4195, 31
    %v4233 = vpop.permute.xlu0 %4232
    %4234 = vrot.lane.b32.xlu0 %v4203, 31
    %v4235 = vpop.permute.xlu0 %4234
    %v4236 = vsel %vm241, %v4229, %v4233
    %v4237 = vsel %vm241, %v4231, %v4235
    %v4238 = vsel %vm241, %v4225, %v4229
    %v4239 = vsel %vm241, %v4227, %v4231
    %v4240 = vsel %vm241, %v4221, %v4225
    %v4241 = vsel %vm241, %v4223, %v4227
    %v4242 = vsel %vm241, %v4217, %v4221
    %v4243 = vsel %vm241, %v4219, %v4223
    %v4244 = vsel %vm241, %v4213, %v4217
    %v4245 = vsel %vm241, %v4215, %v4219
    %v4246 = vsel %vm241, %v4209, %v4213
    %v4247 = vsel %vm241, %v4211, %v4215
    %v4248 = vsel %vm241, %v4205, %v4209
    %v4249 = vsel %vm241, %v4207, %v4211
    %v4250 = vsel %vm241, %v4233, %v4205
    %v4251 = vsel %vm241, %v4235, %v4207
    %v4252 = vld [vmem:[%s250] ss:$8 sm:$0xf]
    %v4253 = vld [vmem:[%s250] ss:$8 sm:$0xf0]
    %v4254 = vor.u32 %v4252, %v4253
    %v4256 = vperm.slane %v4254, 0
    %v4257 = vperm.slane %v4254, 1
    %v4258 = vperm.slane %v4254, 2
    %v4259 = vperm.slane %v4254, 3
    %v4260 = vperm.slane %v4254, 4
    %v4261 = vperm.slane %v4254, 5
    %v4262 = vperm.slane %v4254, 6
    %v4263 = vperm.slane %v4254, 7
    %v4272 = vmul.f32 %v4250, %v4256
    %v4273 = vmul.f32 %v4248, %v4257
    %v4274 = vmul.f32 %v4246, %v4258
    %v4275 = vmul.f32 %v4244, %v4259
    %v4276 = vmul.f32 %v4242, %v4260
    %v4277 = vmul.f32 %v4240, %v4261
    %v4278 = vmul.f32 %v4238, %v4262
    %v4279 = vmul.f32 %v4236, %v4263
    %v4280 = vmul.f32 %v4251, %v4256
    %v4281 = vmul.f32 %v4249, %v4257
    %v4282 = vmul.f32 %v4247, %v4258
    %v4283 = vmul.f32 %v4245, %v4259
    %v4284 = vmul.f32 %v4243, %v4260
    %v4285 = vmul.f32 %v4241, %v4261
    %v4286 = vmul.f32 %v4239, %v4262
    %v4287 = vmul.f32 %v4237, %v4263
    %4288 = vst [vmem:[#allocation5 + $0x100] sm:$0xff] %v4272
    %4289 = vst [vmem:[#allocation5 + $0x108] sm:$0xff] %v4273
    %4290 = vst [vmem:[#allocation5 + $0x110] sm:$0xff] %v4274
    %4291 = vst [vmem:[#allocation5 + $0x118] sm:$0xff] %v4275
    %4292 = vst [vmem:[#allocation5 + $0x120] sm:$0xff] %v4276
    %4293 = vst [vmem:[#allocation5 + $0x128] sm:$0xff] %v4277
    %4294 = vst [vmem:[#allocation5 + $0x130] sm:$0xff] %v4278
    %4295 = vst [vmem:[#allocation5 + $0x138] sm:$0xff] %v4279
    %4296 = vst [vmem:[#allocation5 + $0x140] sm:$0xff] %v4280
    %4297 = vst [vmem:[#allocation5 + $0x148] sm:$0xff] %v4281
    %4298 = vst [vmem:[#allocation5 + $0x150] sm:$0xff] %v4282
    %4299 = vst [vmem:[#allocation5 + $0x158] sm:$0xff] %v4283
    %4300 = vst [vmem:[#allocation5 + $0x160] sm:$0xff] %v4284
    %4301 = vst [vmem:[#allocation5 + $0x168] sm:$0xff] %v4285
    %4302 = vst [vmem:[#allocation5 + $0x170] sm:$0xff] %v4286
    %4303 = vst [vmem:[#allocation5 + $0x178] sm:$0xff] %v4287
    %v4304 = vld [vmem:[#allocation3] sm:$0xff]
    %v4305 = vld [vmem:[#allocation3 + $0x8] sm:$0xff]
    %v4306 = vld [vmem:[#allocation3 + $0x10] sm:$0xff]
    %v4307 = vld [vmem:[#allocation3 + $0x18] sm:$0xff]
    %v4308 = vld [vmem:[#allocation3 + $0x20] sm:$0xff]
    %v4309 = vld [vmem:[#allocation3 + $0x28] sm:$0xff]
    %v4310 = vld [vmem:[#allocation3 + $0x30] sm:$0xff]
    %v4311 = vld [vmem:[#allocation3 + $0x38] sm:$0xff]
    %v4312 = vld [vmem:[#allocation3 + $0x80] sm:$0xff]
    %v4313 = vld [vmem:[#allocation3 + $0x88] sm:$0xff]
    %v4314 = vld [vmem:[#allocation3 + $0x90] sm:$0xff]
    %v4315 = vld [vmem:[#allocation3 + $0x98] sm:$0xff]
    %v4316 = vld [vmem:[#allocation3 + $0xa0] sm:$0xff]
    %v4317 = vld [vmem:[#allocation3 + $0xa8] sm:$0xff]
    %v4318 = vld [vmem:[#allocation3 + $0xb0] sm:$0xff]
    %v4319 = vld [vmem:[#allocation3 + $0xb8] sm:$0xff]
    %4320 = vrot.lane.b32.xlu0 %v4304, 1
    %v4321 = vpop.permute.xlu0 %4320
    %4322 = vrot.lane.b32.xlu0 %v4312, 1
    %v4323 = vpop.permute.xlu0 %4322
    %4324 = vrot.lane.b32.xlu0 %v4305, 1
    %v4325 = vpop.permute.xlu0 %4324
    %4326 = vrot.lane.b32.xlu0 %v4313, 1
    %v4327 = vpop.permute.xlu0 %4326
    %4328 = vrot.lane.b32.xlu0 %v4306, 1
    %v4329 = vpop.permute.xlu0 %4328
    %4330 = vrot.lane.b32.xlu0 %v4314, 1
    %v4331 = vpop.permute.xlu0 %4330
    %4332 = vrot.lane.b32.xlu0 %v4307, 1
    %v4333 = vpop.permute.xlu0 %4332
    %4334 = vrot.lane.b32.xlu0 %v4315, 1
    %v4335 = vpop.permute.xlu0 %4334
    %4336 = vrot.lane.b32.xlu0 %v4308, 1
    %v4337 = vpop.permute.xlu0 %4336
    %4338 = vrot.lane.b32.xlu0 %v4316, 1
    %v4339 = vpop.permute.xlu0 %4338
    %4340 = vrot.lane.b32.xlu0 %v4309, 1
    %v4341 = vpop.permute.xlu0 %4340
    %4342 = vrot.lane.b32.xlu0 %v4317, 1
    %v4343 = vpop.permute.xlu0 %4342
    %4344 = vrot.lane.b32.xlu0 %v4310, 1
    %v4345 = vpop.permute.xlu0 %4344
    %4346 = vrot.lane.b32.xlu0 %v4318, 1
    %v4347 = vpop.permute.xlu0 %4346
    %4348 = vrot.lane.b32.xlu0 %v4311, 1
    %v4349 = vpop.permute.xlu0 %4348
    %4350 = vrot.lane.b32.xlu0 %v4319, 1
    %v4351 = vpop.permute.xlu0 %4350
    %v4352 = vsel %vm353, %v4345, %v4349
    %v4353 = vsel %vm353, %v4347, %v4351
    %v4354 = vsel %vm353, %v4341, %v4345
    %v4355 = vsel %vm353, %v4343, %v4347
    %v4356 = vsel %vm353, %v4337, %v4341
    %v4357 = vsel %vm353, %v4339, %v4343
    %v4358 = vsel %vm353, %v4333, %v4337
    %v4359 = vsel %vm353, %v4335, %v4339
    %v4360 = vsel %vm353, %v4329, %v4333
    %v4361 = vsel %vm353, %v4331, %v4335
    %v4362 = vsel %vm353, %v4325, %v4329
    %v4363 = vsel %vm353, %v4327, %v4331
    %v4364 = vsel %vm353, %v4321, %v4325
    %v4365 = vsel %vm353, %v4323, %v4327
    %v4366 = vsel %vm353, %v4349, %v4321
    %v4367 = vsel %vm353, %v4351, %v4323
    %v4368 = vld [vmem:[%s362] ss:$8 sm:$0xf]
    %v4369 = vld [vmem:[%s362] ss:$8 sm:$0xf0]
    %v4370 = vor.u32 %v4368, %v4369
    %v4372 = vperm.slane %v4370, 0
    %v4373 = vperm.slane %v4370, 1
    %v4374 = vperm.slane %v4370, 2
    %v4375 = vperm.slane %v4370, 3
    %v4376 = vperm.slane %v4370, 4
    %v4377 = vperm.slane %v4370, 5
    %v4378 = vperm.slane %v4370, 6
    %v4379 = vperm.slane %v4370, 7
    %v4388 = vmul.f32 %v4366, %v4372
    %v4389 = vmul.f32 %v4364, %v4373
    %v4390 = vmul.f32 %v4362, %v4374
    %v4391 = vmul.f32 %v4360, %v4375
    %v4392 = vmul.f32 %v4358, %v4376
    %v4393 = vmul.f32 %v4356, %v4377
    %v4394 = vmul.f32 %v4354, %v4378
    %v4395 = vmul.f32 %v4352, %v4379
    %v4396 = vmul.f32 %v4367, %v4372
    %v4397 = vmul.f32 %v4365, %v4373
    %v4398 = vmul.f32 %v4363, %v4374
    %v4399 = vmul.f32 %v4361, %v4375
    %v4400 = vmul.f32 %v4359, %v4376
    %v4401 = vmul.f32 %v4357, %v4377
    %v4402 = vmul.f32 %v4355, %v4378
    %v4403 = vmul.f32 %v4353, %v4379
    %4404 = vst [vmem:[#allocation5 + $0x180] sm:$0xff] %v4388
    %4405 = vst [vmem:[#allocation5 + $0x188] sm:$0xff] %v4389
    %4406 = vst [vmem:[#allocation5 + $0x190] sm:$0xff] %v4390
    %4407 = vst [vmem:[#allocation5 + $0x198] sm:$0xff] %v4391
    %4408 = vst [vmem:[#allocation5 + $0x1a0] sm:$0xff] %v4392
    %4409 = vst [vmem:[#allocation5 + $0x1a8] sm:$0xff] %v4393
    %4410 = vst [vmem:[#allocation5 + $0x1b0] sm:$0xff] %v4394
    %4411 = vst [vmem:[#allocation5 + $0x1b8] sm:$0xff] %v4395
    %4412 = vst [vmem:[#allocation5 + $0x1c0] sm:$0xff] %v4396
    %4413 = vst [vmem:[#allocation5 + $0x1c8] sm:$0xff] %v4397
    %4414 = vst [vmem:[#allocation5 + $0x1d0] sm:$0xff] %v4398
    %4415 = vst [vmem:[#allocation5 + $0x1d8] sm:$0xff] %v4399
    %4416 = vst [vmem:[#allocation5 + $0x1e0] sm:$0xff] %v4400
    %4417 = vst [vmem:[#allocation5 + $0x1e8] sm:$0xff] %v4401
    %4418 = vst [vmem:[#allocation5 + $0x1f0] sm:$0xff] %v4402
    %4419 = vst [vmem:[#allocation5 + $0x1f8] sm:$0xff] %v4403
    %v4420 = vld [vmem:[#allocation3] sm:$0xff]
    %v4421 = vld [vmem:[#allocation3 + $0x8] sm:$0xff]
    %v4422 = vld [vmem:[#allocation3 + $0x10] sm:$0xff]
    %v4423 = vld [vmem:[#allocation3 + $0x18] sm:$0xff]
    %v4424 = vld [vmem:[#allocation3 + $0x20] sm:$0xff]
    %v4425 = vld [vmem:[#allocation3 + $0x28] sm:$0xff]
    %v4426 = vld [vmem:[#allocation3 + $0x30] sm:$0xff]
    %v4427 = vld [vmem:[#allocation3 + $0x38] sm:$0xff]
    %v4428 = vld [vmem:[#allocation3 + $0x80] sm:$0xff]
    %v4429 = vld [vmem:[#allocation3 + $0x88] sm:$0xff]
    %v4430 = vld [vmem:[#allocation3 + $0x90] sm:$0xff]
    %v4431 = vld [vmem:[#allocation3 + $0x98] sm:$0xff]
    %v4432 = vld [vmem:[#allocation3 + $0xa0] sm:$0xff]
    %v4433 = vld [vmem:[#allocation3 + $0xa8] sm:$0xff]
    %v4434 = vld [vmem:[#allocation3 + $0xb0] sm:$0xff]
    %v4435 = vld [vmem:[#allocation3 + $0xb8] sm:$0xff]
    %v4436 = vld [vmem:[%s441] ss:$8 sm:$0xf]
    %v4437 = vld [vmem:[%s441] ss:$8 sm:$0xf0]
    %v4438 = vor.u32 %v4436, %v4437
    %v4440 = vperm.slane %v4438, 0
    %v4441 = vperm.slane %v4438, 1
    %v4442 = vperm.slane %v4438, 2
    %v4443 = vperm.slane %v4438, 3
    %v4444 = vperm.slane %v4438, 4
    %v4445 = vperm.slane %v4438, 5
    %v4446 = vperm.slane %v4438, 6
    %v4447 = vperm.slane %v4438, 7
    %v4456 = vmul.f32 %v4420, %v4440
    %v4457 = vmul.f32 %v4421, %v4441
    %v4458 = vmul.f32 %v4422, %v4442
    %v4459 = vmul.f32 %v4423, %v4443
    %v4460 = vmul.f32 %v4424, %v4444
    %v4461 = vmul.f32 %v4425, %v4445
    %v4462 = vmul.f32 %v4426, %v4446
    %v4463 = vmul.f32 %v4427, %v4447
    %v4464 = vmul.f32 %v4428, %v4440
    %v4465 = vmul.f32 %v4429, %v4441
    %v4466 = vmul.f32 %v4430, %v4442
    %v4467 = vmul.f32 %v4431, %v4443
    %v4468 = vmul.f32 %v4432, %v4444
    %v4469 = vmul.f32 %v4433, %v4445
    %v4470 = vmul.f32 %v4434, %v4446
    %v4471 = vmul.f32 %v4435, %v4447
    %4472 = vst [vmem:[#allocation5 + $0x200] sm:$0xff] %v4456
    %4473 = vst [vmem:[#allocation5 + $0x208] sm:$0xff] %v4457
    %4474 = vst [vmem:[#allocation5 + $0x210] sm:$0xff] %v4458
    %4475 = vst [vmem:[#allocation5 + $0x218] sm:$0xff] %v4459
    %4476 = vst [vmem:[#allocation5 + $0x220] sm:$0xff] %v4460
    %4477 = vst [vmem:[#allocation5 + $0x228] sm:$0xff] %v4461
    %4478 = vst [vmem:[#allocation5 + $0x230] sm:$0xff] %v4462
    %4479 = vst [vmem:[#allocation5 + $0x238] sm:$0xff] %v4463
    %4480 = vst [vmem:[#allocation5 + $0x240] sm:$0xff] %v4464
    %4481 = vst [vmem:[#allocation5 + $0x248] sm:$0xff] %v4465
    %4482 = vst [vmem:[#allocation5 + $0x250] sm:$0xff] %v4466
    %4483 = vst [vmem:[#allocation5 + $0x258] sm:$0xff] %v4467
    %4484 = vst [vmem:[#allocation5 + $0x260] sm:$0xff] %v4468
    %4485 = vst [vmem:[#allocation5 + $0x268] sm:$0xff] %v4469
    %4486 = vst [vmem:[#allocation5 + $0x270] sm:$0xff] %v4470
    %4487 = vst [vmem:[#allocation5 + $0x278] sm:$0xff] %v4471
    %v4488 = vld [vmem:[#allocation3] sm:$0xff]
    %v4489 = vld [vmem:[#allocation3 + $0x8] sm:$0xff]
    %v4490 = vld [vmem:[#allocation3 + $0x10] sm:$0xff]
    %v4491 = vld [vmem:[#allocation3 + $0x18] sm:$0xff]
    %v4492 = vld [vmem:[#allocation3 + $0x20] sm:$0xff]
    %v4493 = vld [vmem:[#allocation3 + $0x28] sm:$0xff]
    %v4494 = vld [vmem:[#allocation3 + $0x30] sm:$0xff]
    %v4495 = vld [vmem:[#allocation3 + $0x38] sm:$0xff]
    %v4496 = vld [vmem:[#allocation3 + $0x80] sm:$0xff]
    %v4497 = vld [vmem:[#allocation3 + $0x88] sm:$0xff]
    %v4498 = vld [vmem:[#allocation3 + $0x90] sm:$0xff]
    %v4499 = vld [vmem:[#allocation3 + $0x98] sm:$0xff]
    %v4500 = vld [vmem:[#allocation3 + $0xa0] sm:$0xff]
    %v4501 = vld [vmem:[#allocation3 + $0xa8] sm:$0xff]
    %v4502 = vld [vmem:[#allocation3 + $0xb0] sm:$0xff]
    %v4503 = vld [vmem:[#allocation3 + $0xb8] sm:$0xff]
    %4504 = vrot.lane.b32.xlu0 %v4488, 127
    %v4505 = vpop.permute.xlu0 %4504
    %4506 = vrot.lane.b32.xlu0 %v4496, 127
    %v4507 = vpop.permute.xlu0 %4506
    %4508 = vrot.lane.b32.xlu0 %v4489, 127
    %v4509 = vpop.permute.xlu0 %4508
    %4510 = vrot.lane.b32.xlu0 %v4497, 127
    %v4511 = vpop.permute.xlu0 %4510
    %4512 = vrot.lane.b32.xlu0 %v4490, 127
    %v4513 = vpop.permute.xlu0 %4512
    %4514 = vrot.lane.b32.xlu0 %v4498, 127
    %v4515 = vpop.permute.xlu0 %4514
    %4516 = vrot.lane.b32.xlu0 %v4491, 127
    %v4517 = vpop.permute.xlu0 %4516
    %4518 = vrot.lane.b32.xlu0 %v4499, 127
    %v4519 = vpop.permute.xlu0 %4518
    %4520 = vrot.lane.b32.xlu0 %v4492, 127
    %v4521 = vpop.permute.xlu0 %4520
    %4522 = vrot.lane.b32.xlu0 %v4500, 127
    %v4523 = vpop.permute.xlu0 %4522
    %4524 = vrot.lane.b32.xlu0 %v4493, 127
    %v4525 = vpop.permute.xlu0 %4524
    %4526 = vrot.lane.b32.xlu0 %v4501, 127
    %v4527 = vpop.permute.xlu0 %4526
    %4528 = vrot.lane.b32.xlu0 %v4494, 127
    %v4529 = vpop.permute.xlu0 %4528
    %4530 = vrot.lane.b32.xlu0 %v4502, 127
    %v4531 = vpop.permute.xlu0 %4530
    %4532 = vrot.lane.b32.xlu0 %v4495, 127
    %v4533 = vpop.permute.xlu0 %4532
    %4534 = vrot.lane.b32.xlu0 %v4503, 127
    %v4535 = vpop.permute.xlu0 %4534
    %v4536 = vsel %vm512, %v4529, %v4533
    %v4537 = vsel %vm512, %v4531, %v4535
    %v4538 = vsel %vm512, %v4525, %v4529
    %v4539 = vsel %vm512, %v4527, %v4531
    %v4540 = vsel %vm512, %v4521, %v4525
    %v4541 = vsel %vm512, %v4523, %v4527
    %v4542 = vsel %vm512, %v4517, %v4521
    %v4543 = vsel %vm512, %v4519, %v4523
    %v4544 = vsel %vm512, %v4513, %v4517
    %v4545 = vsel %vm512, %v4515, %v4519
    %v4546 = vsel %vm512, %v4509, %v4513
    %v4547 = vsel %vm512, %v4511, %v4515
    %v4548 = vsel %vm512, %v4505, %v4509
    %v4549 = vsel %vm512, %v4507, %v4511
    %v4550 = vsel %vm512, %v4533, %v4505
    %v4551 = vsel %vm512, %v4535, %v4507
    %v4552 = vld [vmem:[%s521] ss:$8 sm:$0xf]
    %v4553 = vld [vmem:[%s521] ss:$8 sm:$0xf0]
    %v4554 = vor.u32 %v4552, %v4553
    %v4556 = vperm.slane %v4554, 0
    %v4557 = vperm.slane %v4554, 1
    %v4558 = vperm.slane %v4554, 2
    %v4559 = vperm.slane %v4554, 3
    %v4560 = vperm.slane %v4554, 4
    %v4561 = vperm.slane %v4554, 5
    %v4562 = vperm.slane %v4554, 6
    %v4563 = vperm.slane %v4554, 7
    %v4572 = vmul.f32 %v4548, %v4556
    %v4573 = vmul.f32 %v4546, %v4557
    %v4574 = vmul.f32 %v4544, %v4558
    %v4575 = vmul.f32 %v4542, %v4559
    %v4576 = vmul.f32 %v4540, %v4560
    %v4577 = vmul.f32 %v4538, %v4561
    %v4578 = vmul.f32 %v4536, %v4562
    %v4579 = vmul.f32 %v4550, %v4563
    %v4580 = vmul.f32 %v4549, %v4556
    %v4581 = vmul.f32 %v4547, %v4557
    %v4582 = vmul.f32 %v4545, %v4558
    %v4583 = vmul.f32 %v4543, %v4559
    %v4584 = vmul.f32 %v4541, %v4560
    %v4585 = vmul.f32 %v4539, %v4561
    %v4586 = vmul.f32 %v4537, %v4562
    %v4587 = vmul.f32 %v4551, %v4563
    %4588 = vst [vmem:[#allocation5 + $0x280] sm:$0xff] %v4572
    %4589 = vst [vmem:[#allocation5 + $0x288] sm:$0xff] %v4573
    %4590 = vst [vmem:[#allocation5 + $0x290] sm:$0xff] %v4574
    %4591 = vst [vmem:[#allocation5 + $0x298] sm:$0xff] %v4575
    %4592 = vst [vmem:[#allocation5 + $0x2a0] sm:$0xff] %v4576
    %4593 = vst [vmem:[#allocation5 + $0x2a8] sm:$0xff] %v4577
    %4594 = vst [vmem:[#allocation5 + $0x2b0] sm:$0xff] %v4578
    %4595 = vst [vmem:[#allocation5 + $0x2b8] sm:$0xff] %v4579
    %4596 = vst [vmem:[#allocation5 + $0x2c0] sm:$0xff] %v4580
    %4597 = vst [vmem:[#allocation5 + $0x2c8] sm:$0xff] %v4581
    %4598 = vst [vmem:[#allocation5 + $0x2d0] sm:$0xff] %v4582
    %4599 = vst [vmem:[#allocation5 + $0x2d8] sm:$0xff] %v4583
    %4600 = vst [vmem:[#allocation5 + $0x2e0] sm:$0xff] %v4584
    %4601 = vst [vmem:[#allocation5 + $0x2e8] sm:$0xff] %v4585
    %4602 = vst [vmem:[#allocation5 + $0x2f0] sm:$0xff] %v4586
    %4603 = vst [vmem:[#allocation5 + $0x2f8] sm:$0xff] %v4587
    %v4604 = vld [vmem:[#allocation3] sm:$0xff]
    %v4605 = vld [vmem:[#allocation3 + $0x8] sm:$0xff]
    %v4606 = vld [vmem:[#allocation3 + $0x10] sm:$0xff]
    %v4607 = vld [vmem:[#allocation3 + $0x18] sm:$0xff]
    %v4608 = vld [vmem:[#allocation3 + $0x20] sm:$0xff]
    %v4609 = vld [vmem:[#allocation3 + $0x28] sm:$0xff]
    %v4610 = vld [vmem:[#allocation3 + $0x30] sm:$0xff]
    %v4611 = vld [vmem:[#allocation3 + $0x38] sm:$0xff]
    %v4612 = vld [vmem:[#allocation3 + $0x80] sm:$0xff]
    %v4613 = vld [vmem:[#allocation3 + $0x88] sm:$0xff]
    %v4614 = vld [vmem:[#allocation3 + $0x90] sm:$0xff]
    %v4615 = vld [vmem:[#allocation3 + $0x98] sm:$0xff]
    %v4616 = vld [vmem:[#allocation3 + $0xa0] sm:$0xff]
    %v4617 = vld [vmem:[#allocation3 + $0xa8] sm:$0xff]
    %v4618 = vld [vmem:[#allocation3 + $0xb0] sm:$0xff]
    %v4619 = vld [vmem:[#allocation3 + $0xb8] sm:$0xff]
    %4620 = vrot.lane.b32.xlu0 %v4604, 97
    %v4621 = vpop.permute.xlu0 %4620
    %4622 = vrot.lane.b32.xlu0 %v4612, 97
    %v4623 = vpop.permute.xlu0 %4622
    %4624 = vrot.lane.b32.xlu0 %v4605, 97
    %v4625 = vpop.permute.xlu0 %4624
    %4626 = vrot.lane.b32.xlu0 %v4613, 97
    %v4627 = vpop.permute.xlu0 %4626
    %4628 = vrot.lane.b32.xlu0 %v4606, 97
    %v4629 = vpop.permute.xlu0 %4628
    %4630 = vrot.lane.b32.xlu0 %v4614, 97
    %v4631 = vpop.permute.xlu0 %4630
    %4632 = vrot.lane.b32.xlu0 %v4607, 97
    %v4633 = vpop.permute.xlu0 %4632
    %4634 = vrot.lane.b32.xlu0 %v4615, 97
    %v4635 = vpop.permute.xlu0 %4634
    %4636 = vrot.lane.b32.xlu0 %v4608, 97
    %v4637 = vpop.permute.xlu0 %4636
    %4638 = vrot.lane.b32.xlu0 %v4616, 97
    %v4639 = vpop.permute.xlu0 %4638
    %4640 = vrot.lane.b32.xlu0 %v4609, 97
    %v4641 = vpop.permute.xlu0 %4640
    %4642 = vrot.lane.b32.xlu0 %v4617, 97
    %v4643 = vpop.permute.xlu0 %4642
    %4644 = vrot.lane.b32.xlu0 %v4610, 97
    %v4645 = vpop.permute.xlu0 %4644
    %4646 = vrot.lane.b32.xlu0 %v4618, 97
    %v4647 = vpop.permute.xlu0 %4646
    %4648 = vrot.lane.b32.xlu0 %v4611, 97
    %v4649 = vpop.permute.xlu0 %4648
    %4650 = vrot.lane.b32.xlu0 %v4619, 97
    %v4651 = vpop.permute.xlu0 %4650
    %v4652 = vsel %vm624, %v4645, %v4649
    %v4653 = vsel %vm624, %v4647, %v4651
    %v4654 = vsel %vm624, %v4641, %v4645
    %v4655 = vsel %vm624, %v4643, %v4647
    %v4656 = vsel %vm624, %v4637, %v4641
    %v4657 = vsel %vm624, %v4639, %v4643
    %v4658 = vsel %vm624, %v4633, %v4637
    %v4659 = vsel %vm624, %v4635, %v4639
    %v4660 = vsel %vm624, %v4629, %v4633
    %v4661 = vsel %vm624, %v4631, %v4635
    %v4662 = vsel %vm624, %v4625, %v4629
    %v4663 = vsel %vm624, %v4627, %v4631
    %v4664 = vsel %vm624, %v4621, %v4625
    %v4665 = vsel %vm624, %v4623, %v4627
    %v4666 = vsel %vm624, %v4649, %v4621
    %v4667 = vsel %vm624, %v4651, %v4623
    %v4668 = vld [vmem:[%s633] ss:$8 sm:$0xf]
    %v4669 = vld [vmem:[%s633] ss:$8 sm:$0xf0]
    %v4670 = vor.u32 %v4668, %v4669
    %v4672 = vperm.slane %v4670, 0
    %v4673 = vperm.slane %v4670, 1
    %v4674 = vperm.slane %v4670, 2
    %v4675 = vperm.slane %v4670, 3
    %v4676 = vperm.slane %v4670, 4
    %v4677 = vperm.slane %v4670, 5
    %v4678 = vperm.slane %v4670, 6
    %v4679 = vperm.slane %v4670, 7
    %v4688 = vmul.f32 %v4664, %v4672
    %v4689 = vmul.f32 %v4662, %v4673
    %v4690 = vmul.f32 %v4660, %v4674
    %v4691 = vmul.f32 %v4658, %v4675
    %v4692 = vmul.f32 %v4656, %v4676
    %v4693 = vmul.f32 %v4654, %v4677
    %v4694 = vmul.f32 %v4652, %v4678
    %v4695 = vmul.f32 %v4666, %v4679
    %v4696 = vmul.f32 %v4665, %v4672
    %v4697 = vmul.f32 %v4663, %v4673
    %v4698 = vmul.f32 %v4661, %v4674
    %v4699 = vmul.f32 %v4659, %v4675
    %v4700 = vmul.f32 %v4657, %v4676
    %v4701 = vmul.f32 %v4655, %v4677
    %v4702 = vmul.f32 %v4653, %v4678
    %v4703 = vmul.f32 %v4667, %v4679
    %4704 = vst [vmem:[#allocation5 + $0x300] sm:$0xff] %v4688
    %4705 = vst [vmem:[#allocation5 + $0x308] sm:$0xff] %v4689
    %4706 = vst [vmem:[#allocation5 + $0x310] sm:$0xff] %v4690
    %4707 = vst [vmem:[#allocation5 + $0x318] sm:$0xff] %v4691
    %4708 = vst [vmem:[#allocation5 + $0x320] sm:$0xff] %v4692
    %4709 = vst [vmem:[#allocation5 + $0x328] sm:$0xff] %v4693
    %4710 = vst [vmem:[#allocation5 + $0x330] sm:$0xff] %v4694
    %4711 = vst [vmem:[#allocation5 + $0x338] sm:$0xff] %v4695
    %4712 = vst [vmem:[#allocation5 + $0x340] sm:$0xff] %v4696
    %4713 = vst [vmem:[#allocation5 + $0x348] sm:$0xff] %v4697
    %4714 = vst [vmem:[#allocation5 + $0x350] sm:$0xff] %v4698
    %4715 = vst [vmem:[#allocation5 + $0x358] sm:$0xff] %v4699
    %4716 = vst [vmem:[#allocation5 + $0x360] sm:$0xff] %v4700
    %4717 = vst [vmem:[#allocation5 + $0x368] sm:$0xff] %v4701
    %4718 = vst [vmem:[#allocation5 + $0x370] sm:$0xff] %v4702
    %4719 = vst [vmem:[#allocation5 + $0x378] sm:$0xff] %v4703
    %v4720 = vld [vmem:[#allocation3] sm:$0xff]
    %v4721 = vld [vmem:[#allocation3 + $0x8] sm:$0xff]
    %v4722 = vld [vmem:[#allocation3 + $0x10] sm:$0xff]
    %v4723 = vld [vmem:[#allocation3 + $0x18] sm:$0xff]
    %v4724 = vld [vmem:[#allocation3 + $0x20] sm:$0xff]
    %v4725 = vld [vmem:[#allocation3 + $0x28] sm:$0xff]
    %v4726 = vld [vmem:[#allocation3 + $0x30] sm:$0xff]
    %v4727 = vld [vmem:[#allocation3 + $0x38] sm:$0xff]
    %v4728 = vld [vmem:[#allocation3 + $0x80] sm:$0xff]
    %v4729 = vld [vmem:[#allocation3 + $0x88] sm:$0xff]
    %v4730 = vld [vmem:[#allocation3 + $0x90] sm:$0xff]
    %v4731 = vld [vmem:[#allocation3 + $0x98] sm:$0xff]
    %v4732 = vld [vmem:[#allocation3 + $0xa0] sm:$0xff]
    %v4733 = vld [vmem:[#allocation3 + $0xa8] sm:$0xff]
    %v4734 = vld [vmem:[#allocation3 + $0xb0] sm:$0xff]
    %v4735 = vld [vmem:[#allocation3 + $0xb8] sm:$0xff]
    %4736 = vrot.lane.b32.xlu0 %v4720, 96
    %v4737 = vpop.permute.xlu0 %4736
    %4738 = vrot.lane.b32.xlu0 %v4728, 96
    %v4739 = vpop.permute.xlu0 %4738
    %4740 = vrot.lane.b32.xlu0 %v4721, 96
    %v4741 = vpop.permute.xlu0 %4740
    %4742 = vrot.lane.b32.xlu0 %v4729, 96
    %v4743 = vpop.permute.xlu0 %4742
    %4744 = vrot.lane.b32.xlu0 %v4722, 96
    %v4745 = vpop.permute.xlu0 %4744
    %4746 = vrot.lane.b32.xlu0 %v4730, 96
    %v4747 = vpop.permute.xlu0 %4746
    %4748 = vrot.lane.b32.xlu0 %v4723, 96
    %v4749 = vpop.permute.xlu0 %4748
    %4750 = vrot.lane.b32.xlu0 %v4731, 96
    %v4751 = vpop.permute.xlu0 %4750
    %4752 = vrot.lane.b32.xlu0 %v4724, 96
    %v4753 = vpop.permute.xlu0 %4752
    %4754 = vrot.lane.b32.xlu0 %v4732, 96
    %v4755 = vpop.permute.xlu0 %4754
    %4756 = vrot.lane.b32.xlu0 %v4725, 96
    %v4757 = vpop.permute.xlu0 %4756
    %4758 = vrot.lane.b32.xlu0 %v4733, 96
    %v4759 = vpop.permute.xlu0 %4758
    %4760 = vrot.lane.b32.xlu0 %v4726, 96
    %v4761 = vpop.permute.xlu0 %4760
    %4762 = vrot.lane.b32.xlu0 %v4734, 96
    %v4763 = vpop.permute.xlu0 %4762
    %4764 = vrot.lane.b32.xlu0 %v4727, 96
    %v4765 = vpop.permute.xlu0 %4764
    %4766 = vrot.lane.b32.xlu0 %v4735, 96
    %v4767 = vpop.permute.xlu0 %4766
    %v4768 = vsel %vm728, %v4761, %v4765
    %v4769 = vsel %vm728, %v4763, %v4767
    %v4770 = vsel %vm728, %v4757, %v4761
    %v4771 = vsel %vm728, %v4759, %v4763
    %v4772 = vsel %vm728, %v4753, %v4757
    %v4773 = vsel %vm728, %v4755, %v4759
    %v4774 = vsel %vm728, %v4749, %v4753
    %v4775 = vsel %vm728, %v4751, %v4755
    %v4776 = vsel %vm728, %v4745, %v4749
    %v4777 = vsel %vm728, %v4747, %v4751
    %v4778 = vsel %vm728, %v4741, %v4745
    %v4779 = vsel %vm728, %v4743, %v4747
    %v4780 = vsel %vm728, %v4737, %v4741
    %v4781 = vsel %vm728, %v4739, %v4743
    %v4782 = vsel %vm728, %v4765, %v4737
    %v4783 = vsel %vm728, %v4767, %v4739
    %v4784 = vld [vmem:[%s737] ss:$8 sm:$0xf]
    %v4785 = vld [vmem:[%s737] ss:$8 sm:$0xf0]
    %v4786 = vor.u32 %v4784, %v4785
    %v4788 = vperm.slane %v4786, 0
    %v4789 = vperm.slane %v4786, 1
    %v4790 = vperm.slane %v4786, 2
    %v4791 = vperm.slane %v4786, 3
    %v4792 = vperm.slane %v4786, 4
    %v4793 = vperm.slane %v4786, 5
    %v4794 = vperm.slane %v4786, 6
    %v4795 = vperm.slane %v4786, 7
    %v4804 = vmul.f32 %v4780, %v4788
    %v4805 = vmul.f32 %v4778, %v4789
    %v4806 = vmul.f32 %v4776, %v4790
    %v4807 = vmul.f32 %v4774, %v4791
    %v4808 = vmul.f32 %v4772, %v4792
    %v4809 = vmul.f32 %v4770, %v4793
    %v4810 = vmul.f32 %v4768, %v4794
    %v4811 = vmul.f32 %v4782, %v4795
    %v4812 = vmul.f32 %v4781, %v4788
    %v4813 = vmul.f32 %v4779, %v4789
    %v4814 = vmul.f32 %v4777, %v4790
    %v4815 = vmul.f32 %v4775, %v4791
    %v4816 = vmul.f32 %v4773, %v4792
    %v4817 = vmul.f32 %v4771, %v4793
    %v4818 = vmul.f32 %v4769, %v4794
    %v4819 = vmul.f32 %v4783, %v4795
    %4820 = vst [vmem:[#allocation5 + $0x380] sm:$0xff] %v4804
    %4821 = vst [vmem:[#allocation5 + $0x388] sm:$0xff] %v4805
    %4822 = vst [vmem:[#allocation5 + $0x390] sm:$0xff] %v4806
    %4823 = vst [vmem:[#allocation5 + $0x398] sm:$0xff] %v4807
    %4824 = vst [vmem:[#allocation5 + $0x3a0] sm:$0xff] %v4808
    %4825 = vst [vmem:[#allocation5 + $0x3a8] sm:$0xff] %v4809
    %4826 = vst [vmem:[#allocation5 + $0x3b0] sm:$0xff] %v4810
    %4827 = vst [vmem:[#allocation5 + $0x3b8] sm:$0xff] %v4811
    %4828 = vst [vmem:[#allocation5 + $0x3c0] sm:$0xff] %v4812
    %4829 = vst [vmem:[#allocation5 + $0x3c8] sm:$0xff] %v4813
    %4830 = vst [vmem:[#allocation5 + $0x3d0] sm:$0xff] %v4814
    %4831 = vst [vmem:[#allocation5 + $0x3d8] sm:$0xff] %v4815
    %4832 = vst [vmem:[#allocation5 + $0x3e0] sm:$0xff] %v4816
    %4833 = vst [vmem:[#allocation5 + $0x3e8] sm:$0xff] %v4817
    %4834 = vst [vmem:[#allocation5 + $0x3f0] sm:$0xff] %v4818
    %4835 = vst [vmem:[#allocation5 + $0x3f8] sm:$0xff] %v4819
    %v4836 = vld [vmem:[#allocation3] sm:$0xff]
    %v4837 = vld [vmem:[#allocation3 + $0x8] sm:$0xff]
    %v4838 = vld [vmem:[#allocation3 + $0x10] sm:$0xff]
    %v4839 = vld [vmem:[#allocation3 + $0x18] sm:$0xff]
    %v4840 = vld [vmem:[#allocation3 + $0x20] sm:$0xff]
    %v4841 = vld [vmem:[#allocation3 + $0x28] sm:$0xff]
    %v4842 = vld [vmem:[#allocation3 + $0x30] sm:$0xff]
    %v4843 = vld [vmem:[#allocation3 + $0x38] sm:$0xff]
    %v4844 = vld [vmem:[#allocation3 + $0x80] sm:$0xff]
    %v4845 = vld [vmem:[#allocation3 + $0x88] sm:$0xff]
    %v4846 = vld [vmem:[#allocation3 + $0x90] sm:$0xff]
    %v4847 = vld [vmem:[#allocation3 + $0x98] sm:$0xff]
    %v4848 = vld [vmem:[#allocation3 + $0xa0] sm:$0xff]
    %v4849 = vld [vmem:[#allocation3 + $0xa8] sm:$0xff]
    %v4850 = vld [vmem:[#allocation3 + $0xb0] sm:$0xff]
    %v4851 = vld [vmem:[#allocation3 + $0xb8] sm:$0xff]
    %4852 = vrot.lane.b32.xlu0 %v4836, 95
    %v4853 = vpop.permute.xlu0 %4852
    %4854 = vrot.lane.b32.xlu0 %v4844, 95
    %v4855 = vpop.permute.xlu0 %4854
    %4856 = vrot.lane.b32.xlu0 %v4837, 95
    %v4857 = vpop.permute.xlu0 %4856
    %4858 = vrot.lane.b32.xlu0 %v4845, 95
    %v4859 = vpop.permute.xlu0 %4858
    %4860 = vrot.lane.b32.xlu0 %v4838, 95
    %v4861 = vpop.permute.xlu0 %4860
    %4862 = vrot.lane.b32.xlu0 %v4846, 95
    %v4863 = vpop.permute.xlu0 %4862
    %4864 = vrot.lane.b32.xlu0 %v4839, 95
    %v4865 = vpop.permute.xlu0 %4864
    %4866 = vrot.lane.b32.xlu0 %v4847, 95
    %v4867 = vpop.permute.xlu0 %4866
    %4868 = vrot.lane.b32.xlu0 %v4840, 95
    %v4869 = vpop.permute.xlu0 %4868
    %4870 = vrot.lane.b32.xlu0 %v4848, 95
    %v4871 = vpop.permute.xlu0 %4870
    %4872 = vrot.lane.b32.xlu0 %v4841, 95
    %v4873 = vpop.permute.xlu0 %4872
    %4874 = vrot.lane.b32.xlu0 %v4849, 95
    %v4875 = vpop.permute.xlu0 %4874
    %4876 = vrot.lane.b32.xlu0 %v4842, 95
    %v4877 = vpop.permute.xlu0 %4876
    %4878 = vrot.lane.b32.xlu0 %v4850, 95
    %v4879 = vpop.permute.xlu0 %4878
    %4880 = vrot.lane.b32.xlu0 %v4843, 95
    %v4881 = vpop.permute.xlu0 %4880
    %4882 = vrot.lane.b32.xlu0 %v4851, 95
    %v4883 = vpop.permute.xlu0 %4882
    %v4884 = vsel %vm832, %v4877, %v4881
    %v4885 = vsel %vm832, %v4879, %v4883
    %v4886 = vsel %vm832, %v4873, %v4877
    %v4887 = vsel %vm832, %v4875, %v4879
    %v4888 = vsel %vm832, %v4869, %v4873
    %v4889 = vsel %vm832, %v4871, %v4875
    %v4890 = vsel %vm832, %v4865, %v4869
    %v4891 = vsel %vm832, %v4867, %v4871
    %v4892 = vsel %vm832, %v4861, %v4865
    %v4893 = vsel %vm832, %v4863, %v4867
    %v4894 = vsel %vm832, %v4857, %v4861
    %v4895 = vsel %vm832, %v4859, %v4863
    %v4896 = vsel %vm832, %v4853, %v4857
    %v4897 = vsel %vm832, %v4855, %v4859
    %v4898 = vsel %vm832, %v4881, %v4853
    %v4899 = vsel %vm832, %v4883, %v4855
    %v4900 = vld [vmem:[%s841] ss:$8 sm:$0xf]
    %v4901 = vld [vmem:[%s841] ss:$8 sm:$0xf0]
    %v4902 = vor.u32 %v4900, %v4901
    %v4904 = vperm.slane %v4902, 0
    %v4905 = vperm.slane %v4902, 1
    %v4906 = vperm.slane %v4902, 2
    %v4907 = vperm.slane %v4902, 3
    %v4908 = vperm.slane %v4902, 4
    %v4909 = vperm.slane %v4902, 5
    %v4910 = vperm.slane %v4902, 6
    %v4911 = vperm.slane %v4902, 7
    %v4920 = vmul.f32 %v4896, %v4904
    %v4921 = vmul.f32 %v4894, %v4905
    %v4922 = vmul.f32 %v4892, %v4906
    %v4923 = vmul.f32 %v4890, %v4907
    %v4924 = vmul.f32 %v4888, %v4908
    %v4925 = vmul.f32 %v4886, %v4909
    %v4926 = vmul.f32 %v4884, %v4910
    %v4927 = vmul.f32 %v4898, %v4911
    %v4928 = vmul.f32 %v4897, %v4904
    %v4929 = vmul.f32 %v4895, %v4905
    %v4930 = vmul.f32 %v4893, %v4906
    %v4931 = vmul.f32 %v4891, %v4907
    %v4932 = vmul.f32 %v4889, %v4908
    %v4933 = vmul.f32 %v4887, %v4909
    %v4934 = vmul.f32 %v4885, %v4910
    %v4935 = vmul.f32 %v4899, %v4911
    %4936 = vst [vmem:[#allocation5 + $0x400] sm:$0xff] %v4920
    %4937 = vst [vmem:[#allocation5 + $0x408] sm:$0xff] %v4921
    %4938 = vst [vmem:[#allocation5 + $0x410] sm:$0xff] %v4922
    %4939 = vst [vmem:[#allocation5 + $0x418] sm:$0xff] %v4923
    %4940 = vst [vmem:[#allocation5 + $0x420] sm:$0xff] %v4924
    %4941 = vst [vmem:[#allocation5 + $0x428] sm:$0xff] %v4925
    %4942 = vst [vmem:[#allocation5 + $0x430] sm:$0xff] %v4926
    %4943 = vst [vmem:[#allocation5 + $0x438] sm:$0xff] %v4927
    %4944 = vst [vmem:[#allocation5 + $0x440] sm:$0xff] %v4928
    %4945 = vst [vmem:[#allocation5 + $0x448] sm:$0xff] %v4929
    %4946 = vst [vmem:[#allocation5 + $0x450] sm:$0xff] %v4930
    %4947 = vst [vmem:[#allocation5 + $0x458] sm:$0xff] %v4931
    %4948 = vst [vmem:[#allocation5 + $0x460] sm:$0xff] %v4932
    %4949 = vst [vmem:[#allocation5 + $0x468] sm:$0xff] %v4933
    %4950 = vst [vmem:[#allocation5 + $0x470] sm:$0xff] %v4934
    %4951 = vst [vmem:[#allocation5 + $0x478] sm:$0xff] %v4935
    %v4952 = vld [vmem:[#allocation5] sm:$0xff]
    %v4953 = vld [vmem:[#allocation5 + $0x8] sm:$0xff]
    %v4954 = vld [vmem:[#allocation5 + $0x40] sm:$0xff]
    %v4955 = vld [vmem:[#allocation5 + $0x48] sm:$0xff]
    %v4956 = vld [vmem:[#allocation5 + $0x80] sm:$0xff]
    %v4957 = vld [vmem:[#allocation5 + $0x88] sm:$0xff]
    %v4958 = vld [vmem:[#allocation5 + $0xc0] sm:$0xff]
    %v4959 = vld [vmem:[#allocation5 + $0xc8] sm:$0xff]
    %v4960 = vld [vmem:[#allocation5 + $0x100] sm:$0xff]
    %v4961 = vld [vmem:[#allocation5 + $0x108] sm:$0xff]
    %v4962 = vld [vmem:[#allocation5 + $0x140] sm:$0xff]
    %v4963 = vld [vmem:[#allocation5 + $0x148] sm:$0xff]
    %v4964 = vld [vmem:[#allocation5 + $0x180] sm:$0xff]
    %v4965 = vld [vmem:[#allocation5 + $0x188] sm:$0xff]
    %v4966 = vld [vmem:[#allocation5 + $0x1c0] sm:$0xff]
    %v4967 = vld [vmem:[#allocation5 + $0x1c8] sm:$0xff]
    %v4968 = vld [vmem:[#allocation5 + $0x200] sm:$0xff]
    %v4969 = vld [vmem:[#allocation5 + $0x208] sm:$0xff]
    %v4970 = vld [vmem:[#allocation5 + $0x240] sm:$0xff]
    %v4971 = vld [vmem:[#allocation5 + $0x248] sm:$0xff]
    %v4972 = vld [vmem:[#allocation5 + $0x280] sm:$0xff]
    %v4973 = vld [vmem:[#allocation5 + $0x288] sm:$0xff]
    %v4974 = vld [vmem:[#allocation5 + $0x2c0] sm:$0xff]
    %v4975 = vld [vmem:[#allocation5 + $0x2c8] sm:$0xff]
    %v4976 = vld [vmem:[#allocation5 + $0x300] sm:$0xff]
    %v4977 = vld [vmem:[#allocation5 + $0x308] sm:$0xff]
    %v4978 = vld [vmem:[#allocation5 + $0x340] sm:$0xff]
    %v4979 = vld [vmem:[#allocation5 + $0x348] sm:$0xff]
    %v4980 = vld [vmem:[#allocation5 + $0x380] sm:$0xff]
    %v4981 = vld [vmem:[#allocation5 + $0x388] sm:$0xff]
    %v4982 = vld [vmem:[#allocation5 + $0x3c0] sm:$0xff]
    %v4983 = vld [vmem:[#allocation5 + $0x3c8] sm:$0xff]
    %v4984 = vld [vmem:[#allocation5 + $0x400] sm:$0xff]
    %v4985 = vld [vmem:[#allocation5 + $0x408] sm:$0xff]
    %v4986 = vld [vmem:[#allocation5 + $0x440] sm:$0xff]
    %v4987 = vld [vmem:[#allocation5 + $0x448] sm:$0xff]
    %v4988 = vld [vmem:[%s4] sm:$0xff]
    %v4989 = vld [vmem:[%s4 + $0x8] sm:$0xff]
    %v4990 = vld [vmem:[%s4 + $0x10] sm:$0xff]
    %v4991 = vld [vmem:[%s4 + $0x18] sm:$0xff]
    %v4992 = vpack.c.bf16 %v4954, %v4952
    %v4993 = vpack.c.bf16 %v4955, %v4953
    %v4994 = vpack.c.bf16 %v4958, %v4956
    %v4995 = vpack.c.bf16 %v4959, %v4957
    %v4996 = vpack.c.bf16 %v4962, %v4960
    %v4997 = vpack.c.bf16 %v4963, %v4961
    %v4998 = vpack.c.bf16 %v4966, %v4964
    %v4999 = vpack.c.bf16 %v4967, %v4965
    %v5000 = vpack.c.bf16 %v4970, %v4968
    %v5001 = vpack.c.bf16 %v4971, %v4969
    %v5002 = vpack.c.bf16 %v4974, %v4972
    %v5003 = vpack.c.bf16 %v4975, %v4973
    %v5004 = vpack.c.bf16 %v4978, %v4976
    %v5005 = vpack.c.bf16 %v4979, %v4977
    %v5006 = vpack.c.bf16 %v4982, %v4980
    %v5007 = vpack.c.bf16 %v4983, %v4981
    %v5008 = vpack.c.bf16 %v4986, %v4984
    %v5009 = vpack.c.bf16 %v4987, %v4985
    %v5014 = vunpack.c.l.b16 %v4988
    %v5015 = vunpack.c.h.b16 %v4988
    %v5016 = vunpack.c.l.b16 %v4989
    %v5017 = vunpack.c.h.b16 %v4989
    %v5018 = vunpack.c.l.b16 %v4990
    %v5019 = vunpack.c.h.b16 %v4990
    %v5020 = vunpack.c.l.b16 %v4991
    %v5021 = vunpack.c.h.b16 %v4991
    %v5022 = vpack.c.b16 %v5016, %v5014
    %v5023 = vpack.c.b16 %v5017, %v5015
    %v5024 = vpack.c.b16 %v5020, %v5018
    %v5025 = vpack.c.b16 %v5021, %v5019
    %vm5028 = vcmask 130048
    %v5030 = vsel %vm5028, %v5023, 0
    %v5033 = vsel %vm5028, %v5025, 0
    %5035 = vmatpush.bf16.msra.mxu0 %v5006
    %5036 = vmatpush.bf16.msra.mxu0 %v5004
    %5037 = vmatpush.bf16.msra.mxu0 %v5002
    %5038 = vmatpush.bf16.msra.mxu0 %v5000
    %5039 = vmatpush.bf16.msra.mxu0 %v4998
    %5040 = vmatpush.bf16.msra.mxu0 %v4996
    %5041 = vmatpush.bf16.msra.mxu0 %v4994
    %5042 = vmatpush.bf16.msra.mxu0 %v4992
    %5043 = vmatmul.bf16.gmra.mxu0 %v5022
    %v5044 = vpop.f32.mrf.mxu0
    %v5045 = vadd.f32 0.0, %v5044
    %v5046 = vpop.f32.mrf.mxu0
    %v5047 = vadd.f32 0.0, %v5046
    %5048 = vmatmul.bf16.gmra.mxu0 %v5024
    %v5049 = vpop.f32.mrf.mxu0
    %v5050 = vadd.f32 0.0, %v5049
    %v5051 = vpop.f32.mrf.mxu0
    %v5052 = vadd.f32 0.0, %v5051
    %5053 = vdwg.mxu0
    %5054 = vmatpush.bf16.msra.mxu0 0
    %5055 = vmatpush.bf16.msra.mxu0 0
    %5056 = vmatpush.bf16.msra.mxu0 0
    %5057 = vmatpush.bf16.msra.mxu0 0
    %5058 = vmatpush.bf16.msra.mxu0 0
    %5059 = vmatpush.bf16.msra.mxu0 0
    %5060 = vmatpush.bf16.msra.mxu0 0
    %5061 = vmatpush.bf16.msra.mxu0 %v5008
    %5062 = vmatmul.bf16.gmra.mxu0 %v5030
    %v5063 = vpop.f32.mrf.mxu0
    %v5064 = vadd.f32 %v5045, %v5063
    %v5065 = vpop.f32.mrf.mxu0
    %v5066 = vadd.f32 %v5047, %v5065
    %5067 = vmatmul.bf16.gmra.mxu0 %v5033
    %v5068 = vpop.f32.mrf.mxu0
    %v5069 = vadd.f32 %v5050, %v5068
    %v5070 = vpop.f32.mrf.mxu0
    %v5071 = vadd.f32 %v5052, %v5070
    %5072 = vdwg.mxu0
    %5073 = vmatpush.bf16.msra.mxu0 %v5007
    %5074 = vmatpush.bf16.msra.mxu0 %v5005
    %5075 = vmatpush.bf16.msra.mxu0 %v5003
    %5076 = vmatpush.bf16.msra.mxu0 %v5001
    %5077 = vmatpush.bf16.msra.mxu0 %v4999
    %5078 = vmatpush.bf16.msra.mxu0 %v4997
    %5079 = vmatpush.bf16.msra.mxu0 %v4995
    %5080 = vmatpush.bf16.msra.mxu0 %v4993
    %5081 = vmatmul.bf16.gmra.mxu0 %v5022
    %v5082 = vpop.f32.mrf.mxu0
    %v5083 = vadd.f32 0.0, %v5082
    %v5084 = vpop.f32.mrf.mxu0
    %v5085 = vadd.f32 0.0, %v5084
    %5086 = vmatmul.bf16.gmra.mxu0 %v5024
    %v5087 = vpop.f32.mrf.mxu0
    %v5088 = vadd.f32 0.0, %v5087
    %v5089 = vpop.f32.mrf.mxu0
    %v5090 = vadd.f32 0.0, %v5089
    %5091 = vdwg.mxu0
    %5092 = vmatpush.bf16.msra.mxu0 0
    %5093 = vmatpush.bf16.msra.mxu0 0
    %5094 = vmatpush.bf16.msra.mxu0 0
    %5095 = vmatpush.bf16.msra.mxu0 0
    %5096 = vmatpush.bf16.msra.mxu0 0
    %5097 = vmatpush.bf16.msra.mxu0 0
    %5098 = vmatpush.bf16.msra.mxu0 0
    %5099 = vmatpush.bf16.msra.mxu0 %v5009
    %5100 = vmatmul.bf16.gmra.mxu0 %v5030
    %v5101 = vpop.f32.mrf.mxu0
    %v5102 = vadd.f32 %v5083, %v5101
    %v5103 = vpop.f32.mrf.mxu0
    %v5104 = vadd.f32 %v5085, %v5103
    %5105 = vmatmul.bf16.gmra.mxu0 %v5033
    %v5106 = vpop.f32.mrf.mxu0
    %v5107 = vadd.f32 %v5088, %v5106
    %v5108 = vpop.f32.mrf.mxu0
    %v5109 = vadd.f32 %v5090, %v5108
    %5110 = vdwg.mxu0
    %v5111 = vmax.f32 %v5064, 0.0
    %v5112 = vmax.f32 %v5102, 0.0
    %v5113 = vmax.f32 %v5066, 0.0
    %v5114 = vmax.f32 %v5104, 0.0
    %v5115 = vmax.f32 %v5069, 0.0
    %v5116 = vmax.f32 %v5107, 0.0
    %v5117 = vmax.f32 %v5071, 0.0
    %v5118 = vmax.f32 %v5109, 0.0
    %5119 = vst [vmem:[#allocation4] sm:$0xff] %v5111
    %5120 = vst [vmem:[#allocation4 + $0x8] sm:$0xff] %v5112
    %5121 = vst [vmem:[#allocation4 + $0x80] sm:$0xff] %v5113
    %5122 = vst [vmem:[#allocation4 + $0x88] sm:$0xff] %v5114
    %5123 = vst [vmem:[#allocation4 + $0x100] sm:$0xff] %v5115
    %5124 = vst [vmem:[#allocation4 + $0x108] sm:$0xff] %v5116
    %5125 = vst [vmem:[#allocation4 + $0x180] sm:$0xff] %v5117
    %5126 = vst [vmem:[#allocation4 + $0x188] sm:$0xff] %v5118
    %v5127 = vld [vmem:[#allocation5 + $0x10] sm:$0xff]
    %v5128 = vld [vmem:[#allocation5 + $0x18] sm:$0xff]
    %v5129 = vld [vmem:[#allocation5 + $0x50] sm:$0xff]
    %v5130 = vld [vmem:[#allocation5 + $0x58] sm:$0xff]
    %v5131 = vld [vmem:[#allocation5 + $0x90] sm:$0xff]
    %v5132 = vld [vmem:[#allocation5 + $0x98] sm:$0xff]
    %v5133 = vld [vmem:[#allocation5 + $0xd0] sm:$0xff]
    %v5134 = vld [vmem:[#allocation5 + $0xd8] sm:$0xff]
    %v5135 = vld [vmem:[#allocation5 + $0x110] sm:$0xff]
    %v5136 = vld [vmem:[#allocation5 + $0x118] sm:$0xff]
    %v5137 = vld [vmem:[#allocation5 + $0x150] sm:$0xff]
    %v5138 = vld [vmem:[#allocation5 + $0x158] sm:$0xff]
    %v5139 = vld [vmem:[#allocation5 + $0x190] sm:$0xff]
    %v5140 = vld [vmem:[#allocation5 + $0x198] sm:$0xff]
    %v5141 = vld [vmem:[#allocation5 + $0x1d0] sm:$0xff]
    %v5142 = vld [vmem:[#allocation5 + $0x1d8] sm:$0xff]
    %v5143 = vld [vmem:[#allocation5 + $0x210] sm:$0xff]
    %v5144 = vld [vmem:[#allocation5 + $0x218] sm:$0xff]
    %v5145 = vld [vmem:[#allocation5 + $0x250] sm:$0xff]
    %v5146 = vld [vmem:[#allocation5 + $0x258] sm:$0xff]
    %v5147 = vld [vmem:[#allocation5 + $0x290] sm:$0xff]
    %v5148 = vld [vmem:[#allocation5 + $0x298] sm:$0xff]
    %v5149 = vld [vmem:[#allocation5 + $0x2d0] sm:$0xff]
    %v5150 = vld [vmem:[#allocation5 + $0x2d8] sm:$0xff]
    %v5151 = vld [vmem:[#allocation5 + $0x310] sm:$0xff]
    %v5152 = vld [vmem:[#allocation5 + $0x318] sm:$0xff]
    %v5153 = vld [vmem:[#allocation5 + $0x350] sm:$0xff]
    %v5154 = vld [vmem:[#allocation5 + $0x358] sm:$0xff]
    %v5155 = vld [vmem:[#allocation5 + $0x390] sm:$0xff]
    %v5156 = vld [vmem:[#allocation5 + $0x398] sm:$0xff]
    %v5157 = vld [vmem:[#allocation5 + $0x3d0] sm:$0xff]
    %v5158 = vld [vmem:[#allocation5 + $0x3d8] sm:$0xff]
    %v5159 = vld [vmem:[#allocation5 + $0x410] sm:$0xff]
    %v5160 = vld [vmem:[#allocation5 + $0x418] sm:$0xff]
    %v5161 = vld [vmem:[#allocation5 + $0x450] sm:$0xff]
    %v5162 = vld [vmem:[#allocation5 + $0x458] sm:$0xff]
    %v5163 = vld [vmem:[%s4] sm:$0xff]
    %v5164 = vld [vmem:[%s4 + $0x8] sm:$0xff]
    %v5165 = vld [vmem:[%s4 + $0x10] sm:$0xff]
    %v5166 = vld [vmem:[%s4 + $0x18] sm:$0xff]
    %v5167 = vpack.c.bf16 %v5129, %v5127
    %v5168 = vpack.c.bf16 %v5130, %v5128
    %v5169 = vpack.c.bf16 %v5133, %v5131
    %v5170 = vpack.c.bf16 %v5134, %v5132
    %v5171 = vpack.c.bf16 %v5137, %v5135
    %v5172 = vpack.c.bf16 %v5138, %v5136
    %v5173 = vpack.c.bf16 %v5141, %v5139
    %v5174 = vpack.c.bf16 %v5142, %v5140
    %v5175 = vpack.c.bf16 %v5145, %v5143
    %v5176 = vpack.c.bf16 %v5146, %v5144
    %v5177 = vpack.c.bf16 %v5149, %v5147
    %v5178 = vpack.c.bf16 %v5150, %v5148
    %v5179 = vpack.c.bf16 %v5153, %v5151
    %v5180 = vpack.c.bf16 %v5154, %v5152
    %v5181 = vpack.c.bf16 %v5157, %v5155
    %v5182 = vpack.c.bf16 %v5158, %v5156
    %v5183 = vpack.c.bf16 %v5161, %v5159
    %v5184 = vpack.c.bf16 %v5162, %v5160
    %v5189 = vunpack.c.l.b16 %v5163
    %v5190 = vunpack.c.h.b16 %v5163
    %v5191 = vunpack.c.l.b16 %v5164
    %v5192 = vunpack.c.h.b16 %v5164
    %v5193 = vunpack.c.l.b16 %v5165
    %v5194 = vunpack.c.h.b16 %v5165
    %v5195 = vunpack.c.l.b16 %v5166
    %v5196 = vunpack.c.h.b16 %v5166
    %v5197 = vpack.c.b16 %v5191, %v5189
    %v5198 = vpack.c.b16 %v5192, %v5190
    %v5199 = vpack.c.b16 %v5195, %v5193
    %v5200 = vpack.c.b16 %v5196, %v5194
    %v5204 = vsel %vm5028, %v5198, 0
    %v5207 = vsel %vm5028, %v5200, 0
    %5209 = vmatpush.bf16.msra.mxu0 %v5181
    %5210 = vmatpush.bf16.msra.mxu0 %v5179
    %5211 = vmatpush.bf16.msra.mxu0 %v5177
    %5212 = vmatpush.bf16.msra.mxu0 %v5175
    %5213 = vmatpush.bf16.msra.mxu0 %v5173
    %5214 = vmatpush.bf16.msra.mxu0 %v5171
    %5215 = vmatpush.bf16.msra.mxu0 %v5169
    %5216 = vmatpush.bf16.msra.mxu0 %v5167
    %5217 = vmatmul.bf16.gmra.mxu0 %v5197
    %v5218 = vpop.f32.mrf.mxu0
    %v5219 = vadd.f32 0.0, %v5218
    %v5220 = vpop.f32.mrf.mxu0
    %v5221 = vadd.f32 0.0, %v5220
    %5222 = vmatmul.bf16.gmra.mxu0 %v5199
    %v5223 = vpop.f32.mrf.mxu0
    %v5224 = vadd.f32 0.0, %v5223
    %v5225 = vpop.f32.mrf.mxu0
    %v5226 = vadd.f32 0.0, %v5225
    %5227 = vdwg.mxu0
    %5228 = vmatpush.bf16.msra.mxu0 0
    %5229 = vmatpush.bf16.msra.mxu0 0
    %5230 = vmatpush.bf16.msra.mxu0 0
    %5231 = vmatpush.bf16.msra.mxu0 0
    %5232 = vmatpush.bf16.msra.mxu0 0
    %5233 = vmatpush.bf16.msra.mxu0 0
    %5234 = vmatpush.bf16.msra.mxu0 0
    %5235 = vmatpush.bf16.msra.mxu0 %v5183
    %5236 = vmatmul.bf16.gmra.mxu0 %v5204
    %v5237 = vpop.f32.mrf.mxu0
    %v5238 = vadd.f32 %v5219, %v5237
    %v5239 = vpop.f32.mrf.mxu0
    %v5240 = vadd.f32 %v5221, %v5239
    %5241 = vmatmul.bf16.gmra.mxu0 %v5207
    %v5242 = vpop.f32.mrf.mxu0
    %v5243 = vadd.f32 %v5224, %v5242
    %v5244 = vpop.f32.mrf.mxu0
    %v5245 = vadd.f32 %v5226, %v5244
    %5246 = vdwg.mxu0
    %5247 = vmatpush.bf16.msra.mxu0 %v5182
    %5248 = vmatpush.bf16.msra.mxu0 %v5180
    %5249 = vmatpush.bf16.msra.mxu0 %v5178
    %5250 = vmatpush.bf16.msra.mxu0 %v5176
    %5251 = vmatpush.bf16.msra.mxu0 %v5174
    %5252 = vmatpush.bf16.msra.mxu0 %v5172
    %5253 = vmatpush.bf16.msra.mxu0 %v5170
    %5254 = vmatpush.bf16.msra.mxu0 %v5168
    %5255 = vmatmul.bf16.gmra.mxu0 %v5197
    %v5256 = vpop.f32.mrf.mxu0
    %v5257 = vadd.f32 0.0, %v5256
    %v5258 = vpop.f32.mrf.mxu0
    %v5259 = vadd.f32 0.0, %v5258
    %5260 = vmatmul.bf16.gmra.mxu0 %v5199
    %v5261 = vpop.f32.mrf.mxu0
    %v5262 = vadd.f32 0.0, %v5261
    %v5263 = vpop.f32.mrf.mxu0
    %v5264 = vadd.f32 0.0, %v5263
    %5265 = vdwg.mxu0
    %5266 = vmatpush.bf16.msra.mxu0 0
    %5267 = vmatpush.bf16.msra.mxu0 0
    %5268 = vmatpush.bf16.msra.mxu0 0
    %5269 = vmatpush.bf16.msra.mxu0 0
    %5270 = vmatpush.bf16.msra.mxu0 0
    %5271 = vmatpush.bf16.msra.mxu0 0
    %5272 = vmatpush.bf16.msra.mxu0 0
    %5273 = vmatpush.bf16.msra.mxu0 %v5184
    %5274 = vmatmul.bf16.gmra.mxu0 %v5204
    %v5275 = vpop.f32.mrf.mxu0
    %v5276 = vadd.f32 %v5257, %v5275
    %v5277 = vpop.f32.mrf.mxu0
    %v5278 = vadd.f32 %v5259, %v5277
    %5279 = vmatmul.bf16.gmra.mxu0 %v5207
    %v5280 = vpop.f32.mrf.mxu0
    %v5281 = vadd.f32 %v5262, %v5280
    %v5282 = vpop.f32.mrf.mxu0
    %v5283 = vadd.f32 %v5264, %v5282
    %5284 = vdwg.mxu0
    %v5285 = vmax.f32 %v5238, 0.0
    %v5286 = vmax.f32 %v5276, 0.0
    %v5287 = vmax.f32 %v5240, 0.0
    %v5288 = vmax.f32 %v5278, 0.0
    %v5289 = vmax.f32 %v5243, 0.0
    %v5290 = vmax.f32 %v5281, 0.0
    %v5291 = vmax.f32 %v5245, 0.0
    %v5292 = vmax.f32 %v5283, 0.0
    %5293 = vst [vmem:[#allocation4 + $0x10] sm:$0xff] %v5285
    %5294 = vst [vmem:[#allocation4 + $0x18] sm:$0xff] %v5286
    %5295 = vst [vmem:[#allocation4 + $0x90] sm:$0xff] %v5287
    %5296 = vst [vmem:[#allocation4 + $0x98] sm:$0xff] %v5288
    %5297 = vst [vmem:[#allocation4 + $0x110] sm:$0xff] %v5289
    %5298 = vst [vmem:[#allocation4 + $0x118] sm:$0xff] %v5290
    %5299 = vst [vmem:[#allocation4 + $0x190] sm:$0xff] %v5291
    %5300 = vst [vmem:[#allocation4 + $0x198] sm:$0xff] %v5292
    %v5301 = vld [vmem:[#allocation5 + $0x20] sm:$0xff]
    %v5302 = vld [vmem:[#allocation5 + $0x28] sm:$0xff]
    %v5303 = vld [vmem:[#allocation5 + $0x60] sm:$0xff]
    %v5304 = vld [vmem:[#allocation5 + $0x68] sm:$0xff]
    %v5305 = vld [vmem:[#allocation5 + $0xa0] sm:$0xff]
    %v5306 = vld [vmem:[#allocation5 + $0xa8] sm:$0xff]
    %v5307 = vld [vmem:[#allocation5 + $0xe0] sm:$0xff]
    %v5308 = vld [vmem:[#allocation5 + $0xe8] sm:$0xff]
    %v5309 = vld [vmem:[#allocation5 + $0x120] sm:$0xff]
    %v5310 = vld [vmem:[#allocation5 + $0x128] sm:$0xff]
    %v5311 = vld [vmem:[#allocation5 + $0x160] sm:$0xff]
    %v5312 = vld [vmem:[#allocation5 + $0x168] sm:$0xff]
    %v5313 = vld [vmem:[#allocation5 + $0x1a0] sm:$0xff]
    %v5314 = vld [vmem:[#allocation5 + $0x1a8] sm:$0xff]
    %v5315 = vld [vmem:[#allocation5 + $0x1e0] sm:$0xff]
    %v5316 = vld [vmem:[#allocation5 + $0x1e8] sm:$0xff]
    %v5317 = vld [vmem:[#allocation5 + $0x220] sm:$0xff]
    %v5318 = vld [vmem:[#allocation5 + $0x228] sm:$0xff]
    %v5319 = vld [vmem:[#allocation5 + $0x260] sm:$0xff]
    %v5320 = vld [vmem:[#allocation5 + $0x268] sm:$0xff]
    %v5321 = vld [vmem:[#allocation5 + $0x2a0] sm:$0xff]
    %v5322 = vld [vmem:[#allocation5 + $0x2a8] sm:$0xff]
    %v5323 = vld [vmem:[#allocation5 + $0x2e0] sm:$0xff]
    %v5324 = vld [vmem:[#allocation5 + $0x2e8] sm:$0xff]
    %v5325 = vld [vmem:[#allocation5 + $0x320] sm:$0xff]
    %v5326 = vld [vmem:[#allocation5 + $0x328] sm:$0xff]
    %v5327 = vld [vmem:[#allocation5 + $0x360] sm:$0xff]
    %v5328 = vld [vmem:[#allocation5 + $0x368] sm:$0xff]
    %v5329 = vld [vmem:[#allocation5 + $0x3a0] sm:$0xff]
    %v5330 = vld [vmem:[#allocation5 + $0x3a8] sm:$0xff]
    %v5331 = vld [vmem:[#allocation5 + $0x3e0] sm:$0xff]
    %v5332 = vld [vmem:[#allocation5 + $0x3e8] sm:$0xff]
    %v5333 = vld [vmem:[#allocation5 + $0x420] sm:$0xff]
    %v5334 = vld [vmem:[#allocation5 + $0x428] sm:$0xff]
    %v5335 = vld [vmem:[#allocation5 + $0x460] sm:$0xff]
    %v5336 = vld [vmem:[#allocation5 + $0x468] sm:$0xff]
    %v5337 = vld [vmem:[%s4] sm:$0xff]
    %v5338 = vld [vmem:[%s4 + $0x8] sm:$0xff]
    %v5339 = vld [vmem:[%s4 + $0x10] sm:$0xff]
    %v5340 = vld [vmem:[%s4 + $0x18] sm:$0xff]
    %v5341 = vpack.c.bf16 %v5303, %v5301
    %v5342 = vpack.c.bf16 %v5304, %v5302
    %v5343 = vpack.c.bf16 %v5307, %v5305
    %v5344 = vpack.c.bf16 %v5308, %v5306
    %v5345 = vpack.c.bf16 %v5311, %v5309
    %v5346 = vpack.c.bf16 %v5312, %v5310
    %v5347 = vpack.c.bf16 %v5315, %v5313
    %v5348 = vpack.c.bf16 %v5316, %v5314
    %v5349 = vpack.c.bf16 %v5319, %v5317
    %v5350 = vpack.c.bf16 %v5320, %v5318
    %v5351 = vpack.c.bf16 %v5323, %v5321
    %v5352 = vpack.c.bf16 %v5324, %v5322
    %v5353 = vpack.c.bf16 %v5327, %v5325
    %v5354 = vpack.c.bf16 %v5328, %v5326
    %v5355 = vpack.c.bf16 %v5331, %v5329
    %v5356 = vpack.c.bf16 %v5332, %v5330
    %v5357 = vpack.c.bf16 %v5335, %v5333
    %v5358 = vpack.c.bf16 %v5336, %v5334
    %v5363 = vunpack.c.l.b16 %v5337
    %v5364 = vunpack.c.h.b16 %v5337
    %v5365 = vunpack.c.l.b16 %v5338
    %v5366 = vunpack.c.h.b16 %v5338
    %v5367 = vunpack.c.l.b16 %v5339
    %v5368 = vunpack.c.h.b16 %v5339
    %v5369 = vunpack.c.l.b16 %v5340
    %v5370 = vunpack.c.h.b16 %v5340
    %v5371 = vpack.c.b16 %v5365, %v5363
    %v5372 = vpack.c.b16 %v5366, %v5364
    %v5373 = vpack.c.b16 %v5369, %v5367
    %v5374 = vpack.c.b16 %v5370, %v5368
    %v5378 = vsel %vm5028, %v5372, 0
    %v5381 = vsel %vm5028, %v5374, 0
    %5383 = vmatpush.bf16.msra.mxu0 %v5355
    %5384 = vmatpush.bf16.msra.mxu0 %v5353
    %5385 = vmatpush.bf16.msra.mxu0 %v5351
    %5386 = vmatpush.bf16.msra.mxu0 %v5349
    %5387 = vmatpush.bf16.msra.mxu0 %v5347
    %5388 = vmatpush.bf16.msra.mxu0 %v5345
    %5389 = vmatpush.bf16.msra.mxu0 %v5343
    %5390 = vmatpush.bf16.msra.mxu0 %v5341
    %5391 = vmatmul.bf16.gmra.mxu0 %v5371
    %v5392 = vpop.f32.mrf.mxu0
    %v5393 = vadd.f32 0.0, %v5392
    %v5394 = vpop.f32.mrf.mxu0
    %v5395 = vadd.f32 0.0, %v5394
    %5396 = vmatmul.bf16.gmra.mxu0 %v5373
    %v5397 = vpop.f32.mrf.mxu0
    %v5398 = vadd.f32 0.0, %v5397
    %v5399 = vpop.f32.mrf.mxu0
    %v5400 = vadd.f32 0.0, %v5399
    %5401 = vdwg.mxu0
    %5402 = vmatpush.bf16.msra.mxu0 0
    %5403 = vmatpush.bf16.msra.mxu0 0
    %5404 = vmatpush.bf16.msra.mxu0 0
    %5405 = vmatpush.bf16.msra.mxu0 0
    %5406 = vmatpush.bf16.msra.mxu0 0
    %5407 = vmatpush.bf16.msra.mxu0 0
    %5408 = vmatpush.bf16.msra.mxu0 0
    %5409 = vmatpush.bf16.msra.mxu0 %v5357
    %5410 = vmatmul.bf16.gmra.mxu0 %v5378
    %v5411 = vpop.f32.mrf.mxu0
    %v5412 = vadd.f32 %v5393, %v5411
    %v5413 = vpop.f32.mrf.mxu0
    %v5414 = vadd.f32 %v5395, %v5413
    %5415 = vmatmul.bf16.gmra.mxu0 %v5381
    %v5416 = vpop.f32.mrf.mxu0
    %v5417 = vadd.f32 %v5398, %v5416
    %v5418 = vpop.f32.mrf.mxu0
    %v5419 = vadd.f32 %v5400, %v5418
    %5420 = vdwg.mxu0
    %5421 = vmatpush.bf16.msra.mxu0 %v5356
    %5422 = vmatpush.bf16.msra.mxu0 %v5354
    %5423 = vmatpush.bf16.msra.mxu0 %v5352
    %5424 = vmatpush.bf16.msra.mxu0 %v5350
    %5425 = vmatpush.bf16.msra.mxu0 %v5348
    %5426 = vmatpush.bf16.msra.mxu0 %v5346
    %5427 = vmatpush.bf16.msra.mxu0 %v5344
    %5428 = vmatpush.bf16.msra.mxu0 %v5342
    %5429 = vmatmul.bf16.gmra.mxu0 %v5371
    %v5430 = vpop.f32.mrf.mxu0
    %v5431 = vadd.f32 0.0, %v5430
    %v5432 = vpop.f32.mrf.mxu0
    %v5433 = vadd.f32 0.0, %v5432
    %5434 = vmatmul.bf16.gmra.mxu0 %v5373
    %v5435 = vpop.f32.mrf.mxu0
    %v5436 = vadd.f32 0.0, %v5435
    %v5437 = vpop.f32.mrf.mxu0
    %v5438 = vadd.f32 0.0, %v5437
    %5439 = vdwg.mxu0
    %5440 = vmatpush.bf16.msra.mxu0 0
    %5441 = vmatpush.bf16.msra.mxu0 0
    %5442 = vmatpush.bf16.msra.mxu0 0
    %5443 = vmatpush.bf16.msra.mxu0 0
    %5444 = vmatpush.bf16.msra.mxu0 0
    %5445 = vmatpush.bf16.msra.mxu0 0
    %5446 = vmatpush.bf16.msra.mxu0 0
    %5447 = vmatpush.bf16.msra.mxu0 %v5358
    %5448 = vmatmul.bf16.gmra.mxu0 %v5378
    %v5449 = vpop.f32.mrf.mxu0
    %v5450 = vadd.f32 %v5431, %v5449
    %v5451 = vpop.f32.mrf.mxu0
    %v5452 = vadd.f32 %v5433, %v5451
    %5453 = vmatmul.bf16.gmra.mxu0 %v5381
    %v5454 = vpop.f32.mrf.mxu0
    %v5455 = vadd.f32 %v5436, %v5454
    %v5456 = vpop.f32.mrf.mxu0
    %v5457 = vadd.f32 %v5438, %v5456
    %5458 = vdwg.mxu0
    %v5459 = vmax.f32 %v5412, 0.0
    %v5460 = vmax.f32 %v5450, 0.0
    %v5461 = vmax.f32 %v5414, 0.0
    %v5462 = vmax.f32 %v5452, 0.0
    %v5463 = vmax.f32 %v5417, 0.0
    %v5464 = vmax.f32 %v5455, 0.0
    %v5465 = vmax.f32 %v5419, 0.0
    %v5466 = vmax.f32 %v5457, 0.0
    %5467 = vst [vmem:[#allocation4 + $0x20] sm:$0xff] %v5459
    %5468 = vst [vmem:[#allocation4 + $0x28] sm:$0xff] %v5460
    %5469 = vst [vmem:[#allocation4 + $0xa0] sm:$0xff] %v5461
    %5470 = vst [vmem:[#allocation4 + $0xa8] sm:$0xff] %v5462
    %5471 = vst [vmem:[#allocation4 + $0x120] sm:$0xff] %v5463
    %5472 = vst [vmem:[#allocation4 + $0x128] sm:$0xff] %v5464
    %5473 = vst [vmem:[#allocation4 + $0x1a0] sm:$0xff] %v5465
    %5474 = vst [vmem:[#allocation4 + $0x1a8] sm:$0xff] %v5466
    %v5475 = vld [vmem:[#allocation5 + $0x30] sm:$0xff]
    %v5476 = vld [vmem:[#allocation5 + $0x38] sm:$0xff]
    %v5477 = vld [vmem:[#allocation5 + $0x70] sm:$0xff]
    %v5478 = vld [vmem:[#allocation5 + $0x78] sm:$0xff]
    %v5479 = vld [vmem:[#allocation5 + $0xb0] sm:$0xff]
    %v5480 = vld [vmem:[#allocation5 + $0xb8] sm:$0xff]
    %v5481 = vld [vmem:[#allocation5 + $0xf0] sm:$0xff]
    %v5482 = vld [vmem:[#allocation5 + $0xf8] sm:$0xff]
    %v5483 = vld [vmem:[#allocation5 + $0x130] sm:$0xff]
    %v5484 = vld [vmem:[#allocation5 + $0x138] sm:$0xff]
    %v5485 = vld [vmem:[#allocation5 + $0x170] sm:$0xff]
    %v5486 = vld [vmem:[#allocation5 + $0x178] sm:$0xff]
    %v5487 = vld [vmem:[#allocation5 + $0x1b0] sm:$0xff]
    %v5488 = vld [vmem:[#allocation5 + $0x1b8] sm:$0xff]
    %v5489 = vld [vmem:[#allocation5 + $0x1f0] sm:$0xff]
    %v5490 = vld [vmem:[#allocation5 + $0x1f8] sm:$0xff]
    %v5491 = vld [vmem:[#allocation5 + $0x230] sm:$0xff]
    %v5492 = vld [vmem:[#allocation5 + $0x238] sm:$0xff]
    %v5493 = vld [vmem:[#allocation5 + $0x270] sm:$0xff]
    %v5494 = vld [vmem:[#allocation5 + $0x278] sm:$0xff]
    %v5495 = vld [vmem:[#allocation5 + $0x2b0] sm:$0xff]
    %v5496 = vld [vmem:[#allocation5 + $0x2b8] sm:$0xff]
    %v5497 = vld [vmem:[#allocation5 + $0x2f0] sm:$0xff]
    %v5498 = vld [vmem:[#allocation5 + $0x2f8] sm:$0xff]
    %v5499 = vld [vmem:[#allocation5 + $0x330] sm:$0xff]
    %v5500 = vld [vmem:[#allocation5 + $0x338] sm:$0xff]
    %v5501 = vld [vmem:[#allocation5 + $0x370] sm:$0xff]
    %v5502 = vld [vmem:[#allocation5 + $0x378] sm:$0xff]
    %v5503 = vld [vmem:[#allocation5 + $0x3b0] sm:$0xff]
    %v5504 = vld [vmem:[#allocation5 + $0x3b8] sm:$0xff]
    %v5505 = vld [vmem:[#allocation5 + $0x3f0] sm:$0xff]
    %v5506 = vld [vmem:[#allocation5 + $0x3f8] sm:$0xff]
    %v5507 = vld [vmem:[#allocation5 + $0x430] sm:$0xff]
    %v5508 = vld [vmem:[#allocation5 + $0x438] sm:$0xff]
    %v5509 = vld [vmem:[#allocation5 + $0x470] sm:$0xff]
    %v5510 = vld [vmem:[#allocation5 + $0x478] sm:$0xff]
    %v5511 = vld [vmem:[%s4] sm:$0xff]
    %v5512 = vld [vmem:[%s4 + $0x8] sm:$0xff]
    %v5513 = vld [vmem:[%s4 + $0x10] sm:$0xff]
    %v5514 = vld [vmem:[%s4 + $0x18] sm:$0xff]
    %v5515 = vpack.c.bf16 %v5477, %v5475
    %v5516 = vpack.c.bf16 %v5478, %v5476
    %v5517 = vpack.c.bf16 %v5481, %v5479
    %v5518 = vpack.c.bf16 %v5482, %v5480
    %v5519 = vpack.c.bf16 %v5485, %v5483
    %v5520 = vpack.c.bf16 %v5486, %v5484
    %v5521 = vpack.c.bf16 %v5489, %v5487
    %v5522 = vpack.c.bf16 %v5490, %v5488
    %v5523 = vpack.c.bf16 %v5493, %v5491
    %v5524 = vpack.c.bf16 %v5494, %v5492
    %v5525 = vpack.c.bf16 %v5497, %v5495
    %v5526 = vpack.c.bf16 %v5498, %v5496
    %v5527 = vpack.c.bf16 %v5501, %v5499
    %v5528 = vpack.c.bf16 %v5502, %v5500
    %v5529 = vpack.c.bf16 %v5505, %v5503
    %v5530 = vpack.c.bf16 %v5506, %v5504
    %v5531 = vpack.c.bf16 %v5509, %v5507
    %v5532 = vpack.c.bf16 %v5510, %v5508
    %v5537 = vunpack.c.l.b16 %v5511
    %v5538 = vunpack.c.h.b16 %v5511
    %v5539 = vunpack.c.l.b16 %v5512
    %v5540 = vunpack.c.h.b16 %v5512
    %v5541 = vunpack.c.l.b16 %v5513
    %v5542 = vunpack.c.h.b16 %v5513
    %v5543 = vunpack.c.l.b16 %v5514
    %v5544 = vunpack.c.h.b16 %v5514
    %v5545 = vpack.c.b16 %v5539, %v5537
    %v5546 = vpack.c.b16 %v5540, %v5538
    %v5547 = vpack.c.b16 %v5543, %v5541
    %v5548 = vpack.c.b16 %v5544, %v5542
    %v5552 = vsel %vm5028, %v5546, 0
    %v5555 = vsel %vm5028, %v5548, 0
    %5557 = vmatpush.bf16.msra.mxu0 %v5529
    %5558 = vmatpush.bf16.msra.mxu0 %v5527
    %5559 = vmatpush.bf16.msra.mxu0 %v5525
    %5560 = vmatpush.bf16.msra.mxu0 %v5523
    %5561 = vmatpush.bf16.msra.mxu0 %v5521
    %5562 = vmatpush.bf16.msra.mxu0 %v5519
    %5563 = vmatpush.bf16.msra.mxu0 %v5517
    %5564 = vmatpush.bf16.msra.mxu0 %v5515
    %5565 = vmatmul.bf16.gmra.mxu0 %v5545
    %v5566 = vpop.f32.mrf.mxu0
    %v5567 = vadd.f32 0.0, %v5566
    %v5568 = vpop.f32.mrf.mxu0
    %v5569 = vadd.f32 0.0, %v5568
    %5570 = vmatmul.bf16.gmra.mxu0 %v5547
    %v5571 = vpop.f32.mrf.mxu0
    %v5572 = vadd.f32 0.0, %v5571
    %v5573 = vpop.f32.mrf.mxu0
    %v5574 = vadd.f32 0.0, %v5573
    %5575 = vdwg.mxu0
    %5576 = vmatpush.bf16.msra.mxu0 0
    %5577 = vmatpush.bf16.msra.mxu0 0
    %5578 = vmatpush.bf16.msra.mxu0 0
    %5579 = vmatpush.bf16.msra.mxu0 0
    %5580 = vmatpush.bf16.msra.mxu0 0
    %5581 = vmatpush.bf16.msra.mxu0 0
    %5582 = vmatpush.bf16.msra.mxu0 0
    %5583 = vmatpush.bf16.msra.mxu0 %v5531
    %5584 = vmatmul.bf16.gmra.mxu0 %v5552
    %v5585 = vpop.f32.mrf.mxu0
    %v5586 = vadd.f32 %v5567, %v5585
    %v5587 = vpop.f32.mrf.mxu0
    %v5588 = vadd.f32 %v5569, %v5587
    %5589 = vmatmul.bf16.gmra.mxu0 %v5555
    %v5590 = vpop.f32.mrf.mxu0
    %v5591 = vadd.f32 %v5572, %v5590
    %v5592 = vpop.f32.mrf.mxu0
    %v5593 = vadd.f32 %v5574, %v5592
    %5594 = vdwg.mxu0
    %5595 = vmatpush.bf16.msra.mxu0 %v5530
    %5596 = vmatpush.bf16.msra.mxu0 %v5528
    %5597 = vmatpush.bf16.msra.mxu0 %v5526
    %5598 = vmatpush.bf16.msra.mxu0 %v5524
    %5599 = vmatpush.bf16.msra.mxu0 %v5522
    %5600 = vmatpush.bf16.msra.mxu0 %v5520
    %5601 = vmatpush.bf16.msra.mxu0 %v5518
    %5602 = vmatpush.bf16.msra.mxu0 %v5516
    %5603 = vmatmul.bf16.gmra.mxu0 %v5545
    %v5604 = vpop.f32.mrf.mxu0
    %v5605 = vadd.f32 0.0, %v5604
    %v5606 = vpop.f32.mrf.mxu0
    %v5607 = vadd.f32 0.0, %v5606
    %5608 = vmatmul.bf16.gmra.mxu0 %v5547
    %v5609 = vpop.f32.mrf.mxu0
    %v5610 = vadd.f32 0.0, %v5609
    %v5611 = vpop.f32.mrf.mxu0
    %v5612 = vadd.f32 0.0, %v5611
    %5613 = vdwg.mxu0
    %5614 = vmatpush.bf16.msra.mxu0 0
    %5615 = vmatpush.bf16.msra.mxu0 0
    %5616 = vmatpush.bf16.msra.mxu0 0
    %5617 = vmatpush.bf16.msra.mxu0 0
    %5618 = vmatpush.bf16.msra.mxu0 0
    %5619 = vmatpush.bf16.msra.mxu0 0
    %5620 = vmatpush.bf16.msra.mxu0 0
    %5621 = vmatpush.bf16.msra.mxu0 %v5532
    %5622 = vmatmul.bf16.gmra.mxu0 %v5552
    %v5623 = vpop.f32.mrf.mxu0
    %v5624 = vadd.f32 %v5605, %v5623
    %v5625 = vpop.f32.mrf.mxu0
    %v5626 = vadd.f32 %v5607, %v5625
    %5627 = vmatmul.bf16.gmra.mxu0 %v5555
    %v5628 = vpop.f32.mrf.mxu0
    %v5629 = vadd.f32 %v5610, %v5628
    %v5630 = vpop.f32.mrf.mxu0
    %v5631 = vadd.f32 %v5612, %v5630
    %5632 = vdwg.mxu0
    %v5633 = vmax.f32 %v5586, 0.0
    %v5634 = vmax.f32 %v5624, 0.0
    %v5635 = vmax.f32 %v5588, 0.0
    %v5636 = vmax.f32 %v5626, 0.0
    %v5637 = vmax.f32 %v5591, 0.0
    %v5638 = vmax.f32 %v5629, 0.0
    %v5639 = vmax.f32 %v5593, 0.0
    %v5640 = vmax.f32 %v5631, 0.0
    %5641 = vst [vmem:[#allocation4 + $0x30] sm:$0xff] %v5633
    %5642 = vst [vmem:[#allocation4 + $0x38] sm:$0xff] %v5634
    %5643 = vst [vmem:[#allocation4 + $0xb0] sm:$0xff] %v5635
    %5644 = vst [vmem:[#allocation4 + $0xb8] sm:$0xff] %v5636
    %5645 = vst [vmem:[#allocation4 + $0x130] sm:$0xff] %v5637
    %5646 = vst [vmem:[#allocation4 + $0x138] sm:$0xff] %v5638
    %5647 = vst [vmem:[#allocation4 + $0x1b0] sm:$0xff] %v5639
    %5648 = vst [vmem:[#allocation4 + $0x1b8] sm:$0xff] %v5640
    %v5649 = vld [vmem:[#allocation3 + $0x40] sm:$0xff]
    %v5650 = vld [vmem:[#allocation3 + $0x48] sm:$0xff]
    %v5651 = vld [vmem:[#allocation3 + $0x50] sm:$0xff]
    %v5652 = vld [vmem:[#allocation3 + $0x58] sm:$0xff]
    %v5653 = vld [vmem:[#allocation3 + $0x60] sm:$0xff]
    %v5654 = vld [vmem:[#allocation3 + $0x68] sm:$0xff]
    %v5655 = vld [vmem:[#allocation3 + $0x70] sm:$0xff]
    %v5656 = vld [vmem:[#allocation3 + $0x78] sm:$0xff]
    %v5657 = vld [vmem:[#allocation3 + $0xc0] sm:$0xff]
    %v5658 = vld [vmem:[#allocation3 + $0xc8] sm:$0xff]
    %v5659 = vld [vmem:[#allocation3 + $0xd0] sm:$0xff]
    %v5660 = vld [vmem:[#allocation3 + $0xd8] sm:$0xff]
    %v5661 = vld [vmem:[#allocation3 + $0xe0] sm:$0xff]
    %v5662 = vld [vmem:[#allocation3 + $0xe8] sm:$0xff]
    %v5663 = vld [vmem:[#allocation3 + $0xf0] sm:$0xff]
    %v5664 = vld [vmem:[#allocation3 + $0xf8] sm:$0xff]
    %5665 = vrot.lane.b32.xlu0 %v5649, 33
    %v5666 = vpop.permute.xlu0 %5665
    %5667 = vrot.lane.b32.xlu0 %v5657, 33
    %v5668 = vpop.permute.xlu0 %5667
    %5669 = vrot.lane.b32.xlu0 %v5650, 33
    %v5670 = vpop.permute.xlu0 %5669
    %5671 = vrot.lane.b32.xlu0 %v5658, 33
    %v5672 = vpop.permute.xlu0 %5671
    %5673 = vrot.lane.b32.xlu0 %v5651, 33
    %v5674 = vpop.permute.xlu0 %5673
    %5675 = vrot.lane.b32.xlu0 %v5659, 33
    %v5676 = vpop.permute.xlu0 %5675
    %5677 = vrot.lane.b32.xlu0 %v5652, 33
    %v5678 = vpop.permute.xlu0 %5677
    %5679 = vrot.lane.b32.xlu0 %v5660, 33
    %v5680 = vpop.permute.xlu0 %5679
    %5681 = vrot.lane.b32.xlu0 %v5653, 33
    %v5682 = vpop.permute.xlu0 %5681
    %5683 = vrot.lane.b32.xlu0 %v5661, 33
    %v5684 = vpop.permute.xlu0 %5683
    %5685 = vrot.lane.b32.xlu0 %v5654, 33
    %v5686 = vpop.permute.xlu0 %5685
    %5687 = vrot.lane.b32.xlu0 %v5662, 33
    %v5688 = vpop.permute.xlu0 %5687
    %5689 = vrot.lane.b32.xlu0 %v5655, 33
    %v5690 = vpop.permute.xlu0 %5689
    %5691 = vrot.lane.b32.xlu0 %v5663, 33
    %v5692 = vpop.permute.xlu0 %5691
    %5693 = vrot.lane.b32.xlu0 %v5656, 33
    %v5694 = vpop.permute.xlu0 %5693
    %5695 = vrot.lane.b32.xlu0 %v5664, 33
    %v5696 = vpop.permute.xlu0 %5695
    %v5697 = vsel %vm58, %v5690, %v5694
    %v5698 = vsel %vm58, %v5692, %v5696
    %v5699 = vsel %vm58, %v5686, %v5690
    %v5700 = vsel %vm58, %v5688, %v5692
    %v5701 = vsel %vm58, %v5682, %v5686
    %v5702 = vsel %vm58, %v5684, %v5688
    %v5703 = vsel %vm58, %v5678, %v5682
    %v5704 = vsel %vm58, %v5680, %v5684
    %v5705 = vsel %vm58, %v5674, %v5678
    %v5706 = vsel %vm58, %v5676, %v5680
    %v5707 = vsel %vm58, %v5670, %v5674
    %v5708 = vsel %vm58, %v5672, %v5676
    %v5709 = vsel %vm58, %v5666, %v5670
    %v5710 = vsel %vm58, %v5668, %v5672
    %v5711 = vsel %vm58, %v5694, %v5666
    %v5712 = vsel %vm58, %v5696, %v5668
    %v5713 = vld [vmem:[%s1] ss:$8 sm:$0xf]
    %v5714 = vld [vmem:[%s1] ss:$8 sm:$0xf0]
    %v5715 = vor.u32 %v5713, %v5714
    %v5717 = vperm.slane %v5715, 0
    %v5718 = vperm.slane %v5715, 1
    %v5719 = vperm.slane %v5715, 2
    %v5720 = vperm.slane %v5715, 3
    %v5721 = vperm.slane %v5715, 4
    %v5722 = vperm.slane %v5715, 5
    %v5723 = vperm.slane %v5715, 6
    %v5724 = vperm.slane %v5715, 7
    %v5733 = vmul.f32 %v5711, %v5717
    %v5734 = vmul.f32 %v5709, %v5718
    %v5735 = vmul.f32 %v5707, %v5719
    %v5736 = vmul.f32 %v5705, %v5720
    %v5737 = vmul.f32 %v5703, %v5721
    %v5738 = vmul.f32 %v5701, %v5722
    %v5739 = vmul.f32 %v5699, %v5723
    %v5740 = vmul.f32 %v5697, %v5724
    %v5741 = vmul.f32 %v5712, %v5717
    %v5742 = vmul.f32 %v5710, %v5718
    %v5743 = vmul.f32 %v5708, %v5719
    %v5744 = vmul.f32 %v5706, %v5720
    %v5745 = vmul.f32 %v5704, %v5721
    %v5746 = vmul.f32 %v5702, %v5722
    %v5747 = vmul.f32 %v5700, %v5723
    %v5748 = vmul.f32 %v5698, %v5724
    %5749 = vst [vmem:[#allocation5] sm:$0xff] %v5733
    %5750 = vst [vmem:[#allocation5 + $0x8] sm:$0xff] %v5734
    %5751 = vst [vmem:[#allocation5 + $0x10] sm:$0xff] %v5735
    %5752 = vst [vmem:[#allocation5 + $0x18] sm:$0xff] %v5736
    %5753 = vst [vmem:[#allocation5 + $0x20] sm:$0xff] %v5737
    %5754 = vst [vmem:[#allocation5 + $0x28] sm:$0xff] %v5738
    %5755 = vst [vmem:[#allocation5 + $0x30] sm:$0xff] %v5739
    %5756 = vst [vmem:[#allocation5 + $0x38] sm:$0xff] %v5740
    %5757 = vst [vmem:[#allocation5 + $0x40] sm:$0xff] %v5741
    %5758 = vst [vmem:[#allocation5 + $0x48] sm:$0xff] %v5742
    %5759 = vst [vmem:[#allocation5 + $0x50] sm:$0xff] %v5743
    %5760 = vst [vmem:[#allocation5 + $0x58] sm:$0xff] %v5744
    %5761 = vst [vmem:[#allocation5 + $0x60] sm:$0xff] %v5745
    %5762 = vst [vmem:[#allocation5 + $0x68] sm:$0xff] %v5746
    %5763 = vst [vmem:[#allocation5 + $0x70] sm:$0xff] %v5747
    %5764 = vst [vmem:[#allocation5 + $0x78] sm:$0xff] %v5748
    %v5765 = vld [vmem:[#allocation3 + $0x40] sm:$0xff]
    %v5766 = vld [vmem:[#allocation3 + $0x48] sm:$0xff]
    %v5767 = vld [vmem:[#allocation3 + $0x50] sm:$0xff]
    %v5768 = vld [vmem:[#allocation3 + $0x58] sm:$0xff]
    %v5769 = vld [vmem:[#allocation3 + $0x60] sm:$0xff]
    %v5770 = vld [vmem:[#allocation3 + $0x68] sm:$0xff]
    %v5771 = vld [vmem:[#allocation3 + $0x70] sm:$0xff]
    %v5772 = vld [vmem:[#allocation3 + $0x78] sm:$0xff]
    %v5773 = vld [vmem:[#allocation3 + $0xc0] sm:$0xff]
    %v5774 = vld [vmem:[#allocation3 + $0xc8] sm:$0xff]
    %v5775 = vld [vmem:[#allocation3 + $0xd0] sm:$0xff]
    %v5776 = vld [vmem:[#allocation3 + $0xd8] sm:$0xff]
    %v5777 = vld [vmem:[#allocation3 + $0xe0] sm:$0xff]
    %v5778 = vld [vmem:[#allocation3 + $0xe8] sm:$0xff]
    %v5779 = vld [vmem:[#allocation3 + $0xf0] sm:$0xff]
    %v5780 = vld [vmem:[#allocation3 + $0xf8] sm:$0xff]
    %5781 = vrot.lane.b32.xlu0 %v5765, 32
    %v5782 = vpop.permute.xlu0 %5781
    %5783 = vrot.lane.b32.xlu0 %v5773, 32
    %v5784 = vpop.permute.xlu0 %5783
    %5785 = vrot.lane.b32.xlu0 %v5766, 32
    %v5786 = vpop.permute.xlu0 %5785
    %5787 = vrot.lane.b32.xlu0 %v5774, 32
    %v5788 = vpop.permute.xlu0 %5787
    %5789 = vrot.lane.b32.xlu0 %v5767, 32
    %v5790 = vpop.permute.xlu0 %5789
    %5791 = vrot.lane.b32.xlu0 %v5775, 32
    %v5792 = vpop.permute.xlu0 %5791
    %5793 = vrot.lane.b32.xlu0 %v5768, 32
    %v5794 = vpop.permute.xlu0 %5793
    %5795 = vrot.lane.b32.xlu0 %v5776, 32
    %v5796 = vpop.permute.xlu0 %5795
    %5797 = vrot.lane.b32.xlu0 %v5769, 32
    %v5798 = vpop.permute.xlu0 %5797
    %5799 = vrot.lane.b32.xlu0 %v5777, 32
    %v5800 = vpop.permute.xlu0 %5799
    %5801 = vrot.lane.b32.xlu0 %v5770, 32
    %v5802 = vpop.permute.xlu0 %5801
    %5803 = vrot.lane.b32.xlu0 %v5778, 32
    %v5804 = vpop.permute.xlu0 %5803
    %5805 = vrot.lane.b32.xlu0 %v5771, 32
    %v5806 = vpop.permute.xlu0 %5805
    %5807 = vrot.lane.b32.xlu0 %v5779, 32
    %v5808 = vpop.permute.xlu0 %5807
    %5809 = vrot.lane.b32.xlu0 %v5772, 32
    %v5810 = vpop.permute.xlu0 %5809
    %5811 = vrot.lane.b32.xlu0 %v5780, 32
    %v5812 = vpop.permute.xlu0 %5811
    %v5813 = vsel %vm137, %v5806, %v5810
    %v5814 = vsel %vm137, %v5808, %v5812
    %v5815 = vsel %vm137, %v5802, %v5806
    %v5816 = vsel %vm137, %v5804, %v5808
    %v5817 = vsel %vm137, %v5798, %v5802
    %v5818 = vsel %vm137, %v5800, %v5804
    %v5819 = vsel %vm137, %v5794, %v5798
    %v5820 = vsel %vm137, %v5796, %v5800
    %v5821 = vsel %vm137, %v5790, %v5794
    %v5822 = vsel %vm137, %v5792, %v5796
    %v5823 = vsel %vm137, %v5786, %v5790
    %v5824 = vsel %vm137, %v5788, %v5792
    %v5825 = vsel %vm137, %v5782, %v5786
    %v5826 = vsel %vm137, %v5784, %v5788
    %v5827 = vsel %vm137, %v5810, %v5782
    %v5828 = vsel %vm137, %v5812, %v5784
    %v5829 = vld [vmem:[%s146] ss:$8 sm:$0xf]
    %v5830 = vld [vmem:[%s146] ss:$8 sm:$0xf0]
    %v5831 = vor.u32 %v5829, %v5830
    %v5833 = vperm.slane %v5831, 0
    %v5834 = vperm.slane %v5831, 1
    %v5835 = vperm.slane %v5831, 2
    %v5836 = vperm.slane %v5831, 3
    %v5837 = vperm.slane %v5831, 4
    %v5838 = vperm.slane %v5831, 5
    %v5839 = vperm.slane %v5831, 6
    %v5840 = vperm.slane %v5831, 7
    %v5849 = vmul.f32 %v5827, %v5833
    %v5850 = vmul.f32 %v5825, %v5834
    %v5851 = vmul.f32 %v5823, %v5835
    %v5852 = vmul.f32 %v5821, %v5836
    %v5853 = vmul.f32 %v5819, %v5837
    %v5854 = vmul.f32 %v5817, %v5838
    %v5855 = vmul.f32 %v5815, %v5839
    %v5856 = vmul.f32 %v5813, %v5840
    %v5857 = vmul.f32 %v5828, %v5833
    %v5858 = vmul.f32 %v5826, %v5834
    %v5859 = vmul.f32 %v5824, %v5835
    %v5860 = vmul.f32 %v5822, %v5836
    %v5861 = vmul.f32 %v5820, %v5837
    %v5862 = vmul.f32 %v5818, %v5838
    %v5863 = vmul.f32 %v5816, %v5839
    %v5864 = vmul.f32 %v5814, %v5840
    %5865 = vst [vmem:[#allocation5 + $0x80] sm:$0xff] %v5849
    %5866 = vst [vmem:[#allocation5 + $0x88] sm:$0xff] %v5850
    %5867 = vst [vmem:[#allocation5 + $0x90] sm:$0xff] %v5851
    %5868 = vst [vmem:[#allocation5 + $0x98] sm:$0xff] %v5852
    %5869 = vst [vmem:[#allocation5 + $0xa0] sm:$0xff] %v5853
    %5870 = vst [vmem:[#allocation5 + $0xa8] sm:$0xff] %v5854
    %5871 = vst [vmem:[#allocation5 + $0xb0] sm:$0xff] %v5855
    %5872 = vst [vmem:[#allocation5 + $0xb8] sm:$0xff] %v5856
    %5873 = vst [vmem:[#allocation5 + $0xc0] sm:$0xff] %v5857
    %5874 = vst [vmem:[#allocation5 + $0xc8] sm:$0xff] %v5858
    %5875 = vst [vmem:[#allocation5 + $0xd0] sm:$0xff] %v5859
    %5876 = vst [vmem:[#allocation5 + $0xd8] sm:$0xff] %v5860
    %5877 = vst [vmem:[#allocation5 + $0xe0] sm:$0xff] %v5861
    %5878 = vst [vmem:[#allocation5 + $0xe8] sm:$0xff] %v5862
    %5879 = vst [vmem:[#allocation5 + $0xf0] sm:$0xff] %v5863
    %5880 = vst [vmem:[#allocation5 + $0xf8] sm:$0xff] %v5864
    %v5881 = vld [vmem:[#allocation3 + $0x40] sm:$0xff]
    %v5882 = vld [vmem:[#allocation3 + $0x48] sm:$0xff]
    %v5883 = vld [vmem:[#allocation3 + $0x50] sm:$0xff]
    %v5884 = vld [vmem:[#allocation3 + $0x58] sm:$0xff]
    %v5885 = vld [vmem:[#allocation3 + $0x60] sm:$0xff]
    %v5886 = vld [vmem:[#allocation3 + $0x68] sm:$0xff]
    %v5887 = vld [vmem:[#allocation3 + $0x70] sm:$0xff]
    %v5888 = vld [vmem:[#allocation3 + $0x78] sm:$0xff]
    %v5889 = vld [vmem:[#allocation3 + $0xc0] sm:$0xff]
    %v5890 = vld [vmem:[#allocation3 + $0xc8] sm:$0xff]
    %v5891 = vld [vmem:[#allocation3 + $0xd0] sm:$0xff]
    %v5892 = vld [vmem:[#allocation3 + $0xd8] sm:$0xff]
    %v5893 = vld [vmem:[#allocation3 + $0xe0] sm:$0xff]
    %v5894 = vld [vmem:[#allocation3 + $0xe8] sm:$0xff]
    %v5895 = vld [vmem:[#allocation3 + $0xf0] sm:$0xff]
    %v5896 = vld [vmem:[#allocation3 + $0xf8] sm:$0xff]
    %5897 = vrot.lane.b32.xlu0 %v5881, 31
    %v5898 = vpop.permute.xlu0 %5897
    %5899 = vrot.lane.b32.xlu0 %v5889, 31
    %v5900 = vpop.permute.xlu0 %5899
    %5901 = vrot.lane.b32.xlu0 %v5882, 31
    %v5902 = vpop.permute.xlu0 %5901
    %5903 = vrot.lane.b32.xlu0 %v5890, 31
    %v5904 = vpop.permute.xlu0 %5903
    %5905 = vrot.lane.b32.xlu0 %v5883, 31
    %v5906 = vpop.permute.xlu0 %5905
    %5907 = vrot.lane.b32.xlu0 %v5891, 31
    %v5908 = vpop.permute.xlu0 %5907
    %5909 = vrot.lane.b32.xlu0 %v5884, 31
    %v5910 = vpop.permute.xlu0 %5909
    %5911 = vrot.lane.b32.xlu0 %v5892, 31
    %v5912 = vpop.permute.xlu0 %5911
    %5913 = vrot.lane.b32.xlu0 %v5885, 31
    %v5914 = vpop.permute.xlu0 %5913
    %5915 = vrot.lane.b32.xlu0 %v5893, 31
    %v5916 = vpop.permute.xlu0 %5915
    %5917 = vrot.lane.b32.xlu0 %v5886, 31
    %v5918 = vpop.permute.xlu0 %5917
    %5919 = vrot.lane.b32.xlu0 %v5894, 31
    %v5920 = vpop.permute.xlu0 %5919
    %5921 = vrot.lane.b32.xlu0 %v5887, 31
    %v5922 = vpop.permute.xlu0 %5921
    %5923 = vrot.lane.b32.xlu0 %v5895, 31
    %v5924 = vpop.permute.xlu0 %5923
    %5925 = vrot.lane.b32.xlu0 %v5888, 31
    %v5926 = vpop.permute.xlu0 %5925
    %5927 = vrot.lane.b32.xlu0 %v5896, 31
    %v5928 = vpop.permute.xlu0 %5927
    %v5929 = vsel %vm241, %v5922, %v5926
    %v5930 = vsel %vm241, %v5924, %v5928
    %v5931 = vsel %vm241, %v5918, %v5922
    %v5932 = vsel %vm241, %v5920, %v5924
    %v5933 = vsel %vm241, %v5914, %v5918
    %v5934 = vsel %vm241, %v5916, %v5920
    %v5935 = vsel %vm241, %v5910, %v5914
    %v5936 = vsel %vm241, %v5912, %v5916
    %v5937 = vsel %vm241, %v5906, %v5910
    %v5938 = vsel %vm241, %v5908, %v5912
    %v5939 = vsel %vm241, %v5902, %v5906
    %v5940 = vsel %vm241, %v5904, %v5908
    %v5941 = vsel %vm241, %v5898, %v5902
    %v5942 = vsel %vm241, %v5900, %v5904
    %v5943 = vsel %vm241, %v5926, %v5898
    %v5944 = vsel %vm241, %v5928, %v5900
    %v5945 = vld [vmem:[%s250] ss:$8 sm:$0xf]
    %v5946 = vld [vmem:[%s250] ss:$8 sm:$0xf0]
    %v5947 = vor.u32 %v5945, %v5946
    %v5949 = vperm.slane %v5947, 0
    %v5950 = vperm.slane %v5947, 1
    %v5951 = vperm.slane %v5947, 2
    %v5952 = vperm.slane %v5947, 3
    %v5953 = vperm.slane %v5947, 4
    %v5954 = vperm.slane %v5947, 5
    %v5955 = vperm.slane %v5947, 6
    %v5956 = vperm.slane %v5947, 7
    %v5965 = vmul.f32 %v5943, %v5949
    %v5966 = vmul.f32 %v5941, %v5950
    %v5967 = vmul.f32 %v5939, %v5951
    %v5968 = vmul.f32 %v5937, %v5952
    %v5969 = vmul.f32 %v5935, %v5953
    %v5970 = vmul.f32 %v5933, %v5954
    %v5971 = vmul.f32 %v5931, %v5955
    %v5972 = vmul.f32 %v5929, %v5956
    %v5973 = vmul.f32 %v5944, %v5949
    %v5974 = vmul.f32 %v5942, %v5950
    %v5975 = vmul.f32 %v5940, %v5951
    %v5976 = vmul.f32 %v5938, %v5952
    %v5977 = vmul.f32 %v5936, %v5953
    %v5978 = vmul.f32 %v5934, %v5954
    %v5979 = vmul.f32 %v5932, %v5955
    %v5980 = vmul.f32 %v5930, %v5956
    %5981 = vst [vmem:[#allocation5 + $0x100] sm:$0xff] %v5965
    %5982 = vst [vmem:[#allocation5 + $0x108] sm:$0xff] %v5966
    %5983 = vst [vmem:[#allocation5 + $0x110] sm:$0xff] %v5967
    %5984 = vst [vmem:[#allocation5 + $0x118] sm:$0xff] %v5968
    %5985 = vst [vmem:[#allocation5 + $0x120] sm:$0xff] %v5969
    %5986 = vst [vmem:[#allocation5 + $0x128] sm:$0xff] %v5970
    %5987 = vst [vmem:[#allocation5 + $0x130] sm:$0xff] %v5971
    %5988 = vst [vmem:[#allocation5 + $0x138] sm:$0xff] %v5972
    %5989 = vst [vmem:[#allocation5 + $0x140] sm:$0xff] %v5973
    %5990 = vst [vmem:[#allocation5 + $0x148] sm:$0xff] %v5974
    %5991 = vst [vmem:[#allocation5 + $0x150] sm:$0xff] %v5975
    %5992 = vst [vmem:[#allocation5 + $0x158] sm:$0xff] %v5976
    %5993 = vst [vmem:[#allocation5 + $0x160] sm:$0xff] %v5977
    %5994 = vst [vmem:[#allocation5 + $0x168] sm:$0xff] %v5978
    %5995 = vst [vmem:[#allocation5 + $0x170] sm:$0xff] %v5979
    %5996 = vst [vmem:[#allocation5 + $0x178] sm:$0xff] %v5980
    %v5997 = vld [vmem:[#allocation3 + $0x40] sm:$0xff]
    %v5998 = vld [vmem:[#allocation3 + $0x48] sm:$0xff]
    %v5999 = vld [vmem:[#allocation3 + $0x50] sm:$0xff]
    %v6000 = vld [vmem:[#allocation3 + $0x58] sm:$0xff]
    %v6001 = vld [vmem:[#allocation3 + $0x60] sm:$0xff]
    %v6002 = vld [vmem:[#allocation3 + $0x68] sm:$0xff]
    %v6003 = vld [vmem:[#allocation3 + $0x70] sm:$0xff]
    %v6004 = vld [vmem:[#allocation3 + $0x78] sm:$0xff]
    %v6005 = vld [vmem:[#allocation3 + $0xc0] sm:$0xff]
    %v6006 = vld [vmem:[#allocation3 + $0xc8] sm:$0xff]
    %v6007 = vld [vmem:[#allocation3 + $0xd0] sm:$0xff]
    %v6008 = vld [vmem:[#allocation3 + $0xd8] sm:$0xff]
    %v6009 = vld [vmem:[#allocation3 + $0xe0] sm:$0xff]
    %v6010 = vld [vmem:[#allocation3 + $0xe8] sm:$0xff]
    %v6011 = vld [vmem:[#allocation3 + $0xf0] sm:$0xff]
    %v6012 = vld [vmem:[#allocation3 + $0xf8] sm:$0xff]
    %6013 = vrot.lane.b32.xlu0 %v5997, 1
    %v6014 = vpop.permute.xlu0 %6013
    %6015 = vrot.lane.b32.xlu0 %v6005, 1
    %v6016 = vpop.permute.xlu0 %6015
    %6017 = vrot.lane.b32.xlu0 %v5998, 1
    %v6018 = vpop.permute.xlu0 %6017
    %6019 = vrot.lane.b32.xlu0 %v6006, 1
    %v6020 = vpop.permute.xlu0 %6019
    %6021 = vrot.lane.b32.xlu0 %v5999, 1
    %v6022 = vpop.permute.xlu0 %6021
    %6023 = vrot.lane.b32.xlu0 %v6007, 1
    %v6024 = vpop.permute.xlu0 %6023
    %6025 = vrot.lane.b32.xlu0 %v6000, 1
    %v6026 = vpop.permute.xlu0 %6025
    %6027 = vrot.lane.b32.xlu0 %v6008, 1
    %v6028 = vpop.permute.xlu0 %6027
    %6029 = vrot.lane.b32.xlu0 %v6001, 1
    %v6030 = vpop.permute.xlu0 %6029
    %6031 = vrot.lane.b32.xlu0 %v6009, 1
    %v6032 = vpop.permute.xlu0 %6031
    %6033 = vrot.lane.b32.xlu0 %v6002, 1
    %v6034 = vpop.permute.xlu0 %6033
    %6035 = vrot.lane.b32.xlu0 %v6010, 1
    %v6036 = vpop.permute.xlu0 %6035
    %6037 = vrot.lane.b32.xlu0 %v6003, 1
    %v6038 = vpop.permute.xlu0 %6037
    %6039 = vrot.lane.b32.xlu0 %v6011, 1
    %v6040 = vpop.permute.xlu0 %6039
    %6041 = vrot.lane.b32.xlu0 %v6004, 1
    %v6042 = vpop.permute.xlu0 %6041
    %6043 = vrot.lane.b32.xlu0 %v6012, 1
    %v6044 = vpop.permute.xlu0 %6043
    %v6045 = vsel %vm353, %v6038, %v6042
    %v6046 = vsel %vm353, %v6040, %v6044
    %v6047 = vsel %vm353, %v6034, %v6038
    %v6048 = vsel %vm353, %v6036, %v6040
    %v6049 = vsel %vm353, %v6030, %v6034
    %v6050 = vsel %vm353, %v6032, %v6036
    %v6051 = vsel %vm353, %v6026, %v6030
    %v6052 = vsel %vm353, %v6028, %v6032
    %v6053 = vsel %vm353, %v6022, %v6026
    %v6054 = vsel %vm353, %v6024, %v6028
    %v6055 = vsel %vm353, %v6018, %v6022
    %v6056 = vsel %vm353, %v6020, %v6024
    %v6057 = vsel %vm353, %v6014, %v6018
    %v6058 = vsel %vm353, %v6016, %v6020
    %v6059 = vsel %vm353, %v6042, %v6014
    %v6060 = vsel %vm353, %v6044, %v6016
    %v6061 = vld [vmem:[%s362] ss:$8 sm:$0xf]
    %v6062 = vld [vmem:[%s362] ss:$8 sm:$0xf0]
    %v6063 = vor.u32 %v6061, %v6062
    %v6065 = vperm.slane %v6063, 0
    %v6066 = vperm.slane %v6063, 1
    %v6067 = vperm.slane %v6063, 2
    %v6068 = vperm.slane %v6063, 3
    %v6069 = vperm.slane %v6063, 4
    %v6070 = vperm.slane %v6063, 5
    %v6071 = vperm.slane %v6063, 6
    %v6072 = vperm.slane %v6063, 7
    %v6081 = vmul.f32 %v6059, %v6065
    %v6082 = vmul.f32 %v6057, %v6066
    %v6083 = vmul.f32 %v6055, %v6067
    %v6084 = vmul.f32 %v6053, %v6068
    %v6085 = vmul.f32 %v6051, %v6069
    %v6086 = vmul.f32 %v6049, %v6070
    %v6087 = vmul.f32 %v6047, %v6071
    %v6088 = vmul.f32 %v6045, %v6072
    %v6089 = vmul.f32 %v6060, %v6065
    %v6090 = vmul.f32 %v6058, %v6066
    %v6091 = vmul.f32 %v6056, %v6067
    %v6092 = vmul.f32 %v6054, %v6068
    %v6093 = vmul.f32 %v6052, %v6069
    %v6094 = vmul.f32 %v6050, %v6070
    %v6095 = vmul.f32 %v6048, %v6071
    %v6096 = vmul.f32 %v6046, %v6072
    %6097 = vst [vmem:[#allocation5 + $0x180] sm:$0xff] %v6081
    %6098 = vst [vmem:[#allocation5 + $0x188] sm:$0xff] %v6082
    %6099 = vst [vmem:[#allocation5 + $0x190] sm:$0xff] %v6083
    %6100 = vst [vmem:[#allocation5 + $0x198] sm:$0xff] %v6084
    %6101 = vst [vmem:[#allocation5 + $0x1a0] sm:$0xff] %v6085
    %6102 = vst [vmem:[#allocation5 + $0x1a8] sm:$0xff] %v6086
    %6103 = vst [vmem:[#allocation5 + $0x1b0] sm:$0xff] %v6087
    %6104 = vst [vmem:[#allocation5 + $0x1b8] sm:$0xff] %v6088
    %6105 = vst [vmem:[#allocation5 + $0x1c0] sm:$0xff] %v6089
    %6106 = vst [vmem:[#allocation5 + $0x1c8] sm:$0xff] %v6090
    %6107 = vst [vmem:[#allocation5 + $0x1d0] sm:$0xff] %v6091
    %6108 = vst [vmem:[#allocation5 + $0x1d8] sm:$0xff] %v6092
    %6109 = vst [vmem:[#allocation5 + $0x1e0] sm:$0xff] %v6093
    %6110 = vst [vmem:[#allocation5 + $0x1e8] sm:$0xff] %v6094
    %6111 = vst [vmem:[#allocation5 + $0x1f0] sm:$0xff] %v6095
    %6112 = vst [vmem:[#allocation5 + $0x1f8] sm:$0xff] %v6096
    %v6113 = vld [vmem:[#allocation3 + $0x40] sm:$0xff]
    %v6114 = vld [vmem:[#allocation3 + $0x48] sm:$0xff]
    %v6115 = vld [vmem:[#allocation3 + $0x50] sm:$0xff]
    %v6116 = vld [vmem:[#allocation3 + $0x58] sm:$0xff]
    %v6117 = vld [vmem:[#allocation3 + $0x60] sm:$0xff]
    %v6118 = vld [vmem:[#allocation3 + $0x68] sm:$0xff]
    %v6119 = vld [vmem:[#allocation3 + $0x70] sm:$0xff]
    %v6120 = vld [vmem:[#allocation3 + $0x78] sm:$0xff]
    %v6121 = vld [vmem:[#allocation3 + $0xc0] sm:$0xff]
    %v6122 = vld [vmem:[#allocation3 + $0xc8] sm:$0xff]
    %v6123 = vld [vmem:[#allocation3 + $0xd0] sm:$0xff]
    %v6124 = vld [vmem:[#allocation3 + $0xd8] sm:$0xff]
    %v6125 = vld [vmem:[#allocation3 + $0xe0] sm:$0xff]
    %v6126 = vld [vmem:[#allocation3 + $0xe8] sm:$0xff]
    %v6127 = vld [vmem:[#allocation3 + $0xf0] sm:$0xff]
    %v6128 = vld [vmem:[#allocation3 + $0xf8] sm:$0xff]
    %v6129 = vld [vmem:[%s441] ss:$8 sm:$0xf]
    %v6130 = vld [vmem:[%s441] ss:$8 sm:$0xf0]
    %v6131 = vor.u32 %v6129, %v6130
    %v6133 = vperm.slane %v6131, 0
    %v6134 = vperm.slane %v6131, 1
    %v6135 = vperm.slane %v6131, 2
    %v6136 = vperm.slane %v6131, 3
    %v6137 = vperm.slane %v6131, 4
    %v6138 = vperm.slane %v6131, 5
    %v6139 = vperm.slane %v6131, 6
    %v6140 = vperm.slane %v6131, 7
    %v6149 = vmul.f32 %v6113, %v6133
    %v6150 = vmul.f32 %v6114, %v6134
    %v6151 = vmul.f32 %v6115, %v6135
    %v6152 = vmul.f32 %v6116, %v6136
    %v6153 = vmul.f32 %v6117, %v6137
    %v6154 = vmul.f32 %v6118, %v6138
    %v6155 = vmul.f32 %v6119, %v6139
    %v6156 = vmul.f32 %v6120, %v6140
    %v6157 = vmul.f32 %v6121, %v6133
    %v6158 = vmul.f32 %v6122, %v6134
    %v6159 = vmul.f32 %v6123, %v6135
    %v6160 = vmul.f32 %v6124, %v6136
    %v6161 = vmul.f32 %v6125, %v6137
    %v6162 = vmul.f32 %v6126, %v6138
    %v6163 = vmul.f32 %v6127, %v6139
    %v6164 = vmul.f32 %v6128, %v6140
    %6165 = vst [vmem:[#allocation5 + $0x200] sm:$0xff] %v6149
    %6166 = vst [vmem:[#allocation5 + $0x208] sm:$0xff] %v6150
    %6167 = vst [vmem:[#allocation5 + $0x210] sm:$0xff] %v6151
    %6168 = vst [vmem:[#allocation5 + $0x218] sm:$0xff] %v6152
    %6169 = vst [vmem:[#allocation5 + $0x220] sm:$0xff] %v6153
    %6170 = vst [vmem:[#allocation5 + $0x228] sm:$0xff] %v6154
    %6171 = vst [vmem:[#allocation5 + $0x230] sm:$0xff] %v6155
    %6172 = vst [vmem:[#allocation5 + $0x238] sm:$0xff] %v6156
    %6173 = vst [vmem:[#allocation5 + $0x240] sm:$0xff] %v6157
    %6174 = vst [vmem:[#allocation5 + $0x248] sm:$0xff] %v6158
    %6175 = vst [vmem:[#allocation5 + $0x250] sm:$0xff] %v6159
    %6176 = vst [vmem:[#allocation5 + $0x258] sm:$0xff] %v6160
    %6177 = vst [vmem:[#allocation5 + $0x260] sm:$0xff] %v6161
    %6178 = vst [vmem:[#allocation5 + $0x268] sm:$0xff] %v6162
    %6179 = vst [vmem:[#allocation5 + $0x270] sm:$0xff] %v6163
    %6180 = vst [vmem:[#allocation5 + $0x278] sm:$0xff] %v6164
    %v6181 = vld [vmem:[#allocation3 + $0x40] sm:$0xff]
    %v6182 = vld [vmem:[#allocation3 + $0x48] sm:$0xff]
    %v6183 = vld [vmem:[#allocation3 + $0x50] sm:$0xff]
    %v6184 = vld [vmem:[#allocation3 + $0x58] sm:$0xff]
    %v6185 = vld [vmem:[#allocation3 + $0x60] sm:$0xff]
    %v6186 = vld [vmem:[#allocation3 + $0x68] sm:$0xff]
    %v6187 = vld [vmem:[#allocation3 + $0x70] sm:$0xff]
    %v6188 = vld [vmem:[#allocation3 + $0x78] sm:$0xff]
    %v6189 = vld [vmem:[#allocation3 + $0xc0] sm:$0xff]
    %v6190 = vld [vmem:[#allocation3 + $0xc8] sm:$0xff]
    %v6191 = vld [vmem:[#allocation3 + $0xd0] sm:$0xff]
    %v6192 = vld [vmem:[#allocation3 + $0xd8] sm:$0xff]
    %v6193 = vld [vmem:[#allocation3 + $0xe0] sm:$0xff]
    %v6194 = vld [vmem:[#allocation3 + $0xe8] sm:$0xff]
    %v6195 = vld [vmem:[#allocation3 + $0xf0] sm:$0xff]
    %v6196 = vld [vmem:[#allocation3 + $0xf8] sm:$0xff]
    %6197 = vrot.lane.b32.xlu0 %v6181, 127
    %v6198 = vpop.permute.xlu0 %6197
    %6199 = vrot.lane.b32.xlu0 %v6189, 127
    %v6200 = vpop.permute.xlu0 %6199
    %6201 = vrot.lane.b32.xlu0 %v6182, 127
    %v6202 = vpop.permute.xlu0 %6201
    %6203 = vrot.lane.b32.xlu0 %v6190, 127
    %v6204 = vpop.permute.xlu0 %6203
    %6205 = vrot.lane.b32.xlu0 %v6183, 127
    %v6206 = vpop.permute.xlu0 %6205
    %6207 = vrot.lane.b32.xlu0 %v6191, 127
    %v6208 = vpop.permute.xlu0 %6207
    %6209 = vrot.lane.b32.xlu0 %v6184, 127
    %v6210 = vpop.permute.xlu0 %6209
    %6211 = vrot.lane.b32.xlu0 %v6192, 127
    %v6212 = vpop.permute.xlu0 %6211
    %6213 = vrot.lane.b32.xlu0 %v6185, 127
    %v6214 = vpop.permute.xlu0 %6213
    %6215 = vrot.lane.b32.xlu0 %v6193, 127
    %v6216 = vpop.permute.xlu0 %6215
    %6217 = vrot.lane.b32.xlu0 %v6186, 127
    %v6218 = vpop.permute.xlu0 %6217
    %6219 = vrot.lane.b32.xlu0 %v6194, 127
    %v6220 = vpop.permute.xlu0 %6219
    %6221 = vrot.lane.b32.xlu0 %v6187, 127
    %v6222 = vpop.permute.xlu0 %6221
    %6223 = vrot.lane.b32.xlu0 %v6195, 127
    %v6224 = vpop.permute.xlu0 %6223
    %6225 = vrot.lane.b32.xlu0 %v6188, 127
    %v6226 = vpop.permute.xlu0 %6225
    %6227 = vrot.lane.b32.xlu0 %v6196, 127
    %v6228 = vpop.permute.xlu0 %6227
    %v6229 = vsel %vm512, %v6222, %v6226
    %v6230 = vsel %vm512, %v6224, %v6228
    %v6231 = vsel %vm512, %v6218, %v6222
    %v6232 = vsel %vm512, %v6220, %v6224
    %v6233 = vsel %vm512, %v6214, %v6218
    %v6234 = vsel %vm512, %v6216, %v6220
    %v6235 = vsel %vm512, %v6210, %v6214
    %v6236 = vsel %vm512, %v6212, %v6216
    %v6237 = vsel %vm512, %v6206, %v6210
    %v6238 = vsel %vm512, %v6208, %v6212
    %v6239 = vsel %vm512, %v6202, %v6206
    %v6240 = vsel %vm512, %v6204, %v6208
    %v6241 = vsel %vm512, %v6198, %v6202
    %v6242 = vsel %vm512, %v6200, %v6204
    %v6243 = vsel %vm512, %v6226, %v6198
    %v6244 = vsel %vm512, %v6228, %v6200
    %v6245 = vld [vmem:[%s521] ss:$8 sm:$0xf]
    %v6246 = vld [vmem:[%s521] ss:$8 sm:$0xf0]
    %v6247 = vor.u32 %v6245, %v6246
    %v6249 = vperm.slane %v6247, 0
    %v6250 = vperm.slane %v6247, 1
    %v6251 = vperm.slane %v6247, 2
    %v6252 = vperm.slane %v6247, 3
    %v6253 = vperm.slane %v6247, 4
    %v6254 = vperm.slane %v6247, 5
    %v6255 = vperm.slane %v6247, 6
    %v6256 = vperm.slane %v6247, 7
    %v6265 = vmul.f32 %v6241, %v6249
    %v6266 = vmul.f32 %v6239, %v6250
    %v6267 = vmul.f32 %v6237, %v6251
    %v6268 = vmul.f32 %v6235, %v6252
    %v6269 = vmul.f32 %v6233, %v6253
    %v6270 = vmul.f32 %v6231, %v6254
    %v6271 = vmul.f32 %v6229, %v6255
    %v6272 = vmul.f32 %v6243, %v6256
    %v6273 = vmul.f32 %v6242, %v6249
    %v6274 = vmul.f32 %v6240, %v6250
    %v6275 = vmul.f32 %v6238, %v6251
    %v6276 = vmul.f32 %v6236, %v6252
    %v6277 = vmul.f32 %v6234, %v6253
    %v6278 = vmul.f32 %v6232, %v6254
    %v6279 = vmul.f32 %v6230, %v6255
    %v6280 = vmul.f32 %v6244, %v6256
    %6281 = vst [vmem:[#allocation5 + $0x280] sm:$0xff] %v6265
    %6282 = vst [vmem:[#allocation5 + $0x288] sm:$0xff] %v6266
    %6283 = vst [vmem:[#allocation5 + $0x290] sm:$0xff] %v6267
    %6284 = vst [vmem:[#allocation5 + $0x298] sm:$0xff] %v6268
    %6285 = vst [vmem:[#allocation5 + $0x2a0] sm:$0xff] %v6269
    %6286 = vst [vmem:[#allocation5 + $0x2a8] sm:$0xff] %v6270
    %6287 = vst [vmem:[#allocation5 + $0x2b0] sm:$0xff] %v6271
    %6288 = vst [vmem:[#allocation5 + $0x2b8] sm:$0xff] %v6272
    %6289 = vst [vmem:[#allocation5 + $0x2c0] sm:$0xff] %v6273
    %6290 = vst [vmem:[#allocation5 + $0x2c8] sm:$0xff] %v6274
    %6291 = vst [vmem:[#allocation5 + $0x2d0] sm:$0xff] %v6275
    %6292 = vst [vmem:[#allocation5 + $0x2d8] sm:$0xff] %v6276
    %6293 = vst [vmem:[#allocation5 + $0x2e0] sm:$0xff] %v6277
    %6294 = vst [vmem:[#allocation5 + $0x2e8] sm:$0xff] %v6278
    %6295 = vst [vmem:[#allocation5 + $0x2f0] sm:$0xff] %v6279
    %6296 = vst [vmem:[#allocation5 + $0x2f8] sm:$0xff] %v6280
    %v6297 = vld [vmem:[#allocation3 + $0x40] sm:$0xff]
    %v6298 = vld [vmem:[#allocation3 + $0x48] sm:$0xff]
    %v6299 = vld [vmem:[#allocation3 + $0x50] sm:$0xff]
    %v6300 = vld [vmem:[#allocation3 + $0x58] sm:$0xff]
    %v6301 = vld [vmem:[#allocation3 + $0x60] sm:$0xff]
    %v6302 = vld [vmem:[#allocation3 + $0x68] sm:$0xff]
    %v6303 = vld [vmem:[#allocation3 + $0x70] sm:$0xff]
    %v6304 = vld [vmem:[#allocation3 + $0x78] sm:$0xff]
    %v6305 = vld [vmem:[#allocation3 + $0xc0] sm:$0xff]
    %v6306 = vld [vmem:[#allocation3 + $0xc8] sm:$0xff]
    %v6307 = vld [vmem:[#allocation3 + $0xd0] sm:$0xff]
    %v6308 = vld [vmem:[#allocation3 + $0xd8] sm:$0xff]
    %v6309 = vld [vmem:[#allocation3 + $0xe0] sm:$0xff]
    %v6310 = vld [vmem:[#allocation3 + $0xe8] sm:$0xff]
    %v6311 = vld [vmem:[#allocation3 + $0xf0] sm:$0xff]
    %v6312 = vld [vmem:[#allocation3 + $0xf8] sm:$0xff]
    %6313 = vrot.lane.b32.xlu0 %v6297, 97
    %v6314 = vpop.permute.xlu0 %6313
    %6315 = vrot.lane.b32.xlu0 %v6305, 97
    %v6316 = vpop.permute.xlu0 %6315
    %6317 = vrot.lane.b32.xlu0 %v6298, 97
    %v6318 = vpop.permute.xlu0 %6317
    %6319 = vrot.lane.b32.xlu0 %v6306, 97
    %v6320 = vpop.permute.xlu0 %6319
    %6321 = vrot.lane.b32.xlu0 %v6299, 97
    %v6322 = vpop.permute.xlu0 %6321
    %6323 = vrot.lane.b32.xlu0 %v6307, 97
    %v6324 = vpop.permute.xlu0 %6323
    %6325 = vrot.lane.b32.xlu0 %v6300, 97
    %v6326 = vpop.permute.xlu0 %6325
    %6327 = vrot.lane.b32.xlu0 %v6308, 97
    %v6328 = vpop.permute.xlu0 %6327
    %6329 = vrot.lane.b32.xlu0 %v6301, 97
    %v6330 = vpop.permute.xlu0 %6329
    %6331 = vrot.lane.b32.xlu0 %v6309, 97
    %v6332 = vpop.permute.xlu0 %6331
    %6333 = vrot.lane.b32.xlu0 %v6302, 97
    %v6334 = vpop.permute.xlu0 %6333
    %6335 = vrot.lane.b32.xlu0 %v6310, 97
    %v6336 = vpop.permute.xlu0 %6335
    %6337 = vrot.lane.b32.xlu0 %v6303, 97
    %v6338 = vpop.permute.xlu0 %6337
    %6339 = vrot.lane.b32.xlu0 %v6311, 97
    %v6340 = vpop.permute.xlu0 %6339
    %6341 = vrot.lane.b32.xlu0 %v6304, 97
    %v6342 = vpop.permute.xlu0 %6341
    %6343 = vrot.lane.b32.xlu0 %v6312, 97
    %v6344 = vpop.permute.xlu0 %6343
    %v6345 = vsel %vm624, %v6338, %v6342
    %v6346 = vsel %vm624, %v6340, %v6344
    %v6347 = vsel %vm624, %v6334, %v6338
    %v6348 = vsel %vm624, %v6336, %v6340
    %v6349 = vsel %vm624, %v6330, %v6334
    %v6350 = vsel %vm624, %v6332, %v6336
    %v6351 = vsel %vm624, %v6326, %v6330
    %v6352 = vsel %vm624, %v6328, %v6332
    %v6353 = vsel %vm624, %v6322, %v6326
    %v6354 = vsel %vm624, %v6324, %v6328
    %v6355 = vsel %vm624, %v6318, %v6322
    %v6356 = vsel %vm624, %v6320, %v6324
    %v6357 = vsel %vm624, %v6314, %v6318
    %v6358 = vsel %vm624, %v6316, %v6320
    %v6359 = vsel %vm624, %v6342, %v6314
    %v6360 = vsel %vm624, %v6344, %v6316
    %v6361 = vld [vmem:[%s633] ss:$8 sm:$0xf]
    %v6362 = vld [vmem:[%s633] ss:$8 sm:$0xf0]
    %v6363 = vor.u32 %v6361, %v6362
    %v6365 = vperm.slane %v6363, 0
    %v6366 = vperm.slane %v6363, 1
    %v6367 = vperm.slane %v6363, 2
    %v6368 = vperm.slane %v6363, 3
    %v6369 = vperm.slane %v6363, 4
    %v6370 = vperm.slane %v6363, 5
    %v6371 = vperm.slane %v6363, 6
    %v6372 = vperm.slane %v6363, 7
    %v6381 = vmul.f32 %v6357, %v6365
    %v6382 = vmul.f32 %v6355, %v6366
    %v6383 = vmul.f32 %v6353, %v6367
    %v6384 = vmul.f32 %v6351, %v6368
    %v6385 = vmul.f32 %v6349, %v6369
    %v6386 = vmul.f32 %v6347, %v6370
    %v6387 = vmul.f32 %v6345, %v6371
    %v6388 = vmul.f32 %v6359, %v6372
    %v6389 = vmul.f32 %v6358, %v6365
    %v6390 = vmul.f32 %v6356, %v6366
    %v6391 = vmul.f32 %v6354, %v6367
    %v6392 = vmul.f32 %v6352, %v6368
    %v6393 = vmul.f32 %v6350, %v6369
    %v6394 = vmul.f32 %v6348, %v6370
    %v6395 = vmul.f32 %v6346, %v6371
    %v6396 = vmul.f32 %v6360, %v6372
    %6397 = vst [vmem:[#allocation5 + $0x300] sm:$0xff] %v6381
    %6398 = vst [vmem:[#allocation5 + $0x308] sm:$0xff] %v6382
    %6399 = vst [vmem:[#allocation5 + $0x310] sm:$0xff] %v6383
    %6400 = vst [vmem:[#allocation5 + $0x318] sm:$0xff] %v6384
    %6401 = vst [vmem:[#allocation5 + $0x320] sm:$0xff] %v6385
    %6402 = vst [vmem:[#allocation5 + $0x328] sm:$0xff] %v6386
    %6403 = vst [vmem:[#allocation5 + $0x330] sm:$0xff] %v6387
    %6404 = vst [vmem:[#allocation5 + $0x338] sm:$0xff] %v6388
    %6405 = vst [vmem:[#allocation5 + $0x340] sm:$0xff] %v6389
    %6406 = vst [vmem:[#allocation5 + $0x348] sm:$0xff] %v6390
    %6407 = vst [vmem:[#allocation5 + $0x350] sm:$0xff] %v6391
    %6408 = vst [vmem:[#allocation5 + $0x358] sm:$0xff] %v6392
    %6409 = vst [vmem:[#allocation5 + $0x360] sm:$0xff] %v6393
    %6410 = vst [vmem:[#allocation5 + $0x368] sm:$0xff] %v6394
    %6411 = vst [vmem:[#allocation5 + $0x370] sm:$0xff] %v6395
    %6412 = vst [vmem:[#allocation5 + $0x378] sm:$0xff] %v6396
    %v6413 = vld [vmem:[#allocation3 + $0x40] sm:$0xff]
    %v6414 = vld [vmem:[#allocation3 + $0x48] sm:$0xff]
    %v6415 = vld [vmem:[#allocation3 + $0x50] sm:$0xff]
    %v6416 = vld [vmem:[#allocation3 + $0x58] sm:$0xff]
    %v6417 = vld [vmem:[#allocation3 + $0x60] sm:$0xff]
    %v6418 = vld [vmem:[#allocation3 + $0x68] sm:$0xff]
    %v6419 = vld [vmem:[#allocation3 + $0x70] sm:$0xff]
    %v6420 = vld [vmem:[#allocation3 + $0x78] sm:$0xff]
    %v6421 = vld [vmem:[#allocation3 + $0xc0] sm:$0xff]
    %v6422 = vld [vmem:[#allocation3 + $0xc8] sm:$0xff]
    %v6423 = vld [vmem:[#allocation3 + $0xd0] sm:$0xff]
    %v6424 = vld [vmem:[#allocation3 + $0xd8] sm:$0xff]
    %v6425 = vld [vmem:[#allocation3 + $0xe0] sm:$0xff]
    %v6426 = vld [vmem:[#allocation3 + $0xe8] sm:$0xff]
    %v6427 = vld [vmem:[#allocation3 + $0xf0] sm:$0xff]
    %v6428 = vld [vmem:[#allocation3 + $0xf8] sm:$0xff]
    %6429 = vrot.lane.b32.xlu0 %v6413, 96
    %v6430 = vpop.permute.xlu0 %6429
    %6431 = vrot.lane.b32.xlu0 %v6421, 96
    %v6432 = vpop.permute.xlu0 %6431
    %6433 = vrot.lane.b32.xlu0 %v6414, 96
    %v6434 = vpop.permute.xlu0 %6433
    %6435 = vrot.lane.b32.xlu0 %v6422, 96
    %v6436 = vpop.permute.xlu0 %6435
    %6437 = vrot.lane.b32.xlu0 %v6415, 96
    %v6438 = vpop.permute.xlu0 %6437
    %6439 = vrot.lane.b32.xlu0 %v6423, 96
    %v6440 = vpop.permute.xlu0 %6439
    %6441 = vrot.lane.b32.xlu0 %v6416, 96
    %v6442 = vpop.permute.xlu0 %6441
    %6443 = vrot.lane.b32.xlu0 %v6424, 96
    %v6444 = vpop.permute.xlu0 %6443
    %6445 = vrot.lane.b32.xlu0 %v6417, 96
    %v6446 = vpop.permute.xlu0 %6445
    %6447 = vrot.lane.b32.xlu0 %v6425, 96
    %v6448 = vpop.permute.xlu0 %6447
    %6449 = vrot.lane.b32.xlu0 %v6418, 96
    %v6450 = vpop.permute.xlu0 %6449
    %6451 = vrot.lane.b32.xlu0 %v6426, 96
    %v6452 = vpop.permute.xlu0 %6451
    %6453 = vrot.lane.b32.xlu0 %v6419, 96
    %v6454 = vpop.permute.xlu0 %6453
    %6455 = vrot.lane.b32.xlu0 %v6427, 96
    %v6456 = vpop.permute.xlu0 %6455
    %6457 = vrot.lane.b32.xlu0 %v6420, 96
    %v6458 = vpop.permute.xlu0 %6457
    %6459 = vrot.lane.b32.xlu0 %v6428, 96
    %v6460 = vpop.permute.xlu0 %6459
    %v6461 = vsel %vm728, %v6454, %v6458
    %v6462 = vsel %vm728, %v6456, %v6460
    %v6463 = vsel %vm728, %v6450, %v6454
    %v6464 = vsel %vm728, %v6452, %v6456
    %v6465 = vsel %vm728, %v6446, %v6450
    %v6466 = vsel %vm728, %v6448, %v6452
    %v6467 = vsel %vm728, %v6442, %v6446
    %v6468 = vsel %vm728, %v6444, %v6448
    %v6469 = vsel %vm728, %v6438, %v6442
    %v6470 = vsel %vm728, %v6440, %v6444
    %v6471 = vsel %vm728, %v6434, %v6438
    %v6472 = vsel %vm728, %v6436, %v6440
    %v6473 = vsel %vm728, %v6430, %v6434
    %v6474 = vsel %vm728, %v6432, %v6436
    %v6475 = vsel %vm728, %v6458, %v6430
    %v6476 = vsel %vm728, %v6460, %v6432
    %v6477 = vld [vmem:[%s737] ss:$8 sm:$0xf]
    %v6478 = vld [vmem:[%s737] ss:$8 sm:$0xf0]
    %v6479 = vor.u32 %v6477, %v6478
    %v6481 = vperm.slane %v6479, 0
    %v6482 = vperm.slane %v6479, 1
    %v6483 = vperm.slane %v6479, 2
    %v6484 = vperm.slane %v6479, 3
    %v6485 = vperm.slane %v6479, 4
    %v6486 = vperm.slane %v6479, 5
    %v6487 = vperm.slane %v6479, 6
    %v6488 = vperm.slane %v6479, 7
    %v6497 = vmul.f32 %v6473, %v6481
    %v6498 = vmul.f32 %v6471, %v6482
    %v6499 = vmul.f32 %v6469, %v6483
    %v6500 = vmul.f32 %v6467, %v6484
    %v6501 = vmul.f32 %v6465, %v6485
    %v6502 = vmul.f32 %v6463, %v6486
    %v6503 = vmul.f32 %v6461, %v6487
    %v6504 = vmul.f32 %v6475, %v6488
    %v6505 = vmul.f32 %v6474, %v6481
    %v6506 = vmul.f32 %v6472, %v6482
    %v6507 = vmul.f32 %v6470, %v6483
    %v6508 = vmul.f32 %v6468, %v6484
    %v6509 = vmul.f32 %v6466, %v6485
    %v6510 = vmul.f32 %v6464, %v6486
    %v6511 = vmul.f32 %v6462, %v6487
    %v6512 = vmul.f32 %v6476, %v6488
    %6513 = vst [vmem:[#allocation5 + $0x380] sm:$0xff] %v6497
    %6514 = vst [vmem:[#allocation5 + $0x388] sm:$0xff] %v6498
    %6515 = vst [vmem:[#allocation5 + $0x390] sm:$0xff] %v6499
    %6516 = vst [vmem:[#allocation5 + $0x398] sm:$0xff] %v6500
    %6517 = vst [vmem:[#allocation5 + $0x3a0] sm:$0xff] %v6501
    %6518 = vst [vmem:[#allocation5 + $0x3a8] sm:$0xff] %v6502
    %6519 = vst [vmem:[#allocation5 + $0x3b0] sm:$0xff] %v6503
    %6520 = vst [vmem:[#allocation5 + $0x3b8] sm:$0xff] %v6504
    %6521 = vst [vmem:[#allocation5 + $0x3c0] sm:$0xff] %v6505
    %6522 = vst [vmem:[#allocation5 + $0x3c8] sm:$0xff] %v6506
    %6523 = vst [vmem:[#allocation5 + $0x3d0] sm:$0xff] %v6507
    %6524 = vst [vmem:[#allocation5 + $0x3d8] sm:$0xff] %v6508
    %6525 = vst [vmem:[#allocation5 + $0x3e0] sm:$0xff] %v6509
    %6526 = vst [vmem:[#allocation5 + $0x3e8] sm:$0xff] %v6510
    %6527 = vst [vmem:[#allocation5 + $0x3f0] sm:$0xff] %v6511
    %6528 = vst [vmem:[#allocation5 + $0x3f8] sm:$0xff] %v6512
    %v6529 = vld [vmem:[#allocation3 + $0x40] sm:$0xff]
    %v6530 = vld [vmem:[#allocation3 + $0x48] sm:$0xff]
    %v6531 = vld [vmem:[#allocation3 + $0x50] sm:$0xff]
    %v6532 = vld [vmem:[#allocation3 + $0x58] sm:$0xff]
    %v6533 = vld [vmem:[#allocation3 + $0x60] sm:$0xff]
    %v6534 = vld [vmem:[#allocation3 + $0x68] sm:$0xff]
    %v6535 = vld [vmem:[#allocation3 + $0x70] sm:$0xff]
    %v6536 = vld [vmem:[#allocation3 + $0x78] sm:$0xff]
    %v6537 = vld [vmem:[#allocation3 + $0xc0] sm:$0xff]
    %v6538 = vld [vmem:[#allocation3 + $0xc8] sm:$0xff]
    %v6539 = vld [vmem:[#allocation3 + $0xd0] sm:$0xff]
    %v6540 = vld [vmem:[#allocation3 + $0xd8] sm:$0xff]
    %v6541 = vld [vmem:[#allocation3 + $0xe0] sm:$0xff]
    %v6542 = vld [vmem:[#allocation3 + $0xe8] sm:$0xff]
    %v6543 = vld [vmem:[#allocation3 + $0xf0] sm:$0xff]
    %v6544 = vld [vmem:[#allocation3 + $0xf8] sm:$0xff]
    %6545 = vrot.lane.b32.xlu0 %v6529, 95
    %v6546 = vpop.permute.xlu0 %6545
    %6547 = vrot.lane.b32.xlu0 %v6537, 95
    %v6548 = vpop.permute.xlu0 %6547
    %6549 = vrot.lane.b32.xlu0 %v6530, 95
    %v6550 = vpop.permute.xlu0 %6549
    %6551 = vrot.lane.b32.xlu0 %v6538, 95
    %v6552 = vpop.permute.xlu0 %6551
    %6553 = vrot.lane.b32.xlu0 %v6531, 95
    %v6554 = vpop.permute.xlu0 %6553
    %6555 = vrot.lane.b32.xlu0 %v6539, 95
    %v6556 = vpop.permute.xlu0 %6555
    %6557 = vrot.lane.b32.xlu0 %v6532, 95
    %v6558 = vpop.permute.xlu0 %6557
    %6559 = vrot.lane.b32.xlu0 %v6540, 95
    %v6560 = vpop.permute.xlu0 %6559
    %6561 = vrot.lane.b32.xlu0 %v6533, 95
    %v6562 = vpop.permute.xlu0 %6561
    %6563 = vrot.lane.b32.xlu0 %v6541, 95
    %v6564 = vpop.permute.xlu0 %6563
    %6565 = vrot.lane.b32.xlu0 %v6534, 95
    %v6566 = vpop.permute.xlu0 %6565
    %6567 = vrot.lane.b32.xlu0 %v6542, 95
    %v6568 = vpop.permute.xlu0 %6567
    %6569 = vrot.lane.b32.xlu0 %v6535, 95
    %v6570 = vpop.permute.xlu0 %6569
    %6571 = vrot.lane.b32.xlu0 %v6543, 95
    %v6572 = vpop.permute.xlu0 %6571
    %6573 = vrot.lane.b32.xlu0 %v6536, 95
    %v6574 = vpop.permute.xlu0 %6573
    %6575 = vrot.lane.b32.xlu0 %v6544, 95
    %v6576 = vpop.permute.xlu0 %6575
    %v6577 = vsel %vm832, %v6570, %v6574
    %v6578 = vsel %vm832, %v6572, %v6576
    %v6579 = vsel %vm832, %v6566, %v6570
    %v6580 = vsel %vm832, %v6568, %v6572
    %v6581 = vsel %vm832, %v6562, %v6566
    %v6582 = vsel %vm832, %v6564, %v6568
    %v6583 = vsel %vm832, %v6558, %v6562
    %v6584 = vsel %vm832, %v6560, %v6564
    %v6585 = vsel %vm832, %v6554, %v6558
    %v6586 = vsel %vm832, %v6556, %v6560
    %v6587 = vsel %vm832, %v6550, %v6554
    %v6588 = vsel %vm832, %v6552, %v6556
    %v6589 = vsel %vm832, %v6546, %v6550
    %v6590 = vsel %vm832, %v6548, %v6552
    %v6591 = vsel %vm832, %v6574, %v6546
    %v6592 = vsel %vm832, %v6576, %v6548
    %v6593 = vld [vmem:[%s841] ss:$8 sm:$0xf]
    %v6594 = vld [vmem:[%s841] ss:$8 sm:$0xf0]
    %v6595 = vor.u32 %v6593, %v6594
    %v6597 = vperm.slane %v6595, 0
    %v6598 = vperm.slane %v6595, 1
    %v6599 = vperm.slane %v6595, 2
    %v6600 = vperm.slane %v6595, 3
    %v6601 = vperm.slane %v6595, 4
    %v6602 = vperm.slane %v6595, 5
    %v6603 = vperm.slane %v6595, 6
    %v6604 = vperm.slane %v6595, 7
    %v6613 = vmul.f32 %v6589, %v6597
    %v6614 = vmul.f32 %v6587, %v6598
    %v6615 = vmul.f32 %v6585, %v6599
    %v6616 = vmul.f32 %v6583, %v6600
    %v6617 = vmul.f32 %v6581, %v6601
    %v6618 = vmul.f32 %v6579, %v6602
    %v6619 = vmul.f32 %v6577, %v6603
    %v6620 = vmul.f32 %v6591, %v6604
    %v6621 = vmul.f32 %v6590, %v6597
    %v6622 = vmul.f32 %v6588, %v6598
    %v6623 = vmul.f32 %v6586, %v6599
    %v6624 = vmul.f32 %v6584, %v6600
    %v6625 = vmul.f32 %v6582, %v6601
    %v6626 = vmul.f32 %v6580, %v6602
    %v6627 = vmul.f32 %v6578, %v6603
    %v6628 = vmul.f32 %v6592, %v6604
    %6629 = vst [vmem:[#allocation5 + $0x400] sm:$0xff] %v6613
    %6630 = vst [vmem:[#allocation5 + $0x408] sm:$0xff] %v6614
    %6631 = vst [vmem:[#allocation5 + $0x410] sm:$0xff] %v6615
    %6632 = vst [vmem:[#allocation5 + $0x418] sm:$0xff] %v6616
    %6633 = vst [vmem:[#allocation5 + $0x420] sm:$0xff] %v6617
    %6634 = vst [vmem:[#allocation5 + $0x428] sm:$0xff] %v6618
    %6635 = vst [vmem:[#allocation5 + $0x430] sm:$0xff] %v6619
    %6636 = vst [vmem:[#allocation5 + $0x438] sm:$0xff] %v6620
    %6637 = vst [vmem:[#allocation5 + $0x440] sm:$0xff] %v6621
    %6638 = vst [vmem:[#allocation5 + $0x448] sm:$0xff] %v6622
    %6639 = vst [vmem:[#allocation5 + $0x450] sm:$0xff] %v6623
    %6640 = vst [vmem:[#allocation5 + $0x458] sm:$0xff] %v6624
    %6641 = vst [vmem:[#allocation5 + $0x460] sm:$0xff] %v6625
    %6642 = vst [vmem:[#allocation5 + $0x468] sm:$0xff] %v6626
    %6643 = vst [vmem:[#allocation5 + $0x470] sm:$0xff] %v6627
    %6644 = vst [vmem:[#allocation5 + $0x478] sm:$0xff] %v6628
    %v6645 = vld [vmem:[#allocation5] sm:$0xff]
    %v6646 = vld [vmem:[#allocation5 + $0x8] sm:$0xff]
    %v6647 = vld [vmem:[#allocation5 + $0x40] sm:$0xff]
    %v6648 = vld [vmem:[#allocation5 + $0x48] sm:$0xff]
    %v6649 = vld [vmem:[#allocation5 + $0x80] sm:$0xff]
    %v6650 = vld [vmem:[#allocation5 + $0x88] sm:$0xff]
    %v6651 = vld [vmem:[#allocation5 + $0xc0] sm:$0xff]
    %v6652 = vld [vmem:[#allocation5 + $0xc8] sm:$0xff]
    %v6653 = vld [vmem:[#allocation5 + $0x100] sm:$0xff]
    %v6654 = vld [vmem:[#allocation5 + $0x108] sm:$0xff]
    %v6655 = vld [vmem:[#allocation5 + $0x140] sm:$0xff]
    %v6656 = vld [vmem:[#allocation5 + $0x148] sm:$0xff]
    %v6657 = vld [vmem:[#allocation5 + $0x180] sm:$0xff]
    %v6658 = vld [vmem:[#allocation5 + $0x188] sm:$0xff]
    %v6659 = vld [vmem:[#allocation5 + $0x1c0] sm:$0xff]
    %v6660 = vld [vmem:[#allocation5 + $0x1c8] sm:$0xff]
    %v6661 = vld [vmem:[#allocation5 + $0x200] sm:$0xff]
    %v6662 = vld [vmem:[#allocation5 + $0x208] sm:$0xff]
    %v6663 = vld [vmem:[#allocation5 + $0x240] sm:$0xff]
    %v6664 = vld [vmem:[#allocation5 + $0x248] sm:$0xff]
    %v6665 = vld [vmem:[#allocation5 + $0x280] sm:$0xff]
    %v6666 = vld [vmem:[#allocation5 + $0x288] sm:$0xff]
    %v6667 = vld [vmem:[#allocation5 + $0x2c0] sm:$0xff]
    %v6668 = vld [vmem:[#allocation5 + $0x2c8] sm:$0xff]
    %v6669 = vld [vmem:[#allocation5 + $0x300] sm:$0xff]
    %v6670 = vld [vmem:[#allocation5 + $0x308] sm:$0xff]
    %v6671 = vld [vmem:[#allocation5 + $0x340] sm:$0xff]
    %v6672 = vld [vmem:[#allocation5 + $0x348] sm:$0xff]
    %v6673 = vld [vmem:[#allocation5 + $0x380] sm:$0xff]
    %v6674 = vld [vmem:[#allocation5 + $0x388] sm:$0xff]
    %v6675 = vld [vmem:[#allocation5 + $0x3c0] sm:$0xff]
    %v6676 = vld [vmem:[#allocation5 + $0x3c8] sm:$0xff]
    %v6677 = vld [vmem:[#allocation5 + $0x400] sm:$0xff]
    %v6678 = vld [vmem:[#allocation5 + $0x408] sm:$0xff]
    %v6679 = vld [vmem:[#allocation5 + $0x440] sm:$0xff]
    %v6680 = vld [vmem:[#allocation5 + $0x448] sm:$0xff]
    %v6681 = vld [vmem:[%s4] sm:$0xff]
    %v6682 = vld [vmem:[%s4 + $0x8] sm:$0xff]
    %v6683 = vld [vmem:[%s4 + $0x10] sm:$0xff]
    %v6684 = vld [vmem:[%s4 + $0x18] sm:$0xff]
    %v6685 = vpack.c.bf16 %v6647, %v6645
    %v6686 = vpack.c.bf16 %v6648, %v6646
    %v6687 = vpack.c.bf16 %v6651, %v6649
    %v6688 = vpack.c.bf16 %v6652, %v6650
    %v6689 = vpack.c.bf16 %v6655, %v6653
    %v6690 = vpack.c.bf16 %v6656, %v6654
    %v6691 = vpack.c.bf16 %v6659, %v6657
    %v6692 = vpack.c.bf16 %v6660, %v6658
    %v6693 = vpack.c.bf16 %v6663, %v6661
    %v6694 = vpack.c.bf16 %v6664, %v6662
    %v6695 = vpack.c.bf16 %v6667, %v6665
    %v6696 = vpack.c.bf16 %v6668, %v6666
    %v6697 = vpack.c.bf16 %v6671, %v6669
    %v6698 = vpack.c.bf16 %v6672, %v6670
    %v6699 = vpack.c.bf16 %v6675, %v6673
    %v6700 = vpack.c.bf16 %v6676, %v6674
    %v6701 = vpack.c.bf16 %v6679, %v6677
    %v6702 = vpack.c.bf16 %v6680, %v6678
    %v6707 = vunpack.c.l.b16 %v6681
    %v6708 = vunpack.c.h.b16 %v6681
    %v6709 = vunpack.c.l.b16 %v6682
    %v6710 = vunpack.c.h.b16 %v6682
    %v6711 = vunpack.c.l.b16 %v6683
    %v6712 = vunpack.c.h.b16 %v6683
    %v6713 = vunpack.c.l.b16 %v6684
    %v6714 = vunpack.c.h.b16 %v6684
    %v6715 = vpack.c.b16 %v6709, %v6707
    %v6716 = vpack.c.b16 %v6710, %v6708
    %v6717 = vpack.c.b16 %v6713, %v6711
    %v6718 = vpack.c.b16 %v6714, %v6712
    %v6722 = vsel %vm5028, %v6716, 0
    %v6725 = vsel %vm5028, %v6718, 0
    %6727 = vmatpush.bf16.msra.mxu0 %v6699
    %6728 = vmatpush.bf16.msra.mxu0 %v6697
    %6729 = vmatpush.bf16.msra.mxu0 %v6695
    %6730 = vmatpush.bf16.msra.mxu0 %v6693
    %6731 = vmatpush.bf16.msra.mxu0 %v6691
    %6732 = vmatpush.bf16.msra.mxu0 %v6689
    %6733 = vmatpush.bf16.msra.mxu0 %v6687
    %6734 = vmatpush.bf16.msra.mxu0 %v6685
    %6735 = vmatmul.bf16.gmra.mxu0 %v6715
    %v6736 = vpop.f32.mrf.mxu0
    %v6737 = vadd.f32 0.0, %v6736
    %v6738 = vpop.f32.mrf.mxu0
    %v6739 = vadd.f32 0.0, %v6738
    %6740 = vmatmul.bf16.gmra.mxu0 %v6717
    %v6741 = vpop.f32.mrf.mxu0
    %v6742 = vadd.f32 0.0, %v6741
    %v6743 = vpop.f32.mrf.mxu0
    %v6744 = vadd.f32 0.0, %v6743
    %6745 = vdwg.mxu0
    %6746 = vmatpush.bf16.msra.mxu0 0
    %6747 = vmatpush.bf16.msra.mxu0 0
    %6748 = vmatpush.bf16.msra.mxu0 0
    %6749 = vmatpush.bf16.msra.mxu0 0
    %6750 = vmatpush.bf16.msra.mxu0 0
    %6751 = vmatpush.bf16.msra.mxu0 0
    %6752 = vmatpush.bf16.msra.mxu0 0
    %6753 = vmatpush.bf16.msra.mxu0 %v6701
    %6754 = vmatmul.bf16.gmra.mxu0 %v6722
    %v6755 = vpop.f32.mrf.mxu0
    %v6756 = vadd.f32 %v6737, %v6755
    %v6757 = vpop.f32.mrf.mxu0
    %v6758 = vadd.f32 %v6739, %v6757
    %6759 = vmatmul.bf16.gmra.mxu0 %v6725
    %v6760 = vpop.f32.mrf.mxu0
    %v6761 = vadd.f32 %v6742, %v6760
    %v6762 = vpop.f32.mrf.mxu0
    %v6763 = vadd.f32 %v6744, %v6762
    %6764 = vdwg.mxu0
    %6765 = vmatpush.bf16.msra.mxu0 %v6700
    %6766 = vmatpush.bf16.msra.mxu0 %v6698
    %6767 = vmatpush.bf16.msra.mxu0 %v6696
    %6768 = vmatpush.bf16.msra.mxu0 %v6694
    %6769 = vmatpush.bf16.msra.mxu0 %v6692
    %6770 = vmatpush.bf16.msra.mxu0 %v6690
    %6771 = vmatpush.bf16.msra.mxu0 %v6688
    %6772 = vmatpush.bf16.msra.mxu0 %v6686
    %6773 = vmatmul.bf16.gmra.mxu0 %v6715
    %v6774 = vpop.f32.mrf.mxu0
    %v6775 = vadd.f32 0.0, %v6774
    %v6776 = vpop.f32.mrf.mxu0
    %v6777 = vadd.f32 0.0, %v6776
    %6778 = vmatmul.bf16.gmra.mxu0 %v6717
    %v6779 = vpop.f32.mrf.mxu0
    %v6780 = vadd.f32 0.0, %v6779
    %v6781 = vpop.f32.mrf.mxu0
    %v6782 = vadd.f32 0.0, %v6781
    %6783 = vdwg.mxu0
    %6784 = vmatpush.bf16.msra.mxu0 0
    %6785 = vmatpush.bf16.msra.mxu0 0
    %6786 = vmatpush.bf16.msra.mxu0 0
    %6787 = vmatpush.bf16.msra.mxu0 0
    %6788 = vmatpush.bf16.msra.mxu0 0
    %6789 = vmatpush.bf16.msra.mxu0 0
    %6790 = vmatpush.bf16.msra.mxu0 0
    %6791 = vmatpush.bf16.msra.mxu0 %v6702
    %6792 = vmatmul.bf16.gmra.mxu0 %v6722
    %v6793 = vpop.f32.mrf.mxu0
    %v6794 = vadd.f32 %v6775, %v6793
    %v6795 = vpop.f32.mrf.mxu0
    %v6796 = vadd.f32 %v6777, %v6795
    %6797 = vmatmul.bf16.gmra.mxu0 %v6725
    %v6798 = vpop.f32.mrf.mxu0
    %v6799 = vadd.f32 %v6780, %v6798
    %v6800 = vpop.f32.mrf.mxu0
    %v6801 = vadd.f32 %v6782, %v6800
    %6802 = vdwg.mxu0
    %v6803 = vmax.f32 %v6756, 0.0
    %v6804 = vmax.f32 %v6794, 0.0
    %v6805 = vmax.f32 %v6758, 0.0
    %v6806 = vmax.f32 %v6796, 0.0
    %v6807 = vmax.f32 %v6761, 0.0
    %v6808 = vmax.f32 %v6799, 0.0
    %v6809 = vmax.f32 %v6763, 0.0
    %v6810 = vmax.f32 %v6801, 0.0
    %6811 = vst [vmem:[#allocation4 + $0x40] sm:$0xff] %v6803
    %6812 = vst [vmem:[#allocation4 + $0x48] sm:$0xff] %v6804
    %6813 = vst [vmem:[#allocation4 + $0xc0] sm:$0xff] %v6805
    %6814 = vst [vmem:[#allocation4 + $0xc8] sm:$0xff] %v6806
    %6815 = vst [vmem:[#allocation4 + $0x140] sm:$0xff] %v6807
    %6816 = vst [vmem:[#allocation4 + $0x148] sm:$0xff] %v6808
    %6817 = vst [vmem:[#allocation4 + $0x1c0] sm:$0xff] %v6809
    %6818 = vst [vmem:[#allocation4 + $0x1c8] sm:$0xff] %v6810
    %v6819 = vld [vmem:[#allocation5 + $0x10] sm:$0xff]
    %v6820 = vld [vmem:[#allocation5 + $0x18] sm:$0xff]
    %v6821 = vld [vmem:[#allocation5 + $0x50] sm:$0xff]
    %v6822 = vld [vmem:[#allocation5 + $0x58] sm:$0xff]
    %v6823 = vld [vmem:[#allocation5 + $0x90] sm:$0xff]
    %v6824 = vld [vmem:[#allocation5 + $0x98] sm:$0xff]
    %v6825 = vld [vmem:[#allocation5 + $0xd0] sm:$0xff]
    %v6826 = vld [vmem:[#allocation5 + $0xd8] sm:$0xff]
    %v6827 = vld [vmem:[#allocation5 + $0x110] sm:$0xff]
    %v6828 = vld [vmem:[#allocation5 + $0x118] sm:$0xff]
    %v6829 = vld [vmem:[#allocation5 + $0x150] sm:$0xff]
    %v6830 = vld [vmem:[#allocation5 + $0x158] sm:$0xff]
    %v6831 = vld [vmem:[#allocation5 + $0x190] sm:$0xff]
    %v6832 = vld [vmem:[#allocation5 + $0x198] sm:$0xff]
    %v6833 = vld [vmem:[#allocation5 + $0x1d0] sm:$0xff]
    %v6834 = vld [vmem:[#allocation5 + $0x1d8] sm:$0xff]
    %v6835 = vld [vmem:[#allocation5 + $0x210] sm:$0xff]
    %v6836 = vld [vmem:[#allocation5 + $0x218] sm:$0xff]
    %v6837 = vld [vmem:[#allocation5 + $0x250] sm:$0xff]
    %v6838 = vld [vmem:[#allocation5 + $0x258] sm:$0xff]
    %v6839 = vld [vmem:[#allocation5 + $0x290] sm:$0xff]
    %v6840 = vld [vmem:[#allocation5 + $0x298] sm:$0xff]
    %v6841 = vld [vmem:[#allocation5 + $0x2d0] sm:$0xff]
    %v6842 = vld [vmem:[#allocation5 + $0x2d8] sm:$0xff]
    %v6843 = vld [vmem:[#allocation5 + $0x310] sm:$0xff]
    %v6844 = vld [vmem:[#allocation5 + $0x318] sm:$0xff]
    %v6845 = vld [vmem:[#allocation5 + $0x350] sm:$0xff]
    %v6846 = vld [vmem:[#allocation5 + $0x358] sm:$0xff]
    %v6847 = vld [vmem:[#allocation5 + $0x390] sm:$0xff]
    %v6848 = vld [vmem:[#allocation5 + $0x398] sm:$0xff]
    %v6849 = vld [vmem:[#allocation5 + $0x3d0] sm:$0xff]
    %v6850 = vld [vmem:[#allocation5 + $0x3d8] sm:$0xff]
    %v6851 = vld [vmem:[#allocation5 + $0x410] sm:$0xff]
    %v6852 = vld [vmem:[#allocation5 + $0x418] sm:$0xff]
    %v6853 = vld [vmem:[#allocation5 + $0x450] sm:$0xff]
    %v6854 = vld [vmem:[#allocation5 + $0x458] sm:$0xff]
    %v6855 = vld [vmem:[%s4] sm:$0xff]
    %v6856 = vld [vmem:[%s4 + $0x8] sm:$0xff]
    %v6857 = vld [vmem:[%s4 + $0x10] sm:$0xff]
    %v6858 = vld [vmem:[%s4 + $0x18] sm:$0xff]
    %v6859 = vpack.c.bf16 %v6821, %v6819
    %v6860 = vpack.c.bf16 %v6822, %v6820
    %v6861 = vpack.c.bf16 %v6825, %v6823
    %v6862 = vpack.c.bf16 %v6826, %v6824
    %v6863 = vpack.c.bf16 %v6829, %v6827
    %v6864 = vpack.c.bf16 %v6830, %v6828
    %v6865 = vpack.c.bf16 %v6833, %v6831
    %v6866 = vpack.c.bf16 %v6834, %v6832
    %v6867 = vpack.c.bf16 %v6837, %v6835
    %v6868 = vpack.c.bf16 %v6838, %v6836
    %v6869 = vpack.c.bf16 %v6841, %v6839
    %v6870 = vpack.c.bf16 %v6842, %v6840
    %v6871 = vpack.c.bf16 %v6845, %v6843
    %v6872 = vpack.c.bf16 %v6846, %v6844
    %v6873 = vpack.c.bf16 %v6849, %v6847
    %v6874 = vpack.c.bf16 %v6850, %v6848
    %v6875 = vpack.c.bf16 %v6853, %v6851
    %v6876 = vpack.c.bf16 %v6854, %v6852
    %v6881 = vunpack.c.l.b16 %v6855
    %v6882 = vunpack.c.h.b16 %v6855
    %v6883 = vunpack.c.l.b16 %v6856
    %v6884 = vunpack.c.h.b16 %v6856
    %v6885 = vunpack.c.l.b16 %v6857
    %v6886 = vunpack.c.h.b16 %v6857
    %v6887 = vunpack.c.l.b16 %v6858
    %v6888 = vunpack.c.h.b16 %v6858
    %v6889 = vpack.c.b16 %v6883, %v6881
    %v6890 = vpack.c.b16 %v6884, %v6882
    %v6891 = vpack.c.b16 %v6887, %v6885
    %v6892 = vpack.c.b16 %v6888, %v6886
    %v6896 = vsel %vm5028, %v6890, 0
    %v6899 = vsel %vm5028, %v6892, 0
    %6901 = vmatpush.bf16.msra.mxu0 %v6873
    %6902 = vmatpush.bf16.msra.mxu0 %v6871
    %6903 = vmatpush.bf16.msra.mxu0 %v6869
    %6904 = vmatpush.bf16.msra.mxu0 %v6867
    %6905 = vmatpush.bf16.msra.mxu0 %v6865
    %6906 = vmatpush.bf16.msra.mxu0 %v6863
    %6907 = vmatpush.bf16.msra.mxu0 %v6861
    %6908 = vmatpush.bf16.msra.mxu0 %v6859
    %6909 = vmatmul.bf16.gmra.mxu0 %v6889
    %v6910 = vpop.f32.mrf.mxu0
    %v6911 = vadd.f32 0.0, %v6910
    %v6912 = vpop.f32.mrf.mxu0
    %v6913 = vadd.f32 0.0, %v6912
    %6914 = vmatmul.bf16.gmra.mxu0 %v6891
    %v6915 = vpop.f32.mrf.mxu0
    %v6916 = vadd.f32 0.0, %v6915
    %v6917 = vpop.f32.mrf.mxu0
    %v6918 = vadd.f32 0.0, %v6917
    %6919 = vdwg.mxu0
    %6920 = vmatpush.bf16.msra.mxu0 0
    %6921 = vmatpush.bf16.msra.mxu0 0
    %6922 = vmatpush.bf16.msra.mxu0 0
    %6923 = vmatpush.bf16.msra.mxu0 0
    %6924 = vmatpush.bf16.msra.mxu0 0
    %6925 = vmatpush.bf16.msra.mxu0 0
    %6926 = vmatpush.bf16.msra.mxu0 0
    %6927 = vmatpush.bf16.msra.mxu0 %v6875
    %6928 = vmatmul.bf16.gmra.mxu0 %v6896
    %v6929 = vpop.f32.mrf.mxu0
    %v6930 = vadd.f32 %v6911, %v6929
    %v6931 = vpop.f32.mrf.mxu0
    %v6932 = vadd.f32 %v6913, %v6931
    %6933 = vmatmul.bf16.gmra.mxu0 %v6899
    %v6934 = vpop.f32.mrf.mxu0
    %v6935 = vadd.f32 %v6916, %v6934
    %v6936 = vpop.f32.mrf.mxu0
    %v6937 = vadd.f32 %v6918, %v6936
    %6938 = vdwg.mxu0
    %6939 = vmatpush.bf16.msra.mxu0 %v6874
    %6940 = vmatpush.bf16.msra.mxu0 %v6872
    %6941 = vmatpush.bf16.msra.mxu0 %v6870
    %6942 = vmatpush.bf16.msra.mxu0 %v6868
    %6943 = vmatpush.bf16.msra.mxu0 %v6866
    %6944 = vmatpush.bf16.msra.mxu0 %v6864
    %6945 = vmatpush.bf16.msra.mxu0 %v6862
    %6946 = vmatpush.bf16.msra.mxu0 %v6860
    %6947 = vmatmul.bf16.gmra.mxu0 %v6889
    %v6948 = vpop.f32.mrf.mxu0
    %v6949 = vadd.f32 0.0, %v6948
    %v6950 = vpop.f32.mrf.mxu0
    %v6951 = vadd.f32 0.0, %v6950
    %6952 = vmatmul.bf16.gmra.mxu0 %v6891
    %v6953 = vpop.f32.mrf.mxu0
    %v6954 = vadd.f32 0.0, %v6953
    %v6955 = vpop.f32.mrf.mxu0
    %v6956 = vadd.f32 0.0, %v6955
    %6957 = vdwg.mxu0
    %6958 = vmatpush.bf16.msra.mxu0 0
    %6959 = vmatpush.bf16.msra.mxu0 0
    %6960 = vmatpush.bf16.msra.mxu0 0
    %6961 = vmatpush.bf16.msra.mxu0 0
    %6962 = vmatpush.bf16.msra.mxu0 0
    %6963 = vmatpush.bf16.msra.mxu0 0
    %6964 = vmatpush.bf16.msra.mxu0 0
    %6965 = vmatpush.bf16.msra.mxu0 %v6876
    %6966 = vmatmul.bf16.gmra.mxu0 %v6896
    %v6967 = vpop.f32.mrf.mxu0
    %v6968 = vadd.f32 %v6949, %v6967
    %v6969 = vpop.f32.mrf.mxu0
    %v6970 = vadd.f32 %v6951, %v6969
    %6971 = vmatmul.bf16.gmra.mxu0 %v6899
    %v6972 = vpop.f32.mrf.mxu0
    %v6973 = vadd.f32 %v6954, %v6972
    %v6974 = vpop.f32.mrf.mxu0
    %v6975 = vadd.f32 %v6956, %v6974
    %6976 = vdwg.mxu0
    %v6977 = vmax.f32 %v6930, 0.0
    %v6978 = vmax.f32 %v6968, 0.0
    %v6979 = vmax.f32 %v6932, 0.0
    %v6980 = vmax.f32 %v6970, 0.0
    %v6981 = vmax.f32 %v6935, 0.0
    %v6982 = vmax.f32 %v6973, 0.0
    %v6983 = vmax.f32 %v6937, 0.0
    %v6984 = vmax.f32 %v6975, 0.0
    %6985 = vst [vmem:[#allocation4 + $0x50] sm:$0xff] %v6977
    %6986 = vst [vmem:[#allocation4 + $0x58] sm:$0xff] %v6978
    %6987 = vst [vmem:[#allocation4 + $0xd0] sm:$0xff] %v6979
    %6988 = vst [vmem:[#allocation4 + $0xd8] sm:$0xff] %v6980
    %6989 = vst [vmem:[#allocation4 + $0x150] sm:$0xff] %v6981
    %6990 = vst [vmem:[#allocation4 + $0x158] sm:$0xff] %v6982
    %6991 = vst [vmem:[#allocation4 + $0x1d0] sm:$0xff] %v6983
    %6992 = vst [vmem:[#allocation4 + $0x1d8] sm:$0xff] %v6984
    %v6993 = vld [vmem:[#allocation5 + $0x20] sm:$0xff]
    %v6994 = vld [vmem:[#allocation5 + $0x28] sm:$0xff]
    %v6995 = vld [vmem:[#allocation5 + $0x60] sm:$0xff]
    %v6996 = vld [vmem:[#allocation5 + $0x68] sm:$0xff]
    %v6997 = vld [vmem:[#allocation5 + $0xa0] sm:$0xff]
    %v6998 = vld [vmem:[#allocation5 + $0xa8] sm:$0xff]
    %v6999 = vld [vmem:[#allocation5 + $0xe0] sm:$0xff]
    %v7000 = vld [vmem:[#allocation5 + $0xe8] sm:$0xff]
    %v7001 = vld [vmem:[#allocation5 + $0x120] sm:$0xff]
    %v7002 = vld [vmem:[#allocation5 + $0x128] sm:$0xff]
    %v7003 = vld [vmem:[#allocation5 + $0x160] sm:$0xff]
    %v7004 = vld [vmem:[#allocation5 + $0x168] sm:$0xff]
    %v7005 = vld [vmem:[#allocation5 + $0x1a0] sm:$0xff]
    %v7006 = vld [vmem:[#allocation5 + $0x1a8] sm:$0xff]
    %v7007 = vld [vmem:[#allocation5 + $0x1e0] sm:$0xff]
    %v7008 = vld [vmem:[#allocation5 + $0x1e8] sm:$0xff]
    %v7009 = vld [vmem:[#allocation5 + $0x220] sm:$0xff]
    %v7010 = vld [vmem:[#allocation5 + $0x228] sm:$0xff]
    %v7011 = vld [vmem:[#allocation5 + $0x260] sm:$0xff]
    %v7012 = vld [vmem:[#allocation5 + $0x268] sm:$0xff]
    %v7013 = vld [vmem:[#allocation5 + $0x2a0] sm:$0xff]
    %v7014 = vld [vmem:[#allocation5 + $0x2a8] sm:$0xff]
    %v7015 = vld [vmem:[#allocation5 + $0x2e0] sm:$0xff]
    %v7016 = vld [vmem:[#allocation5 + $0x2e8] sm:$0xff]
    %v7017 = vld [vmem:[#allocation5 + $0x320] sm:$0xff]
    %v7018 = vld [vmem:[#allocation5 + $0x328] sm:$0xff]
    %v7019 = vld [vmem:[#allocation5 + $0x360] sm:$0xff]
    %v7020 = vld [vmem:[#allocation5 + $0x368] sm:$0xff]
    %v7021 = vld [vmem:[#allocation5 + $0x3a0] sm:$0xff]
    %v7022 = vld [vmem:[#allocation5 + $0x3a8] sm:$0xff]
    %v7023 = vld [vmem:[#allocation5 + $0x3e0] sm:$0xff]
    %v7024 = vld [vmem:[#allocation5 + $0x3e8] sm:$0xff]
    %v7025 = vld [vmem:[#allocation5 + $0x420] sm:$0xff]
    %v7026 = vld [vmem:[#allocation5 + $0x428] sm:$0xff]
    %v7027 = vld [vmem:[#allocation5 + $0x460] sm:$0xff]
    %v7028 = vld [vmem:[#allocation5 + $0x468] sm:$0xff]
    %v7029 = vld [vmem:[%s4] sm:$0xff]
    %v7030 = vld [vmem:[%s4 + $0x8] sm:$0xff]
    %v7031 = vld [vmem:[%s4 + $0x10] sm:$0xff]
    %v7032 = vld [vmem:[%s4 + $0x18] sm:$0xff]
    %v7033 = vpack.c.bf16 %v6995, %v6993
    %v7034 = vpack.c.bf16 %v6996, %v6994
    %v7035 = vpack.c.bf16 %v6999, %v6997
    %v7036 = vpack.c.bf16 %v7000, %v6998
    %v7037 = vpack.c.bf16 %v7003, %v7001
    %v7038 = vpack.c.bf16 %v7004, %v7002
    %v7039 = vpack.c.bf16 %v7007, %v7005
    %v7040 = vpack.c.bf16 %v7008, %v7006
    %v7041 = vpack.c.bf16 %v7011, %v7009
    %v7042 = vpack.c.bf16 %v7012, %v7010
    %v7043 = vpack.c.bf16 %v7015, %v7013
    %v7044 = vpack.c.bf16 %v7016, %v7014
    %v7045 = vpack.c.bf16 %v7019, %v7017
    %v7046 = vpack.c.bf16 %v7020, %v7018
    %v7047 = vpack.c.bf16 %v7023, %v7021
    %v7048 = vpack.c.bf16 %v7024, %v7022
    %v7049 = vpack.c.bf16 %v7027, %v7025
    %v7050 = vpack.c.bf16 %v7028, %v7026
    %v7055 = vunpack.c.l.b16 %v7029
    %v7056 = vunpack.c.h.b16 %v7029
    %v7057 = vunpack.c.l.b16 %v7030
    %v7058 = vunpack.c.h.b16 %v7030
    %v7059 = vunpack.c.l.b16 %v7031
    %v7060 = vunpack.c.h.b16 %v7031
    %v7061 = vunpack.c.l.b16 %v7032
    %v7062 = vunpack.c.h.b16 %v7032
    %v7063 = vpack.c.b16 %v7057, %v7055
    %v7064 = vpack.c.b16 %v7058, %v7056
    %v7065 = vpack.c.b16 %v7061, %v7059
    %v7066 = vpack.c.b16 %v7062, %v7060
    %v7070 = vsel %vm5028, %v7064, 0
    %v7073 = vsel %vm5028, %v7066, 0
    %7075 = vmatpush.bf16.msra.mxu0 %v7047
    %7076 = vmatpush.bf16.msra.mxu0 %v7045
    %7077 = vmatpush.bf16.msra.mxu0 %v7043
    %7078 = vmatpush.bf16.msra.mxu0 %v7041
    %7079 = vmatpush.bf16.msra.mxu0 %v7039
    %7080 = vmatpush.bf16.msra.mxu0 %v7037
    %7081 = vmatpush.bf16.msra.mxu0 %v7035
    %7082 = vmatpush.bf16.msra.mxu0 %v7033
    %7083 = vmatmul.bf16.gmra.mxu0 %v7063
    %v7084 = vpop.f32.mrf.mxu0
    %v7085 = vadd.f32 0.0, %v7084
    %v7086 = vpop.f32.mrf.mxu0
    %v7087 = vadd.f32 0.0, %v7086
    %7088 = vmatmul.bf16.gmra.mxu0 %v7065
    %v7089 = vpop.f32.mrf.mxu0
    %v7090 = vadd.f32 0.0, %v7089
    %v7091 = vpop.f32.mrf.mxu0
    %v7092 = vadd.f32 0.0, %v7091
    %7093 = vdwg.mxu0
    %7094 = vmatpush.bf16.msra.mxu0 0
    %7095 = vmatpush.bf16.msra.mxu0 0
    %7096 = vmatpush.bf16.msra.mxu0 0
    %7097 = vmatpush.bf16.msra.mxu0 0
    %7098 = vmatpush.bf16.msra.mxu0 0
    %7099 = vmatpush.bf16.msra.mxu0 0
    %7100 = vmatpush.bf16.msra.mxu0 0
    %7101 = vmatpush.bf16.msra.mxu0 %v7049
    %7102 = vmatmul.bf16.gmra.mxu0 %v7070
    %v7103 = vpop.f32.mrf.mxu0
    %v7104 = vadd.f32 %v7085, %v7103
    %v7105 = vpop.f32.mrf.mxu0
    %v7106 = vadd.f32 %v7087, %v7105
    %7107 = vmatmul.bf16.gmra.mxu0 %v7073
    %v7108 = vpop.f32.mrf.mxu0
    %v7109 = vadd.f32 %v7090, %v7108
    %v7110 = vpop.f32.mrf.mxu0
    %v7111 = vadd.f32 %v7092, %v7110
    %7112 = vdwg.mxu0
    %7113 = vmatpush.bf16.msra.mxu0 %v7048
    %7114 = vmatpush.bf16.msra.mxu0 %v7046
    %7115 = vmatpush.bf16.msra.mxu0 %v7044
    %7116 = vmatpush.bf16.msra.mxu0 %v7042
    %7117 = vmatpush.bf16.msra.mxu0 %v7040
    %7118 = vmatpush.bf16.msra.mxu0 %v7038
    %7119 = vmatpush.bf16.msra.mxu0 %v7036
    %7120 = vmatpush.bf16.msra.mxu0 %v7034
    %7121 = vmatmul.bf16.gmra.mxu0 %v7063
    %v7122 = vpop.f32.mrf.mxu0
    %v7123 = vadd.f32 0.0, %v7122
    %v7124 = vpop.f32.mrf.mxu0
    %v7125 = vadd.f32 0.0, %v7124
    %7126 = vmatmul.bf16.gmra.mxu0 %v7065
    %v7127 = vpop.f32.mrf.mxu0
    %v7128 = vadd.f32 0.0, %v7127
    %v7129 = vpop.f32.mrf.mxu0
    %v7130 = vadd.f32 0.0, %v7129
    %7131 = vdwg.mxu0
    %7132 = vmatpush.bf16.msra.mxu0 0
    %7133 = vmatpush.bf16.msra.mxu0 0
    %7134 = vmatpush.bf16.msra.mxu0 0
    %7135 = vmatpush.bf16.msra.mxu0 0
    %7136 = vmatpush.bf16.msra.mxu0 0
    %7137 = vmatpush.bf16.msra.mxu0 0
    %7138 = vmatpush.bf16.msra.mxu0 0
    %7139 = vmatpush.bf16.msra.mxu0 %v7050
    %7140 = vmatmul.bf16.gmra.mxu0 %v7070
    %v7141 = vpop.f32.mrf.mxu0
    %v7142 = vadd.f32 %v7123, %v7141
    %v7143 = vpop.f32.mrf.mxu0
    %v7144 = vadd.f32 %v7125, %v7143
    %7145 = vmatmul.bf16.gmra.mxu0 %v7073
    %v7146 = vpop.f32.mrf.mxu0
    %v7147 = vadd.f32 %v7128, %v7146
    %v7148 = vpop.f32.mrf.mxu0
    %v7149 = vadd.f32 %v7130, %v7148
    %7150 = vdwg.mxu0
    %v7151 = vmax.f32 %v7104, 0.0
    %v7152 = vmax.f32 %v7142, 0.0
    %v7153 = vmax.f32 %v7106, 0.0
    %v7154 = vmax.f32 %v7144, 0.0
    %v7155 = vmax.f32 %v7109, 0.0
    %v7156 = vmax.f32 %v7147, 0.0
    %v7157 = vmax.f32 %v7111, 0.0
    %v7158 = vmax.f32 %v7149, 0.0
    %7159 = vst [vmem:[#allocation4 + $0x60] sm:$0xff] %v7151
    %7160 = vst [vmem:[#allocation4 + $0x68] sm:$0xff] %v7152
    %7161 = vst [vmem:[#allocation4 + $0xe0] sm:$0xff] %v7153
    %7162 = vst [vmem:[#allocation4 + $0xe8] sm:$0xff] %v7154
    %7163 = vst [vmem:[#allocation4 + $0x160] sm:$0xff] %v7155
    %7164 = vst [vmem:[#allocation4 + $0x168] sm:$0xff] %v7156
    %7165 = vst [vmem:[#allocation4 + $0x1e0] sm:$0xff] %v7157
    %7166 = vst [vmem:[#allocation4 + $0x1e8] sm:$0xff] %v7158
    %v7167 = vld [vmem:[#allocation5 + $0x30] sm:$0xff]
    %v7168 = vld [vmem:[#allocation5 + $0x38] sm:$0xff]
    %v7169 = vld [vmem:[#allocation5 + $0x70] sm:$0xff]
    %v7170 = vld [vmem:[#allocation5 + $0x78] sm:$0xff]
    %v7171 = vld [vmem:[#allocation5 + $0xb0] sm:$0xff]
    %v7172 = vld [vmem:[#allocation5 + $0xb8] sm:$0xff]
    %v7173 = vld [vmem:[#allocation5 + $0xf0] sm:$0xff]
    %v7174 = vld [vmem:[#allocation5 + $0xf8] sm:$0xff]
    %v7175 = vld [vmem:[#allocation5 + $0x130] sm:$0xff]
    %v7176 = vld [vmem:[#allocation5 + $0x138] sm:$0xff]
    %v7177 = vld [vmem:[#allocation5 + $0x170] sm:$0xff]
    %v7178 = vld [vmem:[#allocation5 + $0x178] sm:$0xff]
    %v7179 = vld [vmem:[#allocation5 + $0x1b0] sm:$0xff]
    %v7180 = vld [vmem:[#allocation5 + $0x1b8] sm:$0xff]
    %v7181 = vld [vmem:[#allocation5 + $0x1f0] sm:$0xff]
    %v7182 = vld [vmem:[#allocation5 + $0x1f8] sm:$0xff]
    %v7183 = vld [vmem:[#allocation5 + $0x230] sm:$0xff]
    %v7184 = vld [vmem:[#allocation5 + $0x238] sm:$0xff]
    %v7185 = vld [vmem:[#allocation5 + $0x270] sm:$0xff]
    %v7186 = vld [vmem:[#allocation5 + $0x278] sm:$0xff]
    %v7187 = vld [vmem:[#allocation5 + $0x2b0] sm:$0xff]
    %v7188 = vld [vmem:[#allocation5 + $0x2b8] sm:$0xff]
    %v7189 = vld [vmem:[#allocation5 + $0x2f0] sm:$0xff]
    %v7190 = vld [vmem:[#allocation5 + $0x2f8] sm:$0xff]
    %v7191 = vld [vmem:[#allocation5 + $0x330] sm:$0xff]
    %v7192 = vld [vmem:[#allocation5 + $0x338] sm:$0xff]
    %v7193 = vld [vmem:[#allocation5 + $0x370] sm:$0xff]
    %v7194 = vld [vmem:[#allocation5 + $0x378] sm:$0xff]
    %v7195 = vld [vmem:[#allocation5 + $0x3b0] sm:$0xff]
    %v7196 = vld [vmem:[#allocation5 + $0x3b8] sm:$0xff]
    %v7197 = vld [vmem:[#allocation5 + $0x3f0] sm:$0xff]
    %v7198 = vld [vmem:[#allocation5 + $0x3f8] sm:$0xff]
    %v7199 = vld [vmem:[#allocation5 + $0x430] sm:$0xff]
    %v7200 = vld [vmem:[#allocation5 + $0x438] sm:$0xff]
    %v7201 = vld [vmem:[#allocation5 + $0x470] sm:$0xff]
    %v7202 = vld [vmem:[#allocation5 + $0x478] sm:$0xff]
    %v7203 = vld [vmem:[%s4] sm:$0xff]
    %v7204 = vld [vmem:[%s4 + $0x8] sm:$0xff]
    %v7205 = vld [vmem:[%s4 + $0x10] sm:$0xff]
    %v7206 = vld [vmem:[%s4 + $0x18] sm:$0xff]
    %v7207 = vpack.c.bf16 %v7169, %v7167
    %v7208 = vpack.c.bf16 %v7170, %v7168
    %v7209 = vpack.c.bf16 %v7173, %v7171
    %v7210 = vpack.c.bf16 %v7174, %v7172
    %v7211 = vpack.c.bf16 %v7177, %v7175
    %v7212 = vpack.c.bf16 %v7178, %v7176
    %v7213 = vpack.c.bf16 %v7181, %v7179
    %v7214 = vpack.c.bf16 %v7182, %v7180
    %v7215 = vpack.c.bf16 %v7185, %v7183
    %v7216 = vpack.c.bf16 %v7186, %v7184
    %v7217 = vpack.c.bf16 %v7189, %v7187
    %v7218 = vpack.c.bf16 %v7190, %v7188
    %v7219 = vpack.c.bf16 %v7193, %v7191
    %v7220 = vpack.c.bf16 %v7194, %v7192
    %v7221 = vpack.c.bf16 %v7197, %v7195
    %v7222 = vpack.c.bf16 %v7198, %v7196
    %v7223 = vpack.c.bf16 %v7201, %v7199
    %v7224 = vpack.c.bf16 %v7202, %v7200
    %v7229 = vunpack.c.l.b16 %v7203
    %v7230 = vunpack.c.h.b16 %v7203
    %v7231 = vunpack.c.l.b16 %v7204
    %v7232 = vunpack.c.h.b16 %v7204
    %v7233 = vunpack.c.l.b16 %v7205
    %v7234 = vunpack.c.h.b16 %v7205
    %v7235 = vunpack.c.l.b16 %v7206
    %v7236 = vunpack.c.h.b16 %v7206
    %v7237 = vpack.c.b16 %v7231, %v7229
    %v7238 = vpack.c.b16 %v7232, %v7230
    %v7239 = vpack.c.b16 %v7235, %v7233
    %v7240 = vpack.c.b16 %v7236, %v7234
    %v7244 = vsel %vm5028, %v7238, 0
    %v7247 = vsel %vm5028, %v7240, 0
    %7249 = vmatpush.bf16.msra.mxu0 %v7221
    %7250 = vmatpush.bf16.msra.mxu0 %v7219
    %7251 = vmatpush.bf16.msra.mxu0 %v7217
    %7252 = vmatpush.bf16.msra.mxu0 %v7215
    %7253 = vmatpush.bf16.msra.mxu0 %v7213
    %7254 = vmatpush.bf16.msra.mxu0 %v7211
    %7255 = vmatpush.bf16.msra.mxu0 %v7209
    %7256 = vmatpush.bf16.msra.mxu0 %v7207
    %7257 = vmatmul.bf16.gmra.mxu0 %v7237
    %v7258 = vpop.f32.mrf.mxu0
    %v7259 = vadd.f32 0.0, %v7258
    %v7260 = vpop.f32.mrf.mxu0
    %v7261 = vadd.f32 0.0, %v7260
    %7262 = vmatmul.bf16.gmra.mxu0 %v7239
    %v7263 = vpop.f32.mrf.mxu0
    %v7264 = vadd.f32 0.0, %v7263
    %v7265 = vpop.f32.mrf.mxu0
    %v7266 = vadd.f32 0.0, %v7265
    %7267 = vdwg.mxu0
    %7268 = vmatpush.bf16.msra.mxu0 0
    %7269 = vmatpush.bf16.msra.mxu0 0
    %7270 = vmatpush.bf16.msra.mxu0 0
    %7271 = vmatpush.bf16.msra.mxu0 0
    %7272 = vmatpush.bf16.msra.mxu0 0
    %7273 = vmatpush.bf16.msra.mxu0 0
    %7274 = vmatpush.bf16.msra.mxu0 0
    %7275 = vmatpush.bf16.msra.mxu0 %v7223
    %7276 = vmatmul.bf16.gmra.mxu0 %v7244
    %v7277 = vpop.f32.mrf.mxu0
    %v7278 = vadd.f32 %v7259, %v7277
    %v7279 = vpop.f32.mrf.mxu0
    %v7280 = vadd.f32 %v7261, %v7279
    %7281 = vmatmul.bf16.gmra.mxu0 %v7247
    %v7282 = vpop.f32.mrf.mxu0
    %v7283 = vadd.f32 %v7264, %v7282
    %v7284 = vpop.f32.mrf.mxu0
    %v7285 = vadd.f32 %v7266, %v7284
    %7286 = vdwg.mxu0
    %7287 = vmatpush.bf16.msra.mxu0 %v7222
    %7288 = vmatpush.bf16.msra.mxu0 %v7220
    %7289 = vmatpush.bf16.msra.mxu0 %v7218
    %7290 = vmatpush.bf16.msra.mxu0 %v7216
    %7291 = vmatpush.bf16.msra.mxu0 %v7214
    %7292 = vmatpush.bf16.msra.mxu0 %v7212
    %7293 = vmatpush.bf16.msra.mxu0 %v7210
    %7294 = vmatpush.bf16.msra.mxu0 %v7208
    %7295 = vmatmul.bf16.gmra.mxu0 %v7237
    %v7296 = vpop.f32.mrf.mxu0
    %v7297 = vadd.f32 0.0, %v7296
    %v7298 = vpop.f32.mrf.mxu0
    %v7299 = vadd.f32 0.0, %v7298
    %7300 = vmatmul.bf16.gmra.mxu0 %v7239
    %v7301 = vpop.f32.mrf.mxu0
    %v7302 = vadd.f32 0.0, %v7301
    %v7303 = vpop.f32.mrf.mxu0
    %v7304 = vadd.f32 0.0, %v7303
    %7305 = vdwg.mxu0
    %7306 = vmatpush.bf16.msra.mxu0 0
    %7307 = vmatpush.bf16.msra.mxu0 0
    %7308 = vmatpush.bf16.msra.mxu0 0
    %7309 = vmatpush.bf16.msra.mxu0 0
    %7310 = vmatpush.bf16.msra.mxu0 0
    %7311 = vmatpush.bf16.msra.mxu0 0
    %7312 = vmatpush.bf16.msra.mxu0 0
    %7313 = vmatpush.bf16.msra.mxu0 %v7224
    %7314 = vmatmul.bf16.gmra.mxu0 %v7244
    %v7315 = vpop.f32.mrf.mxu0
    %v7316 = vadd.f32 %v7297, %v7315
    %v7317 = vpop.f32.mrf.mxu0
    %v7318 = vadd.f32 %v7299, %v7317
    %7319 = vmatmul.bf16.gmra.mxu0 %v7247
    %v7320 = vpop.f32.mrf.mxu0
    %v7321 = vadd.f32 %v7302, %v7320
    %v7322 = vpop.f32.mrf.mxu0
    %v7323 = vadd.f32 %v7304, %v7322
    %7324 = vdwg.mxu0
    %v7325 = vmax.f32 %v7278, 0.0
    %v7326 = vmax.f32 %v7316, 0.0
    %v7327 = vmax.f32 %v7280, 0.0
    %v7328 = vmax.f32 %v7318, 0.0
    %v7329 = vmax.f32 %v7283, 0.0
    %v7330 = vmax.f32 %v7321, 0.0
    %v7331 = vmax.f32 %v7285, 0.0
    %v7332 = vmax.f32 %v7323, 0.0
    %7333 = vst [vmem:[#allocation4 + $0x70] sm:$0xff] %v7325
    %7334 = vst [vmem:[#allocation4 + $0x78] sm:$0xff] %v7326
    %7335 = vst [vmem:[#allocation4 + $0xf0] sm:$0xff] %v7327
    %7336 = vst [vmem:[#allocation4 + $0xf8] sm:$0xff] %v7328
    %7337 = vst [vmem:[#allocation4 + $0x170] sm:$0xff] %v7329
    %7338 = vst [vmem:[#allocation4 + $0x178] sm:$0xff] %v7330
    %7339 = vst [vmem:[#allocation4 + $0x1f0] sm:$0xff] %v7331
    %7340 = vst [vmem:[#allocation4 + $0x1f8] sm:$0xff] %v7332
    %v7341 = vld [vmem:[#allocation2] sm:$0xff]
    %v7342 = vld [vmem:[#allocation2 + $0x8] sm:$0xff]
    %v7343 = vsub.f32 %v7341, %v7341
    %v7344 = vsub.f32 %v7342, %v7342
    %v7345 = vand.u32 2147483647, %v7343
    %v7346 = vand.u32 2147483647, %v7344
    %v7347 = vadd.f32 %v7345, %v7346
    %7348 = vadd.xlane.f32.xlu0 %v7347
    %v7349 = vpop.xlane.xlu0 %7348
    %v7350 = vrot.slane %v7349, 4
    %v7351 = vadd.f32 %v7349, %v7350
    %v7352 = vrot.slane %v7351, 2
    %v7353 = vadd.f32 %v7351, %v7352
    %v7354 = vrot.slane %v7353, 1
    %v7355 = vadd.f32 %v7353, %v7354
    %s7356 = vtos %v7355
    %s7357 = sadd.f32 %s7356, 0.0
    %v7358 = vpack.c.bf16 %v7341, %v7341
    %v7359 = vpack.c.bf16 %v7342, %v7342
    %v7360 = vld [vmem:[#allocation2 + $0x10] sm:$0xff]
    %v7361 = vld [vmem:[#allocation2 + $0x18] sm:$0xff]
    %v7362 = vsub.f32 %v7360, %v7360
    %v7363 = vsub.f32 %v7361, %v7361
    %v7364 = vand.u32 2147483647, %v7362
    %v7365 = vand.u32 2147483647, %v7363
    %v7366 = vadd.f32 %v7364, %v7365
    %7367 = vadd.xlane.f32.xlu0 %v7366
    %v7368 = vpop.xlane.xlu0 %7367
    %v7369 = vrot.slane %v7368, 4
    %v7370 = vadd.f32 %v7368, %v7369
    %v7371 = vrot.slane %v7370, 2
    %v7372 = vadd.f32 %v7370, %v7371
    %v7373 = vrot.slane %v7372, 1
    %v7374 = vadd.f32 %v7372, %v7373
    %s7375 = vtos %v7374
    %s7376 = sadd.f32 %s7357, %s7375
    %v7377 = vpack.c.bf16 %v7360, %v7360
    %v7378 = vpack.c.bf16 %v7361, %v7361
    %7379 = vmatpush.bf16.xpose.msra.mxu0 0
    %7380 = vmatpush.bf16.xpose.msra.mxu0 0
    %7381 = vmatpush.bf16.xpose.msra.mxu0 0
    %7382 = vmatpush.bf16.xpose.msra.mxu0 0
    %7383 = vmatpush.bf16.xpose.msra.mxu0 0
    %7384 = vmatpush.bf16.xpose.msra.mxu0 0
    %7385 = vmatpush.bf16.xpose.msra.mxu0 0
    %7386 = vmatpush.bf16.xpose.msra.mxu0 %v7377
    %7387 = vmatmul.bf16.gmra.mxu0 %v7377
    %v7388 = vpop.f32.mrf.mxu0
    %v7389 = vadd.f32 0.0, %v7388
    %v7390 = vpop.f32.mrf.mxu0
    %7391 = vdwg.mxu0
    %7392 = vmatpush.bf16.xpose.msra.mxu0 0
    %7393 = vmatpush.bf16.xpose.msra.mxu0 0
    %7394 = vmatpush.bf16.xpose.msra.mxu0 0
    %7395 = vmatpush.bf16.xpose.msra.mxu0 0
    %7396 = vmatpush.bf16.xpose.msra.mxu0 0
    %7397 = vmatpush.bf16.xpose.msra.mxu0 0
    %7398 = vmatpush.bf16.xpose.msra.mxu0 0
    %7399 = vmatpush.bf16.xpose.msra.mxu0 %v7378
    %7400 = vmatmul.bf16.gmra.mxu0 %v7378
    %v7401 = vpop.f32.mrf.mxu0
    %v7402 = vadd.f32 %v7389, %v7401
    %v7403 = vpop.f32.mrf.mxu0
    %7404 = vdwg.mxu0
    %7405 = vmatpush.bf16.xpose.msra.mxu0 0
    %7406 = vmatpush.bf16.xpose.msra.mxu0 0
    %7407 = vmatpush.bf16.xpose.msra.mxu0 0
    %7408 = vmatpush.bf16.xpose.msra.mxu0 0
    %7409 = vmatpush.bf16.xpose.msra.mxu0 0
    %7410 = vmatpush.bf16.xpose.msra.mxu0 0
    %7411 = vmatpush.bf16.xpose.msra.mxu0 0
    %7412 = vmatpush.bf16.xpose.msra.mxu0 %v7358
    %7413 = vmatmul.bf16.gmra.mxu0 %v7358
    %v7414 = vpop.f32.mrf.mxu0
    %v7415 = vadd.f32 %v7402, %v7414
    %v7416 = vpop.f32.mrf.mxu0
    %7417 = vdwg.mxu0
    %7418 = vmatpush.bf16.xpose.msra.mxu0 0
    %7419 = vmatpush.bf16.xpose.msra.mxu0 0
    %7420 = vmatpush.bf16.xpose.msra.mxu0 0
    %7421 = vmatpush.bf16.xpose.msra.mxu0 0
    %7422 = vmatpush.bf16.xpose.msra.mxu0 0
    %7423 = vmatpush.bf16.xpose.msra.mxu0 0
    %7424 = vmatpush.bf16.xpose.msra.mxu0 0
    %7425 = vmatpush.bf16.xpose.msra.mxu0 %v7359
    %7426 = vmatmul.bf16.gmra.mxu0 %v7359
    %v7427 = vpop.f32.mrf.mxu0
    %v7428 = vadd.f32 %v7415, %v7427
    %v7429 = vpop.f32.mrf.mxu0
    %7430 = vdwg.mxu0
    %v7431 = vld [vmem:[#allocation2 + $0x20] sm:$0xff]
    %v7432 = vld [vmem:[#allocation2 + $0x28] sm:$0xff]
    %v7433 = vsub.f32 %v7431, %v7431
    %v7434 = vsub.f32 %v7432, %v7432
    %v7435 = vand.u32 2147483647, %v7433
    %v7436 = vand.u32 2147483647, %v7434
    %v7437 = vadd.f32 %v7435, %v7436
    %7438 = vadd.xlane.f32.xlu0 %v7437
    %v7439 = vpop.xlane.xlu0 %7438
    %v7440 = vrot.slane %v7439, 4
    %v7441 = vadd.f32 %v7439, %v7440
    %v7442 = vrot.slane %v7441, 2
    %v7443 = vadd.f32 %v7441, %v7442
    %v7444 = vrot.slane %v7443, 1
    %v7445 = vadd.f32 %v7443, %v7444
    %s7446 = vtos %v7445
    %s7447 = sadd.f32 %s7376, %s7446
    %v7448 = vpack.c.bf16 %v7431, %v7431
    %v7449 = vpack.c.bf16 %v7432, %v7432
    %7450 = vmatpush.bf16.xpose.msra.mxu0 0
    %7451 = vmatpush.bf16.xpose.msra.mxu0 0
    %7452 = vmatpush.bf16.xpose.msra.mxu0 0
    %7453 = vmatpush.bf16.xpose.msra.mxu0 0
    %7454 = vmatpush.bf16.xpose.msra.mxu0 0
    %7455 = vmatpush.bf16.xpose.msra.mxu0 0
    %7456 = vmatpush.bf16.xpose.msra.mxu0 0
    %7457 = vmatpush.bf16.xpose.msra.mxu0 %v7448
    %7458 = vmatmul.bf16.gmra.mxu0 %v7448
    %v7459 = vpop.f32.mrf.mxu0
    %v7460 = vadd.f32 0.0, %v7459
    %v7461 = vpop.f32.mrf.mxu0
    %7462 = vdwg.mxu0
    %7463 = vmatpush.bf16.xpose.msra.mxu0 0
    %7464 = vmatpush.bf16.xpose.msra.mxu0 0
    %7465 = vmatpush.bf16.xpose.msra.mxu0 0
    %7466 = vmatpush.bf16.xpose.msra.mxu0 0
    %7467 = vmatpush.bf16.xpose.msra.mxu0 0
    %7468 = vmatpush.bf16.xpose.msra.mxu0 0
    %7469 = vmatpush.bf16.xpose.msra.mxu0 0
    %7470 = vmatpush.bf16.xpose.msra.mxu0 %v7449
    %7471 = vmatmul.bf16.gmra.mxu0 %v7449
    %v7472 = vpop.f32.mrf.mxu0
    %v7473 = vadd.f32 %v7460, %v7472
    %v7474 = vpop.f32.mrf.mxu0
    %7475 = vdwg.mxu0
    %v7476 = vadd.f32 %v7428, %v7473
    %v7477 = vld [vmem:[#allocation2 + $0x30] sm:$0xff]
    %v7478 = vld [vmem:[#allocation2 + $0x38] sm:$0xff]
    %v7479 = vsub.f32 %v7477, %v7477
    %v7480 = vsub.f32 %v7478, %v7478
    %v7481 = vand.u32 2147483647, %v7479
    %v7482 = vand.u32 2147483647, %v7480
    %v7483 = vadd.f32 %v7481, %v7482
    %7484 = vadd.xlane.f32.xlu0 %v7483
    %v7485 = vpop.xlane.xlu0 %7484
    %v7486 = vrot.slane %v7485, 4
    %v7487 = vadd.f32 %v7485, %v7486
    %v7488 = vrot.slane %v7487, 2
    %v7489 = vadd.f32 %v7487, %v7488
    %v7490 = vrot.slane %v7489, 1
    %v7491 = vadd.f32 %v7489, %v7490
    %s7492 = vtos %v7491
    %s7493 = sadd.f32 %s7447, %s7492
    %v7494 = vpack.c.bf16 %v7477, %v7477
    %v7495 = vpack.c.bf16 %v7478, %v7478
    %7496 = vmatpush.bf16.xpose.msra.mxu0 0
    %7497 = vmatpush.bf16.xpose.msra.mxu0 0
    %7498 = vmatpush.bf16.xpose.msra.mxu0 0
    %7499 = vmatpush.bf16.xpose.msra.mxu0 0
    %7500 = vmatpush.bf16.xpose.msra.mxu0 0
    %7501 = vmatpush.bf16.xpose.msra.mxu0 0
    %7502 = vmatpush.bf16.xpose.msra.mxu0 0
    %7503 = vmatpush.bf16.xpose.msra.mxu0 %v7494
    %7504 = vmatmul.bf16.gmra.mxu0 %v7494
    %v7505 = vpop.f32.mrf.mxu0
    %v7506 = vadd.f32 0.0, %v7505
    %v7507 = vpop.f32.mrf.mxu0
    %7508 = vdwg.mxu0
    %7509 = vmatpush.bf16.xpose.msra.mxu0 0
    %7510 = vmatpush.bf16.xpose.msra.mxu0 0
    %7511 = vmatpush.bf16.xpose.msra.mxu0 0
    %7512 = vmatpush.bf16.xpose.msra.mxu0 0
    %7513 = vmatpush.bf16.xpose.msra.mxu0 0
    %7514 = vmatpush.bf16.xpose.msra.mxu0 0
    %7515 = vmatpush.bf16.xpose.msra.mxu0 0
    %7516 = vmatpush.bf16.xpose.msra.mxu0 %v7495
    %7517 = vmatmul.bf16.gmra.mxu0 %v7495
    %v7518 = vpop.f32.mrf.mxu0
    %v7519 = vadd.f32 %v7506, %v7518
    %v7520 = vpop.f32.mrf.mxu0
    %7521 = vdwg.mxu0
    %v7522 = vadd.f32 %v7476, %v7519
    %v7523 = vmul.f32 %v7522, 0.00012207031
    %v7524 = vsub.f32 %v7523, %v7523
    %v7525 = vand.u32 2147483647, %v7524
    %vm7526 = vcmask 64512
    %v7527 = vsel %vm7526, %v7525, 0.0
    %7528 = vadd.xlane.f32.xlu0 %v7527
    %v7529 = vpop.xlane.xlu0 %7528
    %v7530 = vrot.slane %v7529, 4
    %v7531 = vadd.f32 %v7529, %v7530
    %v7532 = vrot.slane %v7531, 2
    %v7533 = vadd.f32 %v7531, %v7532
    %v7534 = vrot.slane %v7533, 1
    %v7535 = vadd.f32 %v7533, %v7534
    %s7536 = vtos %v7535
    %s7537 = sadd.f32 %s7536, 0.0
    %v7538 = vld [vmem:[#allocation2 + $0x40] sm:$0xff]
    %v7539 = vld [vmem:[#allocation2 + $0x48] sm:$0xff]
    %v7540 = vsub.f32 %v7538, %v7538
    %v7541 = vsub.f32 %v7539, %v7539
    %v7542 = vand.u32 2147483647, %v7540
    %v7543 = vand.u32 2147483647, %v7541
    %v7544 = vadd.f32 %v7542, %v7543
    %7545 = vadd.xlane.f32.xlu0 %v7544
    %v7546 = vpop.xlane.xlu0 %7545
    %v7547 = vrot.slane %v7546, 4
    %v7548 = vadd.f32 %v7546, %v7547
    %v7549 = vrot.slane %v7548, 2
    %v7550 = vadd.f32 %v7548, %v7549
    %v7551 = vrot.slane %v7550, 1
    %v7552 = vadd.f32 %v7550, %v7551
    %s7553 = vtos %v7552
    %s7554 = sadd.f32 %s7493, %s7553
    %v7555 = vpack.c.bf16 %v7538, %v7538
    %v7556 = vpack.c.bf16 %v7539, %v7539
    %v7557 = vld [vmem:[#allocation2 + $0x50] sm:$0xff]
    %v7558 = vld [vmem:[#allocation2 + $0x58] sm:$0xff]
    %v7559 = vsub.f32 %v7557, %v7557
    %v7560 = vsub.f32 %v7558, %v7558
    %v7561 = vand.u32 2147483647, %v7559
    %v7562 = vand.u32 2147483647, %v7560
    %v7563 = vadd.f32 %v7561, %v7562
    %7564 = vadd.xlane.f32.xlu0 %v7563
    %v7565 = vpop.xlane.xlu0 %7564
    %v7566 = vrot.slane %v7565, 4
    %v7567 = vadd.f32 %v7565, %v7566
    %v7568 = vrot.slane %v7567, 2
    %v7569 = vadd.f32 %v7567, %v7568
    %v7570 = vrot.slane %v7569, 1
    %v7571 = vadd.f32 %v7569, %v7570
    %s7572 = vtos %v7571
    %s7573 = sadd.f32 %s7554, %s7572
    %v7574 = vpack.c.bf16 %v7557, %v7557
    %v7575 = vpack.c.bf16 %v7558, %v7558
    %7576 = vmatpush.bf16.xpose.msra.mxu0 0
    %7577 = vmatpush.bf16.xpose.msra.mxu0 0
    %7578 = vmatpush.bf16.xpose.msra.mxu0 0
    %7579 = vmatpush.bf16.xpose.msra.mxu0 0
    %7580 = vmatpush.bf16.xpose.msra.mxu0 0
    %7581 = vmatpush.bf16.xpose.msra.mxu0 0
    %7582 = vmatpush.bf16.xpose.msra.mxu0 0
    %7583 = vmatpush.bf16.xpose.msra.mxu0 %v7574
    %7584 = vmatmul.bf16.gmra.mxu0 %v7574
    %v7585 = vpop.f32.mrf.mxu0
    %v7586 = vadd.f32 0.0, %v7585
    %v7587 = vpop.f32.mrf.mxu0
    %7588 = vdwg.mxu0
    %7589 = vmatpush.bf16.xpose.msra.mxu0 0
    %7590 = vmatpush.bf16.xpose.msra.mxu0 0
    %7591 = vmatpush.bf16.xpose.msra.mxu0 0
    %7592 = vmatpush.bf16.xpose.msra.mxu0 0
    %7593 = vmatpush.bf16.xpose.msra.mxu0 0
    %7594 = vmatpush.bf16.xpose.msra.mxu0 0
    %7595 = vmatpush.bf16.xpose.msra.mxu0 0
    %7596 = vmatpush.bf16.xpose.msra.mxu0 %v7575
    %7597 = vmatmul.bf16.gmra.mxu0 %v7575
    %v7598 = vpop.f32.mrf.mxu0
    %v7599 = vadd.f32 %v7586, %v7598
    %v7600 = vpop.f32.mrf.mxu0
    %7601 = vdwg.mxu0
    %7602 = vmatpush.bf16.xpose.msra.mxu0 0
    %7603 = vmatpush.bf16.xpose.msra.mxu0 0
    %7604 = vmatpush.bf16.xpose.msra.mxu0 0
    %7605 = vmatpush.bf16.xpose.msra.mxu0 0
    %7606 = vmatpush.bf16.xpose.msra.mxu0 0
    %7607 = vmatpush.bf16.xpose.msra.mxu0 0
    %7608 = vmatpush.bf16.xpose.msra.mxu0 0
    %7609 = vmatpush.bf16.xpose.msra.mxu0 %v7555
    %7610 = vmatmul.bf16.gmra.mxu0 %v7555
    %v7611 = vpop.f32.mrf.mxu0
    %v7612 = vadd.f32 %v7599, %v7611
    %v7613 = vpop.f32.mrf.mxu0
    %7614 = vdwg.mxu0
    %7615 = vmatpush.bf16.xpose.msra.mxu0 0
    %7616 = vmatpush.bf16.xpose.msra.mxu0 0
    %7617 = vmatpush.bf16.xpose.msra.mxu0 0
    %7618 = vmatpush.bf16.xpose.msra.mxu0 0
    %7619 = vmatpush.bf16.xpose.msra.mxu0 0
    %7620 = vmatpush.bf16.xpose.msra.mxu0 0
    %7621 = vmatpush.bf16.xpose.msra.mxu0 0
    %7622 = vmatpush.bf16.xpose.msra.mxu0 %v7556
    %7623 = vmatmul.bf16.gmra.mxu0 %v7556
    %v7624 = vpop.f32.mrf.mxu0
    %v7625 = vadd.f32 %v7612, %v7624
    %v7626 = vpop.f32.mrf.mxu0
    %7627 = vdwg.mxu0
    %v7628 = vld [vmem:[#allocation2 + $0x60] sm:$0xff]
    %v7629 = vld [vmem:[#allocation2 + $0x68] sm:$0xff]
    %v7630 = vsub.f32 %v7628, %v7628
    %v7631 = vsub.f32 %v7629, %v7629
    %v7632 = vand.u32 2147483647, %v7630
    %v7633 = vand.u32 2147483647, %v7631
    %v7634 = vadd.f32 %v7632, %v7633
    %7635 = vadd.xlane.f32.xlu0 %v7634
    %v7636 = vpop.xlane.xlu0 %7635
    %v7637 = vrot.slane %v7636, 4
    %v7638 = vadd.f32 %v7636, %v7637
    %v7639 = vrot.slane %v7638, 2
    %v7640 = vadd.f32 %v7638, %v7639
    %v7641 = vrot.slane %v7640, 1
    %v7642 = vadd.f32 %v7640, %v7641
    %s7643 = vtos %v7642
    %s7644 = sadd.f32 %s7573, %s7643
    %v7645 = vpack.c.bf16 %v7628, %v7628
    %v7646 = vpack.c.bf16 %v7629, %v7629
    %7647 = vmatpush.bf16.xpose.msra.mxu0 0
    %7648 = vmatpush.bf16.xpose.msra.mxu0 0
    %7649 = vmatpush.bf16.xpose.msra.mxu0 0
    %7650 = vmatpush.bf16.xpose.msra.mxu0 0
    %7651 = vmatpush.bf16.xpose.msra.mxu0 0
    %7652 = vmatpush.bf16.xpose.msra.mxu0 0
    %7653 = vmatpush.bf16.xpose.msra.mxu0 0
    %7654 = vmatpush.bf16.xpose.msra.mxu0 %v7645
    %7655 = vmatmul.bf16.gmra.mxu0 %v7645
    %v7656 = vpop.f32.mrf.mxu0
    %v7657 = vadd.f32 0.0, %v7656
    %v7658 = vpop.f32.mrf.mxu0
    %7659 = vdwg.mxu0
    %7660 = vmatpush.bf16.xpose.msra.mxu0 0
    %7661 = vmatpush.bf16.xpose.msra.mxu0 0
    %7662 = vmatpush.bf16.xpose.msra.mxu0 0
    %7663 = vmatpush.bf16.xpose.msra.mxu0 0
    %7664 = vmatpush.bf16.xpose.msra.mxu0 0
    %7665 = vmatpush.bf16.xpose.msra.mxu0 0
    %7666 = vmatpush.bf16.xpose.msra.mxu0 0
    %7667 = vmatpush.bf16.xpose.msra.mxu0 %v7646
    %7668 = vmatmul.bf16.gmra.mxu0 %v7646
    %v7669 = vpop.f32.mrf.mxu0
    %v7670 = vadd.f32 %v7657, %v7669
    %v7671 = vpop.f32.mrf.mxu0
    %7672 = vdwg.mxu0
    %v7673 = vadd.f32 %v7625, %v7670
    %v7674 = vld [vmem:[#allocation2 + $0x70] sm:$0xff]
    %v7675 = vld [vmem:[#allocation2 + $0x78] sm:$0xff]
    %v7676 = vsub.f32 %v7674, %v7674
    %v7677 = vsub.f32 %v7675, %v7675
    %v7678 = vand.u32 2147483647, %v7676
    %v7679 = vand.u32 2147483647, %v7677
    %v7680 = vadd.f32 %v7678, %v7679
    %7681 = vadd.xlane.f32.xlu0 %v7680
    %v7682 = vpop.xlane.xlu0 %7681
    %v7683 = vrot.slane %v7682, 4
    %v7684 = vadd.f32 %v7682, %v7683
    %v7685 = vrot.slane %v7684, 2
    %v7686 = vadd.f32 %v7684, %v7685
    %v7687 = vrot.slane %v7686, 1
    %v7688 = vadd.f32 %v7686, %v7687
    %s7689 = vtos %v7688
    %s7690 = sadd.f32 %s7644, %s7689
    %v7691 = vpack.c.bf16 %v7674, %v7674
    %v7692 = vpack.c.bf16 %v7675, %v7675
    %7693 = vmatpush.bf16.xpose.msra.mxu0 0
    %7694 = vmatpush.bf16.xpose.msra.mxu0 0
    %7695 = vmatpush.bf16.xpose.msra.mxu0 0
    %7696 = vmatpush.bf16.xpose.msra.mxu0 0
    %7697 = vmatpush.bf16.xpose.msra.mxu0 0
    %7698 = vmatpush.bf16.xpose.msra.mxu0 0
    %7699 = vmatpush.bf16.xpose.msra.mxu0 0
    %7700 = vmatpush.bf16.xpose.msra.mxu0 %v7691
    %7701 = vmatmul.bf16.gmra.mxu0 %v7691
    %v7702 = vpop.f32.mrf.mxu0
    %v7703 = vadd.f32 0.0, %v7702
    %v7704 = vpop.f32.mrf.mxu0
    %7705 = vdwg.mxu0
    %7706 = vmatpush.bf16.xpose.msra.mxu0 0
    %7707 = vmatpush.bf16.xpose.msra.mxu0 0
    %7708 = vmatpush.bf16.xpose.msra.mxu0 0
    %7709 = vmatpush.bf16.xpose.msra.mxu0 0
    %7710 = vmatpush.bf16.xpose.msra.mxu0 0
    %7711 = vmatpush.bf16.xpose.msra.mxu0 0
    %7712 = vmatpush.bf16.xpose.msra.mxu0 0
    %7713 = vmatpush.bf16.xpose.msra.mxu0 %v7692
    %7714 = vmatmul.bf16.gmra.mxu0 %v7692
    %v7715 = vpop.f32.mrf.mxu0
    %v7716 = vadd.f32 %v7703, %v7715
    %v7717 = vpop.f32.mrf.mxu0
    %7718 = vdwg.mxu0
    %v7719 = vadd.f32 %v7673, %v7716
    %v7720 = vmul.f32 %v7719, 0.00012207031
    %v7721 = vsub.f32 %v7720, %v7720
    %v7722 = vand.u32 2147483647, %v7721
    %v7723 = vsel %vm7526, %v7722, 0.0
    %7724 = vadd.xlane.f32.xlu0 %v7723
    %v7725 = vpop.xlane.xlu0 %7724
    %v7726 = vrot.slane %v7725, 4
    %v7727 = vadd.f32 %v7725, %v7726
    %v7728 = vrot.slane %v7727, 2
    %v7729 = vadd.f32 %v7727, %v7728
    %v7730 = vrot.slane %v7729, 1
    %v7731 = vadd.f32 %v7729, %v7730
    %s7732 = vtos %v7731
    %s7733 = sadd.f32 %s7537, %s7732
    %v7734 = vrcp.pop 16384.0
    %v7735 = vmul.f32 16384.0, %v7734
    %v7736 = vsub.f32 1.0, %v7735
    %v7737 = vmul.f32 %v7734, %v7736
    %v7738 = vadd.f32 %v7734, %v7737
    %vm7739 = vweird.f32 %v7734
    %v7740 = vsel %vm7739, %v7734, %v7738
    %s7741 = vtos %v7740
    %s7742 = smul.f32 %s7690, %s7741
    %s7743 = sadd.f32 %s7742, 0.0
    %v7744 = vrcp.pop 128.0
    %v7745 = vmul.f32 128.0, %v7744
    %v7746 = vsub.f32 1.0, %v7745
    %v7747 = vmul.f32 %v7744, %v7746
    %v7748 = vadd.f32 %v7744, %v7747
    %vm7749 = vweird.f32 %v7744
    %v7750 = vsel %vm7749, %v7744, %v7748
    %s7751 = vtos %v7750
    %s7752 = smul.f32 %s7733, %s7751
    %s7753 = sadd.f32 %s7752, 0.0
    %v7754 = vld [vmem:[#allocation3] sm:$0xff]
    %v7755 = vld [vmem:[#allocation3 + $0x8] sm:$0xff]
    %v7756 = vld [vmem:[#allocation3 + $0x80] sm:$0xff]
    %v7757 = vld [vmem:[#allocation3 + $0x88] sm:$0xff]
    %v7758 = vsub.f32 %v7754, %v7754
    %v7759 = vsub.f32 %v7755, %v7755
    %v7760 = vsub.f32 %v7756, %v7756
    %v7761 = vsub.f32 %v7757, %v7757
    %v7762 = vand.u32 2147483647, %v7758
    %v7763 = vand.u32 2147483647, %v7759
    %v7764 = vand.u32 2147483647, %v7760
    %v7765 = vand.u32 2147483647, %v7761
    %v7766 = vadd.f32 %v7762, %v7763
    %v7767 = vadd.f32 %v7766, %v7764
    %v7768 = vadd.f32 %v7767, %v7765
    %7769 = vadd.xlane.f32.xlu0 %v7768
    %v7770 = vpop.xlane.xlu0 %7769
    %v7771 = vrot.slane %v7770, 4
    %v7772 = vadd.f32 %v7770, %v7771
    %v7773 = vrot.slane %v7772, 2
    %v7774 = vadd.f32 %v7772, %v7773
    %v7775 = vrot.slane %v7774, 1
    %v7776 = vadd.f32 %v7774, %v7775
    %s7777 = vtos %v7776
    %s7778 = sadd.f32 %s7777, 0.0
    %v7779 = vpack.c.bf16 %v7756, %v7754
    %v7780 = vpack.c.bf16 %v7757, %v7755
    %v7781 = vld [vmem:[#allocation3 + $0x10] sm:$0xff]
    %v7782 = vld [vmem:[#allocation3 + $0x18] sm:$0xff]
    %v7783 = vld [vmem:[#allocation3 + $0x90] sm:$0xff]
    %v7784 = vld [vmem:[#allocation3 + $0x98] sm:$0xff]
    %v7785 = vsub.f32 %v7781, %v7781
    %v7786 = vsub.f32 %v7782, %v7782
    %v7787 = vsub.f32 %v7783, %v7783
    %v7788 = vsub.f32 %v7784, %v7784
    %v7789 = vand.u32 2147483647, %v7785
    %v7790 = vand.u32 2147483647, %v7786
    %v7791 = vand.u32 2147483647, %v7787
    %v7792 = vand.u32 2147483647, %v7788
    %v7793 = vadd.f32 %v7789, %v7790
    %v7794 = vadd.f32 %v7793, %v7791
    %v7795 = vadd.f32 %v7794, %v7792
    %7796 = vadd.xlane.f32.xlu0 %v7795
    %v7797 = vpop.xlane.xlu0 %7796
    %v7798 = vrot.slane %v7797, 4
    %v7799 = vadd.f32 %v7797, %v7798
    %v7800 = vrot.slane %v7799, 2
    %v7801 = vadd.f32 %v7799, %v7800
    %v7802 = vrot.slane %v7801, 1
    %v7803 = vadd.f32 %v7801, %v7802
    %s7804 = vtos %v7803
    %s7805 = sadd.f32 %s7778, %s7804
    %v7806 = vpack.c.bf16 %v7783, %v7781
    %v7807 = vpack.c.bf16 %v7784, %v7782
    %7808 = vmatpush.bf16.xpose.msra.mxu0 0
    %7809 = vmatpush.bf16.xpose.msra.mxu0 0
    %7810 = vmatpush.bf16.xpose.msra.mxu0 0
    %7811 = vmatpush.bf16.xpose.msra.mxu0 0
    %7812 = vmatpush.bf16.xpose.msra.mxu0 0
    %7813 = vmatpush.bf16.xpose.msra.mxu0 0
    %7814 = vmatpush.bf16.xpose.msra.mxu0 0
    %7815 = vmatpush.bf16.xpose.msra.mxu0 %v7806
    %7816 = vmatmul.bf16.gmra.mxu0 %v7806
    %v7817 = vpop.f32.mrf.mxu0
    %v7818 = vadd.f32 0.0, %v7817
    %v7819 = vpop.f32.mrf.mxu0
    %v7820 = vadd.f32 0.0, %v7819
    %7821 = vdwg.mxu0
    %7822 = vmatpush.bf16.xpose.msra.mxu0 0
    %7823 = vmatpush.bf16.xpose.msra.mxu0 0
    %7824 = vmatpush.bf16.xpose.msra.mxu0 0
    %7825 = vmatpush.bf16.xpose.msra.mxu0 0
    %7826 = vmatpush.bf16.xpose.msra.mxu0 0
    %7827 = vmatpush.bf16.xpose.msra.mxu0 0
    %7828 = vmatpush.bf16.xpose.msra.mxu0 0
    %7829 = vmatpush.bf16.xpose.msra.mxu0 %v7807
    %7830 = vmatmul.bf16.gmra.mxu0 %v7807
    %v7831 = vpop.f32.mrf.mxu0
    %v7832 = vadd.f32 %v7818, %v7831
    %v7833 = vpop.f32.mrf.mxu0
    %v7834 = vadd.f32 %v7820, %v7833
    %7835 = vdwg.mxu0
    %7836 = vmatpush.bf16.xpose.msra.mxu0 0
    %7837 = vmatpush.bf16.xpose.msra.mxu0 0
    %7838 = vmatpush.bf16.xpose.msra.mxu0 0
    %7839 = vmatpush.bf16.xpose.msra.mxu0 0
    %7840 = vmatpush.bf16.xpose.msra.mxu0 0
    %7841 = vmatpush.bf16.xpose.msra.mxu0 0
    %7842 = vmatpush.bf16.xpose.msra.mxu0 0
    %7843 = vmatpush.bf16.xpose.msra.mxu0 %v7779
    %7844 = vmatmul.bf16.gmra.mxu0 %v7779
    %v7845 = vpop.f32.mrf.mxu0
    %v7846 = vadd.f32 %v7832, %v7845
    %v7847 = vpop.f32.mrf.mxu0
    %v7848 = vadd.f32 %v7834, %v7847
    %7849 = vdwg.mxu0
    %7850 = vmatpush.bf16.xpose.msra.mxu0 0
    %7851 = vmatpush.bf16.xpose.msra.mxu0 0
    %7852 = vmatpush.bf16.xpose.msra.mxu0 0
    %7853 = vmatpush.bf16.xpose.msra.mxu0 0
    %7854 = vmatpush.bf16.xpose.msra.mxu0 0
    %7855 = vmatpush.bf16.xpose.msra.mxu0 0
    %7856 = vmatpush.bf16.xpose.msra.mxu0 0
    %7857 = vmatpush.bf16.xpose.msra.mxu0 %v7780
    %7858 = vmatmul.bf16.gmra.mxu0 %v7780
    %v7859 = vpop.f32.mrf.mxu0
    %v7860 = vadd.f32 %v7846, %v7859
    %v7861 = vpop.f32.mrf.mxu0
    %v7862 = vadd.f32 %v7848, %v7861
    %7863 = vdwg.mxu0
    %v7864 = vld [vmem:[#allocation3 + $0x20] sm:$0xff]
    %v7865 = vld [vmem:[#allocation3 + $0x28] sm:$0xff]
    %v7866 = vld [vmem:[#allocation3 + $0xa0] sm:$0xff]
    %v7867 = vld [vmem:[#allocation3 + $0xa8] sm:$0xff]
    %v7868 = vsub.f32 %v7864, %v7864
    %v7869 = vsub.f32 %v7865, %v7865
    %v7870 = vsub.f32 %v7866, %v7866
    %v7871 = vsub.f32 %v7867, %v7867
    %v7872 = vand.u32 2147483647, %v7868
    %v7873 = vand.u32 2147483647, %v7869
    %v7874 = vand.u32 2147483647, %v7870
    %v7875 = vand.u32 2147483647, %v7871
    %v7876 = vadd.f32 %v7872, %v7873
    %v7877 = vadd.f32 %v7876, %v7874
    %v7878 = vadd.f32 %v7877, %v7875
    %7879 = vadd.xlane.f32.xlu0 %v7878
    %v7880 = vpop.xlane.xlu0 %7879
    %v7881 = vrot.slane %v7880, 4
    %v7882 = vadd.f32 %v7880, %v7881
    %v7883 = vrot.slane %v7882, 2
    %v7884 = vadd.f32 %v7882, %v7883
    %v7885 = vrot.slane %v7884, 1
    %v7886 = vadd.f32 %v7884, %v7885
    %s7887 = vtos %v7886
    %s7888 = sadd.f32 %s7805, %s7887
    %v7889 = vpack.c.bf16 %v7866, %v7864
    %v7890 = vpack.c.bf16 %v7867, %v7865
    %7891 = vmatpush.bf16.xpose.msra.mxu0 0
    %7892 = vmatpush.bf16.xpose.msra.mxu0 0
    %7893 = vmatpush.bf16.xpose.msra.mxu0 0
    %7894 = vmatpush.bf16.xpose.msra.mxu0 0
    %7895 = vmatpush.bf16.xpose.msra.mxu0 0
    %7896 = vmatpush.bf16.xpose.msra.mxu0 0
    %7897 = vmatpush.bf16.xpose.msra.mxu0 0
    %7898 = vmatpush.bf16.xpose.msra.mxu0 %v7889
    %7899 = vmatmul.bf16.gmra.mxu0 %v7889
    %v7900 = vpop.f32.mrf.mxu0
    %v7901 = vadd.f32 0.0, %v7900
    %v7902 = vpop.f32.mrf.mxu0
    %v7903 = vadd.f32 0.0, %v7902
    %7904 = vdwg.mxu0
    %7905 = vmatpush.bf16.xpose.msra.mxu0 0
    %7906 = vmatpush.bf16.xpose.msra.mxu0 0
    %7907 = vmatpush.bf16.xpose.msra.mxu0 0
    %7908 = vmatpush.bf16.xpose.msra.mxu0 0
    %7909 = vmatpush.bf16.xpose.msra.mxu0 0
    %7910 = vmatpush.bf16.xpose.msra.mxu0 0
    %7911 = vmatpush.bf16.xpose.msra.mxu0 0
    %7912 = vmatpush.bf16.xpose.msra.mxu0 %v7890
    %7913 = vmatmul.bf16.gmra.mxu0 %v7890
    %v7914 = vpop.f32.mrf.mxu0
    %v7915 = vadd.f32 %v7901, %v7914
    %v7916 = vpop.f32.mrf.mxu0
    %v7917 = vadd.f32 %v7903, %v7916
    %7918 = vdwg.mxu0
    %v7919 = vadd.f32 %v7860, %v7915
    %v7920 = vadd.f32 %v7862, %v7917
    %v7921 = vld [vmem:[#allocation3 + $0x30] sm:$0xff]
    %v7922 = vld [vmem:[#allocation3 + $0x38] sm:$0xff]
    %v7923 = vld [vmem:[#allocation3 + $0xb0] sm:$0xff]
    %v7924 = vld [vmem:[#allocation3 + $0xb8] sm:$0xff]
    %v7925 = vsub.f32 %v7921, %v7921
    %v7926 = vsub.f32 %v7922, %v7922
    %v7927 = vsub.f32 %v7923, %v7923
    %v7928 = vsub.f32 %v7924, %v7924
    %v7929 = vand.u32 2147483647, %v7925
    %v7930 = vand.u32 2147483647, %v7926
    %v7931 = vand.u32 2147483647, %v7927
    %v7932 = vand.u32 2147483647, %v7928
    %v7933 = vadd.f32 %v7929, %v7930
    %v7934 = vadd.f32 %v7933, %v7931
    %v7935 = vadd.f32 %v7934, %v7932
    %7936 = vadd.xlane.f32.xlu0 %v7935
    %v7937 = vpop.xlane.xlu0 %7936
    %v7938 = vrot.slane %v7937, 4
    %v7939 = vadd.f32 %v7937, %v7938
    %v7940 = vrot.slane %v7939, 2
    %v7941 = vadd.f32 %v7939, %v7940
    %v7942 = vrot.slane %v7941, 1
    %v7943 = vadd.f32 %v7941, %v7942
    %s7944 = vtos %v7943
    %s7945 = sadd.f32 %s7888, %s7944
    %v7946 = vpack.c.bf16 %v7923, %v7921
    %v7947 = vpack.c.bf16 %v7924, %v7922
    %7948 = vmatpush.bf16.xpose.msra.mxu0 0
    %7949 = vmatpush.bf16.xpose.msra.mxu0 0
    %7950 = vmatpush.bf16.xpose.msra.mxu0 0
    %7951 = vmatpush.bf16.xpose.msra.mxu0 0
    %7952 = vmatpush.bf16.xpose.msra.mxu0 0
    %7953 = vmatpush.bf16.xpose.msra.mxu0 0
    %7954 = vmatpush.bf16.xpose.msra.mxu0 0
    %7955 = vmatpush.bf16.xpose.msra.mxu0 %v7946
    %7956 = vmatmul.bf16.gmra.mxu0 %v7946
    %v7957 = vpop.f32.mrf.mxu0
    %v7958 = vadd.f32 0.0, %v7957
    %v7959 = vpop.f32.mrf.mxu0
    %v7960 = vadd.f32 0.0, %v7959
    %7961 = vdwg.mxu0
    %7962 = vmatpush.bf16.xpose.msra.mxu0 0
    %7963 = vmatpush.bf16.xpose.msra.mxu0 0
    %7964 = vmatpush.bf16.xpose.msra.mxu0 0
    %7965 = vmatpush.bf16.xpose.msra.mxu0 0
    %7966 = vmatpush.bf16.xpose.msra.mxu0 0
    %7967 = vmatpush.bf16.xpose.msra.mxu0 0
    %7968 = vmatpush.bf16.xpose.msra.mxu0 0
    %7969 = vmatpush.bf16.xpose.msra.mxu0 %v7947
    %7970 = vmatmul.bf16.gmra.mxu0 %v7947
    %v7971 = vpop.f32.mrf.mxu0
    %v7972 = vadd.f32 %v7958, %v7971
    %v7973 = vpop.f32.mrf.mxu0
    %v7974 = vadd.f32 %v7960, %v7973
    %7975 = vdwg.mxu0
    %v7976 = vadd.f32 %v7919, %v7972
    %v7977 = vadd.f32 %v7920, %v7974
    %v7978 = vmul.f32 %v7976, 6.1035156e-05
    %v7979 = vmul.f32 %v7977, 6.1035156e-05
    %v7980 = vsub.f32 %v7978, %v7978
    %v7981 = vsub.f32 %v7979, %v7979
    %v7982 = vand.u32 2147483647, %v7980
    %v7983 = vand.u32 2147483647, %v7981
    %v7984 = vsel %vm5028, %v7982, 0.0
    %v7985 = vsel %vm5028, %v7983, 0.0
    %v7986 = vadd.f32 %v7984, %v7985
    %7987 = vadd.xlane.f32.xlu0 %v7986
    %v7988 = vpop.xlane.xlu0 %7987
    %v7989 = vrot.slane %v7988, 4
    %v7990 = vadd.f32 %v7988, %v7989
    %v7991 = vrot.slane %v7990, 2
    %v7992 = vadd.f32 %v7990, %v7991
    %v7993 = vrot.slane %v7992, 1
    %v7994 = vadd.f32 %v7992, %v7993
    %s7995 = vtos %v7994
    %s7996 = sadd.f32 %s7995, 0.0
    %v7997 = vld [vmem:[#allocation3 + $0x40] sm:$0xff]
    %v7998 = vld [vmem:[#allocation3 + $0x48] sm:$0xff]
    %v7999 = vld [vmem:[#allocation3 + $0xc0] sm:$0xff]
    %v8000 = vld [vmem:[#allocation3 + $0xc8] sm:$0xff]
    %v8001 = vsub.f32 %v7997, %v7997
    %v8002 = vsub.f32 %v7998, %v7998
    %v8003 = vsub.f32 %v7999, %v7999
    %v8004 = vsub.f32 %v8000, %v8000
    %v8005 = vand.u32 2147483647, %v8001
    %v8006 = vand.u32 2147483647, %v8002
    %v8007 = vand.u32 2147483647, %v8003
    %v8008 = vand.u32 2147483647, %v8004
    %v8009 = vadd.f32 %v8005, %v8006
    %v8010 = vadd.f32 %v8009, %v8007
    %v8011 = vadd.f32 %v8010, %v8008
    %8012 = vadd.xlane.f32.xlu0 %v8011
    %v8013 = vpop.xlane.xlu0 %8012
    %v8014 = vrot.slane %v8013, 4
    %v8015 = vadd.f32 %v8013, %v8014
    %v8016 = vrot.slane %v8015, 2
    %v8017 = vadd.f32 %v8015, %v8016
    %v8018 = vrot.slane %v8017, 1
    %v8019 = vadd.f32 %v8017, %v8018
    %s8020 = vtos %v8019
    %s8021 = sadd.f32 %s7945, %s8020
    %v8022 = vpack.c.bf16 %v7999, %v7997
    %v8023 = vpack.c.bf16 %v8000, %v7998
    %v8024 = vld [vmem:[#allocation3 + $0x50] sm:$0xff]
    %v8025 = vld [vmem:[#allocation3 + $0x58] sm:$0xff]
    %v8026 = vld [vmem:[#allocation3 + $0xd0] sm:$0xff]
    %v8027 = vld [vmem:[#allocation3 + $0xd8] sm:$0xff]
    %v8028 = vsub.f32 %v8024, %v8024
    %v8029 = vsub.f32 %v8025, %v8025
    %v8030 = vsub.f32 %v8026, %v8026
    %v8031 = vsub.f32 %v8027, %v8027
    %v8032 = vand.u32 2147483647, %v8028
    %v8033 = vand.u32 2147483647, %v8029
    %v8034 = vand.u32 2147483647, %v8030
    %v8035 = vand.u32 2147483647, %v8031
    %v8036 = vadd.f32 %v8032, %v8033
    %v8037 = vadd.f32 %v8036, %v8034
    %v8038 = vadd.f32 %v8037, %v8035
    %8039 = vadd.xlane.f32.xlu0 %v8038
    %v8040 = vpop.xlane.xlu0 %8039
    %v8041 = vrot.slane %v8040, 4
    %v8042 = vadd.f32 %v8040, %v8041
    %v8043 = vrot.slane %v8042, 2
    %v8044 = vadd.f32 %v8042, %v8043
    %v8045 = vrot.slane %v8044, 1
    %v8046 = vadd.f32 %v8044, %v8045
    %s8047 = vtos %v8046
    %s8048 = sadd.f32 %s8021, %s8047
    %v8049 = vpack.c.bf16 %v8026, %v8024
    %v8050 = vpack.c.bf16 %v8027, %v8025
    %8051 = vmatpush.bf16.xpose.msra.mxu0 0
    %8052 = vmatpush.bf16.xpose.msra.mxu0 0
    %8053 = vmatpush.bf16.xpose.msra.mxu0 0
    %8054 = vmatpush.bf16.xpose.msra.mxu0 0
    %8055 = vmatpush.bf16.xpose.msra.mxu0 0
    %8056 = vmatpush.bf16.xpose.msra.mxu0 0
    %8057 = vmatpush.bf16.xpose.msra.mxu0 0
    %8058 = vmatpush.bf16.xpose.msra.mxu0 %v8049
    %8059 = vmatmul.bf16.gmra.mxu0 %v8049
    %v8060 = vpop.f32.mrf.mxu0
    %v8061 = vadd.f32 0.0, %v8060
    %v8062 = vpop.f32.mrf.mxu0
    %v8063 = vadd.f32 0.0, %v8062
    %8064 = vdwg.mxu0
    %8065 = vmatpush.bf16.xpose.msra.mxu0 0
    %8066 = vmatpush.bf16.xpose.msra.mxu0 0
    %8067 = vmatpush.bf16.xpose.msra.mxu0 0
    %8068 = vmatpush.bf16.xpose.msra.mxu0 0
    %8069 = vmatpush.bf16.xpose.msra.mxu0 0
    %8070 = vmatpush.bf16.xpose.msra.mxu0 0
    %8071 = vmatpush.bf16.xpose.msra.mxu0 0
    %8072 = vmatpush.bf16.xpose.msra.mxu0 %v8050
    %8073 = vmatmul.bf16.gmra.mxu0 %v8050
    %v8074 = vpop.f32.mrf.mxu0
    %v8075 = vadd.f32 %v8061, %v8074
    %v8076 = vpop.f32.mrf.mxu0
    %v8077 = vadd.f32 %v8063, %v8076
    %8078 = vdwg.mxu0
    %8079 = vmatpush.bf16.xpose.msra.mxu0 0
    %8080 = vmatpush.bf16.xpose.msra.mxu0 0
    %8081 = vmatpush.bf16.xpose.msra.mxu0 0
    %8082 = vmatpush.bf16.xpose.msra.mxu0 0
    %8083 = vmatpush.bf16.xpose.msra.mxu0 0
    %8084 = vmatpush.bf16.xpose.msra.mxu0 0
    %8085 = vmatpush.bf16.xpose.msra.mxu0 0
    %8086 = vmatpush.bf16.xpose.msra.mxu0 %v8022
    %8087 = vmatmul.bf16.gmra.mxu0 %v8022
    %v8088 = vpop.f32.mrf.mxu0
    %v8089 = vadd.f32 %v8075, %v8088
    %v8090 = vpop.f32.mrf.mxu0
    %v8091 = vadd.f32 %v8077, %v8090
    %8092 = vdwg.mxu0
    %8093 = vmatpush.bf16.xpose.msra.mxu0 0
    %8094 = vmatpush.bf16.xpose.msra.mxu0 0
    %8095 = vmatpush.bf16.xpose.msra.mxu0 0
    %8096 = vmatpush.bf16.xpose.msra.mxu0 0
    %8097 = vmatpush.bf16.xpose.msra.mxu0 0
    %8098 = vmatpush.bf16.xpose.msra.mxu0 0
    %8099 = vmatpush.bf16.xpose.msra.mxu0 0
    %8100 = vmatpush.bf16.xpose.msra.mxu0 %v8023
    %8101 = vmatmul.bf16.gmra.mxu0 %v8023
    %v8102 = vpop.f32.mrf.mxu0
    %v8103 = vadd.f32 %v8089, %v8102
    %v8104 = vpop.f32.mrf.mxu0
    %v8105 = vadd.f32 %v8091, %v8104
    %8106 = vdwg.mxu0
    %v8107 = vld [vmem:[#allocation3 + $0x60] sm:$0xff]
    %v8108 = vld [vmem:[#allocation3 + $0x68] sm:$0xff]
    %v8109 = vld [vmem:[#allocation3 + $0xe0] sm:$0xff]
    %v8110 = vld [vmem:[#allocation3 + $0xe8] sm:$0xff]
    %v8111 = vsub.f32 %v8107, %v8107
    %v8112 = vsub.f32 %v8108, %v8108
    %v8113 = vsub.f32 %v8109, %v8109
    %v8114 = vsub.f32 %v8110, %v8110
    %v8115 = vand.u32 2147483647, %v8111
    %v8116 = vand.u32 2147483647, %v8112
    %v8117 = vand.u32 2147483647, %v8113
    %v8118 = vand.u32 2147483647, %v8114
    %v8119 = vadd.f32 %v8115, %v8116
    %v8120 = vadd.f32 %v8119, %v8117
    %v8121 = vadd.f32 %v8120, %v8118
    %8122 = vadd.xlane.f32.xlu0 %v8121
    %v8123 = vpop.xlane.xlu0 %8122
    %v8124 = vrot.slane %v8123, 4
    %v8125 = vadd.f32 %v8123, %v8124
    %v8126 = vrot.slane %v8125, 2
    %v8127 = vadd.f32 %v8125, %v8126
    %v8128 = vrot.slane %v8127, 1
    %v8129 = vadd.f32 %v8127, %v8128
    %s8130 = vtos %v8129
    %s8131 = sadd.f32 %s8048, %s8130
    %v8132 = vpack.c.bf16 %v8109, %v8107
    %v8133 = vpack.c.bf16 %v8110, %v8108
    %8134 = vmatpush.bf16.xpose.msra.mxu0 0
    %8135 = vmatpush.bf16.xpose.msra.mxu0 0
    %8136 = vmatpush.bf16.xpose.msra.mxu0 0
    %8137 = vmatpush.bf16.xpose.msra.mxu0 0
    %8138 = vmatpush.bf16.xpose.msra.mxu0 0
    %8139 = vmatpush.bf16.xpose.msra.mxu0 0
    %8140 = vmatpush.bf16.xpose.msra.mxu0 0
    %8141 = vmatpush.bf16.xpose.msra.mxu0 %v8132
    %8142 = vmatmul.bf16.gmra.mxu0 %v8132
    %v8143 = vpop.f32.mrf.mxu0
    %v8144 = vadd.f32 0.0, %v8143
    %v8145 = vpop.f32.mrf.mxu0
    %v8146 = vadd.f32 0.0, %v8145
    %8147 = vdwg.mxu0
    %8148 = vmatpush.bf16.xpose.msra.mxu0 0
    %8149 = vmatpush.bf16.xpose.msra.mxu0 0
    %8150 = vmatpush.bf16.xpose.msra.mxu0 0
    %8151 = vmatpush.bf16.xpose.msra.mxu0 0
    %8152 = vmatpush.bf16.xpose.msra.mxu0 0
    %8153 = vmatpush.bf16.xpose.msra.mxu0 0
    %8154 = vmatpush.bf16.xpose.msra.mxu0 0
    %8155 = vmatpush.bf16.xpose.msra.mxu0 %v8133
    %8156 = vmatmul.bf16.gmra.mxu0 %v8133
    %v8157 = vpop.f32.mrf.mxu0
    %v8158 = vadd.f32 %v8144, %v8157
    %v8159 = vpop.f32.mrf.mxu0
    %v8160 = vadd.f32 %v8146, %v8159
    %8161 = vdwg.mxu0
    %v8162 = vadd.f32 %v8103, %v8158
    %v8163 = vadd.f32 %v8105, %v8160
    %v8164 = vld [vmem:[#allocation3 + $0x70] sm:$0xff]
    %v8165 = vld [vmem:[#allocation3 + $0x78] sm:$0xff]
    %v8166 = vld [vmem:[#allocation3 + $0xf0] sm:$0xff]
    %v8167 = vld [vmem:[#allocation3 + $0xf8] sm:$0xff]
    %v8168 = vsub.f32 %v8164, %v8164
    %v8169 = vsub.f32 %v8165, %v8165
    %v8170 = vsub.f32 %v8166, %v8166
    %v8171 = vsub.f32 %v8167, %v8167
    %v8172 = vand.u32 2147483647, %v8168
    %v8173 = vand.u32 2147483647, %v8169
    %v8174 = vand.u32 2147483647, %v8170
    %v8175 = vand.u32 2147483647, %v8171
    %v8176 = vadd.f32 %v8172, %v8173
    %v8177 = vadd.f32 %v8176, %v8174
    %v8178 = vadd.f32 %v8177, %v8175
    %8179 = vadd.xlane.f32.xlu0 %v8178
    %v8180 = vpop.xlane.xlu0 %8179
    %v8181 = vrot.slane %v8180, 4
    %v8182 = vadd.f32 %v8180, %v8181
    %v8183 = vrot.slane %v8182, 2
    %v8184 = vadd.f32 %v8182, %v8183
    %v8185 = vrot.slane %v8184, 1
    %v8186 = vadd.f32 %v8184, %v8185
    %s8187 = vtos %v8186
    %s8188 = sadd.f32 %s8131, %s8187
    %v8189 = vpack.c.bf16 %v8166, %v8164
    %v8190 = vpack.c.bf16 %v8167, %v8165
    %8191 = vmatpush.bf16.xpose.msra.mxu0 0
    %8192 = vmatpush.bf16.xpose.msra.mxu0 0
    %8193 = vmatpush.bf16.xpose.msra.mxu0 0
    %8194 = vmatpush.bf16.xpose.msra.mxu0 0
    %8195 = vmatpush.bf16.xpose.msra.mxu0 0
    %8196 = vmatpush.bf16.xpose.msra.mxu0 0
    %8197 = vmatpush.bf16.xpose.msra.mxu0 0
    %8198 = vmatpush.bf16.xpose.msra.mxu0 %v8189
    %8199 = vmatmul.bf16.gmra.mxu0 %v8189
    %v8200 = vpop.f32.mrf.mxu0
    %v8201 = vadd.f32 0.0, %v8200
    %v8202 = vpop.f32.mrf.mxu0
    %v8203 = vadd.f32 0.0, %v8202
    %8204 = vdwg.mxu0
    %8205 = vmatpush.bf16.xpose.msra.mxu0 0
    %8206 = vmatpush.bf16.xpose.msra.mxu0 0
    %8207 = vmatpush.bf16.xpose.msra.mxu0 0
    %8208 = vmatpush.bf16.xpose.msra.mxu0 0
    %8209 = vmatpush.bf16.xpose.msra.mxu0 0
    %8210 = vmatpush.bf16.xpose.msra.mxu0 0
    %8211 = vmatpush.bf16.xpose.msra.mxu0 0
    %8212 = vmatpush.bf16.xpose.msra.mxu0 %v8190
    %8213 = vmatmul.bf16.gmra.mxu0 %v8190
    %v8214 = vpop.f32.mrf.mxu0
    %v8215 = vadd.f32 %v8201, %v8214
    %v8216 = vpop.f32.mrf.mxu0
    %v8217 = vadd.f32 %v8203, %v8216
    %8218 = vdwg.mxu0
    %v8219 = vadd.f32 %v8162, %v8215
    %v8220 = vadd.f32 %v8163, %v8217
    %v8221 = vmul.f32 %v8219, 6.1035156e-05
    %v8222 = vmul.f32 %v8220, 6.1035156e-05
    %v8223 = vsub.f32 %v8221, %v8221
    %v8224 = vsub.f32 %v8222, %v8222
    %v8225 = vand.u32 2147483647, %v8223
    %v8226 = vand.u32 2147483647, %v8224
    %v8227 = vsel %vm5028, %v8225, 0.0
    %v8228 = vsel %vm5028, %v8226, 0.0
    %v8229 = vadd.f32 %v8227, %v8228
    %8230 = vadd.xlane.f32.xlu0 %v8229
    %v8231 = vpop.xlane.xlu0 %8230
    %v8232 = vrot.slane %v8231, 4
    %v8233 = vadd.f32 %v8231, %v8232
    %v8234 = vrot.slane %v8233, 2
    %v8235 = vadd.f32 %v8233, %v8234
    %v8236 = vrot.slane %v8235, 1
    %v8237 = vadd.f32 %v8235, %v8236
    %s8238 = vtos %v8237
    %s8239 = sadd.f32 %s7996, %s8238
    %v8240 = vrcp.pop 32768.0
    %v8241 = vmul.f32 32768.0, %v8240
    %v8242 = vsub.f32 1.0, %v8241
    %v8243 = vmul.f32 %v8240, %v8242
    %v8244 = vadd.f32 %v8240, %v8243
    %vm8245 = vweird.f32 %v8240
    %v8246 = vsel %vm8245, %v8240, %v8244
    %s8247 = vtos %v8246
    %s8248 = smul.f32 %s8188, %s8247
    %s8249 = sadd.f32 %s7743, %s8248
    %v8250 = vrcp.pop 512.0
    %v8251 = vmul.f32 512.0, %v8250
    %v8252 = vsub.f32 1.0, %v8251
    %v8253 = vmul.f32 %v8250, %v8252
    %v8254 = vadd.f32 %v8250, %v8253
    %vm8255 = vweird.f32 %v8250
    %v8256 = vsel %vm8255, %v8250, %v8254
    %s8257 = vtos %v8256
    %s8258 = smul.f32 %s8239, %s8257
    %s8259 = sadd.f32 %s7753, %s8258
    %v8260 = vld [vmem:[#allocation4] sm:$0xff]
    %v8261 = vld [vmem:[#allocation4 + $0x8] sm:$0xff]
    %v8262 = vld [vmem:[#allocation4 + $0x80] sm:$0xff]
    %v8263 = vld [vmem:[#allocation4 + $0x88] sm:$0xff]
    %v8264 = vld [vmem:[#allocation4 + $0x100] sm:$0xff]
    %v8265 = vld [vmem:[#allocation4 + $0x108] sm:$0xff]
    %v8266 = vld [vmem:[#allocation4 + $0x180] sm:$0xff]
    %v8267 = vld [vmem:[#allocation4 + $0x188] sm:$0xff]
    %v8268 = vsub.f32 %v8260, %v8260
    %v8269 = vsub.f32 %v8261, %v8261
    %v8270 = vsub.f32 %v8262, %v8262
    %v8271 = vsub.f32 %v8263, %v8263
    %v8272 = vsub.f32 %v8264, %v8264
    %v8273 = vsub.f32 %v8265, %v8265
    %v8274 = vsub.f32 %v8266, %v8266
    %v8275 = vsub.f32 %v8267, %v8267
    %v8276 = vand.u32 2147483647, %v8268
    %v8277 = vand.u32 2147483647, %v8269
    %v8278 = vand.u32 2147483647, %v8270
    %v8279 = vand.u32 2147483647, %v8271
    %v8280 = vand.u32 2147483647, %v8272
    %v8281 = vand.u32 2147483647, %v8273
    %v8282 = vand.u32 2147483647, %v8274
    %v8283 = vand.u32 2147483647, %v8275
    %v8284 = vadd.f32 %v8276, %v8277
    %v8285 = vadd.f32 %v8284, %v8278
    %v8286 = vadd.f32 %v8285, %v8279
    %v8287 = vadd.f32 %v8286, %v8280
    %v8288 = vadd.f32 %v8287, %v8281
    %v8289 = vadd.f32 %v8288, %v8282
    %v8290 = vadd.f32 %v8289, %v8283
    %8291 = vadd.xlane.f32.xlu0 %v8290
    %v8292 = vpop.xlane.xlu0 %8291
    %v8293 = vrot.slane %v8292, 4
    %v8294 = vadd.f32 %v8292, %v8293
    %v8295 = vrot.slane %v8294, 2
    %v8296 = vadd.f32 %v8294, %v8295
    %v8297 = vrot.slane %v8296, 1
    %v8298 = vadd.f32 %v8296, %v8297
    %s8299 = vtos %v8298
    %s8300 = sadd.f32 %s8299, 0.0
    %v8301 = vpack.c.bf16 %v8262, %v8260
    %v8302 = vpack.c.bf16 %v8263, %v8261
    %v8303 = vpack.c.bf16 %v8266, %v8264
    %v8304 = vpack.c.bf16 %v8267, %v8265
    %v8305 = vld [vmem:[#allocation4 + $0x10] sm:$0xff]
    %v8306 = vld [vmem:[#allocation4 + $0x18] sm:$0xff]
    %v8307 = vld [vmem:[#allocation4 + $0x90] sm:$0xff]
    %v8308 = vld [vmem:[#allocation4 + $0x98] sm:$0xff]
    %v8309 = vld [vmem:[#allocation4 + $0x110] sm:$0xff]
    %v8310 = vld [vmem:[#allocation4 + $0x118] sm:$0xff]
    %v8311 = vld [vmem:[#allocation4 + $0x190] sm:$0xff]
    %v8312 = vld [vmem:[#allocation4 + $0x198] sm:$0xff]
    %v8313 = vsub.f32 %v8305, %v8305
    %v8314 = vsub.f32 %v8306, %v8306
    %v8315 = vsub.f32 %v8307, %v8307
    %v8316 = vsub.f32 %v8308, %v8308
    %v8317 = vsub.f32 %v8309, %v8309
    %v8318 = vsub.f32 %v8310, %v8310
    %v8319 = vsub.f32 %v8311, %v8311
    %v8320 = vsub.f32 %v8312, %v8312
    %v8321 = vand.u32 2147483647, %v8313
    %v8322 = vand.u32 2147483647, %v8314
    %v8323 = vand.u32 2147483647, %v8315
    %v8324 = vand.u32 2147483647, %v8316
    %v8325 = vand.u32 2147483647, %v8317
    %v8326 = vand.u32 2147483647, %v8318
    %v8327 = vand.u32 2147483647, %v8319
    %v8328 = vand.u32 2147483647, %v8320
    %v8329 = vadd.f32 %v8321, %v8322
    %v8330 = vadd.f32 %v8329, %v8323
    %v8331 = vadd.f32 %v8330, %v8324
    %v8332 = vadd.f32 %v8331, %v8325
    %v8333 = vadd.f32 %v8332, %v8326
    %v8334 = vadd.f32 %v8333, %v8327
    %v8335 = vadd.f32 %v8334, %v8328
    %8336 = vadd.xlane.f32.xlu0 %v8335
    %v8337 = vpop.xlane.xlu0 %8336
    %v8338 = vrot.slane %v8337, 4
    %v8339 = vadd.f32 %v8337, %v8338
    %v8340 = vrot.slane %v8339, 2
    %v8341 = vadd.f32 %v8339, %v8340
    %v8342 = vrot.slane %v8341, 1
    %v8343 = vadd.f32 %v8341, %v8342
    %s8344 = vtos %v8343
    %s8345 = sadd.f32 %s8300, %s8344
    %v8346 = vpack.c.bf16 %v8307, %v8305
    %v8347 = vpack.c.bf16 %v8308, %v8306
    %v8348 = vpack.c.bf16 %v8311, %v8309
    %v8349 = vpack.c.bf16 %v8312, %v8310
    %8350 = vmatpush.bf16.xpose.msra.mxu0 0
    %8351 = vmatpush.bf16.xpose.msra.mxu0 0
    %8352 = vmatpush.bf16.xpose.msra.mxu0 0
    %8353 = vmatpush.bf16.xpose.msra.mxu0 0
    %8354 = vmatpush.bf16.xpose.msra.mxu0 0
    %8355 = vmatpush.bf16.xpose.msra.mxu0 0
    %8356 = vmatpush.bf16.xpose.msra.mxu0 %v8348
    %8357 = vmatpush.bf16.xpose.msra.mxu0 %v8346
    %8358 = vmatmul.bf16.gmra.mxu0 %v8346
    %v8359 = vpop.f32.mrf.mxu0
    %v8360 = vadd.f32 0.0, %v8359
    %v8361 = vpop.f32.mrf.mxu0
    %v8362 = vadd.f32 0.0, %v8361
    %8363 = vmatmul.bf16.gmra.mxu0 %v8348
    %v8364 = vpop.f32.mrf.mxu0
    %v8365 = vadd.f32 0.0, %v8364
    %v8366 = vpop.f32.mrf.mxu0
    %v8367 = vadd.f32 0.0, %v8366
    %8368 = vdwg.mxu0
    %8369 = vmatpush.bf16.xpose.msra.mxu0 0
    %8370 = vmatpush.bf16.xpose.msra.mxu0 0
    %8371 = vmatpush.bf16.xpose.msra.mxu0 0
    %8372 = vmatpush.bf16.xpose.msra.mxu0 0
    %8373 = vmatpush.bf16.xpose.msra.mxu0 0
    %8374 = vmatpush.bf16.xpose.msra.mxu0 0
    %8375 = vmatpush.bf16.xpose.msra.mxu0 %v8349
    %8376 = vmatpush.bf16.xpose.msra.mxu0 %v8347
    %8377 = vmatmul.bf16.gmra.mxu0 %v8347
    %v8378 = vpop.f32.mrf.mxu0
    %v8379 = vadd.f32 %v8360, %v8378
    %v8380 = vpop.f32.mrf.mxu0
    %v8381 = vadd.f32 %v8362, %v8380
    %8382 = vmatmul.bf16.gmra.mxu0 %v8349
    %v8383 = vpop.f32.mrf.mxu0
    %v8384 = vadd.f32 %v8365, %v8383
    %v8385 = vpop.f32.mrf.mxu0
    %v8386 = vadd.f32 %v8367, %v8385
    %8387 = vdwg.mxu0
    %8388 = vmatpush.bf16.xpose.msra.mxu0 0
    %8389 = vmatpush.bf16.xpose.msra.mxu0 0
    %8390 = vmatpush.bf16.xpose.msra.mxu0 0
    %8391 = vmatpush.bf16.xpose.msra.mxu0 0
    %8392 = vmatpush.bf16.xpose.msra.mxu0 0
    %8393 = vmatpush.bf16.xpose.msra.mxu0 0
    %8394 = vmatpush.bf16.xpose.msra.mxu0 %v8303
    %8395 = vmatpush.bf16.xpose.msra.mxu0 %v8301
    %8396 = vmatmul.bf16.gmra.mxu0 %v8301
    %v8397 = vpop.f32.mrf.mxu0
    %v8398 = vadd.f32 %v8379, %v8397
    %v8399 = vpop.f32.mrf.mxu0
    %v8400 = vadd.f32 %v8381, %v8399
    %8401 = vmatmul.bf16.gmra.mxu0 %v8303
    %v8402 = vpop.f32.mrf.mxu0
    %v8403 = vadd.f32 %v8384, %v8402
    %v8404 = vpop.f32.mrf.mxu0
    %v8405 = vadd.f32 %v8386, %v8404
    %8406 = vdwg.mxu0
    %8407 = vmatpush.bf16.xpose.msra.mxu0 0
    %8408 = vmatpush.bf16.xpose.msra.mxu0 0
    %8409 = vmatpush.bf16.xpose.msra.mxu0 0
    %8410 = vmatpush.bf16.xpose.msra.mxu0 0
    %8411 = vmatpush.bf16.xpose.msra.mxu0 0
    %8412 = vmatpush.bf16.xpose.msra.mxu0 0
    %8413 = vmatpush.bf16.xpose.msra.mxu0 %v8304
    %8414 = vmatpush.bf16.xpose.msra.mxu0 %v8302
    %8415 = vmatmul.bf16.gmra.mxu0 %v8302
    %v8416 = vpop.f32.mrf.mxu0
    %v8417 = vadd.f32 %v8398, %v8416
    %v8418 = vpop.f32.mrf.mxu0
    %v8419 = vadd.f32 %v8400, %v8418
    %8420 = vmatmul.bf16.gmra.mxu0 %v8304
    %v8421 = vpop.f32.mrf.mxu0
    %v8422 = vadd.f32 %v8403, %v8421
    %v8423 = vpop.f32.mrf.mxu0
    %v8424 = vadd.f32 %v8405, %v8423
    %8425 = vdwg.mxu0
    %v8426 = vld [vmem:[#allocation4 + $0x20] sm:$0xff]
    %v8427 = vld [vmem:[#allocation4 + $0x28] sm:$0xff]
    %v8428 = vld [vmem:[#allocation4 + $0xa0] sm:$0xff]
    %v8429 = vld [vmem:[#allocation4 + $0xa8] sm:$0xff]
    %v8430 = vld [vmem:[#allocation4 + $0x120] sm:$0xff]
    %v8431 = vld [vmem:[#allocation4 + $0x128] sm:$0xff]
    %v8432 = vld [vmem:[#allocation4 + $0x1a0] sm:$0xff]
    %v8433 = vld [vmem:[#allocation4 + $0x1a8] sm:$0xff]
    %v8434 = vsub.f32 %v8426, %v8426
    %v8435 = vsub.f32 %v8427, %v8427
    %v8436 = vsub.f32 %v8428, %v8428
    %v8437 = vsub.f32 %v8429, %v8429
    %v8438 = vsub.f32 %v8430, %v8430
    %v8439 = vsub.f32 %v8431, %v8431
    %v8440 = vsub.f32 %v8432, %v8432
    %v8441 = vsub.f32 %v8433, %v8433
    %v8442 = vand.u32 2147483647, %v8434
    %v8443 = vand.u32 2147483647, %v8435
    %v8444 = vand.u32 2147483647, %v8436
    %v8445 = vand.u32 2147483647, %v8437
    %v8446 = vand.u32 2147483647, %v8438
    %v8447 = vand.u32 2147483647, %v8439
    %v8448 = vand.u32 2147483647, %v8440
    %v8449 = vand.u32 2147483647, %v8441
    %v8450 = vadd.f32 %v8442, %v8443
    %v8451 = vadd.f32 %v8450, %v8444
    %v8452 = vadd.f32 %v8451, %v8445
    %v8453 = vadd.f32 %v8452, %v8446
    %v8454 = vadd.f32 %v8453, %v8447
    %v8455 = vadd.f32 %v8454, %v8448
    %v8456 = vadd.f32 %v8455, %v8449
    %8457 = vadd.xlane.f32.xlu0 %v8456
    %v8458 = vpop.xlane.xlu0 %8457
    %v8459 = vrot.slane %v8458, 4
    %v8460 = vadd.f32 %v8458, %v8459
    %v8461 = vrot.slane %v8460, 2
    %v8462 = vadd.f32 %v8460, %v8461
    %v8463 = vrot.slane %v8462, 1
    %v8464 = vadd.f32 %v8462, %v8463
    %s8465 = vtos %v8464
    %s8466 = sadd.f32 %s8345, %s8465
    %v8467 = vpack.c.bf16 %v8428, %v8426
    %v8468 = vpack.c.bf16 %v8429, %v8427
    %v8469 = vpack.c.bf16 %v8432, %v8430
    %v8470 = vpack.c.bf16 %v8433, %v8431
    %8471 = vmatpush.bf16.xpose.msra.mxu0 0
    %8472 = vmatpush.bf16.xpose.msra.mxu0 0
    %8473 = vmatpush.bf16.xpose.msra.mxu0 0
    %8474 = vmatpush.bf16.xpose.msra.mxu0 0
    %8475 = vmatpush.bf16.xpose.msra.mxu0 0
    %8476 = vmatpush.bf16.xpose.msra.mxu0 0
    %8477 = vmatpush.bf16.xpose.msra.mxu0 %v8469
    %8478 = vmatpush.bf16.xpose.msra.mxu0 %v8467
    %8479 = vmatmul.bf16.gmra.mxu0 %v8467
    %v8480 = vpop.f32.mrf.mxu0
    %v8481 = vadd.f32 0.0, %v8480
    %v8482 = vpop.f32.mrf.mxu0
    %v8483 = vadd.f32 0.0, %v8482
    %8484 = vmatmul.bf16.gmra.mxu0 %v8469
    %v8485 = vpop.f32.mrf.mxu0
    %v8486 = vadd.f32 0.0, %v8485
    %v8487 = vpop.f32.mrf.mxu0
    %v8488 = vadd.f32 0.0, %v8487
    %8489 = vdwg.mxu0
    %8490 = vmatpush.bf16.xpose.msra.mxu0 0
    %8491 = vmatpush.bf16.xpose.msra.mxu0 0
    %8492 = vmatpush.bf16.xpose.msra.mxu0 0
    %8493 = vmatpush.bf16.xpose.msra.mxu0 0
    %8494 = vmatpush.bf16.xpose.msra.mxu0 0
    %8495 = vmatpush.bf16.xpose.msra.mxu0 0
    %8496 = vmatpush.bf16.xpose.msra.mxu0 %v8470
    %8497 = vmatpush.bf16.xpose.msra.mxu0 %v8468
    %8498 = vmatmul.bf16.gmra.mxu0 %v8468
    %v8499 = vpop.f32.mrf.mxu0
    %v8500 = vadd.f32 %v8481, %v8499
    %v8501 = vpop.f32.mrf.mxu0
    %v8502 = vadd.f32 %v8483, %v8501
    %8503 = vmatmul.bf16.gmra.mxu0 %v8470
    %v8504 = vpop.f32.mrf.mxu0
    %v8505 = vadd.f32 %v8486, %v8504
    %v8506 = vpop.f32.mrf.mxu0
    %v8507 = vadd.f32 %v8488, %v8506
    %8508 = vdwg.mxu0
    %v8509 = vadd.f32 %v8417, %v8500
    %v8510 = vadd.f32 %v8419, %v8502
    %v8511 = vadd.f32 %v8422, %v8505
    %v8512 = vadd.f32 %v8424, %v8507
    %v8513 = vld [vmem:[#allocation4 + $0x30] sm:$0xff]
    %v8514 = vld [vmem:[#allocation4 + $0x38] sm:$0xff]
    %v8515 = vld [vmem:[#allocation4 + $0xb0] sm:$0xff]
    %v8516 = vld [vmem:[#allocation4 + $0xb8] sm:$0xff]
    %v8517 = vld [vmem:[#allocation4 + $0x130] sm:$0xff]
    %v8518 = vld [vmem:[#allocation4 + $0x138] sm:$0xff]
    %v8519 = vld [vmem:[#allocation4 + $0x1b0] sm:$0xff]
    %v8520 = vld [vmem:[#allocation4 + $0x1b8] sm:$0xff]
    %v8521 = vsub.f32 %v8513, %v8513
    %v8522 = vsub.f32 %v8514, %v8514
    %v8523 = vsub.f32 %v8515, %v8515
    %v8524 = vsub.f32 %v8516, %v8516
    %v8525 = vsub.f32 %v8517, %v8517
    %v8526 = vsub.f32 %v8518, %v8518
    %v8527 = vsub.f32 %v8519, %v8519
    %v8528 = vsub.f32 %v8520, %v8520
    %v8529 = vand.u32 2147483647, %v8521
    %v8530 = vand.u32 2147483647, %v8522
    %v8531 = vand.u32 2147483647, %v8523
    %v8532 = vand.u32 2147483647, %v8524
    %v8533 = vand.u32 2147483647, %v8525
    %v8534 = vand.u32 2147483647, %v8526
    %v8535 = vand.u32 2147483647, %v8527
    %v8536 = vand.u32 2147483647, %v8528
    %v8537 = vadd.f32 %v8529, %v8530
    %v8538 = vadd.f32 %v8537, %v8531
    %v8539 = vadd.f32 %v8538, %v8532
    %v8540 = vadd.f32 %v8539, %v8533
    %v8541 = vadd.f32 %v8540, %v8534
    %v8542 = vadd.f32 %v8541, %v8535
    %v8543 = vadd.f32 %v8542, %v8536
    %8544 = vadd.xlane.f32.xlu0 %v8543
    %v8545 = vpop.xlane.xlu0 %8544
    %v8546 = vrot.slane %v8545, 4
    %v8547 = vadd.f32 %v8545, %v8546
    %v8548 = vrot.slane %v8547, 2
    %v8549 = vadd.f32 %v8547, %v8548
    %v8550 = vrot.slane %v8549, 1
    %v8551 = vadd.f32 %v8549, %v8550
    %s8552 = vtos %v8551
    %s8553 = sadd.f32 %s8466, %s8552
    %v8554 = vpack.c.bf16 %v8515, %v8513
    %v8555 = vpack.c.bf16 %v8516, %v8514
    %v8556 = vpack.c.bf16 %v8519, %v8517
    %v8557 = vpack.c.bf16 %v8520, %v8518
    %8558 = vmatpush.bf16.xpose.msra.mxu0 0
    %8559 = vmatpush.bf16.xpose.msra.mxu0 0
    %8560 = vmatpush.bf16.xpose.msra.mxu0 0
    %8561 = vmatpush.bf16.xpose.msra.mxu0 0
    %8562 = vmatpush.bf16.xpose.msra.mxu0 0
    %8563 = vmatpush.bf16.xpose.msra.mxu0 0
    %8564 = vmatpush.bf16.xpose.msra.mxu0 %v8556
    %8565 = vmatpush.bf16.xpose.msra.mxu0 %v8554
    %8566 = vmatmul.bf16.gmra.mxu0 %v8554
    %v8567 = vpop.f32.mrf.mxu0
    %v8568 = vadd.f32 0.0, %v8567
    %v8569 = vpop.f32.mrf.mxu0
    %v8570 = vadd.f32 0.0, %v8569
    %8571 = vmatmul.bf16.gmra.mxu0 %v8556
    %v8572 = vpop.f32.mrf.mxu0
    %v8573 = vadd.f32 0.0, %v8572
    %v8574 = vpop.f32.mrf.mxu0
    %v8575 = vadd.f32 0.0, %v8574
    %8576 = vdwg.mxu0
    %8577 = vmatpush.bf16.xpose.msra.mxu0 0
    %8578 = vmatpush.bf16.xpose.msra.mxu0 0
    %8579 = vmatpush.bf16.xpose.msra.mxu0 0
    %8580 = vmatpush.bf16.xpose.msra.mxu0 0
    %8581 = vmatpush.bf16.xpose.msra.mxu0 0
    %8582 = vmatpush.bf16.xpose.msra.mxu0 0
    %8583 = vmatpush.bf16.xpose.msra.mxu0 %v8557
    %8584 = vmatpush.bf16.xpose.msra.mxu0 %v8555
    %8585 = vmatmul.bf16.gmra.mxu0 %v8555
    %v8586 = vpop.f32.mrf.mxu0
    %v8587 = vadd.f32 %v8568, %v8586
    %v8588 = vpop.f32.mrf.mxu0
    %v8589 = vadd.f32 %v8570, %v8588
    %8590 = vmatmul.bf16.gmra.mxu0 %v8557
    %v8591 = vpop.f32.mrf.mxu0
    %v8592 = vadd.f32 %v8573, %v8591
    %v8593 = vpop.f32.mrf.mxu0
    %v8594 = vadd.f32 %v8575, %v8593
    %8595 = vdwg.mxu0
    %v8596 = vadd.f32 %v8509, %v8587
    %v8597 = vadd.f32 %v8510, %v8589
    %v8598 = vadd.f32 %v8511, %v8592
    %v8599 = vadd.f32 %v8512, %v8594
    %v8600 = vmul.f32 %v8596, 3.0517578e-05
    %v8601 = vmul.f32 %v8597, 3.0517578e-05
    %v8602 = vmul.f32 %v8598, 3.0517578e-05
    %v8603 = vmul.f32 %v8599, 3.0517578e-05
    %v8604 = vsub.f32 %v8600, %v8600
    %v8605 = vsub.f32 %v8601, %v8601
    %v8606 = vsub.f32 %v8602, %v8602
    %v8607 = vsub.f32 %v8603, %v8603
    %v8608 = vand.u32 2147483647, %v8604
    %v8609 = vand.u32 2147483647, %v8605
    %v8610 = vand.u32 2147483647, %v8606
    %v8611 = vand.u32 2147483647, %v8607
    %vm8612 = vcmask 261120
    %v8613 = vsel %vm8612, %v8608, 0.0
    %v8614 = vsel %vm8612, %v8609, 0.0
    %v8615 = vadd.f32 %v8613, %v8614
    %v8616 = vsel %vm8612, %v8610, 0.0
    %v8617 = vadd.f32 %v8615, %v8616
    %v8618 = vsel %vm8612, %v8611, 0.0
    %v8619 = vadd.f32 %v8617, %v8618
    %8620 = vadd.xlane.f32.xlu0 %v8619
    %v8621 = vpop.xlane.xlu0 %8620
    %v8622 = vrot.slane %v8621, 4
    %v8623 = vadd.f32 %v8621, %v8622
    %v8624 = vrot.slane %v8623, 2
    %v8625 = vadd.f32 %v8623, %v8624
    %v8626 = vrot.slane %v8625, 1
    %v8627 = vadd.f32 %v8625, %v8626
    %s8628 = vtos %v8627
    %s8629 = sadd.f32 %s8628, 0.0
    %v8630 = vld [vmem:[#allocation4 + $0x40] sm:$0xff]
    %v8631 = vld [vmem:[#allocation4 + $0x48] sm:$0xff]
    %v8632 = vld [vmem:[#allocation4 + $0xc0] sm:$0xff]
    %v8633 = vld [vmem:[#allocation4 + $0xc8] sm:$0xff]
    %v8634 = vld [vmem:[#allocation4 + $0x140] sm:$0xff]
    %v8635 = vld [vmem:[#allocation4 + $0x148] sm:$0xff]
    %v8636 = vld [vmem:[#allocation4 + $0x1c0] sm:$0xff]
    %v8637 = vld [vmem:[#allocation4 + $0x1c8] sm:$0xff]
    %v8638 = vsub.f32 %v8630, %v8630
    %v8639 = vsub.f32 %v8631, %v8631
    %v8640 = vsub.f32 %v8632, %v8632
    %v8641 = vsub.f32 %v8633, %v8633
    %v8642 = vsub.f32 %v8634, %v8634
    %v8643 = vsub.f32 %v8635, %v8635
    %v8644 = vsub.f32 %v8636, %v8636
    %v8645 = vsub.f32 %v8637, %v8637
    %v8646 = vand.u32 2147483647, %v8638
    %v8647 = vand.u32 2147483647, %v8639
    %v8648 = vand.u32 2147483647, %v8640
    %v8649 = vand.u32 2147483647, %v8641
    %v8650 = vand.u32 2147483647, %v8642
    %v8651 = vand.u32 2147483647, %v8643
    %v8652 = vand.u32 2147483647, %v8644
    %v8653 = vand.u32 2147483647, %v8645
    %v8654 = vadd.f32 %v8646, %v8647
    %v8655 = vadd.f32 %v8654, %v8648
    %v8656 = vadd.f32 %v8655, %v8649
    %v8657 = vadd.f32 %v8656, %v8650
    %v8658 = vadd.f32 %v8657, %v8651
    %v8659 = vadd.f32 %v8658, %v8652
    %v8660 = vadd.f32 %v8659, %v8653
    %8661 = vadd.xlane.f32.xlu0 %v8660
    %v8662 = vpop.xlane.xlu0 %8661
    %v8663 = vrot.slane %v8662, 4
    %v8664 = vadd.f32 %v8662, %v8663
    %v8665 = vrot.slane %v8664, 2
    %v8666 = vadd.f32 %v8664, %v8665
    %v8667 = vrot.slane %v8666, 1
    %v8668 = vadd.f32 %v8666, %v8667
    %s8669 = vtos %v8668
    %s8670 = sadd.f32 %s8553, %s8669
    %v8671 = vpack.c.bf16 %v8632, %v8630
    %v8672 = vpack.c.bf16 %v8633, %v8631
    %v8673 = vpack.c.bf16 %v8636, %v8634
    %v8674 = vpack.c.bf16 %v8637, %v8635
    %v8675 = vld [vmem:[#allocation4 + $0x50] sm:$0xff]
    %v8676 = vld [vmem:[#allocation4 + $0x58] sm:$0xff]
    %v8677 = vld [vmem:[#allocation4 + $0xd0] sm:$0xff]
    %v8678 = vld [vmem:[#allocation4 + $0xd8] sm:$0xff]
    %v8679 = vld [vmem:[#allocation4 + $0x150] sm:$0xff]
    %v8680 = vld [vmem:[#allocation4 + $0x158] sm:$0xff]
    %v8681 = vld [vmem:[#allocation4 + $0x1d0] sm:$0xff]
    %v8682 = vld [vmem:[#allocation4 + $0x1d8] sm:$0xff]
    %v8683 = vsub.f32 %v8675, %v8675
    %v8684 = vsub.f32 %v8676, %v8676
    %v8685 = vsub.f32 %v8677, %v8677
    %v8686 = vsub.f32 %v8678, %v8678
    %v8687 = vsub.f32 %v8679, %v8679
    %v8688 = vsub.f32 %v8680, %v8680
    %v8689 = vsub.f32 %v8681, %v8681
    %v8690 = vsub.f32 %v8682, %v8682
    %v8691 = vand.u32 2147483647, %v8683
    %v8692 = vand.u32 2147483647, %v8684
    %v8693 = vand.u32 2147483647, %v8685
    %v8694 = vand.u32 2147483647, %v8686
    %v8695 = vand.u32 2147483647, %v8687
    %v8696 = vand.u32 2147483647, %v8688
    %v8697 = vand.u32 2147483647, %v8689
    %v8698 = vand.u32 2147483647, %v8690
    %v8699 = vadd.f32 %v8691, %v8692
    %v8700 = vadd.f32 %v8699, %v8693
    %v8701 = vadd.f32 %v8700, %v8694
    %v8702 = vadd.f32 %v8701, %v8695
    %v8703 = vadd.f32 %v8702, %v8696
    %v8704 = vadd.f32 %v8703, %v8697
    %v8705 = vadd.f32 %v8704, %v8698
    %8706 = vadd.xlane.f32.xlu0 %v8705
    %v8707 = vpop.xlane.xlu0 %8706
    %v8708 = vrot.slane %v8707, 4
    %v8709 = vadd.f32 %v8707, %v8708
    %v8710 = vrot.slane %v8709, 2
    %v8711 = vadd.f32 %v8709, %v8710
    %v8712 = vrot.slane %v8711, 1
    %v8713 = vadd.f32 %v8711, %v8712
    %s8714 = vtos %v8713
    %s8715 = sadd.f32 %s8670, %s8714
    %v8716 = vpack.c.bf16 %v8677, %v8675
    %v8717 = vpack.c.bf16 %v8678, %v8676
    %v8718 = vpack.c.bf16 %v8681, %v8679
    %v8719 = vpack.c.bf16 %v8682, %v8680
    %8720 = vmatpush.bf16.xpose.msra.mxu0 0
    %8721 = vmatpush.bf16.xpose.msra.mxu0 0
    %8722 = vmatpush.bf16.xpose.msra.mxu0 0
    %8723 = vmatpush.bf16.xpose.msra.mxu0 0
    %8724 = vmatpush.bf16.xpose.msra.mxu0 0
    %8725 = vmatpush.bf16.xpose.msra.mxu0 0
    %8726 = vmatpush.bf16.xpose.msra.mxu0 %v8718
    %8727 = vmatpush.bf16.xpose.msra.mxu0 %v8716
    %8728 = vmatmul.bf16.gmra.mxu0 %v8716
    %v8729 = vpop.f32.mrf.mxu0
    %v8730 = vadd.f32 0.0, %v8729
    %v8731 = vpop.f32.mrf.mxu0
    %v8732 = vadd.f32 0.0, %v8731
    %8733 = vmatmul.bf16.gmra.mxu0 %v8718
    %v8734 = vpop.f32.mrf.mxu0
    %v8735 = vadd.f32 0.0, %v8734
    %v8736 = vpop.f32.mrf.mxu0
    %v8737 = vadd.f32 0.0, %v8736
    %8738 = vdwg.mxu0
    %8739 = vmatpush.bf16.xpose.msra.mxu0 0
    %8740 = vmatpush.bf16.xpose.msra.mxu0 0
    %8741 = vmatpush.bf16.xpose.msra.mxu0 0
    %8742 = vmatpush.bf16.xpose.msra.mxu0 0
    %8743 = vmatpush.bf16.xpose.msra.mxu0 0
    %8744 = vmatpush.bf16.xpose.msra.mxu0 0
    %8745 = vmatpush.bf16.xpose.msra.mxu0 %v8719
    %8746 = vmatpush.bf16.xpose.msra.mxu0 %v8717
    %8747 = vmatmul.bf16.gmra.mxu0 %v8717
    %v8748 = vpop.f32.mrf.mxu0
    %v8749 = vadd.f32 %v8730, %v8748
    %v8750 = vpop.f32.mrf.mxu0
    %v8751 = vadd.f32 %v8732, %v8750
    %8752 = vmatmul.bf16.gmra.mxu0 %v8719
    %v8753 = vpop.f32.mrf.mxu0
    %v8754 = vadd.f32 %v8735, %v8753
    %v8755 = vpop.f32.mrf.mxu0
    %v8756 = vadd.f32 %v8737, %v8755
    %8757 = vdwg.mxu0
    %8758 = vmatpush.bf16.xpose.msra.mxu0 0
    %8759 = vmatpush.bf16.xpose.msra.mxu0 0
    %8760 = vmatpush.bf16.xpose.msra.mxu0 0
    %8761 = vmatpush.bf16.xpose.msra.mxu0 0
    %8762 = vmatpush.bf16.xpose.msra.mxu0 0
    %8763 = vmatpush.bf16.xpose.msra.mxu0 0
    %8764 = vmatpush.bf16.xpose.msra.mxu0 %v8673
    %8765 = vmatpush.bf16.xpose.msra.mxu0 %v8671
    %8766 = vmatmul.bf16.gmra.mxu0 %v8671
    %v8767 = vpop.f32.mrf.mxu0
    %v8768 = vadd.f32 %v8749, %v8767
    %v8769 = vpop.f32.mrf.mxu0
    %v8770 = vadd.f32 %v8751, %v8769
    %8771 = vmatmul.bf16.gmra.mxu0 %v8673
    %v8772 = vpop.f32.mrf.mxu0
    %v8773 = vadd.f32 %v8754, %v8772
    %v8774 = vpop.f32.mrf.mxu0
    %v8775 = vadd.f32 %v8756, %v8774
    %8776 = vdwg.mxu0
    %8777 = vmatpush.bf16.xpose.msra.mxu0 0
    %8778 = vmatpush.bf16.xpose.msra.mxu0 0
    %8779 = vmatpush.bf16.xpose.msra.mxu0 0
    %8780 = vmatpush.bf16.xpose.msra.mxu0 0
    %8781 = vmatpush.bf16.xpose.msra.mxu0 0
    %8782 = vmatpush.bf16.xpose.msra.mxu0 0
    %8783 = vmatpush.bf16.xpose.msra.mxu0 %v8674
    %8784 = vmatpush.bf16.xpose.msra.mxu0 %v8672
    %8785 = vmatmul.bf16.gmra.mxu0 %v8672
    %v8786 = vpop.f32.mrf.mxu0
    %v8787 = vadd.f32 %v8768, %v8786
    %v8788 = vpop.f32.mrf.mxu0
    %v8789 = vadd.f32 %v8770, %v8788
    %8790 = vmatmul.bf16.gmra.mxu0 %v8674
    %v8791 = vpop.f32.mrf.mxu0
    %v8792 = vadd.f32 %v8773, %v8791
    %v8793 = vpop.f32.mrf.mxu0
    %v8794 = vadd.f32 %v8775, %v8793
    %8795 = vdwg.mxu0
    %v8796 = vld [vmem:[#allocation4 + $0x60] sm:$0xff]
    %v8797 = vld [vmem:[#allocation4 + $0x68] sm:$0xff]
    %v8798 = vld [vmem:[#allocation4 + $0xe0] sm:$0xff]
    %v8799 = vld [vmem:[#allocation4 + $0xe8] sm:$0xff]
    %v8800 = vld [vmem:[#allocation4 + $0x160] sm:$0xff]
    %v8801 = vld [vmem:[#allocation4 + $0x168] sm:$0xff]
    %v8802 = vld [vmem:[#allocation4 + $0x1e0] sm:$0xff]
    %v8803 = vld [vmem:[#allocation4 + $0x1e8] sm:$0xff]
    %v8804 = vsub.f32 %v8796, %v8796
    %v8805 = vsub.f32 %v8797, %v8797
    %v8806 = vsub.f32 %v8798, %v8798
    %v8807 = vsub.f32 %v8799, %v8799
    %v8808 = vsub.f32 %v8800, %v8800
    %v8809 = vsub.f32 %v8801, %v8801
    %v8810 = vsub.f32 %v8802, %v8802
    %v8811 = vsub.f32 %v8803, %v8803
    %v8812 = vand.u32 2147483647, %v8804
    %v8813 = vand.u32 2147483647, %v8805
    %v8814 = vand.u32 2147483647, %v8806
    %v8815 = vand.u32 2147483647, %v8807
    %v8816 = vand.u32 2147483647, %v8808
    %v8817 = vand.u32 2147483647, %v8809
    %v8818 = vand.u32 2147483647, %v8810
    %v8819 = vand.u32 2147483647, %v8811
    %v8820 = vadd.f32 %v8812, %v8813
    %v8821 = vadd.f32 %v8820, %v8814
    %v8822 = vadd.f32 %v8821, %v8815
    %v8823 = vadd.f32 %v8822, %v8816
    %v8824 = vadd.f32 %v8823, %v8817
    %v8825 = vadd.f32 %v8824, %v8818
    %v8826 = vadd.f32 %v8825, %v8819
    %8827 = vadd.xlane.f32.xlu0 %v8826
    %v8828 = vpop.xlane.xlu0 %8827
    %v8829 = vrot.slane %v8828, 4
    %v8830 = vadd.f32 %v8828, %v8829
    %v8831 = vrot.slane %v8830, 2
    %v8832 = vadd.f32 %v8830, %v8831
    %v8833 = vrot.slane %v8832, 1
    %v8834 = vadd.f32 %v8832, %v8833
    %s8835 = vtos %v8834
    %s8836 = sadd.f32 %s8715, %s8835
    %v8837 = vpack.c.bf16 %v8798, %v8796
    %v8838 = vpack.c.bf16 %v8799, %v8797
    %v8839 = vpack.c.bf16 %v8802, %v8800
    %v8840 = vpack.c.bf16 %v8803, %v8801
    %8841 = vmatpush.bf16.xpose.msra.mxu0 0
    %8842 = vmatpush.bf16.xpose.msra.mxu0 0
    %8843 = vmatpush.bf16.xpose.msra.mxu0 0
    %8844 = vmatpush.bf16.xpose.msra.mxu0 0
    %8845 = vmatpush.bf16.xpose.msra.mxu0 0
    %8846 = vmatpush.bf16.xpose.msra.mxu0 0
    %8847 = vmatpush.bf16.xpose.msra.mxu0 %v8839
    %8848 = vmatpush.bf16.xpose.msra.mxu0 %v8837
    %8849 = vmatmul.bf16.gmra.mxu0 %v8837
    %v8850 = vpop.f32.mrf.mxu0
    %v8851 = vadd.f32 0.0, %v8850
    %v8852 = vpop.f32.mrf.mxu0
    %v8853 = vadd.f32 0.0, %v8852
    %8854 = vmatmul.bf16.gmra.mxu0 %v8839
    %v8855 = vpop.f32.mrf.mxu0
    %v8856 = vadd.f32 0.0, %v8855
    %v8857 = vpop.f32.mrf.mxu0
    %v8858 = vadd.f32 0.0, %v8857
    %8859 = vdwg.mxu0
    %8860 = vmatpush.bf16.xpose.msra.mxu0 0
    %8861 = vmatpush.bf16.xpose.msra.mxu0 0
    %8862 = vmatpush.bf16.xpose.msra.mxu0 0
    %8863 = vmatpush.bf16.xpose.msra.mxu0 0
    %8864 = vmatpush.bf16.xpose.msra.mxu0 0
    %8865 = vmatpush.bf16.xpose.msra.mxu0 0
    %8866 = vmatpush.bf16.xpose.msra.mxu0 %v8840
    %8867 = vmatpush.bf16.xpose.msra.mxu0 %v8838
    %8868 = vmatmul.bf16.gmra.mxu0 %v8838
    %v8869 = vpop.f32.mrf.mxu0
    %v8870 = vadd.f32 %v8851, %v8869
    %v8871 = vpop.f32.mrf.mxu0
    %v8872 = vadd.f32 %v8853, %v8871
    %8873 = vmatmul.bf16.gmra.mxu0 %v8840
    %v8874 = vpop.f32.mrf.mxu0
    %v8875 = vadd.f32 %v8856, %v8874
    %v8876 = vpop.f32.mrf.mxu0
    %v8877 = vadd.f32 %v8858, %v8876
    %8878 = vdwg.mxu0
    %v8879 = vadd.f32 %v8787, %v8870
    %v8880 = vadd.f32 %v8789, %v8872
    %v8881 = vadd.f32 %v8792, %v8875
    %v8882 = vadd.f32 %v8794, %v8877
    %v8883 = vld [vmem:[#allocation4 + $0x70] sm:$0xff]
    %v8884 = vld [vmem:[#allocation4 + $0x78] sm:$0xff]
    %v8885 = vld [vmem:[#allocation4 + $0xf0] sm:$0xff]
    %v8886 = vld [vmem:[#allocation4 + $0xf8] sm:$0xff]
    %v8887 = vld [vmem:[#allocation4 + $0x170] sm:$0xff]
    %v8888 = vld [vmem:[#allocation4 + $0x178] sm:$0xff]
    %v8889 = vld [vmem:[#allocation4 + $0x1f0] sm:$0xff]
    %v8890 = vld [vmem:[#allocation4 + $0x1f8] sm:$0xff]
    %v8891 = vsub.f32 %v8883, %v8883
    %v8892 = vsub.f32 %v8884, %v8884
    %v8893 = vsub.f32 %v8885, %v8885
    %v8894 = vsub.f32 %v8886, %v8886
    %v8895 = vsub.f32 %v8887, %v8887
    %v8896 = vsub.f32 %v8888, %v8888
    %v8897 = vsub.f32 %v8889, %v8889
    %v8898 = vsub.f32 %v8890, %v8890
    %v8899 = vand.u32 2147483647, %v8891
    %v8900 = vand.u32 2147483647, %v8892
    %v8901 = vand.u32 2147483647, %v8893
    %v8902 = vand.u32 2147483647, %v8894
    %v8903 = vand.u32 2147483647, %v8895
    %v8904 = vand.u32 2147483647, %v8896
    %v8905 = vand.u32 2147483647, %v8897
    %v8906 = vand.u32 2147483647, %v8898
    %v8907 = vadd.f32 %v8899, %v8900
    %v8908 = vadd.f32 %v8907, %v8901
    %v8909 = vadd.f32 %v8908, %v8902
    %v8910 = vadd.f32 %v8909, %v8903
    %v8911 = vadd.f32 %v8910, %v8904
    %v8912 = vadd.f32 %v8911, %v8905
    %v8913 = vadd.f32 %v8912, %v8906
    %8914 = vadd.xlane.f32.xlu0 %v8913
    %v8915 = vpop.xlane.xlu0 %8914
    %v8916 = vrot.slane %v8915, 4
    %v8917 = vadd.f32 %v8915, %v8916
    %v8918 = vrot.slane %v8917, 2
    %v8919 = vadd.f32 %v8917, %v8918
    %v8920 = vrot.slane %v8919, 1
    %v8921 = vadd.f32 %v8919, %v8920
    %s8922 = vtos %v8921
    %s8923 = sadd.f32 %s8836, %s8922
    %v8924 = vpack.c.bf16 %v8885, %v8883
    %v8925 = vpack.c.bf16 %v8886, %v8884
    %v8926 = vpack.c.bf16 %v8889, %v8887
    %v8927 = vpack.c.bf16 %v8890, %v8888
    %8928 = vmatpush.bf16.xpose.msra.mxu0 0
    %8929 = vmatpush.bf16.xpose.msra.mxu0 0
    %8930 = vmatpush.bf16.xpose.msra.mxu0 0
    %8931 = vmatpush.bf16.xpose.msra.mxu0 0
    %8932 = vmatpush.bf16.xpose.msra.mxu0 0
    %8933 = vmatpush.bf16.xpose.msra.mxu0 0
    %8934 = vmatpush.bf16.xpose.msra.mxu0 %v8926
    %8935 = vmatpush.bf16.xpose.msra.mxu0 %v8924
    %8936 = vmatmul.bf16.gmra.mxu0 %v8924
    %v8937 = vpop.f32.mrf.mxu0
    %v8938 = vadd.f32 0.0, %v8937
    %v8939 = vpop.f32.mrf.mxu0
    %v8940 = vadd.f32 0.0, %v8939
    %8941 = vmatmul.bf16.gmra.mxu0 %v8926
    %v8942 = vpop.f32.mrf.mxu0
    %v8943 = vadd.f32 0.0, %v8942
    %v8944 = vpop.f32.mrf.mxu0
    %v8945 = vadd.f32 0.0, %v8944
    %8946 = vdwg.mxu0
    %8947 = vmatpush.bf16.xpose.msra.mxu0 0
    %8948 = vmatpush.bf16.xpose.msra.mxu0 0
    %8949 = vmatpush.bf16.xpose.msra.mxu0 0
    %8950 = vmatpush.bf16.xpose.msra.mxu0 0
    %8951 = vmatpush.bf16.xpose.msra.mxu0 0
    %8952 = vmatpush.bf16.xpose.msra.mxu0 0
    %8953 = vmatpush.bf16.xpose.msra.mxu0 %v8927
    %8954 = vmatpush.bf16.xpose.msra.mxu0 %v8925
    %8955 = vmatmul.bf16.gmra.mxu0 %v8925
    %v8956 = vpop.f32.mrf.mxu0
    %v8957 = vadd.f32 %v8938, %v8956
    %v8958 = vpop.f32.mrf.mxu0
    %v8959 = vadd.f32 %v8940, %v8958
    %8960 = vmatmul.bf16.gmra.mxu0 %v8927
    %v8961 = vpop.f32.mrf.mxu0
    %v8962 = vadd.f32 %v8943, %v8961
    %v8963 = vpop.f32.mrf.mxu0
    %v8964 = vadd.f32 %v8945, %v8963
    %8965 = vdwg.mxu0
    %v8966 = vadd.f32 %v8879, %v8957
    %v8967 = vadd.f32 %v8880, %v8959
    %v8968 = vadd.f32 %v8881, %v8962
    %v8969 = vadd.f32 %v8882, %v8964
    %v8970 = vmul.f32 %v8966, 3.0517578e-05
    %v8971 = vmul.f32 %v8967, 3.0517578e-05
    %v8972 = vmul.f32 %v8968, 3.0517578e-05
    %v8973 = vmul.f32 %v8969, 3.0517578e-05
    %v8974 = vsub.f32 %v8970, %v8970
    %v8975 = vsub.f32 %v8971, %v8971
    %v8976 = vsub.f32 %v8972, %v8972
    %v8977 = vsub.f32 %v8973, %v8973
    %v8978 = vand.u32 2147483647, %v8974
    %v8979 = vand.u32 2147483647, %v8975
    %v8980 = vand.u32 2147483647, %v8976
    %v8981 = vand.u32 2147483647, %v8977
    %v8982 = vsel %vm8612, %v8978, 0.0
    %v8983 = vsel %vm8612, %v8979, 0.0
    %v8984 = vadd.f32 %v8982, %v8983
    %v8985 = vsel %vm8612, %v8980, 0.0
    %v8986 = vadd.f32 %v8984, %v8985
    %v8987 = vsel %vm8612, %v8981, 0.0
    %v8988 = vadd.f32 %v8986, %v8987
    %8989 = vadd.xlane.f32.xlu0 %v8988
    %v8990 = vpop.xlane.xlu0 %8989
    %v8991 = vrot.slane %v8990, 4
    %v8992 = vadd.f32 %v8990, %v8991
    %v8993 = vrot.slane %v8992, 2
    %v8994 = vadd.f32 %v8992, %v8993
    %v8995 = vrot.slane %v8994, 1
    %v8996 = vadd.f32 %v8994, %v8995
    %s8997 = vtos %v8996
    %s8998 = sadd.f32 %s8629, %s8997
    %v8999 = vrcp.pop 65536.0
    %v9000 = vmul.f32 65536.0, %v8999
    %v9001 = vsub.f32 1.0, %v9000
    %v9002 = vmul.f32 %v8999, %v9001
    %v9003 = vadd.f32 %v8999, %v9002
    %vm9004 = vweird.f32 %v8999
    %v9005 = vsel %vm9004, %v8999, %v9003
    %s9006 = vtos %v9005
    %s9007 = smul.f32 %s8923, %s9006
    %s9008 = sadd.f32 %s8249, %s9007
    %v9009 = vrcp.pop 2048.0
    %v9010 = vmul.f32 2048.0, %v9009
    %v9011 = vsub.f32 1.0, %v9010
    %v9012 = vmul.f32 %v9009, %v9011
    %v9013 = vadd.f32 %v9009, %v9012
    %vm9014 = vweird.f32 %v9009
    %v9015 = vsel %vm9014, %v9009, %v9013
    %s9016 = vtos %v9015
    %s9017 = smul.f32 %s8998, %s9016
    %s9018 = sadd.f32 %s8259, %s9017
    %s9019 = scalar_lea.smem [#allocation6], 0
    %9020 = sst [smem:[%s9019]] %s9008
    %s9021 = scalar_lea.smem [#allocation6], 1
    %9022 = sst [smem:[%s9021]] %s9018
    // Predicated region
    $region22: #{inpainting_loss_forward.1} parent=1 // pred_check
      _
    $region23: #{inpainting_loss_forward.1} parent=1 // pred_check_branch
      %9024 = sbr.rel (0) target = $region25
    $region24: #{inpainting_loss_forward.1} parent=1 // pred_region
      %9026 = vsyncadd [#allocation7], 0
      %s9028 = sshll.u32 %s5, 4
      %s9029 = int_to_ptr.vmem [resolvable:$true] %s9028
      %9031 = dma.smem_to_vmem [#allocation6], 16, %s9029, [#allocation7]
    $region25: #{inpainting_loss_forward.1} parent=1 // pred_fallthru
      _
    // Predicated region
    $region26: #{inpainting_loss_forward.1} parent=1 // pred_check
      _
    $region27: #{inpainting_loss_forward.1} parent=1 // pred_check_branch
      %9033 = sbr.rel (0) target = $region29
    $region28: #{inpainting_loss_forward.1} parent=1 // pred_region
      %9035 = dma.done [#allocation7], 16
    $region29: #{inpainting_loss_forward.1} parent=1 // pred_fallthru
      _
    %9036 = sfence
    %9037 = vsyncpa [#allocation7], 1

</llo_original>
